<compile_context>
chip_gen: v6e
topology: v6e:2x2x1
jax: 0.10.0
libtpu: 0.0.40
codegen_flags: <defaults>
</compile_context>

<pallas_src>
import numpy as np
import jax
import jax.numpy as jnp
from jax.experimental import pallas as pl
from jax.experimental.pallas import tpu as pltpu

IN_DIM = 16
HIDDEN = 32
BLOCKS = 3
OUT_DIM = 2
BN_EPS = 1e-5

# ---- packed parameter slab layout (row offsets; every chunk 8-row aligned) --
W_IN_OFF = 0                              # (IN_DIM, HIDDEN)
B_IN_OFF = 16                             # 1 row used, 8 reserved
BLK_OFF = 24
BLK_STRIDE = 80                           # w1(32) + b1(8) + w2(32) + b2(8)
W1_OFF, B1_OFF, W2_OFF, B2_OFF = 0, 32, 40, 72
W_OUT_OFF = BLK_OFF + BLOCKS * BLK_STRIDE  # 264, (HIDDEN, OUT_DIM padded to 32)
B_OUT_OFF = W_OUT_OFF + HIDDEN             # 296
TOTAL_ROWS = B_OUT_OFF + 8                 # 304 (multiple of 8)

_PREC = jax.lax.Precision.HIGHEST


def residual_mlp_kernel(x_ref, p_ref, o_ref):
    x = x_ref[...]                                        # (TB, IN_DIM) f32

    # input_proj: Linear (BatchNorm folded in) + ReLU
    w_in = p_ref[W_IN_OFF:W_IN_OFF + IN_DIM, :]
    b_in = p_ref[B_IN_OFF:B_IN_OFF + 1, :]
    h = jnp.dot(x, w_in, preferred_element_type=jnp.float32, precision=_PREC) + b_in
    h = jnp.maximum(h, 0.0)

    # residual blocks (statically unrolled; BN folded; Dropout == identity in eval)
    for i in range(BLOCKS):
        base = BLK_OFF + i * BLK_STRIDE
        w1 = p_ref[base + W1_OFF:base + W1_OFF + HIDDEN, :]
        b1 = p_ref[base + B1_OFF:base + B1_OFF + 1, :]
        w2 = p_ref[base + W2_OFF:base + W2_OFF + HIDDEN, :]
        b2 = p_ref[base + B2_OFF:base + B2_OFF + 1, :]
        y = jnp.dot(h, w1, preferred_element_type=jnp.float32, precision=_PREC) + b1
        y = jnp.maximum(y, 0.0)
        y = jnp.dot(y, w2, preferred_element_type=jnp.float32, precision=_PREC) + b2
        h = jnp.maximum(y + h, 0.0)                       # out += identity; ReLU

    # output_layer: columns >= OUT_DIM of w_out/b_out are zero; the store is
    # HIDDEN wide (denser than a width-2 store), wrapper slices afterwards.
    w_out = p_ref[W_OUT_OFF:W_OUT_OFF + HIDDEN, :]
    b_out = p_ref[B_OUT_OFF:B_OUT_OFF + 1, :]
    o_ref[...] = (jnp.dot(h, w_out, preferred_element_type=jnp.float32,
                          precision=_PREC) + b_out)


def residual_mlp_forward(x, param_slab, *, tb=128):
    B = x.shape[0]
    TB = max(8, min(tb, ((B + 7) // 8) * 8))      # multiple of 8, capped at tb
    Bp = pl.cdiv(B, TB) * TB
    if Bp != B:
        x = jnp.pad(x, ((0, Bp - B), (0, 0)))

    out = pl.pallas_call(
        residual_mlp_kernel,
        out_shape=jax.ShapeDtypeStruct((Bp, HIDDEN), jnp.float32),
        grid_spec=pl.GridSpec(
            grid=(Bp // TB,),
            in_specs=[
                pl.BlockSpec((TB, IN_DIM), lambda i: (i, 0)),
                # single packed-parameter DMA; constant index_map -> fetched once
                pl.BlockSpec((TOTAL_ROWS, HIDDEN), lambda i: (0, 0)),
            ],
            out_specs=pl.BlockSpec((TB, HIDDEN), lambda i: (i, 0)),
        ),
        compiler_params=pltpu.CompilerParams(
            dimension_semantics=("parallel",)),
    )(x, param_slab)
    return out[:B, :OUT_DIM]


# ----------------------------- host-side setup ------------------------------

def fold_linear_bn(w, b, bn_params):
    """Fold inference-mode BatchNorm1d into the preceding Linear."""
    gamma, beta, mean, var = bn_params
    s = gamma / jnp.sqrt(var + BN_EPS)
    t = beta - mean * s
    return w * s[None, :], b * s + t


def make_raw_params(key):
    keys = jax.random.split(key, 48)
    kit = iter(keys)

    def linear(kin, kout):
        w = jax.random.normal(next(kit), (kin, kout), jnp.float32) * 0.1  # [in, out]
        b = jax.random.normal(next(kit), (kout,), jnp.float32) * 0.05
        return w, b

    def bn(dim):
        gamma = 1.0 + 0.1 * jax.random.normal(next(kit), (dim,), jnp.float32)
        beta = 0.1 * jax.random.normal(next(kit), (dim,), jnp.float32)
        mean = 0.1 * jax.random.normal(next(kit), (dim,), jnp.float32)
        var = jnp.abs(1.0 + 0.1 * jax.random.normal(next(kit), (dim,), jnp.float32))
        return gamma, beta, mean, var

    w_in, b_in = linear(IN_DIM, HIDDEN)
    bn_in = bn(HIDDEN)
    blocks = []
    for _ in range(BLOCKS):
        w1, b1 = linear(HIDDEN, HIDDEN)
        bn1 = bn(HIDDEN)
        w2, b2 = linear(HIDDEN, HIDDEN)
        bn2 = bn(HIDDEN)
        blocks.append((w1, b1, bn1, w2, b2, bn2))
    w_out, b_out = linear(HIDDEN, OUT_DIM)
    return (w_in, b_in, bn_in), tuple(blocks), (w_out, b_out)


def pack_params(raw):
    (w_in, b_in, bn_in), blocks, (w_out, b_out) = raw
    slab = np.zeros((TOTAL_ROWS, HIDDEN), np.float32)

    wf, bf = fold_linear_bn(w_in, b_in, bn_in)
    slab[W_IN_OFF:W_IN_OFF + IN_DIM, :] = np.asarray(wf)
    slab[B_IN_OFF, :] = np.asarray(bf)

    for i, (w1, b1, bn1, w2, b2, bn2) in enumerate(blocks):
        base = BLK_OFF + i * BLK_STRIDE
        w1f, b1f = fold_linear_bn(w1, b1, bn1)
        w2f, b2f = fold_linear_bn(w2, b2, bn2)
        slab[base + W1_OFF:base + W1_OFF + HIDDEN, :] = np.asarray(w1f)
        slab[base + B1_OFF, :] = np.asarray(b1f)
        slab[base + W2_OFF:base + W2_OFF + HIDDEN, :] = np.asarray(w2f)
        slab[base + B2_OFF, :] = np.asarray(b2f)

    slab[W_OUT_OFF:W_OUT_OFF + HIDDEN, :OUT_DIM] = np.asarray(w_out)
    slab[B_OUT_OFF, :OUT_DIM] = np.asarray(b_out)
    return jnp.asarray(slab)


def reference_forward(x, raw):
    """Unfused reference (Linear -> BN(running stats) -> ReLU -> ...)."""
    (w_in, b_in, bn_in), blocks, (w_out, b_out) = raw

    def mm(a, b):
        return jnp.dot(a, b, precision=_PREC)

    def bn_apply(h, p):
        gamma, beta, mean, var = p
        return (h - mean) / jnp.sqrt(var + BN_EPS) * gamma + beta

    h = jnp.maximum(bn_apply(mm(x, w_in) + b_in, bn_in), 0.0)
    for (w1, b1, bn1, w2, b2, bn2) in blocks:
        y = jnp.maximum(bn_apply(mm(h, w1) + b1, bn1), 0.0)
        # Dropout == identity in eval mode
        y = bn_apply(mm(y, w2) + b2, bn2)
        h = jnp.maximum(y + h, 0.0)
    return mm(h, w_out) + b_out


if __name__ == "__main__":
    key = jax.random.PRNGKey(0)
    kx, kp = jax.random.split(key)

    B = 256                         # 2 grid steps of TB=128 (shards on v7x)
    x = jax.random.normal(kx, (B, IN_DIM), jnp.float32)

    raw = make_raw_params(kp)
    param_slab = pack_params(raw)

    out = residual_mlp_forward(x, param_slab, tb=128)
    out = jax.block_until_ready(out)

    ref = reference_forward(x, raw)
    assert out.shape == (B, OUT_DIM)
    np.testing.assert_allclose(np.asarray(out), np.asarray(ref),
                               rtol=1e-3, atol=1e-3)

    print("KERNEL_OK")
</pallas_src>

<mosaic_0001>
module attributes {stable_mosaic.version = 11 : i64} {
  func.func @residual_mlp_kernel(%arg0: i32, %arg1: memref<128x16xf32, #tpu.memory_space<vmem>>, %arg2: memref<304x32xf32, #tpu.memory_space<vmem>>, %arg3: memref<128x32xf32, #tpu.memory_space<vmem>>) attributes {dimension_semantics = [#tpu.dimension_semantics<parallel>], iteration_bounds = array<i64: 2>, scalar_prefetch = 0 : i64, scratch_operands = 0 : i64, tpu.core_type = #tpu.core_type<tc>, window_params = [{transform_indices = @transform_0, window_bounds = array<i64: 128, 16>}, {pipeline_mode = #tpu.pipeline_mode<synchronous>, transform_indices = @transform_1, window_bounds = array<i64: 304, 32>}, {transform_indices = @transform_2, window_bounds = array<i64: 128, 32>}]} {
    %c0 = arith.constant 0 : index
    %c0_0 = arith.constant 0 : index
    %0 = vector.load %arg1[%c0, %c0_0] : memref<128x16xf32, #tpu.memory_space<vmem>>, vector<128x16xf32>
    %c0_1 = arith.constant 0 : index
    %c0_2 = arith.constant 0 : index
    %1 = vector.load %arg2[%c0_1, %c0_2] : memref<304x32xf32, #tpu.memory_space<vmem>>, vector<16x32xf32>
    %c16 = arith.constant 16 : index
    %c0_3 = arith.constant 0 : index
    %2 = vector.load %arg2[%c16, %c0_3] : memref<304x32xf32, #tpu.memory_space<vmem>>, vector<1x32xf32>
    %cst = arith.constant dense<0.000000e+00> : vector<128x32xf32>
    %3 = tpu.matmul %0, %1, %cst {dimension_numbers = #tpu.dot_dimension_numbers<[1], [0], [0], [1], [0, 0, 1, 1], [], []>, precision = #tpu.contract_precision<fp32>} : vector<128x16xf32>, vector<16x32xf32>, vector<128x32xf32> -> vector<128x32xf32>
    %4 = vector.broadcast %2 : vector<1x32xf32> to vector<128x32xf32>
    %5 = arith.addf %3, %4 : vector<128x32xf32>
    %cst_4 = arith.constant 0.000000e+00 : f32
    %6 = vector.broadcast %cst_4 : f32 to vector<128x32xf32>
    %7 = arith.maximumf %5, %6 : vector<128x32xf32>
    %c24 = arith.constant 24 : index
    %c0_5 = arith.constant 0 : index
    %8 = vector.load %arg2[%c24, %c0_5] : memref<304x32xf32, #tpu.memory_space<vmem>>, vector<32x32xf32>
    %c56 = arith.constant 56 : index
    %c0_6 = arith.constant 0 : index
    %9 = vector.load %arg2[%c56, %c0_6] : memref<304x32xf32, #tpu.memory_space<vmem>>, vector<1x32xf32>
    %c64 = arith.constant 64 : index
    %c0_7 = arith.constant 0 : index
    %10 = vector.load %arg2[%c64, %c0_7] : memref<304x32xf32, #tpu.memory_space<vmem>>, vector<32x32xf32>
    %c96 = arith.constant 96 : index
    %c0_8 = arith.constant 0 : index
    %11 = vector.load %arg2[%c96, %c0_8] : memref<304x32xf32, #tpu.memory_space<vmem>>, vector<1x32xf32>
    %cst_9 = arith.constant dense<0.000000e+00> : vector<128x32xf32>
    %12 = tpu.matmul %7, %8, %cst_9 {dimension_numbers = #tpu.dot_dimension_numbers<[1], [0], [0], [1], [0, 0, 1, 1], [], []>, precision = #tpu.contract_precision<fp32>} : vector<128x32xf32>, vector<32x32xf32>, vector<128x32xf32> -> vector<128x32xf32>
    %13 = vector.broadcast %9 : vector<1x32xf32> to vector<128x32xf32>
    %14 = arith.addf %12, %13 : vector<128x32xf32>
    %cst_10 = arith.constant 0.000000e+00 : f32
    %15 = vector.broadcast %cst_10 : f32 to vector<128x32xf32>
    %16 = arith.maximumf %14, %15 : vector<128x32xf32>
    %cst_11 = arith.constant dense<0.000000e+00> : vector<128x32xf32>
    %17 = tpu.matmul %16, %10, %cst_11 {dimension_numbers = #tpu.dot_dimension_numbers<[1], [0], [0], [1], [0, 0, 1, 1], [], []>, precision = #tpu.contract_precision<fp32>} : vector<128x32xf32>, vector<32x32xf32>, vector<128x32xf32> -> vector<128x32xf32>
    %18 = vector.broadcast %11 : vector<1x32xf32> to vector<128x32xf32>
    %19 = arith.addf %17, %18 : vector<128x32xf32>
    %20 = arith.addf %19, %7 : vector<128x32xf32>
    %cst_12 = arith.constant 0.000000e+00 : f32
    %21 = vector.broadcast %cst_12 : f32 to vector<128x32xf32>
    %22 = arith.maximumf %20, %21 : vector<128x32xf32>
    %c104 = arith.constant 104 : index
    %c0_13 = arith.constant 0 : index
    %23 = vector.load %arg2[%c104, %c0_13] : memref<304x32xf32, #tpu.memory_space<vmem>>, vector<32x32xf32>
    %c136 = arith.constant 136 : index
    %c0_14 = arith.constant 0 : index
    %24 = vector.load %arg2[%c136, %c0_14] : memref<304x32xf32, #tpu.memory_space<vmem>>, vector<1x32xf32>
    %c144 = arith.constant 144 : index
    %c0_15 = arith.constant 0 : index
    %25 = vector.load %arg2[%c144, %c0_15] : memref<304x32xf32, #tpu.memory_space<vmem>>, vector<32x32xf32>
    %c176 = arith.constant 176 : index
    %c0_16 = arith.constant 0 : index
    %26 = vector.load %arg2[%c176, %c0_16] : memref<304x32xf32, #tpu.memory_space<vmem>>, vector<1x32xf32>
    %cst_17 = arith.constant dense<0.000000e+00> : vector<128x32xf32>
    %27 = tpu.matmul %22, %23, %cst_17 {dimension_numbers = #tpu.dot_dimension_numbers<[1], [0], [0], [1], [0, 0, 1, 1], [], []>, precision = #tpu.contract_precision<fp32>} : vector<128x32xf32>, vector<32x32xf32>, vector<128x32xf32> -> vector<128x32xf32>
    %28 = vector.broadcast %24 : vector<1x32xf32> to vector<128x32xf32>
    %29 = arith.addf %27, %28 : vector<128x32xf32>
    %cst_18 = arith.constant 0.000000e+00 : f32
    %30 = vector.broadcast %cst_18 : f32 to vector<128x32xf32>
    %31 = arith.maximumf %29, %30 : vector<128x32xf32>
    %cst_19 = arith.constant dense<0.000000e+00> : vector<128x32xf32>
    %32 = tpu.matmul %31, %25, %cst_19 {dimension_numbers = #tpu.dot_dimension_numbers<[1], [0], [0], [1], [0, 0, 1, 1], [], []>, precision = #tpu.contract_precision<fp32>} : vector<128x32xf32>, vector<32x32xf32>, vector<128x32xf32> -> vector<128x32xf32>
    %33 = vector.broadcast %26 : vector<1x32xf32> to vector<128x32xf32>
    %34 = arith.addf %32, %33 : vector<128x32xf32>
    %35 = arith.addf %34, %22 : vector<128x32xf32>
    %cst_20 = arith.constant 0.000000e+00 : f32
    %36 = vector.broadcast %cst_20 : f32 to vector<128x32xf32>
    %37 = arith.maximumf %35, %36 : vector<128x32xf32>
    %c184 = arith.constant 184 : index
    %c0_21 = arith.constant 0 : index
    %38 = vector.load %arg2[%c184, %c0_21] : memref<304x32xf32, #tpu.memory_space<vmem>>, vector<32x32xf32>
    %c216 = arith.constant 216 : index
    %c0_22 = arith.constant 0 : index
    %39 = vector.load %arg2[%c216, %c0_22] : memref<304x32xf32, #tpu.memory_space<vmem>>, vector<1x32xf32>
    %c224 = arith.constant 224 : index
    %c0_23 = arith.constant 0 : index
    %40 = vector.load %arg2[%c224, %c0_23] : memref<304x32xf32, #tpu.memory_space<vmem>>, vector<32x32xf32>
    %c256 = arith.constant 256 : index
    %c0_24 = arith.constant 0 : index
    %41 = vector.load %arg2[%c256, %c0_24] : memref<304x32xf32, #tpu.memory_space<vmem>>, vector<1x32xf32>
    %cst_25 = arith.constant dense<0.000000e+00> : vector<128x32xf32>
    %42 = tpu.matmul %37, %38, %cst_25 {dimension_numbers = #tpu.dot_dimension_numbers<[1], [0], [0], [1], [0, 0, 1, 1], [], []>, precision = #tpu.contract_precision<fp32>} : vector<128x32xf32>, vector<32x32xf32>, vector<128x32xf32> -> vector<128x32xf32>
    %43 = vector.broadcast %39 : vector<1x32xf32> to vector<128x32xf32>
    %44 = arith.addf %42, %43 : vector<128x32xf32>
    %cst_26 = arith.constant 0.000000e+00 : f32
    %45 = vector.broadcast %cst_26 : f32 to vector<128x32xf32>
    %46 = arith.maximumf %44, %45 : vector<128x32xf32>
    %cst_27 = arith.constant dense<0.000000e+00> : vector<128x32xf32>
    %47 = tpu.matmul %46, %40, %cst_27 {dimension_numbers = #tpu.dot_dimension_numbers<[1], [0], [0], [1], [0, 0, 1, 1], [], []>, precision = #tpu.contract_precision<fp32>} : vector<128x32xf32>, vector<32x32xf32>, vector<128x32xf32> -> vector<128x32xf32>
    %48 = vector.broadcast %41 : vector<1x32xf32> to vector<128x32xf32>
    %49 = arith.addf %47, %48 : vector<128x32xf32>
    %50 = arith.addf %49, %37 : vector<128x32xf32>
    %cst_28 = arith.constant 0.000000e+00 : f32
    %51 = vector.broadcast %cst_28 : f32 to vector<128x32xf32>
    %52 = arith.maximumf %50, %51 : vector<128x32xf32>
    %c264 = arith.constant 264 : index
    %c0_29 = arith.constant 0 : index
    %53 = vector.load %arg2[%c264, %c0_29] : memref<304x32xf32, #tpu.memory_space<vmem>>, vector<32x32xf32>
    %c296 = arith.constant 296 : index
    %c0_30 = arith.constant 0 : index
    %54 = vector.load %arg2[%c296, %c0_30] : memref<304x32xf32, #tpu.memory_space<vmem>>, vector<1x32xf32>
    %cst_31 = arith.constant dense<0.000000e+00> : vector<128x32xf32>
    %55 = tpu.matmul %52, %53, %cst_31 {dimension_numbers = #tpu.dot_dimension_numbers<[1], [0], [0], [1], [0, 0, 1, 1], [], []>, precision = #tpu.contract_precision<fp32>} : vector<128x32xf32>, vector<32x32xf32>, vector<128x32xf32> -> vector<128x32xf32>
    %56 = vector.broadcast %54 : vector<1x32xf32> to vector<128x32xf32>
    %57 = arith.addf %55, %56 : vector<128x32xf32>
    %c0_32 = arith.constant 0 : index
    %c0_33 = arith.constant 0 : index
    %58 = vector.load %arg3[%c0_32, %c0_33] : memref<128x32xf32, #tpu.memory_space<vmem>>, vector<128x32xf32>
    tpu.vector_store %arg3[%c0_32, %c0_33], %57 {strides = array<i32>} : memref<128x32xf32, #tpu.memory_space<vmem>>, vector<128x32xf32>,
    return
  }
  func.func @transform_0(%arg0: i32) -> (i32, i32) {
    %c0_i32 = arith.constant 0 : i32
    %c0_i32_0 = arith.constant 0 : i32
    return %arg0, %c0_i32 : i32, i32
  }
  func.func @transform_1(%arg0: i32) -> (i32, i32) {
    %c0_i32 = arith.constant 0 : i32
    %c0_i32_0 = arith.constant 0 : i32
    %c0_i32_1 = arith.constant 0 : i32
    return %c0_i32, %c0_i32_0 : i32, i32
  }
  func.func @transform_2(%arg0: i32) -> (i32, i32) {
    %c0_i32 = arith.constant 0 : i32
    %c0_i32_0 = arith.constant 0 : i32
    return %arg0, %c0_i32 : i32, i32
  }
}

</mosaic_0001>

<llo_original>
// kernel: tpu_custom_call.1
$region0: #{tpu_custom_call.1}
  #allocation0 [shape = 'u32[]', space=smem, size = 0x4, offset = 0x4, fixed_abs, tag = 'smem constant byte address 0x4 - core index']
  #allocation1 [shape = 'u32[144,128]{1,0:T(1,128)}', space=vmem, size = 0x12000, scoped, tag = 'internal scratch']
  %s0 = inlined_call_operand.vmem [shape: f32[256,16], index: 0, kind: input, shape index: {}]
  %s1 = inlined_call_operand.vmem [shape: f32[304,32], index: 1, kind: input, shape index: {}]
  %s2 = inlined_call_operand.vmem [shape: f32[256,32], index: 2, kind: output, shape index: {}]
  %s3 = sld [smem:[#allocation0]]
  $region41: #{tpu_custom_call.1} parent=0
    _
  %s5 = ssub.s32 1, %s3
  %s6 = scalar_select 0, %s5, %s3
  loop: start=0, step=1, limit=4
  $region2: #{tpu_custom_call.1} parent=0 // loop_pre_header
    _
  $region3: #{tpu_custom_call.1} parent=0 // loop_header
    %s8 = sphi 0, %s12
    %p9 = scmp.ge.s32.totalorder %s8, 4
    %s18 = sphi 0, %s20
    %s21 = sphi 0, %s18
    %s22 = sphi 0, %s21
    %s38 = sphi 0, %s22
    %s42 = sphi 0, %s42
    %s44 = sphi 0, %s42
    %s45 = sphi 0, %s44
    %s59 = sphi 0, %s45
    %s65 = sphi 0, %s67
    %s68 = sphi 0, %s65
    %s69 = sphi 0, %s68
    %s85 = sphi 0, %s69
  $region4: #{tpu_custom_call.1} parent=0 // loop_header_branch
    %11 = sbr.rel (%p9) target = $region8
  $region5: #{tpu_custom_call.1} parent=0 // loop_body
    %s13 = ssub.s32 %s8, 1
    %s14 = ssub.s32 %s8, 2
    %s15 = sadd.s32 %s8, 1
    %s16 = ssub.s32 %s8, %s15
    %p17 = scmp.eq.s32.totalorder %s16, 0
    %s19 = sadd.s32 %s18, 1
    %s20 = scalar_select %p17, %s18, %s19
    %p23 = pneg %p17
    %p24 = scmp.eq.s32.totalorder %s8, 1
    %p25 = por %p23, %p24
    %p26 = scmp.ne.s32.totalorder %s18, %s21
    %p27 = scmp.eq.s32.totalorder %s8, 0
    %p28 = por %p26, %p27
    %p29 = scmp.ne.s32.totalorder %s18, %s21
    %p30 = scmp.eq.s32.totalorder %s13, 1
    %p31 = por %p29, %p30
    %p32 = scmp.ne.s32.totalorder %s21, %s22
    %p33 = scmp.eq.s32.totalorder %s13, 0
    %p34 = por %p32, %p33
    %p35 = scmp.ne.s32.totalorder %s21, %s22
    %p36 = scmp.eq.s32.totalorder %s14, 1
    %p37 = por %p35, %p36
    %p39 = scmp.ne.s32.totalorder %s22, %s38
    %p40 = scmp.eq.s32.totalorder %s14, 0
    %p41 = por %p39, %p40
    %s43 = sadd.s32 %s42, 1
    %p46 = scmp.eq.s32.totalorder %s8, 1
    %p47 = scmp.ne.s32.totalorder %s42, %s44
    %p48 = scmp.eq.s32.totalorder %s8, 0
    %p49 = por %p47, %p48
    %p50 = scmp.ne.s32.totalorder %s42, %s44
    %p51 = scmp.eq.s32.totalorder %s13, 1
    %p52 = por %p50, %p51
    %p53 = scmp.ne.s32.totalorder %s44, %s45
    %p54 = scmp.eq.s32.totalorder %s13, 0
    %p55 = por %p53, %p54
    %p56 = scmp.ne.s32.totalorder %s44, %s45
    %p57 = scmp.eq.s32.totalorder %s14, 1
    %p58 = por %p56, %p57
    %p60 = scmp.ne.s32.totalorder %s45, %s59
    %p61 = scmp.eq.s32.totalorder %s14, 0
    %p62 = por %p60, %p61
    %s63 = ssub.s32 %s8, %s15
    %p64 = scmp.eq.s32.totalorder %s63, 0
    %s66 = sadd.s32 %s65, 1
    %s67 = scalar_select %p64, %s65, %s66
    %p70 = pneg %p64
    %p71 = scmp.eq.s32.totalorder %s8, 1
    %p72 = por %p70, %p71
    %p73 = scmp.ne.s32.totalorder %s65, %s68
    %p74 = scmp.eq.s32.totalorder %s8, 0
    %p75 = por %p73, %p74
    %p76 = scmp.ne.s32.totalorder %s65, %s68
    %p77 = scmp.eq.s32.totalorder %s13, 1
    %p78 = por %p76, %p77
    %p79 = scmp.ne.s32.totalorder %s68, %s69
    %p80 = scmp.eq.s32.totalorder %s13, 0
    %p81 = por %p79, %p80
    %p82 = scmp.ne.s32.totalorder %s68, %s69
    %p83 = scmp.eq.s32.totalorder %s14, 1
    %p84 = por %p82, %p83
    %p86 = scmp.ne.s32.totalorder %s69, %s85
    %p87 = scmp.eq.s32.totalorder %s14, 0
    %p88 = por %p86, %p87
    %p89 = scmp.le.s32.totalorder 1, %s8
    %p90 = scmp.lt.s32.totalorder %s8, 3
    %p91 = pnand %p89, %p90
    %p92 = pneg %p91
    // Predicated region
    $region9: #{tpu_custom_call.1} parent=5 // pred_check
      _
    $region10: #{tpu_custom_call.1} parent=5 // pred_check_branch
      %94 = sbr.rel (%p91) target = $region12
    $region11: #{tpu_custom_call.1} parent=5 // pred_region
      %s95 = ssub.s32 %s8, 1
      // Predicated region
      $region13: #{tpu_custom_call.1} parent=11 // pred_check
        %p96 = pneg %p55
      $region14: #{tpu_custom_call.1} parent=11 // pred_check_branch
        %98 = sbr.rel (%p96) target = $region16
      $region15: #{tpu_custom_call.1} parent=11 // pred_region
        _
      $region16: #{tpu_custom_call.1} parent=11 // pred_fallthru
        _
    $region12: #{tpu_custom_call.1} parent=5 // pred_fallthru
      _
    %p99 = scmp.lt.s32.totalorder %s8, 2
    // Predicated region
    $region17: #{tpu_custom_call.1} parent=5 // pred_check
      %p100 = pneg %p99
    $region18: #{tpu_custom_call.1} parent=5 // pred_check_branch
      %102 = sbr.rel (%p100) target = $region20
    $region19: #{tpu_custom_call.1} parent=5 // pred_region
      // Predicated region
      $region21: #{tpu_custom_call.1} parent=19 // pred_check
        %p103 = pneg %p28
      $region22: #{tpu_custom_call.1} parent=19 // pred_check_branch
        %105 = sbr.rel (%p103) target = $region24
      $region23: #{tpu_custom_call.1} parent=19 // pred_region
        %s106 = smul.u32 16, %s8
        %p107 = scmp.lt.s32.totalorder %s106, 31
        %s108 = scalar_select %p107, %s106, 31
        %s109 = smul.addr %s108, 8
        %s110 = scalar_lea.vmem %s0, %s109
        %s111 = smul.u32 16, %s8
      $region24: #{tpu_custom_call.1} parent=19 // pred_fallthru
        _
    $region20: #{tpu_custom_call.1} parent=5 // pred_fallthru
      _
    %p112 = scmp.le.s32.totalorder 1, %s8
    %p113 = scmp.lt.s32.totalorder %s8, 3
    %p114 = pnand %p112, %p113
    %p115 = pneg %p114
    // Predicated region
    $region25: #{tpu_custom_call.1} parent=5 // pred_check
      _
    $region26: #{tpu_custom_call.1} parent=5 // pred_check_branch
      %117 = sbr.rel (%p114) target = $region28
    $region27: #{tpu_custom_call.1} parent=5 // pred_region
      %s118 = ssub.s32 %s8, 1
      %s119 = smul.u32 16, %s13
      %p120 = scmp.lt.s32.totalorder %s119, 31
      %s121 = scalar_select %p120, %s119, 31
      %s122 = smul.addr %s121, 8
      %s123 = scalar_lea.vmem %s0, %s122
      %p124 = pneg %p34
      %p125 = pneg %p31
      %p126 = pneg %p55
      %p127 = pneg %p52
      %p128 = pneg %p81
      %p129 = pneg %p78
      %s130 = smul.u32 16, %s13
      %p131 = scmp.lt.s32.totalorder %s130, 31
      %s132 = scalar_select %p131, %s130, 31
      %s133 = smul.addr %s132, 8
      %s134 = scalar_lea.vmem %s2, %s133
      %s135 = smul.u32 16, %s13
      %p136 = scmp.lt.s32.totalorder %s135, 31
      %s137 = scalar_select %p136, %s135, 31
      %s138 = smul.addr %s137, 8
      %s139 = scalar_lea.vmem %s0, %s138
      %s140 = smul.u32 16, %s13
      %s141 = smul.u32 16, %s13
      %p142 = scmp.lt.s32.totalorder %s141, 31
      %s143 = scalar_select %p142, %s141, 31
      %s144 = smul.addr %s143, 8
      %s145 = scalar_lea.vmem %s2, %s144
      %s146 = smul.u32 16, %s13
      %v147 = vld [vmem:[%s139] sm:$0xff]
      %v148 = vld [vmem:[%s139 + $0x8] sm:$0xff]
      %v149 = vld [vmem:[%s139 + $0x10] sm:$0xff]
      %v150 = vld [vmem:[%s139 + $0x18] sm:$0xff]
      %v151 = vld [vmem:[%s139 + $0x20] sm:$0xff]
      %v152 = vld [vmem:[%s139 + $0x28] sm:$0xff]
      %v153 = vld [vmem:[%s139 + $0x30] sm:$0xff]
      %v154 = vld [vmem:[%s139 + $0x38] sm:$0xff]
      %v155 = vld [vmem:[%s139 + $0x40] sm:$0xff]
      %v156 = vld [vmem:[%s139 + $0x48] sm:$0xff]
      %v157 = vld [vmem:[%s139 + $0x50] sm:$0xff]
      %v158 = vld [vmem:[%s139 + $0x58] sm:$0xff]
      %v159 = vld [vmem:[%s139 + $0x60] sm:$0xff]
      %v160 = vld [vmem:[%s139 + $0x68] sm:$0xff]
      %v161 = vld [vmem:[%s139 + $0x70] sm:$0xff]
      %v162 = vld [vmem:[%s139 + $0x78] sm:$0xff]
      %v163 = vld [vmem:[%s1] sm:$0xff]
      %v164 = vld [vmem:[%s1 + $0x8] sm:$0xff]
      %v165 = vld [vmem:[%s1 + $0x10] sm:$0x1]
      %v166 = vlaneseq
      %v167 = vshrl.u32 %v166, 7
      %v168 = vsub.s32 0, %v167
      %v169 = vrot.slane %v165, %v168
      %vm170 = vcmask 130048
      %v172 = vsel %vm170, %v147, 0
      %v175 = vsel %vm170, %v148, 0
      %v178 = vsel %vm170, %v149, 0
      %v181 = vsel %vm170, %v150, 0
      %v184 = vsel %vm170, %v151, 0
      %v187 = vsel %vm170, %v152, 0
      %v190 = vsel %vm170, %v153, 0
      %v193 = vsel %vm170, %v154, 0
      %v196 = vsel %vm170, %v155, 0
      %v199 = vsel %vm170, %v156, 0
      %v202 = vsel %vm170, %v157, 0
      %v205 = vsel %vm170, %v158, 0
      %v208 = vsel %vm170, %v159, 0
      %v211 = vsel %vm170, %v160, 0
      %v214 = vsel %vm170, %v161, 0
      %v217 = vsel %vm170, %v162, 0
      %219 = vmatprep.subr.mxu0 0.0
      %220 = vmatpush1.msra.mxu0 0.0
      %221 = vmatprep.subr.mxu0 0.0
      %222 = vmatpush1.msra.mxu0 0.0
      %223 = vmatprep.subr.mxu0 0.0
      %224 = vmatpush1.msra.mxu0 0.0
      %225 = vmatprep.subr.mxu0 0.0
      %226 = vmatpush1.msra.mxu0 0.0
      %227 = vmatprep.subr.mxu0 0.0
      %228 = vmatpush1.msra.mxu0 0.0
      %229 = vmatprep.subr.mxu0 0.0
      %230 = vmatpush1.msra.mxu0 0.0
      %231 = vmatprep.subr.mxu0 0.0
      %232 = vmatpush1.msra.mxu0 0.0
      %233 = vmatprep.subr.mxu0 0.0
      %234 = vmatpush1.msra.mxu0 0.0
      %235 = vmatprep.subr.mxu0 0.0
      %236 = vmatpush1.msra.mxu0 0.0
      %237 = vmatprep.subr.mxu0 0.0
      %238 = vmatpush1.msra.mxu0 0.0
      %239 = vmatprep.subr.mxu0 0.0
      %240 = vmatpush1.msra.mxu0 0.0
      %241 = vmatprep.subr.mxu0 0.0
      %242 = vmatpush1.msra.mxu0 0.0
      %243 = vmatprep.subr.mxu0 0.0
      %244 = vmatpush1.msra.mxu0 0.0
      %245 = vmatprep.subr.mxu0 0.0
      %246 = vmatpush1.msra.mxu0 0.0
      %247 = vmatprep.subr.mxu0 0.0
      %v248 = vand.u32 %v164, 4294901760
      %249 = vmatpush1.msra.mxu0 %v248
      %250 = vmatprep.subr.mxu0 0.0
      %v251 = vand.u32 %v163, 4294901760
      %252 = vmatpush1.msra.mxu0 %v251
      %253 = vmatprep.subr.mxu0 0.0
      %254 = vmatpush2.msra.mxu0 0.0
      %255 = vmatprep.subr.mxu0 0.0
      %256 = vmatpush2.msra.mxu0 0.0
      %257 = vmatprep.subr.mxu0 0.0
      %258 = vmatpush2.msra.mxu0 0.0
      %259 = vmatprep.subr.mxu0 0.0
      %260 = vmatpush2.msra.mxu0 0.0
      %261 = vmatprep.subr.mxu0 0.0
      %262 = vmatpush2.msra.mxu0 0.0
      %263 = vmatprep.subr.mxu0 0.0
      %264 = vmatpush2.msra.mxu0 0.0
      %265 = vmatprep.subr.mxu0 0.0
      %266 = vmatpush2.msra.mxu0 0.0
      %267 = vmatprep.subr.mxu0 0.0
      %268 = vmatpush2.msra.mxu0 0.0
      %269 = vmatprep.subr.mxu0 0.0
      %270 = vmatpush2.msra.mxu0 0.0
      %271 = vmatprep.subr.mxu0 0.0
      %272 = vmatpush2.msra.mxu0 0.0
      %273 = vmatprep.subr.mxu0 0.0
      %274 = vmatpush2.msra.mxu0 0.0
      %275 = vmatprep.subr.mxu0 0.0
      %276 = vmatpush2.msra.mxu0 0.0
      %277 = vmatprep.subr.mxu0 0.0
      %278 = vmatpush2.msra.mxu0 0.0
      %279 = vmatprep.subr.mxu0 0.0
      %280 = vmatpush2.msra.mxu0 0.0
      %281 = vmatprep.subr.mxu0 0.0
      %282 = vmatpush2.msra.mxu0 0.0
      %283 = vmatprep.subr.mxu0 0.0
      %284 = vmatpush2.msra.mxu0 0.0
      %285 = vmatprep.mubr.f32.mxu0 0.0
      %v286 = vand.u32 %v172, 4294901760
      %v287 = vsub.f32 %v172, %v286
      %v288 = vand.u32 %v287, 4294901760
      %v289 = vsub.f32 %v287, %v288
      %v290 = vand.u32 %v289, 4294901760
      %291 = vmatmul.mubr.f32.gmra.mxu0 %v290
      %v292 = vpop.f32.mrf.mxu0
      %v293 = vadd.f32 %v169, %v292
      %v294 = vpop.f32.mrf.mxu0
      %295 = vmatprep.mubr.f32.mxu0 0.0
      %v296 = vand.u32 %v175, 4294901760
      %v297 = vsub.f32 %v175, %v296
      %v298 = vand.u32 %v297, 4294901760
      %v299 = vsub.f32 %v297, %v298
      %v300 = vand.u32 %v299, 4294901760
      %301 = vmatmul.mubr.f32.gmra.mxu0 %v300
      %v302 = vpop.f32.mrf.mxu0
      %v303 = vadd.f32 %v169, %v302
      %v304 = vpop.f32.mrf.mxu0
      %305 = vmatprep.mubr.f32.mxu0 0.0
      %v306 = vand.u32 %v178, 4294901760
      %v307 = vsub.f32 %v178, %v306
      %v308 = vand.u32 %v307, 4294901760
      %v309 = vsub.f32 %v307, %v308
      %v310 = vand.u32 %v309, 4294901760
      %311 = vmatmul.mubr.f32.gmra.mxu0 %v310
      %v312 = vpop.f32.mrf.mxu0
      %v313 = vadd.f32 %v169, %v312
      %v314 = vpop.f32.mrf.mxu0
      %315 = vmatprep.mubr.f32.mxu0 0.0
      %v316 = vand.u32 %v181, 4294901760
      %v317 = vsub.f32 %v181, %v316
      %v318 = vand.u32 %v317, 4294901760
      %v319 = vsub.f32 %v317, %v318
      %v320 = vand.u32 %v319, 4294901760
      %321 = vmatmul.mubr.f32.gmra.mxu0 %v320
      %v322 = vpop.f32.mrf.mxu0
      %v323 = vadd.f32 %v169, %v322
      %v324 = vpop.f32.mrf.mxu0
      %325 = vmatprep.mubr.f32.mxu0 0.0
      %v326 = vand.u32 %v184, 4294901760
      %v327 = vsub.f32 %v184, %v326
      %v328 = vand.u32 %v327, 4294901760
      %v329 = vsub.f32 %v327, %v328
      %v330 = vand.u32 %v329, 4294901760
      %331 = vmatmul.mubr.f32.gmra.mxu0 %v330
      %v332 = vpop.f32.mrf.mxu0
      %v333 = vadd.f32 %v169, %v332
      %v334 = vpop.f32.mrf.mxu0
      %335 = vmatprep.mubr.f32.mxu0 0.0
      %v336 = vand.u32 %v187, 4294901760
      %v337 = vsub.f32 %v187, %v336
      %v338 = vand.u32 %v337, 4294901760
      %v339 = vsub.f32 %v337, %v338
      %v340 = vand.u32 %v339, 4294901760
      %341 = vmatmul.mubr.f32.gmra.mxu0 %v340
      %v342 = vpop.f32.mrf.mxu0
      %v343 = vadd.f32 %v169, %v342
      %v344 = vpop.f32.mrf.mxu0
      %345 = vmatprep.mubr.f32.mxu0 0.0
      %v346 = vand.u32 %v190, 4294901760
      %v347 = vsub.f32 %v190, %v346
      %v348 = vand.u32 %v347, 4294901760
      %v349 = vsub.f32 %v347, %v348
      %v350 = vand.u32 %v349, 4294901760
      %351 = vmatmul.mubr.f32.gmra.mxu0 %v350
      %v352 = vpop.f32.mrf.mxu0
      %v353 = vadd.f32 %v169, %v352
      %v354 = vpop.f32.mrf.mxu0
      %355 = vmatprep.mubr.f32.mxu0 0.0
      %v356 = vand.u32 %v193, 4294901760
      %v357 = vsub.f32 %v193, %v356
      %v358 = vand.u32 %v357, 4294901760
      %v359 = vsub.f32 %v357, %v358
      %v360 = vand.u32 %v359, 4294901760
      %361 = vmatmul.mubr.f32.gmra.mxu0 %v360
      %v362 = vpop.f32.mrf.mxu0
      %v363 = vadd.f32 %v169, %v362
      %v364 = vpop.f32.mrf.mxu0
      %365 = vmatprep.mubr.f32.mxu0 0.0
      %v366 = vand.u32 %v196, 4294901760
      %v367 = vsub.f32 %v196, %v366
      %v368 = vand.u32 %v367, 4294901760
      %v369 = vsub.f32 %v367, %v368
      %v370 = vand.u32 %v369, 4294901760
      %371 = vmatmul.mubr.f32.gmra.mxu0 %v370
      %v372 = vpop.f32.mrf.mxu0
      %v373 = vadd.f32 %v169, %v372
      %v374 = vpop.f32.mrf.mxu0
      %375 = vmatprep.mubr.f32.mxu0 0.0
      %v376 = vand.u32 %v199, 4294901760
      %v377 = vsub.f32 %v199, %v376
      %v378 = vand.u32 %v377, 4294901760
      %v379 = vsub.f32 %v377, %v378
      %v380 = vand.u32 %v379, 4294901760
      %381 = vmatmul.mubr.f32.gmra.mxu0 %v380
      %v382 = vpop.f32.mrf.mxu0
      %v383 = vadd.f32 %v169, %v382
      %v384 = vpop.f32.mrf.mxu0
      %385 = vmatprep.mubr.f32.mxu0 0.0
      %v386 = vand.u32 %v202, 4294901760
      %v387 = vsub.f32 %v202, %v386
      %v388 = vand.u32 %v387, 4294901760
      %v389 = vsub.f32 %v387, %v388
      %v390 = vand.u32 %v389, 4294901760
      %391 = vmatmul.mubr.f32.gmra.mxu0 %v390
      %v392 = vpop.f32.mrf.mxu0
      %v393 = vadd.f32 %v169, %v392
      %v394 = vpop.f32.mrf.mxu0
      %395 = vmatprep.mubr.f32.mxu0 0.0
      %v396 = vand.u32 %v205, 4294901760
      %v397 = vsub.f32 %v205, %v396
      %v398 = vand.u32 %v397, 4294901760
      %v399 = vsub.f32 %v397, %v398
      %v400 = vand.u32 %v399, 4294901760
      %401 = vmatmul.mubr.f32.gmra.mxu0 %v400
      %v402 = vpop.f32.mrf.mxu0
      %v403 = vadd.f32 %v169, %v402
      %v404 = vpop.f32.mrf.mxu0
      %405 = vmatprep.mubr.f32.mxu0 0.0
      %v406 = vand.u32 %v208, 4294901760
      %v407 = vsub.f32 %v208, %v406
      %v408 = vand.u32 %v407, 4294901760
      %v409 = vsub.f32 %v407, %v408
      %v410 = vand.u32 %v409, 4294901760
      %411 = vmatmul.mubr.f32.gmra.mxu0 %v410
      %v412 = vpop.f32.mrf.mxu0
      %v413 = vadd.f32 %v169, %v412
      %v414 = vpop.f32.mrf.mxu0
      %415 = vmatprep.mubr.f32.mxu0 0.0
      %v416 = vand.u32 %v211, 4294901760
      %v417 = vsub.f32 %v211, %v416
      %v418 = vand.u32 %v417, 4294901760
      %v419 = vsub.f32 %v417, %v418
      %v420 = vand.u32 %v419, 4294901760
      %421 = vmatmul.mubr.f32.gmra.mxu0 %v420
      %v422 = vpop.f32.mrf.mxu0
      %v423 = vadd.f32 %v169, %v422
      %v424 = vpop.f32.mrf.mxu0
      %425 = vmatprep.mubr.f32.mxu0 0.0
      %v426 = vand.u32 %v214, 4294901760
      %v427 = vsub.f32 %v214, %v426
      %v428 = vand.u32 %v427, 4294901760
      %v429 = vsub.f32 %v427, %v428
      %v430 = vand.u32 %v429, 4294901760
      %431 = vmatmul.mubr.f32.gmra.mxu0 %v430
      %v432 = vpop.f32.mrf.mxu0
      %v433 = vadd.f32 %v169, %v432
      %v434 = vpop.f32.mrf.mxu0
      %435 = vmatprep.mubr.f32.mxu0 0.0
      %v436 = vand.u32 %v217, 4294901760
      %v437 = vsub.f32 %v217, %v436
      %v438 = vand.u32 %v437, 4294901760
      %v439 = vsub.f32 %v437, %v438
      %v440 = vand.u32 %v439, 4294901760
      %441 = vmatmul.mubr.f32.gmra.mxu0 %v440
      %v442 = vpop.f32.mrf.mxu0
      %v443 = vadd.f32 %v169, %v442
      %v444 = vpop.f32.mrf.mxu0
      %445 = vdwg.mxu0
      %446 = vmatprep.subr.mxu0 0.0
      %447 = vmatpush1.msra.mxu0 0.0
      %448 = vmatprep.subr.mxu0 0.0
      %449 = vmatpush1.msra.mxu0 0.0
      %450 = vmatprep.subr.mxu0 0.0
      %451 = vmatpush1.msra.mxu0 0.0
      %452 = vmatprep.subr.mxu0 0.0
      %453 = vmatpush1.msra.mxu0 0.0
      %454 = vmatprep.subr.mxu0 0.0
      %455 = vmatpush1.msra.mxu0 0.0
      %456 = vmatprep.subr.mxu0 0.0
      %457 = vmatpush1.msra.mxu0 0.0
      %458 = vmatprep.subr.mxu0 0.0
      %459 = vmatpush1.msra.mxu0 0.0
      %460 = vmatprep.subr.mxu0 0.0
      %461 = vmatpush1.msra.mxu0 0.0
      %462 = vmatprep.subr.mxu0 0.0
      %463 = vmatpush1.msra.mxu0 0.0
      %464 = vmatprep.subr.mxu0 0.0
      %465 = vmatpush1.msra.mxu0 0.0
      %466 = vmatprep.subr.mxu0 0.0
      %467 = vmatpush1.msra.mxu0 0.0
      %468 = vmatprep.subr.mxu0 0.0
      %469 = vmatpush1.msra.mxu0 0.0
      %470 = vmatprep.subr.mxu0 0.0
      %471 = vmatpush1.msra.mxu0 0.0
      %472 = vmatprep.subr.mxu0 0.0
      %473 = vmatpush1.msra.mxu0 0.0
      %474 = vmatprep.subr.mxu0 0.0
      %v475 = vand.u32 %v164, 4294901760
      %v476 = vsub.f32 %v164, %v475
      %v477 = vand.u32 %v476, 4294901760
      %v478 = vsub.f32 %v476, %v477
      %v479 = vand.u32 %v478, 4294901760
      %480 = vmatpush1.msra.mxu0 %v479
      %481 = vmatprep.subr.mxu0 0.0
      %v482 = vand.u32 %v163, 4294901760
      %v483 = vsub.f32 %v163, %v482
      %v484 = vand.u32 %v483, 4294901760
      %v485 = vsub.f32 %v483, %v484
      %v486 = vand.u32 %v485, 4294901760
      %487 = vmatpush1.msra.mxu0 %v486
      %488 = vmatprep.subr.mxu0 0.0
      %489 = vmatpush2.msra.mxu0 0.0
      %490 = vmatprep.subr.mxu0 0.0
      %491 = vmatpush2.msra.mxu0 0.0
      %492 = vmatprep.subr.mxu0 0.0
      %493 = vmatpush2.msra.mxu0 0.0
      %494 = vmatprep.subr.mxu0 0.0
      %495 = vmatpush2.msra.mxu0 0.0
      %496 = vmatprep.subr.mxu0 0.0
      %497 = vmatpush2.msra.mxu0 0.0
      %498 = vmatprep.subr.mxu0 0.0
      %499 = vmatpush2.msra.mxu0 0.0
      %500 = vmatprep.subr.mxu0 0.0
      %501 = vmatpush2.msra.mxu0 0.0
      %502 = vmatprep.subr.mxu0 0.0
      %503 = vmatpush2.msra.mxu0 0.0
      %504 = vmatprep.subr.mxu0 0.0
      %505 = vmatpush2.msra.mxu0 0.0
      %506 = vmatprep.subr.mxu0 0.0
      %507 = vmatpush2.msra.mxu0 0.0
      %508 = vmatprep.subr.mxu0 0.0
      %509 = vmatpush2.msra.mxu0 0.0
      %510 = vmatprep.subr.mxu0 0.0
      %511 = vmatpush2.msra.mxu0 0.0
      %512 = vmatprep.subr.mxu0 0.0
      %513 = vmatpush2.msra.mxu0 0.0
      %514 = vmatprep.subr.mxu0 0.0
      %515 = vmatpush2.msra.mxu0 0.0
      %516 = vmatprep.subr.mxu0 0.0
      %517 = vmatpush2.msra.mxu0 0.0
      %518 = vmatprep.subr.mxu0 0.0
      %519 = vmatpush2.msra.mxu0 0.0
      %520 = vmatprep.mubr.f32.mxu0 0.0
      %v521 = vand.u32 %v172, 4294901760
      %522 = vmatmul.mubr.f32.gmra.mxu0 %v521
      %v523 = vpop.f32.mrf.mxu0
      %v524 = vadd.f32 %v293, %v523
      %v525 = vpop.f32.mrf.mxu0
      %526 = vmatprep.mubr.f32.mxu0 0.0
      %v527 = vand.u32 %v175, 4294901760
      %528 = vmatmul.mubr.f32.gmra.mxu0 %v527
      %v529 = vpop.f32.mrf.mxu0
      %v530 = vadd.f32 %v303, %v529
      %v531 = vpop.f32.mrf.mxu0
      %532 = vmatprep.mubr.f32.mxu0 0.0
      %v533 = vand.u32 %v178, 4294901760
      %534 = vmatmul.mubr.f32.gmra.mxu0 %v533
      %v535 = vpop.f32.mrf.mxu0
      %v536 = vadd.f32 %v313, %v535
      %v537 = vpop.f32.mrf.mxu0
      %538 = vmatprep.mubr.f32.mxu0 0.0
      %v539 = vand.u32 %v181, 4294901760
      %540 = vmatmul.mubr.f32.gmra.mxu0 %v539
      %v541 = vpop.f32.mrf.mxu0
      %v542 = vadd.f32 %v323, %v541
      %v543 = vpop.f32.mrf.mxu0
      %544 = vmatprep.mubr.f32.mxu0 0.0
      %v545 = vand.u32 %v184, 4294901760
      %546 = vmatmul.mubr.f32.gmra.mxu0 %v545
      %v547 = vpop.f32.mrf.mxu0
      %v548 = vadd.f32 %v333, %v547
      %v549 = vpop.f32.mrf.mxu0
      %550 = vmatprep.mubr.f32.mxu0 0.0
      %v551 = vand.u32 %v187, 4294901760
      %552 = vmatmul.mubr.f32.gmra.mxu0 %v551
      %v553 = vpop.f32.mrf.mxu0
      %v554 = vadd.f32 %v343, %v553
      %v555 = vpop.f32.mrf.mxu0
      %556 = vmatprep.mubr.f32.mxu0 0.0
      %v557 = vand.u32 %v190, 4294901760
      %558 = vmatmul.mubr.f32.gmra.mxu0 %v557
      %v559 = vpop.f32.mrf.mxu0
      %v560 = vadd.f32 %v353, %v559
      %v561 = vpop.f32.mrf.mxu0
      %562 = vmatprep.mubr.f32.mxu0 0.0
      %v563 = vand.u32 %v193, 4294901760
      %564 = vmatmul.mubr.f32.gmra.mxu0 %v563
      %v565 = vpop.f32.mrf.mxu0
      %v566 = vadd.f32 %v363, %v565
      %v567 = vpop.f32.mrf.mxu0
      %568 = vmatprep.mubr.f32.mxu0 0.0
      %v569 = vand.u32 %v196, 4294901760
      %570 = vmatmul.mubr.f32.gmra.mxu0 %v569
      %v571 = vpop.f32.mrf.mxu0
      %v572 = vadd.f32 %v373, %v571
      %v573 = vpop.f32.mrf.mxu0
      %574 = vmatprep.mubr.f32.mxu0 0.0
      %v575 = vand.u32 %v199, 4294901760
      %576 = vmatmul.mubr.f32.gmra.mxu0 %v575
      %v577 = vpop.f32.mrf.mxu0
      %v578 = vadd.f32 %v383, %v577
      %v579 = vpop.f32.mrf.mxu0
      %580 = vmatprep.mubr.f32.mxu0 0.0
      %v581 = vand.u32 %v202, 4294901760
      %582 = vmatmul.mubr.f32.gmra.mxu0 %v581
      %v583 = vpop.f32.mrf.mxu0
      %v584 = vadd.f32 %v393, %v583
      %v585 = vpop.f32.mrf.mxu0
      %586 = vmatprep.mubr.f32.mxu0 0.0
      %v587 = vand.u32 %v205, 4294901760
      %588 = vmatmul.mubr.f32.gmra.mxu0 %v587
      %v589 = vpop.f32.mrf.mxu0
      %v590 = vadd.f32 %v403, %v589
      %v591 = vpop.f32.mrf.mxu0
      %592 = vmatprep.mubr.f32.mxu0 0.0
      %v593 = vand.u32 %v208, 4294901760
      %594 = vmatmul.mubr.f32.gmra.mxu0 %v593
      %v595 = vpop.f32.mrf.mxu0
      %v596 = vadd.f32 %v413, %v595
      %v597 = vpop.f32.mrf.mxu0
      %598 = vmatprep.mubr.f32.mxu0 0.0
      %v599 = vand.u32 %v211, 4294901760
      %600 = vmatmul.mubr.f32.gmra.mxu0 %v599
      %v601 = vpop.f32.mrf.mxu0
      %v602 = vadd.f32 %v423, %v601
      %v603 = vpop.f32.mrf.mxu0
      %604 = vmatprep.mubr.f32.mxu0 0.0
      %v605 = vand.u32 %v214, 4294901760
      %606 = vmatmul.mubr.f32.gmra.mxu0 %v605
      %v607 = vpop.f32.mrf.mxu0
      %v608 = vadd.f32 %v433, %v607
      %v609 = vpop.f32.mrf.mxu0
      %610 = vmatprep.mubr.f32.mxu0 0.0
      %v611 = vand.u32 %v217, 4294901760
      %612 = vmatmul.mubr.f32.gmra.mxu0 %v611
      %v613 = vpop.f32.mrf.mxu0
      %v614 = vadd.f32 %v443, %v613
      %v615 = vpop.f32.mrf.mxu0
      %616 = vdwg.mxu0
      %617 = vmatprep.subr.mxu0 0.0
      %618 = vmatpush1.msra.mxu0 0.0
      %619 = vmatprep.subr.mxu0 0.0
      %620 = vmatpush1.msra.mxu0 0.0
      %621 = vmatprep.subr.mxu0 0.0
      %622 = vmatpush1.msra.mxu0 0.0
      %623 = vmatprep.subr.mxu0 0.0
      %624 = vmatpush1.msra.mxu0 0.0
      %625 = vmatprep.subr.mxu0 0.0
      %626 = vmatpush1.msra.mxu0 0.0
      %627 = vmatprep.subr.mxu0 0.0
      %628 = vmatpush1.msra.mxu0 0.0
      %629 = vmatprep.subr.mxu0 0.0
      %630 = vmatpush1.msra.mxu0 0.0
      %631 = vmatprep.subr.mxu0 0.0
      %632 = vmatpush1.msra.mxu0 0.0
      %633 = vmatprep.subr.mxu0 0.0
      %634 = vmatpush1.msra.mxu0 0.0
      %635 = vmatprep.subr.mxu0 0.0
      %636 = vmatpush1.msra.mxu0 0.0
      %637 = vmatprep.subr.mxu0 0.0
      %638 = vmatpush1.msra.mxu0 0.0
      %639 = vmatprep.subr.mxu0 0.0
      %640 = vmatpush1.msra.mxu0 0.0
      %641 = vmatprep.subr.mxu0 0.0
      %642 = vmatpush1.msra.mxu0 0.0
      %643 = vmatprep.subr.mxu0 0.0
      %644 = vmatpush1.msra.mxu0 0.0
      %645 = vmatprep.subr.mxu0 0.0
      %v646 = vand.u32 %v164, 4294901760
      %v647 = vsub.f32 %v164, %v646
      %648 = vmatpush1.msra.mxu0 %v647
      %649 = vmatprep.subr.mxu0 0.0
      %v650 = vand.u32 %v163, 4294901760
      %v651 = vsub.f32 %v163, %v650
      %652 = vmatpush1.msra.mxu0 %v651
      %653 = vmatprep.subr.mxu0 0.0
      %654 = vmatpush2.msra.mxu0 0.0
      %655 = vmatprep.subr.mxu0 0.0
      %656 = vmatpush2.msra.mxu0 0.0
      %657 = vmatprep.subr.mxu0 0.0
      %658 = vmatpush2.msra.mxu0 0.0
      %659 = vmatprep.subr.mxu0 0.0
      %660 = vmatpush2.msra.mxu0 0.0
      %661 = vmatprep.subr.mxu0 0.0
      %662 = vmatpush2.msra.mxu0 0.0
      %663 = vmatprep.subr.mxu0 0.0
      %664 = vmatpush2.msra.mxu0 0.0
      %665 = vmatprep.subr.mxu0 0.0
      %666 = vmatpush2.msra.mxu0 0.0
      %667 = vmatprep.subr.mxu0 0.0
      %668 = vmatpush2.msra.mxu0 0.0
      %669 = vmatprep.subr.mxu0 0.0
      %670 = vmatpush2.msra.mxu0 0.0
      %671 = vmatprep.subr.mxu0 0.0
      %672 = vmatpush2.msra.mxu0 0.0
      %673 = vmatprep.subr.mxu0 0.0
      %674 = vmatpush2.msra.mxu0 0.0
      %675 = vmatprep.subr.mxu0 0.0
      %676 = vmatpush2.msra.mxu0 0.0
      %677 = vmatprep.subr.mxu0 0.0
      %678 = vmatpush2.msra.mxu0 0.0
      %679 = vmatprep.subr.mxu0 0.0
      %680 = vmatpush2.msra.mxu0 0.0
      %681 = vmatprep.subr.mxu0 0.0
      %682 = vmatpush2.msra.mxu0 0.0
      %683 = vmatprep.subr.mxu0 0.0
      %684 = vmatpush2.msra.mxu0 0.0
      %685 = vmatprep.mubr.f32.mxu0 0.0
      %v686 = vand.u32 %v172, 4294901760
      %v687 = vsub.f32 %v172, %v686
      %688 = vmatmul.mubr.f32.gmra.mxu0 %v687
      %v689 = vpop.f32.mrf.mxu0
      %v690 = vadd.f32 %v524, %v689
      %v691 = vpop.f32.mrf.mxu0
      %692 = vmatprep.mubr.f32.mxu0 0.0
      %v693 = vand.u32 %v175, 4294901760
      %v694 = vsub.f32 %v175, %v693
      %695 = vmatmul.mubr.f32.gmra.mxu0 %v694
      %v696 = vpop.f32.mrf.mxu0
      %v697 = vadd.f32 %v530, %v696
      %v698 = vpop.f32.mrf.mxu0
      %699 = vmatprep.mubr.f32.mxu0 0.0
      %v700 = vand.u32 %v178, 4294901760
      %v701 = vsub.f32 %v178, %v700
      %702 = vmatmul.mubr.f32.gmra.mxu0 %v701
      %v703 = vpop.f32.mrf.mxu0
      %v704 = vadd.f32 %v536, %v703
      %v705 = vpop.f32.mrf.mxu0
      %706 = vmatprep.mubr.f32.mxu0 0.0
      %v707 = vand.u32 %v181, 4294901760
      %v708 = vsub.f32 %v181, %v707
      %709 = vmatmul.mubr.f32.gmra.mxu0 %v708
      %v710 = vpop.f32.mrf.mxu0
      %v711 = vadd.f32 %v542, %v710
      %v712 = vpop.f32.mrf.mxu0
      %713 = vmatprep.mubr.f32.mxu0 0.0
      %v714 = vand.u32 %v184, 4294901760
      %v715 = vsub.f32 %v184, %v714
      %716 = vmatmul.mubr.f32.gmra.mxu0 %v715
      %v717 = vpop.f32.mrf.mxu0
      %v718 = vadd.f32 %v548, %v717
      %v719 = vpop.f32.mrf.mxu0
      %720 = vmatprep.mubr.f32.mxu0 0.0
      %v721 = vand.u32 %v187, 4294901760
      %v722 = vsub.f32 %v187, %v721
      %723 = vmatmul.mubr.f32.gmra.mxu0 %v722
      %v724 = vpop.f32.mrf.mxu0
      %v725 = vadd.f32 %v554, %v724
      %v726 = vpop.f32.mrf.mxu0
      %727 = vmatprep.mubr.f32.mxu0 0.0
      %v728 = vand.u32 %v190, 4294901760
      %v729 = vsub.f32 %v190, %v728
      %730 = vmatmul.mubr.f32.gmra.mxu0 %v729
      %v731 = vpop.f32.mrf.mxu0
      %v732 = vadd.f32 %v560, %v731
      %v733 = vpop.f32.mrf.mxu0
      %734 = vmatprep.mubr.f32.mxu0 0.0
      %v735 = vand.u32 %v193, 4294901760
      %v736 = vsub.f32 %v193, %v735
      %737 = vmatmul.mubr.f32.gmra.mxu0 %v736
      %v738 = vpop.f32.mrf.mxu0
      %v739 = vadd.f32 %v566, %v738
      %v740 = vpop.f32.mrf.mxu0
      %741 = vmatprep.mubr.f32.mxu0 0.0
      %v742 = vand.u32 %v196, 4294901760
      %v743 = vsub.f32 %v196, %v742
      %744 = vmatmul.mubr.f32.gmra.mxu0 %v743
      %v745 = vpop.f32.mrf.mxu0
      %v746 = vadd.f32 %v572, %v745
      %v747 = vpop.f32.mrf.mxu0
      %748 = vmatprep.mubr.f32.mxu0 0.0
      %v749 = vand.u32 %v199, 4294901760
      %v750 = vsub.f32 %v199, %v749
      %751 = vmatmul.mubr.f32.gmra.mxu0 %v750
      %v752 = vpop.f32.mrf.mxu0
      %v753 = vadd.f32 %v578, %v752
      %v754 = vpop.f32.mrf.mxu0
      %755 = vmatprep.mubr.f32.mxu0 0.0
      %v756 = vand.u32 %v202, 4294901760
      %v757 = vsub.f32 %v202, %v756
      %758 = vmatmul.mubr.f32.gmra.mxu0 %v757
      %v759 = vpop.f32.mrf.mxu0
      %v760 = vadd.f32 %v584, %v759
      %v761 = vpop.f32.mrf.mxu0
      %762 = vmatprep.mubr.f32.mxu0 0.0
      %v763 = vand.u32 %v205, 4294901760
      %v764 = vsub.f32 %v205, %v763
      %765 = vmatmul.mubr.f32.gmra.mxu0 %v764
      %v766 = vpop.f32.mrf.mxu0
      %v767 = vadd.f32 %v590, %v766
      %v768 = vpop.f32.mrf.mxu0
      %769 = vmatprep.mubr.f32.mxu0 0.0
      %v770 = vand.u32 %v208, 4294901760
      %v771 = vsub.f32 %v208, %v770
      %772 = vmatmul.mubr.f32.gmra.mxu0 %v771
      %v773 = vpop.f32.mrf.mxu0
      %v774 = vadd.f32 %v596, %v773
      %v775 = vpop.f32.mrf.mxu0
      %776 = vmatprep.mubr.f32.mxu0 0.0
      %v777 = vand.u32 %v211, 4294901760
      %v778 = vsub.f32 %v211, %v777
      %779 = vmatmul.mubr.f32.gmra.mxu0 %v778
      %v780 = vpop.f32.mrf.mxu0
      %v781 = vadd.f32 %v602, %v780
      %v782 = vpop.f32.mrf.mxu0
      %783 = vmatprep.mubr.f32.mxu0 0.0
      %v784 = vand.u32 %v214, 4294901760
      %v785 = vsub.f32 %v214, %v784
      %786 = vmatmul.mubr.f32.gmra.mxu0 %v785
      %v787 = vpop.f32.mrf.mxu0
      %v788 = vadd.f32 %v608, %v787
      %v789 = vpop.f32.mrf.mxu0
      %790 = vmatprep.mubr.f32.mxu0 0.0
      %v791 = vand.u32 %v217, 4294901760
      %v792 = vsub.f32 %v217, %v791
      %793 = vmatmul.mubr.f32.gmra.mxu0 %v792
      %v794 = vpop.f32.mrf.mxu0
      %v795 = vadd.f32 %v614, %v794
      %v796 = vpop.f32.mrf.mxu0
      %797 = vdwg.mxu0
      %798 = vmatprep.subr.mxu0 0.0
      %799 = vmatpush1.msra.mxu0 0.0
      %800 = vmatprep.subr.mxu0 0.0
      %801 = vmatpush1.msra.mxu0 0.0
      %802 = vmatprep.subr.mxu0 0.0
      %803 = vmatpush1.msra.mxu0 0.0
      %804 = vmatprep.subr.mxu0 0.0
      %805 = vmatpush1.msra.mxu0 0.0
      %806 = vmatprep.subr.mxu0 0.0
      %807 = vmatpush1.msra.mxu0 0.0
      %808 = vmatprep.subr.mxu0 0.0
      %809 = vmatpush1.msra.mxu0 0.0
      %810 = vmatprep.subr.mxu0 0.0
      %811 = vmatpush1.msra.mxu0 0.0
      %812 = vmatprep.subr.mxu0 0.0
      %813 = vmatpush1.msra.mxu0 0.0
      %814 = vmatprep.subr.mxu0 0.0
      %815 = vmatpush1.msra.mxu0 0.0
      %816 = vmatprep.subr.mxu0 0.0
      %817 = vmatpush1.msra.mxu0 0.0
      %818 = vmatprep.subr.mxu0 0.0
      %819 = vmatpush1.msra.mxu0 0.0
      %820 = vmatprep.subr.mxu0 0.0
      %821 = vmatpush1.msra.mxu0 0.0
      %822 = vmatprep.subr.mxu0 0.0
      %823 = vmatpush1.msra.mxu0 0.0
      %824 = vmatprep.subr.mxu0 0.0
      %825 = vmatpush1.msra.mxu0 0.0
      %826 = vmatprep.subr.mxu0 0.0
      %v827 = vand.u32 %v164, 4294901760
      %828 = vmatpush1.msra.mxu0 %v827
      %829 = vmatprep.subr.mxu0 0.0
      %v830 = vand.u32 %v163, 4294901760
      %831 = vmatpush1.msra.mxu0 %v830
      %832 = vmatprep.subr.mxu0 0.0
      %833 = vmatpush2.msra.mxu0 0.0
      %834 = vmatprep.subr.mxu0 0.0
      %835 = vmatpush2.msra.mxu0 0.0
      %836 = vmatprep.subr.mxu0 0.0
      %837 = vmatpush2.msra.mxu0 0.0
      %838 = vmatprep.subr.mxu0 0.0
      %839 = vmatpush2.msra.mxu0 0.0
      %840 = vmatprep.subr.mxu0 0.0
      %841 = vmatpush2.msra.mxu0 0.0
      %842 = vmatprep.subr.mxu0 0.0
      %843 = vmatpush2.msra.mxu0 0.0
      %844 = vmatprep.subr.mxu0 0.0
      %845 = vmatpush2.msra.mxu0 0.0
      %846 = vmatprep.subr.mxu0 0.0
      %847 = vmatpush2.msra.mxu0 0.0
      %848 = vmatprep.subr.mxu0 0.0
      %849 = vmatpush2.msra.mxu0 0.0
      %850 = vmatprep.subr.mxu0 0.0
      %851 = vmatpush2.msra.mxu0 0.0
      %852 = vmatprep.subr.mxu0 0.0
      %853 = vmatpush2.msra.mxu0 0.0
      %854 = vmatprep.subr.mxu0 0.0
      %855 = vmatpush2.msra.mxu0 0.0
      %856 = vmatprep.subr.mxu0 0.0
      %857 = vmatpush2.msra.mxu0 0.0
      %858 = vmatprep.subr.mxu0 0.0
      %859 = vmatpush2.msra.mxu0 0.0
      %860 = vmatprep.subr.mxu0 0.0
      %861 = vmatpush2.msra.mxu0 0.0
      %862 = vmatprep.subr.mxu0 0.0
      %863 = vmatpush2.msra.mxu0 0.0
      %864 = vmatprep.mubr.f32.mxu0 0.0
      %v865 = vand.u32 %v172, 4294901760
      %v866 = vsub.f32 %v172, %v865
      %v867 = vand.u32 %v866, 4294901760
      %868 = vmatmul.mubr.f32.gmra.mxu0 %v867
      %v869 = vpop.f32.mrf.mxu0
      %v870 = vadd.f32 %v690, %v869
      %v871 = vpop.f32.mrf.mxu0
      %872 = vmatprep.mubr.f32.mxu0 0.0
      %v873 = vand.u32 %v175, 4294901760
      %v874 = vsub.f32 %v175, %v873
      %v875 = vand.u32 %v874, 4294901760
      %876 = vmatmul.mubr.f32.gmra.mxu0 %v875
      %v877 = vpop.f32.mrf.mxu0
      %v878 = vadd.f32 %v697, %v877
      %v879 = vpop.f32.mrf.mxu0
      %880 = vmatprep.mubr.f32.mxu0 0.0
      %v881 = vand.u32 %v178, 4294901760
      %v882 = vsub.f32 %v178, %v881
      %v883 = vand.u32 %v882, 4294901760
      %884 = vmatmul.mubr.f32.gmra.mxu0 %v883
      %v885 = vpop.f32.mrf.mxu0
      %v886 = vadd.f32 %v704, %v885
      %v887 = vpop.f32.mrf.mxu0
      %888 = vmatprep.mubr.f32.mxu0 0.0
      %v889 = vand.u32 %v181, 4294901760
      %v890 = vsub.f32 %v181, %v889
      %v891 = vand.u32 %v890, 4294901760
      %892 = vmatmul.mubr.f32.gmra.mxu0 %v891
      %v893 = vpop.f32.mrf.mxu0
      %v894 = vadd.f32 %v711, %v893
      %v895 = vpop.f32.mrf.mxu0
      %896 = vmatprep.mubr.f32.mxu0 0.0
      %v897 = vand.u32 %v184, 4294901760
      %v898 = vsub.f32 %v184, %v897
      %v899 = vand.u32 %v898, 4294901760
      %900 = vmatmul.mubr.f32.gmra.mxu0 %v899
      %v901 = vpop.f32.mrf.mxu0
      %v902 = vadd.f32 %v718, %v901
      %v903 = vpop.f32.mrf.mxu0
      %904 = vmatprep.mubr.f32.mxu0 0.0
      %v905 = vand.u32 %v187, 4294901760
      %v906 = vsub.f32 %v187, %v905
      %v907 = vand.u32 %v906, 4294901760
      %908 = vmatmul.mubr.f32.gmra.mxu0 %v907
      %v909 = vpop.f32.mrf.mxu0
      %v910 = vadd.f32 %v725, %v909
      %v911 = vpop.f32.mrf.mxu0
      %912 = vmatprep.mubr.f32.mxu0 0.0
      %v913 = vand.u32 %v190, 4294901760
      %v914 = vsub.f32 %v190, %v913
      %v915 = vand.u32 %v914, 4294901760
      %916 = vmatmul.mubr.f32.gmra.mxu0 %v915
      %v917 = vpop.f32.mrf.mxu0
      %v918 = vadd.f32 %v732, %v917
      %v919 = vpop.f32.mrf.mxu0
      %920 = vmatprep.mubr.f32.mxu0 0.0
      %v921 = vand.u32 %v193, 4294901760
      %v922 = vsub.f32 %v193, %v921
      %v923 = vand.u32 %v922, 4294901760
      %924 = vmatmul.mubr.f32.gmra.mxu0 %v923
      %v925 = vpop.f32.mrf.mxu0
      %v926 = vadd.f32 %v739, %v925
      %v927 = vpop.f32.mrf.mxu0
      %928 = vmatprep.mubr.f32.mxu0 0.0
      %v929 = vand.u32 %v196, 4294901760
      %v930 = vsub.f32 %v196, %v929
      %v931 = vand.u32 %v930, 4294901760
      %932 = vmatmul.mubr.f32.gmra.mxu0 %v931
      %v933 = vpop.f32.mrf.mxu0
      %v934 = vadd.f32 %v746, %v933
      %v935 = vpop.f32.mrf.mxu0
      %936 = vmatprep.mubr.f32.mxu0 0.0
      %v937 = vand.u32 %v199, 4294901760
      %v938 = vsub.f32 %v199, %v937
      %v939 = vand.u32 %v938, 4294901760
      %940 = vmatmul.mubr.f32.gmra.mxu0 %v939
      %v941 = vpop.f32.mrf.mxu0
      %v942 = vadd.f32 %v753, %v941
      %v943 = vpop.f32.mrf.mxu0
      %944 = vmatprep.mubr.f32.mxu0 0.0
      %v945 = vand.u32 %v202, 4294901760
      %v946 = vsub.f32 %v202, %v945
      %v947 = vand.u32 %v946, 4294901760
      %948 = vmatmul.mubr.f32.gmra.mxu0 %v947
      %v949 = vpop.f32.mrf.mxu0
      %v950 = vadd.f32 %v760, %v949
      %v951 = vpop.f32.mrf.mxu0
      %952 = vmatprep.mubr.f32.mxu0 0.0
      %v953 = vand.u32 %v205, 4294901760
      %v954 = vsub.f32 %v205, %v953
      %v955 = vand.u32 %v954, 4294901760
      %956 = vmatmul.mubr.f32.gmra.mxu0 %v955
      %v957 = vpop.f32.mrf.mxu0
      %v958 = vadd.f32 %v767, %v957
      %v959 = vpop.f32.mrf.mxu0
      %960 = vmatprep.mubr.f32.mxu0 0.0
      %v961 = vand.u32 %v208, 4294901760
      %v962 = vsub.f32 %v208, %v961
      %v963 = vand.u32 %v962, 4294901760
      %964 = vmatmul.mubr.f32.gmra.mxu0 %v963
      %v965 = vpop.f32.mrf.mxu0
      %v966 = vadd.f32 %v774, %v965
      %v967 = vpop.f32.mrf.mxu0
      %968 = vmatprep.mubr.f32.mxu0 0.0
      %v969 = vand.u32 %v211, 4294901760
      %v970 = vsub.f32 %v211, %v969
      %v971 = vand.u32 %v970, 4294901760
      %972 = vmatmul.mubr.f32.gmra.mxu0 %v971
      %v973 = vpop.f32.mrf.mxu0
      %v974 = vadd.f32 %v781, %v973
      %v975 = vpop.f32.mrf.mxu0
      %976 = vmatprep.mubr.f32.mxu0 0.0
      %v977 = vand.u32 %v214, 4294901760
      %v978 = vsub.f32 %v214, %v977
      %v979 = vand.u32 %v978, 4294901760
      %980 = vmatmul.mubr.f32.gmra.mxu0 %v979
      %v981 = vpop.f32.mrf.mxu0
      %v982 = vadd.f32 %v788, %v981
      %v983 = vpop.f32.mrf.mxu0
      %984 = vmatprep.mubr.f32.mxu0 0.0
      %v985 = vand.u32 %v217, 4294901760
      %v986 = vsub.f32 %v217, %v985
      %v987 = vand.u32 %v986, 4294901760
      %988 = vmatmul.mubr.f32.gmra.mxu0 %v987
      %v989 = vpop.f32.mrf.mxu0
      %v990 = vadd.f32 %v795, %v989
      %v991 = vpop.f32.mrf.mxu0
      %992 = vdwg.mxu0
      %993 = vmatprep.subr.mxu0 0.0
      %994 = vmatpush1.msra.mxu0 0.0
      %995 = vmatprep.subr.mxu0 0.0
      %996 = vmatpush1.msra.mxu0 0.0
      %997 = vmatprep.subr.mxu0 0.0
      %998 = vmatpush1.msra.mxu0 0.0
      %999 = vmatprep.subr.mxu0 0.0
      %1000 = vmatpush1.msra.mxu0 0.0
      %1001 = vmatprep.subr.mxu0 0.0
      %1002 = vmatpush1.msra.mxu0 0.0
      %1003 = vmatprep.subr.mxu0 0.0
      %1004 = vmatpush1.msra.mxu0 0.0
      %1005 = vmatprep.subr.mxu0 0.0
      %1006 = vmatpush1.msra.mxu0 0.0
      %1007 = vmatprep.subr.mxu0 0.0
      %1008 = vmatpush1.msra.mxu0 0.0
      %1009 = vmatprep.subr.mxu0 0.0
      %1010 = vmatpush1.msra.mxu0 0.0
      %1011 = vmatprep.subr.mxu0 0.0
      %1012 = vmatpush1.msra.mxu0 0.0
      %1013 = vmatprep.subr.mxu0 0.0
      %1014 = vmatpush1.msra.mxu0 0.0
      %1015 = vmatprep.subr.mxu0 0.0
      %1016 = vmatpush1.msra.mxu0 0.0
      %1017 = vmatprep.subr.mxu0 0.0
      %1018 = vmatpush1.msra.mxu0 0.0
      %1019 = vmatprep.subr.mxu0 0.0
      %1020 = vmatpush1.msra.mxu0 0.0
      %1021 = vmatprep.subr.mxu0 0.0
      %v1022 = vand.u32 %v164, 4294901760
      %v1023 = vsub.f32 %v164, %v1022
      %v1024 = vand.u32 %v1023, 4294901760
      %1025 = vmatpush1.msra.mxu0 %v1024
      %1026 = vmatprep.subr.mxu0 0.0
      %v1027 = vand.u32 %v163, 4294901760
      %v1028 = vsub.f32 %v163, %v1027
      %v1029 = vand.u32 %v1028, 4294901760
      %1030 = vmatpush1.msra.mxu0 %v1029
      %1031 = vmatprep.subr.mxu0 0.0
      %1032 = vmatpush2.msra.mxu0 0.0
      %1033 = vmatprep.subr.mxu0 0.0
      %1034 = vmatpush2.msra.mxu0 0.0
      %1035 = vmatprep.subr.mxu0 0.0
      %1036 = vmatpush2.msra.mxu0 0.0
      %1037 = vmatprep.subr.mxu0 0.0
      %1038 = vmatpush2.msra.mxu0 0.0
      %1039 = vmatprep.subr.mxu0 0.0
      %1040 = vmatpush2.msra.mxu0 0.0
      %1041 = vmatprep.subr.mxu0 0.0
      %1042 = vmatpush2.msra.mxu0 0.0
      %1043 = vmatprep.subr.mxu0 0.0
      %1044 = vmatpush2.msra.mxu0 0.0
      %1045 = vmatprep.subr.mxu0 0.0
      %1046 = vmatpush2.msra.mxu0 0.0
      %1047 = vmatprep.subr.mxu0 0.0
      %1048 = vmatpush2.msra.mxu0 0.0
      %1049 = vmatprep.subr.mxu0 0.0
      %1050 = vmatpush2.msra.mxu0 0.0
      %1051 = vmatprep.subr.mxu0 0.0
      %1052 = vmatpush2.msra.mxu0 0.0
      %1053 = vmatprep.subr.mxu0 0.0
      %1054 = vmatpush2.msra.mxu0 0.0
      %1055 = vmatprep.subr.mxu0 0.0
      %1056 = vmatpush2.msra.mxu0 0.0
      %1057 = vmatprep.subr.mxu0 0.0
      %1058 = vmatpush2.msra.mxu0 0.0
      %1059 = vmatprep.subr.mxu0 0.0
      %1060 = vmatpush2.msra.mxu0 0.0
      %1061 = vmatprep.subr.mxu0 0.0
      %1062 = vmatpush2.msra.mxu0 0.0
      %1063 = vmatprep.mubr.f32.mxu0 0.0
      %v1064 = vand.u32 %v172, 4294901760
      %1065 = vmatmul.mubr.f32.gmra.mxu0 %v1064
      %v1066 = vpop.f32.mrf.mxu0
      %v1067 = vadd.f32 %v870, %v1066
      %v1068 = vpop.f32.mrf.mxu0
      %1069 = vmatprep.mubr.f32.mxu0 0.0
      %v1070 = vand.u32 %v175, 4294901760
      %1071 = vmatmul.mubr.f32.gmra.mxu0 %v1070
      %v1072 = vpop.f32.mrf.mxu0
      %v1073 = vadd.f32 %v878, %v1072
      %v1074 = vpop.f32.mrf.mxu0
      %1075 = vmatprep.mubr.f32.mxu0 0.0
      %v1076 = vand.u32 %v178, 4294901760
      %1077 = vmatmul.mubr.f32.gmra.mxu0 %v1076
      %v1078 = vpop.f32.mrf.mxu0
      %v1079 = vadd.f32 %v886, %v1078
      %v1080 = vpop.f32.mrf.mxu0
      %1081 = vmatprep.mubr.f32.mxu0 0.0
      %v1082 = vand.u32 %v181, 4294901760
      %1083 = vmatmul.mubr.f32.gmra.mxu0 %v1082
      %v1084 = vpop.f32.mrf.mxu0
      %v1085 = vadd.f32 %v894, %v1084
      %v1086 = vpop.f32.mrf.mxu0
      %1087 = vmatprep.mubr.f32.mxu0 0.0
      %v1088 = vand.u32 %v184, 4294901760
      %1089 = vmatmul.mubr.f32.gmra.mxu0 %v1088
      %v1090 = vpop.f32.mrf.mxu0
      %v1091 = vadd.f32 %v902, %v1090
      %v1092 = vpop.f32.mrf.mxu0
      %1093 = vmatprep.mubr.f32.mxu0 0.0
      %v1094 = vand.u32 %v187, 4294901760
      %1095 = vmatmul.mubr.f32.gmra.mxu0 %v1094
      %v1096 = vpop.f32.mrf.mxu0
      %v1097 = vadd.f32 %v910, %v1096
      %v1098 = vpop.f32.mrf.mxu0
      %1099 = vmatprep.mubr.f32.mxu0 0.0
      %v1100 = vand.u32 %v190, 4294901760
      %1101 = vmatmul.mubr.f32.gmra.mxu0 %v1100
      %v1102 = vpop.f32.mrf.mxu0
      %v1103 = vadd.f32 %v918, %v1102
      %v1104 = vpop.f32.mrf.mxu0
      %1105 = vmatprep.mubr.f32.mxu0 0.0
      %v1106 = vand.u32 %v193, 4294901760
      %1107 = vmatmul.mubr.f32.gmra.mxu0 %v1106
      %v1108 = vpop.f32.mrf.mxu0
      %v1109 = vadd.f32 %v926, %v1108
      %v1110 = vpop.f32.mrf.mxu0
      %1111 = vmatprep.mubr.f32.mxu0 0.0
      %v1112 = vand.u32 %v196, 4294901760
      %1113 = vmatmul.mubr.f32.gmra.mxu0 %v1112
      %v1114 = vpop.f32.mrf.mxu0
      %v1115 = vadd.f32 %v934, %v1114
      %v1116 = vpop.f32.mrf.mxu0
      %1117 = vmatprep.mubr.f32.mxu0 0.0
      %v1118 = vand.u32 %v199, 4294901760
      %1119 = vmatmul.mubr.f32.gmra.mxu0 %v1118
      %v1120 = vpop.f32.mrf.mxu0
      %v1121 = vadd.f32 %v942, %v1120
      %v1122 = vpop.f32.mrf.mxu0
      %1123 = vmatprep.mubr.f32.mxu0 0.0
      %v1124 = vand.u32 %v202, 4294901760
      %1125 = vmatmul.mubr.f32.gmra.mxu0 %v1124
      %v1126 = vpop.f32.mrf.mxu0
      %v1127 = vadd.f32 %v950, %v1126
      %v1128 = vpop.f32.mrf.mxu0
      %1129 = vmatprep.mubr.f32.mxu0 0.0
      %v1130 = vand.u32 %v205, 4294901760
      %1131 = vmatmul.mubr.f32.gmra.mxu0 %v1130
      %v1132 = vpop.f32.mrf.mxu0
      %v1133 = vadd.f32 %v958, %v1132
      %v1134 = vpop.f32.mrf.mxu0
      %1135 = vmatprep.mubr.f32.mxu0 0.0
      %v1136 = vand.u32 %v208, 4294901760
      %1137 = vmatmul.mubr.f32.gmra.mxu0 %v1136
      %v1138 = vpop.f32.mrf.mxu0
      %v1139 = vadd.f32 %v966, %v1138
      %v1140 = vpop.f32.mrf.mxu0
      %1141 = vmatprep.mubr.f32.mxu0 0.0
      %v1142 = vand.u32 %v211, 4294901760
      %1143 = vmatmul.mubr.f32.gmra.mxu0 %v1142
      %v1144 = vpop.f32.mrf.mxu0
      %v1145 = vadd.f32 %v974, %v1144
      %v1146 = vpop.f32.mrf.mxu0
      %1147 = vmatprep.mubr.f32.mxu0 0.0
      %v1148 = vand.u32 %v214, 4294901760
      %1149 = vmatmul.mubr.f32.gmra.mxu0 %v1148
      %v1150 = vpop.f32.mrf.mxu0
      %v1151 = vadd.f32 %v982, %v1150
      %v1152 = vpop.f32.mrf.mxu0
      %1153 = vmatprep.mubr.f32.mxu0 0.0
      %v1154 = vand.u32 %v217, 4294901760
      %1155 = vmatmul.mubr.f32.gmra.mxu0 %v1154
      %v1156 = vpop.f32.mrf.mxu0
      %v1157 = vadd.f32 %v990, %v1156
      %v1158 = vpop.f32.mrf.mxu0
      %1159 = vdwg.mxu0
      %1160 = vmatprep.subr.mxu0 0.0
      %1161 = vmatpush1.msra.mxu0 0.0
      %1162 = vmatprep.subr.mxu0 0.0
      %1163 = vmatpush1.msra.mxu0 0.0
      %1164 = vmatprep.subr.mxu0 0.0
      %1165 = vmatpush1.msra.mxu0 0.0
      %1166 = vmatprep.subr.mxu0 0.0
      %1167 = vmatpush1.msra.mxu0 0.0
      %1168 = vmatprep.subr.mxu0 0.0
      %1169 = vmatpush1.msra.mxu0 0.0
      %1170 = vmatprep.subr.mxu0 0.0
      %1171 = vmatpush1.msra.mxu0 0.0
      %1172 = vmatprep.subr.mxu0 0.0
      %1173 = vmatpush1.msra.mxu0 0.0
      %1174 = vmatprep.subr.mxu0 0.0
      %1175 = vmatpush1.msra.mxu0 0.0
      %1176 = vmatprep.subr.mxu0 0.0
      %1177 = vmatpush1.msra.mxu0 0.0
      %1178 = vmatprep.subr.mxu0 0.0
      %1179 = vmatpush1.msra.mxu0 0.0
      %1180 = vmatprep.subr.mxu0 0.0
      %1181 = vmatpush1.msra.mxu0 0.0
      %1182 = vmatprep.subr.mxu0 0.0
      %1183 = vmatpush1.msra.mxu0 0.0
      %1184 = vmatprep.subr.mxu0 0.0
      %1185 = vmatpush1.msra.mxu0 0.0
      %1186 = vmatprep.subr.mxu0 0.0
      %1187 = vmatpush1.msra.mxu0 0.0
      %1188 = vmatprep.subr.mxu0 0.0
      %v1189 = vand.u32 %v164, 4294901760
      %1190 = vmatpush1.msra.mxu0 %v1189
      %1191 = vmatprep.subr.mxu0 0.0
      %v1192 = vand.u32 %v163, 4294901760
      %1193 = vmatpush1.msra.mxu0 %v1192
      %1194 = vmatprep.subr.mxu0 0.0
      %1195 = vmatpush2.msra.mxu0 0.0
      %1196 = vmatprep.subr.mxu0 0.0
      %1197 = vmatpush2.msra.mxu0 0.0
      %1198 = vmatprep.subr.mxu0 0.0
      %1199 = vmatpush2.msra.mxu0 0.0
      %1200 = vmatprep.subr.mxu0 0.0
      %1201 = vmatpush2.msra.mxu0 0.0
      %1202 = vmatprep.subr.mxu0 0.0
      %1203 = vmatpush2.msra.mxu0 0.0
      %1204 = vmatprep.subr.mxu0 0.0
      %1205 = vmatpush2.msra.mxu0 0.0
      %1206 = vmatprep.subr.mxu0 0.0
      %1207 = vmatpush2.msra.mxu0 0.0
      %1208 = vmatprep.subr.mxu0 0.0
      %1209 = vmatpush2.msra.mxu0 0.0
      %1210 = vmatprep.subr.mxu0 0.0
      %1211 = vmatpush2.msra.mxu0 0.0
      %1212 = vmatprep.subr.mxu0 0.0
      %1213 = vmatpush2.msra.mxu0 0.0
      %1214 = vmatprep.subr.mxu0 0.0
      %1215 = vmatpush2.msra.mxu0 0.0
      %1216 = vmatprep.subr.mxu0 0.0
      %1217 = vmatpush2.msra.mxu0 0.0
      %1218 = vmatprep.subr.mxu0 0.0
      %1219 = vmatpush2.msra.mxu0 0.0
      %1220 = vmatprep.subr.mxu0 0.0
      %1221 = vmatpush2.msra.mxu0 0.0
      %1222 = vmatprep.subr.mxu0 0.0
      %1223 = vmatpush2.msra.mxu0 0.0
      %1224 = vmatprep.subr.mxu0 0.0
      %1225 = vmatpush2.msra.mxu0 0.0
      %1226 = vmatprep.mubr.f32.mxu0 0.0
      %v1227 = vand.u32 %v172, 4294901760
      %1228 = vmatmul.mubr.f32.gmra.mxu0 %v1227
      %v1229 = vpop.f32.mrf.mxu0
      %v1230 = vadd.f32 %v1067, %v1229
      %v1231 = vpop.f32.mrf.mxu0
      %1232 = vmatprep.mubr.f32.mxu0 0.0
      %v1233 = vand.u32 %v175, 4294901760
      %1234 = vmatmul.mubr.f32.gmra.mxu0 %v1233
      %v1235 = vpop.f32.mrf.mxu0
      %v1236 = vadd.f32 %v1073, %v1235
      %v1237 = vpop.f32.mrf.mxu0
      %1238 = vmatprep.mubr.f32.mxu0 0.0
      %v1239 = vand.u32 %v178, 4294901760
      %1240 = vmatmul.mubr.f32.gmra.mxu0 %v1239
      %v1241 = vpop.f32.mrf.mxu0
      %v1242 = vadd.f32 %v1079, %v1241
      %v1243 = vpop.f32.mrf.mxu0
      %1244 = vmatprep.mubr.f32.mxu0 0.0
      %v1245 = vand.u32 %v181, 4294901760
      %1246 = vmatmul.mubr.f32.gmra.mxu0 %v1245
      %v1247 = vpop.f32.mrf.mxu0
      %v1248 = vadd.f32 %v1085, %v1247
      %v1249 = vpop.f32.mrf.mxu0
      %1250 = vmatprep.mubr.f32.mxu0 0.0
      %v1251 = vand.u32 %v184, 4294901760
      %1252 = vmatmul.mubr.f32.gmra.mxu0 %v1251
      %v1253 = vpop.f32.mrf.mxu0
      %v1254 = vadd.f32 %v1091, %v1253
      %v1255 = vpop.f32.mrf.mxu0
      %1256 = vmatprep.mubr.f32.mxu0 0.0
      %v1257 = vand.u32 %v187, 4294901760
      %1258 = vmatmul.mubr.f32.gmra.mxu0 %v1257
      %v1259 = vpop.f32.mrf.mxu0
      %v1260 = vadd.f32 %v1097, %v1259
      %v1261 = vpop.f32.mrf.mxu0
      %1262 = vmatprep.mubr.f32.mxu0 0.0
      %v1263 = vand.u32 %v190, 4294901760
      %1264 = vmatmul.mubr.f32.gmra.mxu0 %v1263
      %v1265 = vpop.f32.mrf.mxu0
      %v1266 = vadd.f32 %v1103, %v1265
      %v1267 = vpop.f32.mrf.mxu0
      %1268 = vmatprep.mubr.f32.mxu0 0.0
      %v1269 = vand.u32 %v193, 4294901760
      %1270 = vmatmul.mubr.f32.gmra.mxu0 %v1269
      %v1271 = vpop.f32.mrf.mxu0
      %v1272 = vadd.f32 %v1109, %v1271
      %v1273 = vpop.f32.mrf.mxu0
      %1274 = vmatprep.mubr.f32.mxu0 0.0
      %v1275 = vand.u32 %v196, 4294901760
      %1276 = vmatmul.mubr.f32.gmra.mxu0 %v1275
      %v1277 = vpop.f32.mrf.mxu0
      %v1278 = vadd.f32 %v1115, %v1277
      %v1279 = vpop.f32.mrf.mxu0
      %1280 = vmatprep.mubr.f32.mxu0 0.0
      %v1281 = vand.u32 %v199, 4294901760
      %1282 = vmatmul.mubr.f32.gmra.mxu0 %v1281
      %v1283 = vpop.f32.mrf.mxu0
      %v1284 = vadd.f32 %v1121, %v1283
      %v1285 = vpop.f32.mrf.mxu0
      %1286 = vmatprep.mubr.f32.mxu0 0.0
      %v1287 = vand.u32 %v202, 4294901760
      %1288 = vmatmul.mubr.f32.gmra.mxu0 %v1287
      %v1289 = vpop.f32.mrf.mxu0
      %v1290 = vadd.f32 %v1127, %v1289
      %v1291 = vpop.f32.mrf.mxu0
      %1292 = vmatprep.mubr.f32.mxu0 0.0
      %v1293 = vand.u32 %v205, 4294901760
      %1294 = vmatmul.mubr.f32.gmra.mxu0 %v1293
      %v1295 = vpop.f32.mrf.mxu0
      %v1296 = vadd.f32 %v1133, %v1295
      %v1297 = vpop.f32.mrf.mxu0
      %1298 = vmatprep.mubr.f32.mxu0 0.0
      %v1299 = vand.u32 %v208, 4294901760
      %1300 = vmatmul.mubr.f32.gmra.mxu0 %v1299
      %v1301 = vpop.f32.mrf.mxu0
      %v1302 = vadd.f32 %v1139, %v1301
      %v1303 = vpop.f32.mrf.mxu0
      %1304 = vmatprep.mubr.f32.mxu0 0.0
      %v1305 = vand.u32 %v211, 4294901760
      %1306 = vmatmul.mubr.f32.gmra.mxu0 %v1305
      %v1307 = vpop.f32.mrf.mxu0
      %v1308 = vadd.f32 %v1145, %v1307
      %v1309 = vpop.f32.mrf.mxu0
      %1310 = vmatprep.mubr.f32.mxu0 0.0
      %v1311 = vand.u32 %v214, 4294901760
      %1312 = vmatmul.mubr.f32.gmra.mxu0 %v1311
      %v1313 = vpop.f32.mrf.mxu0
      %v1314 = vadd.f32 %v1151, %v1313
      %v1315 = vpop.f32.mrf.mxu0
      %1316 = vmatprep.mubr.f32.mxu0 0.0
      %v1317 = vand.u32 %v217, 4294901760
      %1318 = vmatmul.mubr.f32.gmra.mxu0 %v1317
      %v1319 = vpop.f32.mrf.mxu0
      %v1320 = vadd.f32 %v1157, %v1319
      %v1321 = vpop.f32.mrf.mxu0
      %1322 = vdwg.mxu0
      %v1323 = vmax.f32 %v1230, 0.0
      %v1324 = vmax.f32 %v1236, 0.0
      %v1325 = vmax.f32 %v1242, 0.0
      %v1326 = vmax.f32 %v1248, 0.0
      %v1327 = vmax.f32 %v1254, 0.0
      %v1328 = vmax.f32 %v1260, 0.0
      %v1329 = vmax.f32 %v1266, 0.0
      %v1330 = vmax.f32 %v1272, 0.0
      %v1331 = vmax.f32 %v1278, 0.0
      %v1332 = vmax.f32 %v1284, 0.0
      %v1333 = vmax.f32 %v1290, 0.0
      %v1334 = vmax.f32 %v1296, 0.0
      %v1335 = vmax.f32 %v1302, 0.0
      %v1336 = vmax.f32 %v1308, 0.0
      %v1337 = vmax.f32 %v1314, 0.0
      %v1338 = vmax.f32 %v1320, 0.0
      %v1339 = vld [vmem:[%s1 + $0x18] sm:$0xff]
      %v1340 = vld [vmem:[%s1 + $0x20] sm:$0xff]
      %v1341 = vld [vmem:[%s1 + $0x28] sm:$0xff]
      %v1342 = vld [vmem:[%s1 + $0x30] sm:$0xff]
      %v1343 = vld [vmem:[%s1 + $0x38] sm:$0x1]
      %v1344 = vld [vmem:[%s1 + $0x40] sm:$0xff]
      %v1345 = vld [vmem:[%s1 + $0x48] sm:$0xff]
      %v1346 = vld [vmem:[%s1 + $0x50] sm:$0xff]
      %v1347 = vld [vmem:[%s1 + $0x58] sm:$0xff]
      %v1348 = vld [vmem:[%s1 + $0x60] sm:$0x1]
      %v1349 = vlaneseq
      %v1350 = vshrl.u32 %v1349, 7
      %v1351 = vsub.s32 0, %v1350
      %v1352 = vrot.slane %v1343, %v1351
      %vm1353 = vcmask 261120
      %v1355 = vsel %vm1353, %v1323, 0
      %v1358 = vsel %vm1353, %v1324, 0
      %v1361 = vsel %vm1353, %v1325, 0
      %v1364 = vsel %vm1353, %v1326, 0
      %v1367 = vsel %vm1353, %v1327, 0
      %v1370 = vsel %vm1353, %v1328, 0
      %v1373 = vsel %vm1353, %v1329, 0
      %v1376 = vsel %vm1353, %v1330, 0
      %v1379 = vsel %vm1353, %v1331, 0
      %v1382 = vsel %vm1353, %v1332, 0
      %v1385 = vsel %vm1353, %v1333, 0
      %v1388 = vsel %vm1353, %v1334, 0
      %v1391 = vsel %vm1353, %v1335, 0
      %v1394 = vsel %vm1353, %v1336, 0
      %v1397 = vsel %vm1353, %v1337, 0
      %v1400 = vsel %vm1353, %v1338, 0
      %1402 = vmatprep.subr.mxu0 0.0
      %1403 = vmatpush1.msra.mxu0 0.0
      %1404 = vmatprep.subr.mxu0 0.0
      %1405 = vmatpush1.msra.mxu0 0.0
      %1406 = vmatprep.subr.mxu0 0.0
      %1407 = vmatpush1.msra.mxu0 0.0
      %1408 = vmatprep.subr.mxu0 0.0
      %1409 = vmatpush1.msra.mxu0 0.0
      %1410 = vmatprep.subr.mxu0 0.0
      %1411 = vmatpush1.msra.mxu0 0.0
      %1412 = vmatprep.subr.mxu0 0.0
      %1413 = vmatpush1.msra.mxu0 0.0
      %1414 = vmatprep.subr.mxu0 0.0
      %1415 = vmatpush1.msra.mxu0 0.0
      %1416 = vmatprep.subr.mxu0 0.0
      %1417 = vmatpush1.msra.mxu0 0.0
      %1418 = vmatprep.subr.mxu0 0.0
      %1419 = vmatpush1.msra.mxu0 0.0
      %1420 = vmatprep.subr.mxu0 0.0
      %1421 = vmatpush1.msra.mxu0 0.0
      %1422 = vmatprep.subr.mxu0 0.0
      %1423 = vmatpush1.msra.mxu0 0.0
      %1424 = vmatprep.subr.mxu0 0.0
      %1425 = vmatpush1.msra.mxu0 0.0
      %1426 = vmatprep.subr.mxu0 0.0
      %v1427 = vand.u32 %v1342, 4294901760
      %1428 = vmatpush1.msra.mxu0 %v1427
      %1429 = vmatprep.subr.mxu0 0.0
      %v1430 = vand.u32 %v1341, 4294901760
      %1431 = vmatpush1.msra.mxu0 %v1430
      %1432 = vmatprep.subr.mxu0 0.0
      %v1433 = vand.u32 %v1340, 4294901760
      %1434 = vmatpush1.msra.mxu0 %v1433
      %1435 = vmatprep.subr.mxu0 0.0
      %v1436 = vand.u32 %v1339, 4294901760
      %1437 = vmatpush1.msra.mxu0 %v1436
      %1438 = vmatprep.subr.mxu0 0.0
      %1439 = vmatpush2.msra.mxu0 0.0
      %1440 = vmatprep.subr.mxu0 0.0
      %1441 = vmatpush2.msra.mxu0 0.0
      %1442 = vmatprep.subr.mxu0 0.0
      %1443 = vmatpush2.msra.mxu0 0.0
      %1444 = vmatprep.subr.mxu0 0.0
      %1445 = vmatpush2.msra.mxu0 0.0
      %1446 = vmatprep.subr.mxu0 0.0
      %1447 = vmatpush2.msra.mxu0 0.0
      %1448 = vmatprep.subr.mxu0 0.0
      %1449 = vmatpush2.msra.mxu0 0.0
      %1450 = vmatprep.subr.mxu0 0.0
      %1451 = vmatpush2.msra.mxu0 0.0
      %1452 = vmatprep.subr.mxu0 0.0
      %1453 = vmatpush2.msra.mxu0 0.0
      %1454 = vmatprep.subr.mxu0 0.0
      %1455 = vmatpush2.msra.mxu0 0.0
      %1456 = vmatprep.subr.mxu0 0.0
      %1457 = vmatpush2.msra.mxu0 0.0
      %1458 = vmatprep.subr.mxu0 0.0
      %1459 = vmatpush2.msra.mxu0 0.0
      %1460 = vmatprep.subr.mxu0 0.0
      %1461 = vmatpush2.msra.mxu0 0.0
      %1462 = vmatprep.subr.mxu0 0.0
      %1463 = vmatpush2.msra.mxu0 0.0
      %1464 = vmatprep.subr.mxu0 0.0
      %1465 = vmatpush2.msra.mxu0 0.0
      %1466 = vmatprep.subr.mxu0 0.0
      %1467 = vmatpush2.msra.mxu0 0.0
      %1468 = vmatprep.subr.mxu0 0.0
      %1469 = vmatpush2.msra.mxu0 0.0
      %1470 = vmatprep.mubr.f32.mxu0 0.0
      %v1471 = vand.u32 %v1355, 4294901760
      %v1472 = vsub.f32 %v1355, %v1471
      %v1473 = vand.u32 %v1472, 4294901760
      %v1474 = vsub.f32 %v1472, %v1473
      %v1475 = vand.u32 %v1474, 4294901760
      %1476 = vmatmul.mubr.f32.gmra.mxu0 %v1475
      %v1477 = vpop.f32.mrf.mxu0
      %v1478 = vadd.f32 %v1352, %v1477
      %v1479 = vpop.f32.mrf.mxu0
      %1480 = vmatprep.mubr.f32.mxu0 0.0
      %v1481 = vand.u32 %v1358, 4294901760
      %v1482 = vsub.f32 %v1358, %v1481
      %v1483 = vand.u32 %v1482, 4294901760
      %v1484 = vsub.f32 %v1482, %v1483
      %v1485 = vand.u32 %v1484, 4294901760
      %1486 = vmatmul.mubr.f32.gmra.mxu0 %v1485
      %v1487 = vpop.f32.mrf.mxu0
      %v1488 = vadd.f32 %v1352, %v1487
      %v1489 = vpop.f32.mrf.mxu0
      %1490 = vmatprep.mubr.f32.mxu0 0.0
      %v1491 = vand.u32 %v1361, 4294901760
      %v1492 = vsub.f32 %v1361, %v1491
      %v1493 = vand.u32 %v1492, 4294901760
      %v1494 = vsub.f32 %v1492, %v1493
      %v1495 = vand.u32 %v1494, 4294901760
      %1496 = vmatmul.mubr.f32.gmra.mxu0 %v1495
      %v1497 = vpop.f32.mrf.mxu0
      %v1498 = vadd.f32 %v1352, %v1497
      %v1499 = vpop.f32.mrf.mxu0
      %1500 = vmatprep.mubr.f32.mxu0 0.0
      %v1501 = vand.u32 %v1364, 4294901760
      %v1502 = vsub.f32 %v1364, %v1501
      %v1503 = vand.u32 %v1502, 4294901760
      %v1504 = vsub.f32 %v1502, %v1503
      %v1505 = vand.u32 %v1504, 4294901760
      %1506 = vmatmul.mubr.f32.gmra.mxu0 %v1505
      %v1507 = vpop.f32.mrf.mxu0
      %v1508 = vadd.f32 %v1352, %v1507
      %v1509 = vpop.f32.mrf.mxu0
      %1510 = vmatprep.mubr.f32.mxu0 0.0
      %v1511 = vand.u32 %v1367, 4294901760
      %v1512 = vsub.f32 %v1367, %v1511
      %v1513 = vand.u32 %v1512, 4294901760
      %v1514 = vsub.f32 %v1512, %v1513
      %v1515 = vand.u32 %v1514, 4294901760
      %1516 = vmatmul.mubr.f32.gmra.mxu0 %v1515
      %v1517 = vpop.f32.mrf.mxu0
      %v1518 = vadd.f32 %v1352, %v1517
      %v1519 = vpop.f32.mrf.mxu0
      %1520 = vmatprep.mubr.f32.mxu0 0.0
      %v1521 = vand.u32 %v1370, 4294901760
      %v1522 = vsub.f32 %v1370, %v1521
      %v1523 = vand.u32 %v1522, 4294901760
      %v1524 = vsub.f32 %v1522, %v1523
      %v1525 = vand.u32 %v1524, 4294901760
      %1526 = vmatmul.mubr.f32.gmra.mxu0 %v1525
      %v1527 = vpop.f32.mrf.mxu0
      %v1528 = vadd.f32 %v1352, %v1527
      %v1529 = vpop.f32.mrf.mxu0
      %1530 = vmatprep.mubr.f32.mxu0 0.0
      %v1531 = vand.u32 %v1373, 4294901760
      %v1532 = vsub.f32 %v1373, %v1531
      %v1533 = vand.u32 %v1532, 4294901760
      %v1534 = vsub.f32 %v1532, %v1533
      %v1535 = vand.u32 %v1534, 4294901760
      %1536 = vmatmul.mubr.f32.gmra.mxu0 %v1535
      %v1537 = vpop.f32.mrf.mxu0
      %v1538 = vadd.f32 %v1352, %v1537
      %v1539 = vpop.f32.mrf.mxu0
      %1540 = vmatprep.mubr.f32.mxu0 0.0
      %v1541 = vand.u32 %v1376, 4294901760
      %v1542 = vsub.f32 %v1376, %v1541
      %v1543 = vand.u32 %v1542, 4294901760
      %v1544 = vsub.f32 %v1542, %v1543
      %v1545 = vand.u32 %v1544, 4294901760
      %1546 = vmatmul.mubr.f32.gmra.mxu0 %v1545
      %v1547 = vpop.f32.mrf.mxu0
      %v1548 = vadd.f32 %v1352, %v1547
      %v1549 = vpop.f32.mrf.mxu0
      %1550 = vmatprep.mubr.f32.mxu0 0.0
      %v1551 = vand.u32 %v1379, 4294901760
      %v1552 = vsub.f32 %v1379, %v1551
      %v1553 = vand.u32 %v1552, 4294901760
      %v1554 = vsub.f32 %v1552, %v1553
      %v1555 = vand.u32 %v1554, 4294901760
      %1556 = vmatmul.mubr.f32.gmra.mxu0 %v1555
      %v1557 = vpop.f32.mrf.mxu0
      %v1558 = vadd.f32 %v1352, %v1557
      %v1559 = vpop.f32.mrf.mxu0
      %1560 = vmatprep.mubr.f32.mxu0 0.0
      %v1561 = vand.u32 %v1382, 4294901760
      %v1562 = vsub.f32 %v1382, %v1561
      %v1563 = vand.u32 %v1562, 4294901760
      %v1564 = vsub.f32 %v1562, %v1563
      %v1565 = vand.u32 %v1564, 4294901760
      %1566 = vmatmul.mubr.f32.gmra.mxu0 %v1565
      %v1567 = vpop.f32.mrf.mxu0
      %v1568 = vadd.f32 %v1352, %v1567
      %v1569 = vpop.f32.mrf.mxu0
      %1570 = vmatprep.mubr.f32.mxu0 0.0
      %v1571 = vand.u32 %v1385, 4294901760
      %v1572 = vsub.f32 %v1385, %v1571
      %v1573 = vand.u32 %v1572, 4294901760
      %v1574 = vsub.f32 %v1572, %v1573
      %v1575 = vand.u32 %v1574, 4294901760
      %1576 = vmatmul.mubr.f32.gmra.mxu0 %v1575
      %v1577 = vpop.f32.mrf.mxu0
      %v1578 = vadd.f32 %v1352, %v1577
      %v1579 = vpop.f32.mrf.mxu0
      %1580 = vmatprep.mubr.f32.mxu0 0.0
      %v1581 = vand.u32 %v1388, 4294901760
      %v1582 = vsub.f32 %v1388, %v1581
      %v1583 = vand.u32 %v1582, 4294901760
      %v1584 = vsub.f32 %v1582, %v1583
      %v1585 = vand.u32 %v1584, 4294901760
      %1586 = vmatmul.mubr.f32.gmra.mxu0 %v1585
      %v1587 = vpop.f32.mrf.mxu0
      %v1588 = vadd.f32 %v1352, %v1587
      %v1589 = vpop.f32.mrf.mxu0
      %1590 = vmatprep.mubr.f32.mxu0 0.0
      %v1591 = vand.u32 %v1391, 4294901760
      %v1592 = vsub.f32 %v1391, %v1591
      %v1593 = vand.u32 %v1592, 4294901760
      %v1594 = vsub.f32 %v1592, %v1593
      %v1595 = vand.u32 %v1594, 4294901760
      %1596 = vmatmul.mubr.f32.gmra.mxu0 %v1595
      %v1597 = vpop.f32.mrf.mxu0
      %v1598 = vadd.f32 %v1352, %v1597
      %v1599 = vpop.f32.mrf.mxu0
      %1600 = vmatprep.mubr.f32.mxu0 0.0
      %v1601 = vand.u32 %v1394, 4294901760
      %v1602 = vsub.f32 %v1394, %v1601
      %v1603 = vand.u32 %v1602, 4294901760
      %v1604 = vsub.f32 %v1602, %v1603
      %v1605 = vand.u32 %v1604, 4294901760
      %1606 = vmatmul.mubr.f32.gmra.mxu0 %v1605
      %v1607 = vpop.f32.mrf.mxu0
      %v1608 = vadd.f32 %v1352, %v1607
      %v1609 = vpop.f32.mrf.mxu0
      %1610 = vmatprep.mubr.f32.mxu0 0.0
      %v1611 = vand.u32 %v1397, 4294901760
      %v1612 = vsub.f32 %v1397, %v1611
      %v1613 = vand.u32 %v1612, 4294901760
      %v1614 = vsub.f32 %v1612, %v1613
      %v1615 = vand.u32 %v1614, 4294901760
      %1616 = vmatmul.mubr.f32.gmra.mxu0 %v1615
      %v1617 = vpop.f32.mrf.mxu0
      %v1618 = vadd.f32 %v1352, %v1617
      %v1619 = vpop.f32.mrf.mxu0
      %1620 = vmatprep.mubr.f32.mxu0 0.0
      %v1621 = vand.u32 %v1400, 4294901760
      %v1622 = vsub.f32 %v1400, %v1621
      %v1623 = vand.u32 %v1622, 4294901760
      %v1624 = vsub.f32 %v1622, %v1623
      %v1625 = vand.u32 %v1624, 4294901760
      %1626 = vmatmul.mubr.f32.gmra.mxu0 %v1625
      %v1627 = vpop.f32.mrf.mxu0
      %v1628 = vadd.f32 %v1352, %v1627
      %v1629 = vpop.f32.mrf.mxu0
      %1630 = vdwg.mxu0
      %1631 = vmatprep.subr.mxu0 0.0
      %1632 = vmatpush1.msra.mxu0 0.0
      %1633 = vmatprep.subr.mxu0 0.0
      %1634 = vmatpush1.msra.mxu0 0.0
      %1635 = vmatprep.subr.mxu0 0.0
      %1636 = vmatpush1.msra.mxu0 0.0
      %1637 = vmatprep.subr.mxu0 0.0
      %1638 = vmatpush1.msra.mxu0 0.0
      %1639 = vmatprep.subr.mxu0 0.0
      %1640 = vmatpush1.msra.mxu0 0.0
      %1641 = vmatprep.subr.mxu0 0.0
      %1642 = vmatpush1.msra.mxu0 0.0
      %1643 = vmatprep.subr.mxu0 0.0
      %1644 = vmatpush1.msra.mxu0 0.0
      %1645 = vmatprep.subr.mxu0 0.0
      %1646 = vmatpush1.msra.mxu0 0.0
      %1647 = vmatprep.subr.mxu0 0.0
      %1648 = vmatpush1.msra.mxu0 0.0
      %1649 = vmatprep.subr.mxu0 0.0
      %1650 = vmatpush1.msra.mxu0 0.0
      %1651 = vmatprep.subr.mxu0 0.0
      %1652 = vmatpush1.msra.mxu0 0.0
      %1653 = vmatprep.subr.mxu0 0.0
      %1654 = vmatpush1.msra.mxu0 0.0
      %1655 = vmatprep.subr.mxu0 0.0
      %v1656 = vand.u32 %v1342, 4294901760
      %v1657 = vsub.f32 %v1342, %v1656
      %v1658 = vand.u32 %v1657, 4294901760
      %v1659 = vsub.f32 %v1657, %v1658
      %v1660 = vand.u32 %v1659, 4294901760
      %1661 = vmatpush1.msra.mxu0 %v1660
      %1662 = vmatprep.subr.mxu0 0.0
      %v1663 = vand.u32 %v1341, 4294901760
      %v1664 = vsub.f32 %v1341, %v1663
      %v1665 = vand.u32 %v1664, 4294901760
      %v1666 = vsub.f32 %v1664, %v1665
      %v1667 = vand.u32 %v1666, 4294901760
      %1668 = vmatpush1.msra.mxu0 %v1667
      %1669 = vmatprep.subr.mxu0 0.0
      %v1670 = vand.u32 %v1340, 4294901760
      %v1671 = vsub.f32 %v1340, %v1670
      %v1672 = vand.u32 %v1671, 4294901760
      %v1673 = vsub.f32 %v1671, %v1672
      %v1674 = vand.u32 %v1673, 4294901760
      %1675 = vmatpush1.msra.mxu0 %v1674
      %1676 = vmatprep.subr.mxu0 0.0
      %v1677 = vand.u32 %v1339, 4294901760
      %v1678 = vsub.f32 %v1339, %v1677
      %v1679 = vand.u32 %v1678, 4294901760
      %v1680 = vsub.f32 %v1678, %v1679
      %v1681 = vand.u32 %v1680, 4294901760
      %1682 = vmatpush1.msra.mxu0 %v1681
      %1683 = vmatprep.subr.mxu0 0.0
      %1684 = vmatpush2.msra.mxu0 0.0
      %1685 = vmatprep.subr.mxu0 0.0
      %1686 = vmatpush2.msra.mxu0 0.0
      %1687 = vmatprep.subr.mxu0 0.0
      %1688 = vmatpush2.msra.mxu0 0.0
      %1689 = vmatprep.subr.mxu0 0.0
      %1690 = vmatpush2.msra.mxu0 0.0
      %1691 = vmatprep.subr.mxu0 0.0
      %1692 = vmatpush2.msra.mxu0 0.0
      %1693 = vmatprep.subr.mxu0 0.0
      %1694 = vmatpush2.msra.mxu0 0.0
      %1695 = vmatprep.subr.mxu0 0.0
      %1696 = vmatpush2.msra.mxu0 0.0
      %1697 = vmatprep.subr.mxu0 0.0
      %1698 = vmatpush2.msra.mxu0 0.0
      %1699 = vmatprep.subr.mxu0 0.0
      %1700 = vmatpush2.msra.mxu0 0.0
      %1701 = vmatprep.subr.mxu0 0.0
      %1702 = vmatpush2.msra.mxu0 0.0
      %1703 = vmatprep.subr.mxu0 0.0
      %1704 = vmatpush2.msra.mxu0 0.0
      %1705 = vmatprep.subr.mxu0 0.0
      %1706 = vmatpush2.msra.mxu0 0.0
      %1707 = vmatprep.subr.mxu0 0.0
      %1708 = vmatpush2.msra.mxu0 0.0
      %1709 = vmatprep.subr.mxu0 0.0
      %1710 = vmatpush2.msra.mxu0 0.0
      %1711 = vmatprep.subr.mxu0 0.0
      %1712 = vmatpush2.msra.mxu0 0.0
      %1713 = vmatprep.subr.mxu0 0.0
      %1714 = vmatpush2.msra.mxu0 0.0
      %1715 = vmatprep.mubr.f32.mxu0 0.0
      %v1716 = vand.u32 %v1355, 4294901760
      %1717 = vmatmul.mubr.f32.gmra.mxu0 %v1716
      %v1718 = vpop.f32.mrf.mxu0
      %v1719 = vadd.f32 %v1478, %v1718
      %v1720 = vpop.f32.mrf.mxu0
      %1721 = vmatprep.mubr.f32.mxu0 0.0
      %v1722 = vand.u32 %v1358, 4294901760
      %1723 = vmatmul.mubr.f32.gmra.mxu0 %v1722
      %v1724 = vpop.f32.mrf.mxu0
      %v1725 = vadd.f32 %v1488, %v1724
      %v1726 = vpop.f32.mrf.mxu0
      %1727 = vmatprep.mubr.f32.mxu0 0.0
      %v1728 = vand.u32 %v1361, 4294901760
      %1729 = vmatmul.mubr.f32.gmra.mxu0 %v1728
      %v1730 = vpop.f32.mrf.mxu0
      %v1731 = vadd.f32 %v1498, %v1730
      %v1732 = vpop.f32.mrf.mxu0
      %1733 = vmatprep.mubr.f32.mxu0 0.0
      %v1734 = vand.u32 %v1364, 4294901760
      %1735 = vmatmul.mubr.f32.gmra.mxu0 %v1734
      %v1736 = vpop.f32.mrf.mxu0
      %v1737 = vadd.f32 %v1508, %v1736
      %v1738 = vpop.f32.mrf.mxu0
      %1739 = vmatprep.mubr.f32.mxu0 0.0
      %v1740 = vand.u32 %v1367, 4294901760
      %1741 = vmatmul.mubr.f32.gmra.mxu0 %v1740
      %v1742 = vpop.f32.mrf.mxu0
      %v1743 = vadd.f32 %v1518, %v1742
      %v1744 = vpop.f32.mrf.mxu0
      %1745 = vmatprep.mubr.f32.mxu0 0.0
      %v1746 = vand.u32 %v1370, 4294901760
      %1747 = vmatmul.mubr.f32.gmra.mxu0 %v1746
      %v1748 = vpop.f32.mrf.mxu0
      %v1749 = vadd.f32 %v1528, %v1748
      %v1750 = vpop.f32.mrf.mxu0
      %1751 = vmatprep.mubr.f32.mxu0 0.0
      %v1752 = vand.u32 %v1373, 4294901760
      %1753 = vmatmul.mubr.f32.gmra.mxu0 %v1752
      %v1754 = vpop.f32.mrf.mxu0
      %v1755 = vadd.f32 %v1538, %v1754
      %v1756 = vpop.f32.mrf.mxu0
      %1757 = vmatprep.mubr.f32.mxu0 0.0
      %v1758 = vand.u32 %v1376, 4294901760
      %1759 = vmatmul.mubr.f32.gmra.mxu0 %v1758
      %v1760 = vpop.f32.mrf.mxu0
      %v1761 = vadd.f32 %v1548, %v1760
      %v1762 = vpop.f32.mrf.mxu0
      %1763 = vmatprep.mubr.f32.mxu0 0.0
      %v1764 = vand.u32 %v1379, 4294901760
      %1765 = vmatmul.mubr.f32.gmra.mxu0 %v1764
      %v1766 = vpop.f32.mrf.mxu0
      %v1767 = vadd.f32 %v1558, %v1766
      %v1768 = vpop.f32.mrf.mxu0
      %1769 = vmatprep.mubr.f32.mxu0 0.0
      %v1770 = vand.u32 %v1382, 4294901760
      %1771 = vmatmul.mubr.f32.gmra.mxu0 %v1770
      %v1772 = vpop.f32.mrf.mxu0
      %v1773 = vadd.f32 %v1568, %v1772
      %v1774 = vpop.f32.mrf.mxu0
      %1775 = vmatprep.mubr.f32.mxu0 0.0
      %v1776 = vand.u32 %v1385, 4294901760
      %1777 = vmatmul.mubr.f32.gmra.mxu0 %v1776
      %v1778 = vpop.f32.mrf.mxu0
      %v1779 = vadd.f32 %v1578, %v1778
      %v1780 = vpop.f32.mrf.mxu0
      %1781 = vmatprep.mubr.f32.mxu0 0.0
      %v1782 = vand.u32 %v1388, 4294901760
      %1783 = vmatmul.mubr.f32.gmra.mxu0 %v1782
      %v1784 = vpop.f32.mrf.mxu0
      %v1785 = vadd.f32 %v1588, %v1784
      %v1786 = vpop.f32.mrf.mxu0
      %1787 = vmatprep.mubr.f32.mxu0 0.0
      %v1788 = vand.u32 %v1391, 4294901760
      %1789 = vmatmul.mubr.f32.gmra.mxu0 %v1788
      %v1790 = vpop.f32.mrf.mxu0
      %v1791 = vadd.f32 %v1598, %v1790
      %v1792 = vpop.f32.mrf.mxu0
      %1793 = vmatprep.mubr.f32.mxu0 0.0
      %v1794 = vand.u32 %v1394, 4294901760
      %1795 = vmatmul.mubr.f32.gmra.mxu0 %v1794
      %v1796 = vpop.f32.mrf.mxu0
      %v1797 = vadd.f32 %v1608, %v1796
      %v1798 = vpop.f32.mrf.mxu0
      %1799 = vmatprep.mubr.f32.mxu0 0.0
      %v1800 = vand.u32 %v1397, 4294901760
      %1801 = vmatmul.mubr.f32.gmra.mxu0 %v1800
      %v1802 = vpop.f32.mrf.mxu0
      %v1803 = vadd.f32 %v1618, %v1802
      %v1804 = vpop.f32.mrf.mxu0
      %1805 = vmatprep.mubr.f32.mxu0 0.0
      %v1806 = vand.u32 %v1400, 4294901760
      %1807 = vmatmul.mubr.f32.gmra.mxu0 %v1806
      %v1808 = vpop.f32.mrf.mxu0
      %v1809 = vadd.f32 %v1628, %v1808
      %v1810 = vpop.f32.mrf.mxu0
      %1811 = vdwg.mxu0
      %1812 = vmatprep.subr.mxu0 0.0
      %1813 = vmatpush1.msra.mxu0 0.0
      %1814 = vmatprep.subr.mxu0 0.0
      %1815 = vmatpush1.msra.mxu0 0.0
      %1816 = vmatprep.subr.mxu0 0.0
      %1817 = vmatpush1.msra.mxu0 0.0
      %1818 = vmatprep.subr.mxu0 0.0
      %1819 = vmatpush1.msra.mxu0 0.0
      %1820 = vmatprep.subr.mxu0 0.0
      %1821 = vmatpush1.msra.mxu0 0.0
      %1822 = vmatprep.subr.mxu0 0.0
      %1823 = vmatpush1.msra.mxu0 0.0
      %1824 = vmatprep.subr.mxu0 0.0
      %1825 = vmatpush1.msra.mxu0 0.0
      %1826 = vmatprep.subr.mxu0 0.0
      %1827 = vmatpush1.msra.mxu0 0.0
      %1828 = vmatprep.subr.mxu0 0.0
      %1829 = vmatpush1.msra.mxu0 0.0
      %1830 = vmatprep.subr.mxu0 0.0
      %1831 = vmatpush1.msra.mxu0 0.0
      %1832 = vmatprep.subr.mxu0 0.0
      %1833 = vmatpush1.msra.mxu0 0.0
      %1834 = vmatprep.subr.mxu0 0.0
      %1835 = vmatpush1.msra.mxu0 0.0
      %1836 = vmatprep.subr.mxu0 0.0
      %v1837 = vand.u32 %v1342, 4294901760
      %v1838 = vsub.f32 %v1342, %v1837
      %1839 = vmatpush1.msra.mxu0 %v1838
      %1840 = vmatprep.subr.mxu0 0.0
      %v1841 = vand.u32 %v1341, 4294901760
      %v1842 = vsub.f32 %v1341, %v1841
      %1843 = vmatpush1.msra.mxu0 %v1842
      %1844 = vmatprep.subr.mxu0 0.0
      %v1845 = vand.u32 %v1340, 4294901760
      %v1846 = vsub.f32 %v1340, %v1845
      %1847 = vmatpush1.msra.mxu0 %v1846
      %1848 = vmatprep.subr.mxu0 0.0
      %v1849 = vand.u32 %v1339, 4294901760
      %v1850 = vsub.f32 %v1339, %v1849
      %1851 = vmatpush1.msra.mxu0 %v1850
      %1852 = vmatprep.subr.mxu0 0.0
      %1853 = vmatpush2.msra.mxu0 0.0
      %1854 = vmatprep.subr.mxu0 0.0
      %1855 = vmatpush2.msra.mxu0 0.0
      %1856 = vmatprep.subr.mxu0 0.0
      %1857 = vmatpush2.msra.mxu0 0.0
      %1858 = vmatprep.subr.mxu0 0.0
      %1859 = vmatpush2.msra.mxu0 0.0
      %1860 = vmatprep.subr.mxu0 0.0
      %1861 = vmatpush2.msra.mxu0 0.0
      %1862 = vmatprep.subr.mxu0 0.0
      %1863 = vmatpush2.msra.mxu0 0.0
      %1864 = vmatprep.subr.mxu0 0.0
      %1865 = vmatpush2.msra.mxu0 0.0
      %1866 = vmatprep.subr.mxu0 0.0
      %1867 = vmatpush2.msra.mxu0 0.0
      %1868 = vmatprep.subr.mxu0 0.0
      %1869 = vmatpush2.msra.mxu0 0.0
      %1870 = vmatprep.subr.mxu0 0.0
      %1871 = vmatpush2.msra.mxu0 0.0
      %1872 = vmatprep.subr.mxu0 0.0
      %1873 = vmatpush2.msra.mxu0 0.0
      %1874 = vmatprep.subr.mxu0 0.0
      %1875 = vmatpush2.msra.mxu0 0.0
      %1876 = vmatprep.subr.mxu0 0.0
      %1877 = vmatpush2.msra.mxu0 0.0
      %1878 = vmatprep.subr.mxu0 0.0
      %1879 = vmatpush2.msra.mxu0 0.0
      %1880 = vmatprep.subr.mxu0 0.0
      %1881 = vmatpush2.msra.mxu0 0.0
      %1882 = vmatprep.subr.mxu0 0.0
      %1883 = vmatpush2.msra.mxu0 0.0
      %1884 = vmatprep.mubr.f32.mxu0 0.0
      %v1885 = vand.u32 %v1355, 4294901760
      %v1886 = vsub.f32 %v1355, %v1885
      %1887 = vmatmul.mubr.f32.gmra.mxu0 %v1886
      %v1888 = vpop.f32.mrf.mxu0
      %v1889 = vadd.f32 %v1719, %v1888
      %v1890 = vpop.f32.mrf.mxu0
      %1891 = vmatprep.mubr.f32.mxu0 0.0
      %v1892 = vand.u32 %v1358, 4294901760
      %v1893 = vsub.f32 %v1358, %v1892
      %1894 = vmatmul.mubr.f32.gmra.mxu0 %v1893
      %v1895 = vpop.f32.mrf.mxu0
      %v1896 = vadd.f32 %v1725, %v1895
      %v1897 = vpop.f32.mrf.mxu0
      %1898 = vmatprep.mubr.f32.mxu0 0.0
      %v1899 = vand.u32 %v1361, 4294901760
      %v1900 = vsub.f32 %v1361, %v1899
      %1901 = vmatmul.mubr.f32.gmra.mxu0 %v1900
      %v1902 = vpop.f32.mrf.mxu0
      %v1903 = vadd.f32 %v1731, %v1902
      %v1904 = vpop.f32.mrf.mxu0
      %1905 = vmatprep.mubr.f32.mxu0 0.0
      %v1906 = vand.u32 %v1364, 4294901760
      %v1907 = vsub.f32 %v1364, %v1906
      %1908 = vmatmul.mubr.f32.gmra.mxu0 %v1907
      %v1909 = vpop.f32.mrf.mxu0
      %v1910 = vadd.f32 %v1737, %v1909
      %v1911 = vpop.f32.mrf.mxu0
      %1912 = vmatprep.mubr.f32.mxu0 0.0
      %v1913 = vand.u32 %v1367, 4294901760
      %v1914 = vsub.f32 %v1367, %v1913
      %1915 = vmatmul.mubr.f32.gmra.mxu0 %v1914
      %v1916 = vpop.f32.mrf.mxu0
      %v1917 = vadd.f32 %v1743, %v1916
      %v1918 = vpop.f32.mrf.mxu0
      %1919 = vmatprep.mubr.f32.mxu0 0.0
      %v1920 = vand.u32 %v1370, 4294901760
      %v1921 = vsub.f32 %v1370, %v1920
      %1922 = vmatmul.mubr.f32.gmra.mxu0 %v1921
      %v1923 = vpop.f32.mrf.mxu0
      %v1924 = vadd.f32 %v1749, %v1923
      %v1925 = vpop.f32.mrf.mxu0
      %1926 = vmatprep.mubr.f32.mxu0 0.0
      %v1927 = vand.u32 %v1373, 4294901760
      %v1928 = vsub.f32 %v1373, %v1927
      %1929 = vmatmul.mubr.f32.gmra.mxu0 %v1928
      %v1930 = vpop.f32.mrf.mxu0
      %v1931 = vadd.f32 %v1755, %v1930
      %v1932 = vpop.f32.mrf.mxu0
      %1933 = vmatprep.mubr.f32.mxu0 0.0
      %v1934 = vand.u32 %v1376, 4294901760
      %v1935 = vsub.f32 %v1376, %v1934
      %1936 = vmatmul.mubr.f32.gmra.mxu0 %v1935
      %v1937 = vpop.f32.mrf.mxu0
      %v1938 = vadd.f32 %v1761, %v1937
      %v1939 = vpop.f32.mrf.mxu0
      %1940 = vmatprep.mubr.f32.mxu0 0.0
      %v1941 = vand.u32 %v1379, 4294901760
      %v1942 = vsub.f32 %v1379, %v1941
      %1943 = vmatmul.mubr.f32.gmra.mxu0 %v1942
      %v1944 = vpop.f32.mrf.mxu0
      %v1945 = vadd.f32 %v1767, %v1944
      %v1946 = vpop.f32.mrf.mxu0
      %1947 = vmatprep.mubr.f32.mxu0 0.0
      %v1948 = vand.u32 %v1382, 4294901760
      %v1949 = vsub.f32 %v1382, %v1948
      %1950 = vmatmul.mubr.f32.gmra.mxu0 %v1949
      %v1951 = vpop.f32.mrf.mxu0
      %v1952 = vadd.f32 %v1773, %v1951
      %v1953 = vpop.f32.mrf.mxu0
      %1954 = vmatprep.mubr.f32.mxu0 0.0
      %v1955 = vand.u32 %v1385, 4294901760
      %v1956 = vsub.f32 %v1385, %v1955
      %1957 = vmatmul.mubr.f32.gmra.mxu0 %v1956
      %v1958 = vpop.f32.mrf.mxu0
      %v1959 = vadd.f32 %v1779, %v1958
      %v1960 = vpop.f32.mrf.mxu0
      %1961 = vmatprep.mubr.f32.mxu0 0.0
      %v1962 = vand.u32 %v1388, 4294901760
      %v1963 = vsub.f32 %v1388, %v1962
      %1964 = vmatmul.mubr.f32.gmra.mxu0 %v1963
      %v1965 = vpop.f32.mrf.mxu0
      %v1966 = vadd.f32 %v1785, %v1965
      %v1967 = vpop.f32.mrf.mxu0
      %1968 = vmatprep.mubr.f32.mxu0 0.0
      %v1969 = vand.u32 %v1391, 4294901760
      %v1970 = vsub.f32 %v1391, %v1969
      %1971 = vmatmul.mubr.f32.gmra.mxu0 %v1970
      %v1972 = vpop.f32.mrf.mxu0
      %v1973 = vadd.f32 %v1791, %v1972
      %v1974 = vpop.f32.mrf.mxu0
      %1975 = vmatprep.mubr.f32.mxu0 0.0
      %v1976 = vand.u32 %v1394, 4294901760
      %v1977 = vsub.f32 %v1394, %v1976
      %1978 = vmatmul.mubr.f32.gmra.mxu0 %v1977
      %v1979 = vpop.f32.mrf.mxu0
      %v1980 = vadd.f32 %v1797, %v1979
      %v1981 = vpop.f32.mrf.mxu0
      %1982 = vmatprep.mubr.f32.mxu0 0.0
      %v1983 = vand.u32 %v1397, 4294901760
      %v1984 = vsub.f32 %v1397, %v1983
      %1985 = vmatmul.mubr.f32.gmra.mxu0 %v1984
      %v1986 = vpop.f32.mrf.mxu0
      %v1987 = vadd.f32 %v1803, %v1986
      %v1988 = vpop.f32.mrf.mxu0
      %1989 = vmatprep.mubr.f32.mxu0 0.0
      %v1990 = vand.u32 %v1400, 4294901760
      %v1991 = vsub.f32 %v1400, %v1990
      %1992 = vmatmul.mubr.f32.gmra.mxu0 %v1991
      %v1993 = vpop.f32.mrf.mxu0
      %v1994 = vadd.f32 %v1809, %v1993
      %v1995 = vpop.f32.mrf.mxu0
      %1996 = vdwg.mxu0
      %1997 = vmatprep.subr.mxu0 0.0
      %1998 = vmatpush1.msra.mxu0 0.0
      %1999 = vmatprep.subr.mxu0 0.0
      %2000 = vmatpush1.msra.mxu0 0.0
      %2001 = vmatprep.subr.mxu0 0.0
      %2002 = vmatpush1.msra.mxu0 0.0
      %2003 = vmatprep.subr.mxu0 0.0
      %2004 = vmatpush1.msra.mxu0 0.0
      %2005 = vmatprep.subr.mxu0 0.0
      %2006 = vmatpush1.msra.mxu0 0.0
      %2007 = vmatprep.subr.mxu0 0.0
      %2008 = vmatpush1.msra.mxu0 0.0
      %2009 = vmatprep.subr.mxu0 0.0
      %2010 = vmatpush1.msra.mxu0 0.0
      %2011 = vmatprep.subr.mxu0 0.0
      %2012 = vmatpush1.msra.mxu0 0.0
      %2013 = vmatprep.subr.mxu0 0.0
      %2014 = vmatpush1.msra.mxu0 0.0
      %2015 = vmatprep.subr.mxu0 0.0
      %2016 = vmatpush1.msra.mxu0 0.0
      %2017 = vmatprep.subr.mxu0 0.0
      %2018 = vmatpush1.msra.mxu0 0.0
      %2019 = vmatprep.subr.mxu0 0.0
      %2020 = vmatpush1.msra.mxu0 0.0
      %2021 = vmatprep.subr.mxu0 0.0
      %v2022 = vand.u32 %v1342, 4294901760
      %2023 = vmatpush1.msra.mxu0 %v2022
      %2024 = vmatprep.subr.mxu0 0.0
      %v2025 = vand.u32 %v1341, 4294901760
      %2026 = vmatpush1.msra.mxu0 %v2025
      %2027 = vmatprep.subr.mxu0 0.0
      %v2028 = vand.u32 %v1340, 4294901760
      %2029 = vmatpush1.msra.mxu0 %v2028
      %2030 = vmatprep.subr.mxu0 0.0
      %v2031 = vand.u32 %v1339, 4294901760
      %2032 = vmatpush1.msra.mxu0 %v2031
      %2033 = vmatprep.subr.mxu0 0.0
      %2034 = vmatpush2.msra.mxu0 0.0
      %2035 = vmatprep.subr.mxu0 0.0
      %2036 = vmatpush2.msra.mxu0 0.0
      %2037 = vmatprep.subr.mxu0 0.0
      %2038 = vmatpush2.msra.mxu0 0.0
      %2039 = vmatprep.subr.mxu0 0.0
      %2040 = vmatpush2.msra.mxu0 0.0
      %2041 = vmatprep.subr.mxu0 0.0
      %2042 = vmatpush2.msra.mxu0 0.0
      %2043 = vmatprep.subr.mxu0 0.0
      %2044 = vmatpush2.msra.mxu0 0.0
      %2045 = vmatprep.subr.mxu0 0.0
      %2046 = vmatpush2.msra.mxu0 0.0
      %2047 = vmatprep.subr.mxu0 0.0
      %2048 = vmatpush2.msra.mxu0 0.0
      %2049 = vmatprep.subr.mxu0 0.0
      %2050 = vmatpush2.msra.mxu0 0.0
      %2051 = vmatprep.subr.mxu0 0.0
      %2052 = vmatpush2.msra.mxu0 0.0
      %2053 = vmatprep.subr.mxu0 0.0
      %2054 = vmatpush2.msra.mxu0 0.0
      %2055 = vmatprep.subr.mxu0 0.0
      %2056 = vmatpush2.msra.mxu0 0.0
      %2057 = vmatprep.subr.mxu0 0.0
      %2058 = vmatpush2.msra.mxu0 0.0
      %2059 = vmatprep.subr.mxu0 0.0
      %2060 = vmatpush2.msra.mxu0 0.0
      %2061 = vmatprep.subr.mxu0 0.0
      %2062 = vmatpush2.msra.mxu0 0.0
      %2063 = vmatprep.subr.mxu0 0.0
      %2064 = vmatpush2.msra.mxu0 0.0
      %2065 = vmatprep.mubr.f32.mxu0 0.0
      %v2066 = vand.u32 %v1355, 4294901760
      %v2067 = vsub.f32 %v1355, %v2066
      %v2068 = vand.u32 %v2067, 4294901760
      %2069 = vmatmul.mubr.f32.gmra.mxu0 %v2068
      %v2070 = vpop.f32.mrf.mxu0
      %v2071 = vadd.f32 %v1889, %v2070
      %v2072 = vpop.f32.mrf.mxu0
      %2073 = vmatprep.mubr.f32.mxu0 0.0
      %v2074 = vand.u32 %v1358, 4294901760
      %v2075 = vsub.f32 %v1358, %v2074
      %v2076 = vand.u32 %v2075, 4294901760
      %2077 = vmatmul.mubr.f32.gmra.mxu0 %v2076
      %v2078 = vpop.f32.mrf.mxu0
      %v2079 = vadd.f32 %v1896, %v2078
      %v2080 = vpop.f32.mrf.mxu0
      %2081 = vmatprep.mubr.f32.mxu0 0.0
      %v2082 = vand.u32 %v1361, 4294901760
      %v2083 = vsub.f32 %v1361, %v2082
      %v2084 = vand.u32 %v2083, 4294901760
      %2085 = vmatmul.mubr.f32.gmra.mxu0 %v2084
      %v2086 = vpop.f32.mrf.mxu0
      %v2087 = vadd.f32 %v1903, %v2086
      %v2088 = vpop.f32.mrf.mxu0
      %2089 = vmatprep.mubr.f32.mxu0 0.0
      %v2090 = vand.u32 %v1364, 4294901760
      %v2091 = vsub.f32 %v1364, %v2090
      %v2092 = vand.u32 %v2091, 4294901760
      %2093 = vmatmul.mubr.f32.gmra.mxu0 %v2092
      %v2094 = vpop.f32.mrf.mxu0
      %v2095 = vadd.f32 %v1910, %v2094
      %v2096 = vpop.f32.mrf.mxu0
      %2097 = vmatprep.mubr.f32.mxu0 0.0
      %v2098 = vand.u32 %v1367, 4294901760
      %v2099 = vsub.f32 %v1367, %v2098
      %v2100 = vand.u32 %v2099, 4294901760
      %2101 = vmatmul.mubr.f32.gmra.mxu0 %v2100
      %v2102 = vpop.f32.mrf.mxu0
      %v2103 = vadd.f32 %v1917, %v2102
      %v2104 = vpop.f32.mrf.mxu0
      %2105 = vmatprep.mubr.f32.mxu0 0.0
      %v2106 = vand.u32 %v1370, 4294901760
      %v2107 = vsub.f32 %v1370, %v2106
      %v2108 = vand.u32 %v2107, 4294901760
      %2109 = vmatmul.mubr.f32.gmra.mxu0 %v2108
      %v2110 = vpop.f32.mrf.mxu0
      %v2111 = vadd.f32 %v1924, %v2110
      %v2112 = vpop.f32.mrf.mxu0
      %2113 = vmatprep.mubr.f32.mxu0 0.0
      %v2114 = vand.u32 %v1373, 4294901760
      %v2115 = vsub.f32 %v1373, %v2114
      %v2116 = vand.u32 %v2115, 4294901760
      %2117 = vmatmul.mubr.f32.gmra.mxu0 %v2116
      %v2118 = vpop.f32.mrf.mxu0
      %v2119 = vadd.f32 %v1931, %v2118
      %v2120 = vpop.f32.mrf.mxu0
      %2121 = vmatprep.mubr.f32.mxu0 0.0
      %v2122 = vand.u32 %v1376, 4294901760
      %v2123 = vsub.f32 %v1376, %v2122
      %v2124 = vand.u32 %v2123, 4294901760
      %2125 = vmatmul.mubr.f32.gmra.mxu0 %v2124
      %v2126 = vpop.f32.mrf.mxu0
      %v2127 = vadd.f32 %v1938, %v2126
      %v2128 = vpop.f32.mrf.mxu0
      %2129 = vmatprep.mubr.f32.mxu0 0.0
      %v2130 = vand.u32 %v1379, 4294901760
      %v2131 = vsub.f32 %v1379, %v2130
      %v2132 = vand.u32 %v2131, 4294901760
      %2133 = vmatmul.mubr.f32.gmra.mxu0 %v2132
      %v2134 = vpop.f32.mrf.mxu0
      %v2135 = vadd.f32 %v1945, %v2134
      %v2136 = vpop.f32.mrf.mxu0
      %2137 = vmatprep.mubr.f32.mxu0 0.0
      %v2138 = vand.u32 %v1382, 4294901760
      %v2139 = vsub.f32 %v1382, %v2138
      %v2140 = vand.u32 %v2139, 4294901760
      %2141 = vmatmul.mubr.f32.gmra.mxu0 %v2140
      %v2142 = vpop.f32.mrf.mxu0
      %v2143 = vadd.f32 %v1952, %v2142
      %v2144 = vpop.f32.mrf.mxu0
      %2145 = vmatprep.mubr.f32.mxu0 0.0
      %v2146 = vand.u32 %v1385, 4294901760
      %v2147 = vsub.f32 %v1385, %v2146
      %v2148 = vand.u32 %v2147, 4294901760
      %2149 = vmatmul.mubr.f32.gmra.mxu0 %v2148
      %v2150 = vpop.f32.mrf.mxu0
      %v2151 = vadd.f32 %v1959, %v2150
      %v2152 = vpop.f32.mrf.mxu0
      %2153 = vmatprep.mubr.f32.mxu0 0.0
      %v2154 = vand.u32 %v1388, 4294901760
      %v2155 = vsub.f32 %v1388, %v2154
      %v2156 = vand.u32 %v2155, 4294901760
      %2157 = vmatmul.mubr.f32.gmra.mxu0 %v2156
      %v2158 = vpop.f32.mrf.mxu0
      %v2159 = vadd.f32 %v1966, %v2158
      %v2160 = vpop.f32.mrf.mxu0
      %2161 = vmatprep.mubr.f32.mxu0 0.0
      %v2162 = vand.u32 %v1391, 4294901760
      %v2163 = vsub.f32 %v1391, %v2162
      %v2164 = vand.u32 %v2163, 4294901760
      %2165 = vmatmul.mubr.f32.gmra.mxu0 %v2164
      %v2166 = vpop.f32.mrf.mxu0
      %v2167 = vadd.f32 %v1973, %v2166
      %v2168 = vpop.f32.mrf.mxu0
      %2169 = vmatprep.mubr.f32.mxu0 0.0
      %v2170 = vand.u32 %v1394, 4294901760
      %v2171 = vsub.f32 %v1394, %v2170
      %v2172 = vand.u32 %v2171, 4294901760
      %2173 = vmatmul.mubr.f32.gmra.mxu0 %v2172
      %v2174 = vpop.f32.mrf.mxu0
      %v2175 = vadd.f32 %v1980, %v2174
      %v2176 = vpop.f32.mrf.mxu0
      %2177 = vmatprep.mubr.f32.mxu0 0.0
      %v2178 = vand.u32 %v1397, 4294901760
      %v2179 = vsub.f32 %v1397, %v2178
      %v2180 = vand.u32 %v2179, 4294901760
      %2181 = vmatmul.mubr.f32.gmra.mxu0 %v2180
      %v2182 = vpop.f32.mrf.mxu0
      %v2183 = vadd.f32 %v1987, %v2182
      %v2184 = vpop.f32.mrf.mxu0
      %2185 = vmatprep.mubr.f32.mxu0 0.0
      %v2186 = vand.u32 %v1400, 4294901760
      %v2187 = vsub.f32 %v1400, %v2186
      %v2188 = vand.u32 %v2187, 4294901760
      %2189 = vmatmul.mubr.f32.gmra.mxu0 %v2188
      %v2190 = vpop.f32.mrf.mxu0
      %v2191 = vadd.f32 %v1994, %v2190
      %v2192 = vpop.f32.mrf.mxu0
      %2193 = vdwg.mxu0
      %2194 = vmatprep.subr.mxu0 0.0
      %2195 = vmatpush1.msra.mxu0 0.0
      %2196 = vmatprep.subr.mxu0 0.0
      %2197 = vmatpush1.msra.mxu0 0.0
      %2198 = vmatprep.subr.mxu0 0.0
      %2199 = vmatpush1.msra.mxu0 0.0
      %2200 = vmatprep.subr.mxu0 0.0
      %2201 = vmatpush1.msra.mxu0 0.0
      %2202 = vmatprep.subr.mxu0 0.0
      %2203 = vmatpush1.msra.mxu0 0.0
      %2204 = vmatprep.subr.mxu0 0.0
      %2205 = vmatpush1.msra.mxu0 0.0
      %2206 = vmatprep.subr.mxu0 0.0
      %2207 = vmatpush1.msra.mxu0 0.0
      %2208 = vmatprep.subr.mxu0 0.0
      %2209 = vmatpush1.msra.mxu0 0.0
      %2210 = vmatprep.subr.mxu0 0.0
      %2211 = vmatpush1.msra.mxu0 0.0
      %2212 = vmatprep.subr.mxu0 0.0
      %2213 = vmatpush1.msra.mxu0 0.0
      %2214 = vmatprep.subr.mxu0 0.0
      %2215 = vmatpush1.msra.mxu0 0.0
      %2216 = vmatprep.subr.mxu0 0.0
      %2217 = vmatpush1.msra.mxu0 0.0
      %2218 = vmatprep.subr.mxu0 0.0
      %v2219 = vand.u32 %v1342, 4294901760
      %v2220 = vsub.f32 %v1342, %v2219
      %v2221 = vand.u32 %v2220, 4294901760
      %2222 = vmatpush1.msra.mxu0 %v2221
      %2223 = vmatprep.subr.mxu0 0.0
      %v2224 = vand.u32 %v1341, 4294901760
      %v2225 = vsub.f32 %v1341, %v2224
      %v2226 = vand.u32 %v2225, 4294901760
      %2227 = vmatpush1.msra.mxu0 %v2226
      %2228 = vmatprep.subr.mxu0 0.0
      %v2229 = vand.u32 %v1340, 4294901760
      %v2230 = vsub.f32 %v1340, %v2229
      %v2231 = vand.u32 %v2230, 4294901760
      %2232 = vmatpush1.msra.mxu0 %v2231
      %2233 = vmatprep.subr.mxu0 0.0
      %v2234 = vand.u32 %v1339, 4294901760
      %v2235 = vsub.f32 %v1339, %v2234
      %v2236 = vand.u32 %v2235, 4294901760
      %2237 = vmatpush1.msra.mxu0 %v2236
      %2238 = vmatprep.subr.mxu0 0.0
      %2239 = vmatpush2.msra.mxu0 0.0
      %2240 = vmatprep.subr.mxu0 0.0
      %2241 = vmatpush2.msra.mxu0 0.0
      %2242 = vmatprep.subr.mxu0 0.0
      %2243 = vmatpush2.msra.mxu0 0.0
      %2244 = vmatprep.subr.mxu0 0.0
      %2245 = vmatpush2.msra.mxu0 0.0
      %2246 = vmatprep.subr.mxu0 0.0
      %2247 = vmatpush2.msra.mxu0 0.0
      %2248 = vmatprep.subr.mxu0 0.0
      %2249 = vmatpush2.msra.mxu0 0.0
      %2250 = vmatprep.subr.mxu0 0.0
      %2251 = vmatpush2.msra.mxu0 0.0
      %2252 = vmatprep.subr.mxu0 0.0
      %2253 = vmatpush2.msra.mxu0 0.0
      %2254 = vmatprep.subr.mxu0 0.0
      %2255 = vmatpush2.msra.mxu0 0.0
      %2256 = vmatprep.subr.mxu0 0.0
      %2257 = vmatpush2.msra.mxu0 0.0
      %2258 = vmatprep.subr.mxu0 0.0
      %2259 = vmatpush2.msra.mxu0 0.0
      %2260 = vmatprep.subr.mxu0 0.0
      %2261 = vmatpush2.msra.mxu0 0.0
      %2262 = vmatprep.subr.mxu0 0.0
      %2263 = vmatpush2.msra.mxu0 0.0
      %2264 = vmatprep.subr.mxu0 0.0
      %2265 = vmatpush2.msra.mxu0 0.0
      %2266 = vmatprep.subr.mxu0 0.0
      %2267 = vmatpush2.msra.mxu0 0.0
      %2268 = vmatprep.subr.mxu0 0.0
      %2269 = vmatpush2.msra.mxu0 0.0
      %2270 = vmatprep.mubr.f32.mxu0 0.0
      %v2271 = vand.u32 %v1355, 4294901760
      %2272 = vmatmul.mubr.f32.gmra.mxu0 %v2271
      %v2273 = vpop.f32.mrf.mxu0
      %v2274 = vadd.f32 %v2071, %v2273
      %v2275 = vpop.f32.mrf.mxu0
      %2276 = vmatprep.mubr.f32.mxu0 0.0
      %v2277 = vand.u32 %v1358, 4294901760
      %2278 = vmatmul.mubr.f32.gmra.mxu0 %v2277
      %v2279 = vpop.f32.mrf.mxu0
      %v2280 = vadd.f32 %v2079, %v2279
      %v2281 = vpop.f32.mrf.mxu0
      %2282 = vmatprep.mubr.f32.mxu0 0.0
      %v2283 = vand.u32 %v1361, 4294901760
      %2284 = vmatmul.mubr.f32.gmra.mxu0 %v2283
      %v2285 = vpop.f32.mrf.mxu0
      %v2286 = vadd.f32 %v2087, %v2285
      %v2287 = vpop.f32.mrf.mxu0
      %2288 = vmatprep.mubr.f32.mxu0 0.0
      %v2289 = vand.u32 %v1364, 4294901760
      %2290 = vmatmul.mubr.f32.gmra.mxu0 %v2289
      %v2291 = vpop.f32.mrf.mxu0
      %v2292 = vadd.f32 %v2095, %v2291
      %v2293 = vpop.f32.mrf.mxu0
      %2294 = vmatprep.mubr.f32.mxu0 0.0
      %v2295 = vand.u32 %v1367, 4294901760
      %2296 = vmatmul.mubr.f32.gmra.mxu0 %v2295
      %v2297 = vpop.f32.mrf.mxu0
      %v2298 = vadd.f32 %v2103, %v2297
      %v2299 = vpop.f32.mrf.mxu0
      %2300 = vmatprep.mubr.f32.mxu0 0.0
      %v2301 = vand.u32 %v1370, 4294901760
      %2302 = vmatmul.mubr.f32.gmra.mxu0 %v2301
      %v2303 = vpop.f32.mrf.mxu0
      %v2304 = vadd.f32 %v2111, %v2303
      %v2305 = vpop.f32.mrf.mxu0
      %2306 = vmatprep.mubr.f32.mxu0 0.0
      %v2307 = vand.u32 %v1373, 4294901760
      %2308 = vmatmul.mubr.f32.gmra.mxu0 %v2307
      %v2309 = vpop.f32.mrf.mxu0
      %v2310 = vadd.f32 %v2119, %v2309
      %v2311 = vpop.f32.mrf.mxu0
      %2312 = vmatprep.mubr.f32.mxu0 0.0
      %v2313 = vand.u32 %v1376, 4294901760
      %2314 = vmatmul.mubr.f32.gmra.mxu0 %v2313
      %v2315 = vpop.f32.mrf.mxu0
      %v2316 = vadd.f32 %v2127, %v2315
      %v2317 = vpop.f32.mrf.mxu0
      %2318 = vmatprep.mubr.f32.mxu0 0.0
      %v2319 = vand.u32 %v1379, 4294901760
      %2320 = vmatmul.mubr.f32.gmra.mxu0 %v2319
      %v2321 = vpop.f32.mrf.mxu0
      %v2322 = vadd.f32 %v2135, %v2321
      %v2323 = vpop.f32.mrf.mxu0
      %2324 = vmatprep.mubr.f32.mxu0 0.0
      %v2325 = vand.u32 %v1382, 4294901760
      %2326 = vmatmul.mubr.f32.gmra.mxu0 %v2325
      %v2327 = vpop.f32.mrf.mxu0
      %v2328 = vadd.f32 %v2143, %v2327
      %v2329 = vpop.f32.mrf.mxu0
      %2330 = vmatprep.mubr.f32.mxu0 0.0
      %v2331 = vand.u32 %v1385, 4294901760
      %2332 = vmatmul.mubr.f32.gmra.mxu0 %v2331
      %v2333 = vpop.f32.mrf.mxu0
      %v2334 = vadd.f32 %v2151, %v2333
      %v2335 = vpop.f32.mrf.mxu0
      %2336 = vmatprep.mubr.f32.mxu0 0.0
      %v2337 = vand.u32 %v1388, 4294901760
      %2338 = vmatmul.mubr.f32.gmra.mxu0 %v2337
      %v2339 = vpop.f32.mrf.mxu0
      %v2340 = vadd.f32 %v2159, %v2339
      %v2341 = vpop.f32.mrf.mxu0
      %2342 = vmatprep.mubr.f32.mxu0 0.0
      %v2343 = vand.u32 %v1391, 4294901760
      %2344 = vmatmul.mubr.f32.gmra.mxu0 %v2343
      %v2345 = vpop.f32.mrf.mxu0
      %v2346 = vadd.f32 %v2167, %v2345
      %v2347 = vpop.f32.mrf.mxu0
      %2348 = vmatprep.mubr.f32.mxu0 0.0
      %v2349 = vand.u32 %v1394, 4294901760
      %2350 = vmatmul.mubr.f32.gmra.mxu0 %v2349
      %v2351 = vpop.f32.mrf.mxu0
      %v2352 = vadd.f32 %v2175, %v2351
      %v2353 = vpop.f32.mrf.mxu0
      %2354 = vmatprep.mubr.f32.mxu0 0.0
      %v2355 = vand.u32 %v1397, 4294901760
      %2356 = vmatmul.mubr.f32.gmra.mxu0 %v2355
      %v2357 = vpop.f32.mrf.mxu0
      %v2358 = vadd.f32 %v2183, %v2357
      %v2359 = vpop.f32.mrf.mxu0
      %2360 = vmatprep.mubr.f32.mxu0 0.0
      %v2361 = vand.u32 %v1400, 4294901760
      %2362 = vmatmul.mubr.f32.gmra.mxu0 %v2361
      %v2363 = vpop.f32.mrf.mxu0
      %v2364 = vadd.f32 %v2191, %v2363
      %v2365 = vpop.f32.mrf.mxu0
      %2366 = vdwg.mxu0
      %2367 = vmatprep.subr.mxu0 0.0
      %2368 = vmatpush1.msra.mxu0 0.0
      %2369 = vmatprep.subr.mxu0 0.0
      %2370 = vmatpush1.msra.mxu0 0.0
      %2371 = vmatprep.subr.mxu0 0.0
      %2372 = vmatpush1.msra.mxu0 0.0
      %2373 = vmatprep.subr.mxu0 0.0
      %2374 = vmatpush1.msra.mxu0 0.0
      %2375 = vmatprep.subr.mxu0 0.0
      %2376 = vmatpush1.msra.mxu0 0.0
      %2377 = vmatprep.subr.mxu0 0.0
      %2378 = vmatpush1.msra.mxu0 0.0
      %2379 = vmatprep.subr.mxu0 0.0
      %2380 = vmatpush1.msra.mxu0 0.0
      %2381 = vmatprep.subr.mxu0 0.0
      %2382 = vmatpush1.msra.mxu0 0.0
      %2383 = vmatprep.subr.mxu0 0.0
      %2384 = vmatpush1.msra.mxu0 0.0
      %2385 = vmatprep.subr.mxu0 0.0
      %2386 = vmatpush1.msra.mxu0 0.0
      %2387 = vmatprep.subr.mxu0 0.0
      %2388 = vmatpush1.msra.mxu0 0.0
      %2389 = vmatprep.subr.mxu0 0.0
      %2390 = vmatpush1.msra.mxu0 0.0
      %2391 = vmatprep.subr.mxu0 0.0
      %v2392 = vand.u32 %v1342, 4294901760
      %2393 = vmatpush1.msra.mxu0 %v2392
      %2394 = vmatprep.subr.mxu0 0.0
      %v2395 = vand.u32 %v1341, 4294901760
      %2396 = vmatpush1.msra.mxu0 %v2395
      %2397 = vmatprep.subr.mxu0 0.0
      %v2398 = vand.u32 %v1340, 4294901760
      %2399 = vmatpush1.msra.mxu0 %v2398
      %2400 = vmatprep.subr.mxu0 0.0
      %v2401 = vand.u32 %v1339, 4294901760
      %2402 = vmatpush1.msra.mxu0 %v2401
      %2403 = vmatprep.subr.mxu0 0.0
      %2404 = vmatpush2.msra.mxu0 0.0
      %2405 = vmatprep.subr.mxu0 0.0
      %2406 = vmatpush2.msra.mxu0 0.0
      %2407 = vmatprep.subr.mxu0 0.0
      %2408 = vmatpush2.msra.mxu0 0.0
      %2409 = vmatprep.subr.mxu0 0.0
      %2410 = vmatpush2.msra.mxu0 0.0
      %2411 = vmatprep.subr.mxu0 0.0
      %2412 = vmatpush2.msra.mxu0 0.0
      %2413 = vmatprep.subr.mxu0 0.0
      %2414 = vmatpush2.msra.mxu0 0.0
      %2415 = vmatprep.subr.mxu0 0.0
      %2416 = vmatpush2.msra.mxu0 0.0
      %2417 = vmatprep.subr.mxu0 0.0
      %2418 = vmatpush2.msra.mxu0 0.0
      %2419 = vmatprep.subr.mxu0 0.0
      %2420 = vmatpush2.msra.mxu0 0.0
      %2421 = vmatprep.subr.mxu0 0.0
      %2422 = vmatpush2.msra.mxu0 0.0
      %2423 = vmatprep.subr.mxu0 0.0
      %2424 = vmatpush2.msra.mxu0 0.0
      %2425 = vmatprep.subr.mxu0 0.0
      %2426 = vmatpush2.msra.mxu0 0.0
      %2427 = vmatprep.subr.mxu0 0.0
      %2428 = vmatpush2.msra.mxu0 0.0
      %2429 = vmatprep.subr.mxu0 0.0
      %2430 = vmatpush2.msra.mxu0 0.0
      %2431 = vmatprep.subr.mxu0 0.0
      %2432 = vmatpush2.msra.mxu0 0.0
      %2433 = vmatprep.subr.mxu0 0.0
      %2434 = vmatpush2.msra.mxu0 0.0
      %2435 = vmatprep.mubr.f32.mxu0 0.0
      %v2436 = vand.u32 %v1355, 4294901760
      %2437 = vmatmul.mubr.f32.gmra.mxu0 %v2436
      %v2438 = vpop.f32.mrf.mxu0
      %v2439 = vadd.f32 %v2274, %v2438
      %v2440 = vpop.f32.mrf.mxu0
      %2441 = vmatprep.mubr.f32.mxu0 0.0
      %v2442 = vand.u32 %v1358, 4294901760
      %2443 = vmatmul.mubr.f32.gmra.mxu0 %v2442
      %v2444 = vpop.f32.mrf.mxu0
      %v2445 = vadd.f32 %v2280, %v2444
      %v2446 = vpop.f32.mrf.mxu0
      %2447 = vmatprep.mubr.f32.mxu0 0.0
      %v2448 = vand.u32 %v1361, 4294901760
      %2449 = vmatmul.mubr.f32.gmra.mxu0 %v2448
      %v2450 = vpop.f32.mrf.mxu0
      %v2451 = vadd.f32 %v2286, %v2450
      %v2452 = vpop.f32.mrf.mxu0
      %2453 = vmatprep.mubr.f32.mxu0 0.0
      %v2454 = vand.u32 %v1364, 4294901760
      %2455 = vmatmul.mubr.f32.gmra.mxu0 %v2454
      %v2456 = vpop.f32.mrf.mxu0
      %v2457 = vadd.f32 %v2292, %v2456
      %v2458 = vpop.f32.mrf.mxu0
      %2459 = vmatprep.mubr.f32.mxu0 0.0
      %v2460 = vand.u32 %v1367, 4294901760
      %2461 = vmatmul.mubr.f32.gmra.mxu0 %v2460
      %v2462 = vpop.f32.mrf.mxu0
      %v2463 = vadd.f32 %v2298, %v2462
      %v2464 = vpop.f32.mrf.mxu0
      %2465 = vmatprep.mubr.f32.mxu0 0.0
      %v2466 = vand.u32 %v1370, 4294901760
      %2467 = vmatmul.mubr.f32.gmra.mxu0 %v2466
      %v2468 = vpop.f32.mrf.mxu0
      %v2469 = vadd.f32 %v2304, %v2468
      %v2470 = vpop.f32.mrf.mxu0
      %2471 = vmatprep.mubr.f32.mxu0 0.0
      %v2472 = vand.u32 %v1373, 4294901760
      %2473 = vmatmul.mubr.f32.gmra.mxu0 %v2472
      %v2474 = vpop.f32.mrf.mxu0
      %v2475 = vadd.f32 %v2310, %v2474
      %v2476 = vpop.f32.mrf.mxu0
      %2477 = vmatprep.mubr.f32.mxu0 0.0
      %v2478 = vand.u32 %v1376, 4294901760
      %2479 = vmatmul.mubr.f32.gmra.mxu0 %v2478
      %v2480 = vpop.f32.mrf.mxu0
      %v2481 = vadd.f32 %v2316, %v2480
      %v2482 = vpop.f32.mrf.mxu0
      %2483 = vmatprep.mubr.f32.mxu0 0.0
      %v2484 = vand.u32 %v1379, 4294901760
      %2485 = vmatmul.mubr.f32.gmra.mxu0 %v2484
      %v2486 = vpop.f32.mrf.mxu0
      %v2487 = vadd.f32 %v2322, %v2486
      %v2488 = vpop.f32.mrf.mxu0
      %2489 = vmatprep.mubr.f32.mxu0 0.0
      %v2490 = vand.u32 %v1382, 4294901760
      %2491 = vmatmul.mubr.f32.gmra.mxu0 %v2490
      %v2492 = vpop.f32.mrf.mxu0
      %v2493 = vadd.f32 %v2328, %v2492
      %v2494 = vpop.f32.mrf.mxu0
      %2495 = vmatprep.mubr.f32.mxu0 0.0
      %v2496 = vand.u32 %v1385, 4294901760
      %2497 = vmatmul.mubr.f32.gmra.mxu0 %v2496
      %v2498 = vpop.f32.mrf.mxu0
      %v2499 = vadd.f32 %v2334, %v2498
      %v2500 = vpop.f32.mrf.mxu0
      %2501 = vmatprep.mubr.f32.mxu0 0.0
      %v2502 = vand.u32 %v1388, 4294901760
      %2503 = vmatmul.mubr.f32.gmra.mxu0 %v2502
      %v2504 = vpop.f32.mrf.mxu0
      %v2505 = vadd.f32 %v2340, %v2504
      %v2506 = vpop.f32.mrf.mxu0
      %2507 = vmatprep.mubr.f32.mxu0 0.0
      %v2508 = vand.u32 %v1391, 4294901760
      %2509 = vmatmul.mubr.f32.gmra.mxu0 %v2508
      %v2510 = vpop.f32.mrf.mxu0
      %v2511 = vadd.f32 %v2346, %v2510
      %v2512 = vpop.f32.mrf.mxu0
      %2513 = vmatprep.mubr.f32.mxu0 0.0
      %v2514 = vand.u32 %v1394, 4294901760
      %2515 = vmatmul.mubr.f32.gmra.mxu0 %v2514
      %v2516 = vpop.f32.mrf.mxu0
      %v2517 = vadd.f32 %v2352, %v2516
      %v2518 = vpop.f32.mrf.mxu0
      %2519 = vmatprep.mubr.f32.mxu0 0.0
      %v2520 = vand.u32 %v1397, 4294901760
      %2521 = vmatmul.mubr.f32.gmra.mxu0 %v2520
      %v2522 = vpop.f32.mrf.mxu0
      %v2523 = vadd.f32 %v2358, %v2522
      %v2524 = vpop.f32.mrf.mxu0
      %2525 = vmatprep.mubr.f32.mxu0 0.0
      %v2526 = vand.u32 %v1400, 4294901760
      %2527 = vmatmul.mubr.f32.gmra.mxu0 %v2526
      %v2528 = vpop.f32.mrf.mxu0
      %v2529 = vadd.f32 %v2364, %v2528
      %v2530 = vpop.f32.mrf.mxu0
      %2531 = vdwg.mxu0
      %v2532 = vmax.f32 %v2439, 0.0
      %v2533 = vmax.f32 %v2445, 0.0
      %v2534 = vmax.f32 %v2451, 0.0
      %v2535 = vmax.f32 %v2457, 0.0
      %v2536 = vmax.f32 %v2463, 0.0
      %v2537 = vmax.f32 %v2469, 0.0
      %v2538 = vmax.f32 %v2475, 0.0
      %v2539 = vmax.f32 %v2481, 0.0
      %v2540 = vmax.f32 %v2487, 0.0
      %v2541 = vmax.f32 %v2493, 0.0
      %v2542 = vmax.f32 %v2499, 0.0
      %v2543 = vmax.f32 %v2505, 0.0
      %v2544 = vmax.f32 %v2511, 0.0
      %v2545 = vmax.f32 %v2517, 0.0
      %v2546 = vmax.f32 %v2523, 0.0
      %v2547 = vmax.f32 %v2529, 0.0
      %v2548 = vlaneseq
      %v2549 = vshrl.u32 %v2548, 7
      %v2550 = vsub.s32 0, %v2549
      %v2551 = vrot.slane %v1348, %v2550
      %v2553 = vsel %vm1353, %v2532, 0
      %v2556 = vsel %vm1353, %v2533, 0
      %v2559 = vsel %vm1353, %v2534, 0
      %v2562 = vsel %vm1353, %v2535, 0
      %v2565 = vsel %vm1353, %v2536, 0
      %v2568 = vsel %vm1353, %v2537, 0
      %v2571 = vsel %vm1353, %v2538, 0
      %v2574 = vsel %vm1353, %v2539, 0
      %v2577 = vsel %vm1353, %v2540, 0
      %v2580 = vsel %vm1353, %v2541, 0
      %v2583 = vsel %vm1353, %v2542, 0
      %v2586 = vsel %vm1353, %v2543, 0
      %v2589 = vsel %vm1353, %v2544, 0
      %v2592 = vsel %vm1353, %v2545, 0
      %v2595 = vsel %vm1353, %v2546, 0
      %v2598 = vsel %vm1353, %v2547, 0
      %2600 = vmatprep.subr.mxu0 0.0
      %2601 = vmatpush1.msra.mxu0 0.0
      %2602 = vmatprep.subr.mxu0 0.0
      %2603 = vmatpush1.msra.mxu0 0.0
      %2604 = vmatprep.subr.mxu0 0.0
      %2605 = vmatpush1.msra.mxu0 0.0
      %2606 = vmatprep.subr.mxu0 0.0
      %2607 = vmatpush1.msra.mxu0 0.0
      %2608 = vmatprep.subr.mxu0 0.0
      %2609 = vmatpush1.msra.mxu0 0.0
      %2610 = vmatprep.subr.mxu0 0.0
      %2611 = vmatpush1.msra.mxu0 0.0
      %2612 = vmatprep.subr.mxu0 0.0
      %2613 = vmatpush1.msra.mxu0 0.0
      %2614 = vmatprep.subr.mxu0 0.0
      %2615 = vmatpush1.msra.mxu0 0.0
      %2616 = vmatprep.subr.mxu0 0.0
      %2617 = vmatpush1.msra.mxu0 0.0
      %2618 = vmatprep.subr.mxu0 0.0
      %2619 = vmatpush1.msra.mxu0 0.0
      %2620 = vmatprep.subr.mxu0 0.0
      %2621 = vmatpush1.msra.mxu0 0.0
      %2622 = vmatprep.subr.mxu0 0.0
      %2623 = vmatpush1.msra.mxu0 0.0
      %2624 = vmatprep.subr.mxu0 0.0
      %v2625 = vand.u32 %v1347, 4294901760
      %2626 = vmatpush1.msra.mxu0 %v2625
      %2627 = vmatprep.subr.mxu0 0.0
      %v2628 = vand.u32 %v1346, 4294901760
      %2629 = vmatpush1.msra.mxu0 %v2628
      %2630 = vmatprep.subr.mxu0 0.0
      %v2631 = vand.u32 %v1345, 4294901760
      %2632 = vmatpush1.msra.mxu0 %v2631
      %2633 = vmatprep.subr.mxu0 0.0
      %v2634 = vand.u32 %v1344, 4294901760
      %2635 = vmatpush1.msra.mxu0 %v2634
      %2636 = vmatprep.subr.mxu0 0.0
      %2637 = vmatpush2.msra.mxu0 0.0
      %2638 = vmatprep.subr.mxu0 0.0
      %2639 = vmatpush2.msra.mxu0 0.0
      %2640 = vmatprep.subr.mxu0 0.0
      %2641 = vmatpush2.msra.mxu0 0.0
      %2642 = vmatprep.subr.mxu0 0.0
      %2643 = vmatpush2.msra.mxu0 0.0
      %2644 = vmatprep.subr.mxu0 0.0
      %2645 = vmatpush2.msra.mxu0 0.0
      %2646 = vmatprep.subr.mxu0 0.0
      %2647 = vmatpush2.msra.mxu0 0.0
      %2648 = vmatprep.subr.mxu0 0.0
      %2649 = vmatpush2.msra.mxu0 0.0
      %2650 = vmatprep.subr.mxu0 0.0
      %2651 = vmatpush2.msra.mxu0 0.0
      %2652 = vmatprep.subr.mxu0 0.0
      %2653 = vmatpush2.msra.mxu0 0.0
      %2654 = vmatprep.subr.mxu0 0.0
      %2655 = vmatpush2.msra.mxu0 0.0
      %2656 = vmatprep.subr.mxu0 0.0
      %2657 = vmatpush2.msra.mxu0 0.0
      %2658 = vmatprep.subr.mxu0 0.0
      %2659 = vmatpush2.msra.mxu0 0.0
      %2660 = vmatprep.subr.mxu0 0.0
      %2661 = vmatpush2.msra.mxu0 0.0
      %2662 = vmatprep.subr.mxu0 0.0
      %2663 = vmatpush2.msra.mxu0 0.0
      %2664 = vmatprep.subr.mxu0 0.0
      %2665 = vmatpush2.msra.mxu0 0.0
      %2666 = vmatprep.subr.mxu0 0.0
      %2667 = vmatpush2.msra.mxu0 0.0
      %2668 = vmatprep.mubr.f32.mxu0 0.0
      %v2669 = vand.u32 %v2553, 4294901760
      %v2670 = vsub.f32 %v2553, %v2669
      %v2671 = vand.u32 %v2670, 4294901760
      %v2672 = vsub.f32 %v2670, %v2671
      %v2673 = vand.u32 %v2672, 4294901760
      %2674 = vmatmul.mubr.f32.gmra.mxu0 %v2673
      %v2675 = vpop.f32.mrf.mxu0
      %v2676 = vadd.f32 %v2551, %v2675
      %v2677 = vpop.f32.mrf.mxu0
      %2678 = vmatprep.mubr.f32.mxu0 0.0
      %v2679 = vand.u32 %v2556, 4294901760
      %v2680 = vsub.f32 %v2556, %v2679
      %v2681 = vand.u32 %v2680, 4294901760
      %v2682 = vsub.f32 %v2680, %v2681
      %v2683 = vand.u32 %v2682, 4294901760
      %2684 = vmatmul.mubr.f32.gmra.mxu0 %v2683
      %v2685 = vpop.f32.mrf.mxu0
      %v2686 = vadd.f32 %v2551, %v2685
      %v2687 = vpop.f32.mrf.mxu0
      %2688 = vmatprep.mubr.f32.mxu0 0.0
      %v2689 = vand.u32 %v2559, 4294901760
      %v2690 = vsub.f32 %v2559, %v2689
      %v2691 = vand.u32 %v2690, 4294901760
      %v2692 = vsub.f32 %v2690, %v2691
      %v2693 = vand.u32 %v2692, 4294901760
      %2694 = vmatmul.mubr.f32.gmra.mxu0 %v2693
      %v2695 = vpop.f32.mrf.mxu0
      %v2696 = vadd.f32 %v2551, %v2695
      %v2697 = vpop.f32.mrf.mxu0
      %2698 = vmatprep.mubr.f32.mxu0 0.0
      %v2699 = vand.u32 %v2562, 4294901760
      %v2700 = vsub.f32 %v2562, %v2699
      %v2701 = vand.u32 %v2700, 4294901760
      %v2702 = vsub.f32 %v2700, %v2701
      %v2703 = vand.u32 %v2702, 4294901760
      %2704 = vmatmul.mubr.f32.gmra.mxu0 %v2703
      %v2705 = vpop.f32.mrf.mxu0
      %v2706 = vadd.f32 %v2551, %v2705
      %v2707 = vpop.f32.mrf.mxu0
      %2708 = vmatprep.mubr.f32.mxu0 0.0
      %v2709 = vand.u32 %v2565, 4294901760
      %v2710 = vsub.f32 %v2565, %v2709
      %v2711 = vand.u32 %v2710, 4294901760
      %v2712 = vsub.f32 %v2710, %v2711
      %v2713 = vand.u32 %v2712, 4294901760
      %2714 = vmatmul.mubr.f32.gmra.mxu0 %v2713
      %v2715 = vpop.f32.mrf.mxu0
      %v2716 = vadd.f32 %v2551, %v2715
      %v2717 = vpop.f32.mrf.mxu0
      %2718 = vmatprep.mubr.f32.mxu0 0.0
      %v2719 = vand.u32 %v2568, 4294901760
      %v2720 = vsub.f32 %v2568, %v2719
      %v2721 = vand.u32 %v2720, 4294901760
      %v2722 = vsub.f32 %v2720, %v2721
      %v2723 = vand.u32 %v2722, 4294901760
      %2724 = vmatmul.mubr.f32.gmra.mxu0 %v2723
      %v2725 = vpop.f32.mrf.mxu0
      %v2726 = vadd.f32 %v2551, %v2725
      %v2727 = vpop.f32.mrf.mxu0
      %2728 = vmatprep.mubr.f32.mxu0 0.0
      %v2729 = vand.u32 %v2571, 4294901760
      %v2730 = vsub.f32 %v2571, %v2729
      %v2731 = vand.u32 %v2730, 4294901760
      %v2732 = vsub.f32 %v2730, %v2731
      %v2733 = vand.u32 %v2732, 4294901760
      %2734 = vmatmul.mubr.f32.gmra.mxu0 %v2733
      %v2735 = vpop.f32.mrf.mxu0
      %v2736 = vadd.f32 %v2551, %v2735
      %v2737 = vpop.f32.mrf.mxu0
      %2738 = vmatprep.mubr.f32.mxu0 0.0
      %v2739 = vand.u32 %v2574, 4294901760
      %v2740 = vsub.f32 %v2574, %v2739
      %v2741 = vand.u32 %v2740, 4294901760
      %v2742 = vsub.f32 %v2740, %v2741
      %v2743 = vand.u32 %v2742, 4294901760
      %2744 = vmatmul.mubr.f32.gmra.mxu0 %v2743
      %v2745 = vpop.f32.mrf.mxu0
      %v2746 = vadd.f32 %v2551, %v2745
      %v2747 = vpop.f32.mrf.mxu0
      %2748 = vmatprep.mubr.f32.mxu0 0.0
      %v2749 = vand.u32 %v2577, 4294901760
      %v2750 = vsub.f32 %v2577, %v2749
      %v2751 = vand.u32 %v2750, 4294901760
      %v2752 = vsub.f32 %v2750, %v2751
      %v2753 = vand.u32 %v2752, 4294901760
      %2754 = vmatmul.mubr.f32.gmra.mxu0 %v2753
      %v2755 = vpop.f32.mrf.mxu0
      %v2756 = vadd.f32 %v2551, %v2755
      %v2757 = vpop.f32.mrf.mxu0
      %2758 = vmatprep.mubr.f32.mxu0 0.0
      %v2759 = vand.u32 %v2580, 4294901760
      %v2760 = vsub.f32 %v2580, %v2759
      %v2761 = vand.u32 %v2760, 4294901760
      %v2762 = vsub.f32 %v2760, %v2761
      %v2763 = vand.u32 %v2762, 4294901760
      %2764 = vmatmul.mubr.f32.gmra.mxu0 %v2763
      %v2765 = vpop.f32.mrf.mxu0
      %v2766 = vadd.f32 %v2551, %v2765
      %v2767 = vpop.f32.mrf.mxu0
      %2768 = vmatprep.mubr.f32.mxu0 0.0
      %v2769 = vand.u32 %v2583, 4294901760
      %v2770 = vsub.f32 %v2583, %v2769
      %v2771 = vand.u32 %v2770, 4294901760
      %v2772 = vsub.f32 %v2770, %v2771
      %v2773 = vand.u32 %v2772, 4294901760
      %2774 = vmatmul.mubr.f32.gmra.mxu0 %v2773
      %v2775 = vpop.f32.mrf.mxu0
      %v2776 = vadd.f32 %v2551, %v2775
      %v2777 = vpop.f32.mrf.mxu0
      %2778 = vmatprep.mubr.f32.mxu0 0.0
      %v2779 = vand.u32 %v2586, 4294901760
      %v2780 = vsub.f32 %v2586, %v2779
      %v2781 = vand.u32 %v2780, 4294901760
      %v2782 = vsub.f32 %v2780, %v2781
      %v2783 = vand.u32 %v2782, 4294901760
      %2784 = vmatmul.mubr.f32.gmra.mxu0 %v2783
      %v2785 = vpop.f32.mrf.mxu0
      %v2786 = vadd.f32 %v2551, %v2785
      %v2787 = vpop.f32.mrf.mxu0
      %2788 = vmatprep.mubr.f32.mxu0 0.0
      %v2789 = vand.u32 %v2589, 4294901760
      %v2790 = vsub.f32 %v2589, %v2789
      %v2791 = vand.u32 %v2790, 4294901760
      %v2792 = vsub.f32 %v2790, %v2791
      %v2793 = vand.u32 %v2792, 4294901760
      %2794 = vmatmul.mubr.f32.gmra.mxu0 %v2793
      %v2795 = vpop.f32.mrf.mxu0
      %v2796 = vadd.f32 %v2551, %v2795
      %v2797 = vpop.f32.mrf.mxu0
      %2798 = vmatprep.mubr.f32.mxu0 0.0
      %v2799 = vand.u32 %v2592, 4294901760
      %v2800 = vsub.f32 %v2592, %v2799
      %v2801 = vand.u32 %v2800, 4294901760
      %v2802 = vsub.f32 %v2800, %v2801
      %v2803 = vand.u32 %v2802, 4294901760
      %2804 = vmatmul.mubr.f32.gmra.mxu0 %v2803
      %v2805 = vpop.f32.mrf.mxu0
      %v2806 = vadd.f32 %v2551, %v2805
      %v2807 = vpop.f32.mrf.mxu0
      %2808 = vmatprep.mubr.f32.mxu0 0.0
      %v2809 = vand.u32 %v2595, 4294901760
      %v2810 = vsub.f32 %v2595, %v2809
      %v2811 = vand.u32 %v2810, 4294901760
      %v2812 = vsub.f32 %v2810, %v2811
      %v2813 = vand.u32 %v2812, 4294901760
      %2814 = vmatmul.mubr.f32.gmra.mxu0 %v2813
      %v2815 = vpop.f32.mrf.mxu0
      %v2816 = vadd.f32 %v2551, %v2815
      %v2817 = vpop.f32.mrf.mxu0
      %2818 = vmatprep.mubr.f32.mxu0 0.0
      %v2819 = vand.u32 %v2598, 4294901760
      %v2820 = vsub.f32 %v2598, %v2819
      %v2821 = vand.u32 %v2820, 4294901760
      %v2822 = vsub.f32 %v2820, %v2821
      %v2823 = vand.u32 %v2822, 4294901760
      %2824 = vmatmul.mubr.f32.gmra.mxu0 %v2823
      %v2825 = vpop.f32.mrf.mxu0
      %v2826 = vadd.f32 %v2551, %v2825
      %v2827 = vpop.f32.mrf.mxu0
      %2828 = vdwg.mxu0
      %2829 = vmatprep.subr.mxu0 0.0
      %2830 = vmatpush1.msra.mxu0 0.0
      %2831 = vmatprep.subr.mxu0 0.0
      %2832 = vmatpush1.msra.mxu0 0.0
      %2833 = vmatprep.subr.mxu0 0.0
      %2834 = vmatpush1.msra.mxu0 0.0
      %2835 = vmatprep.subr.mxu0 0.0
      %2836 = vmatpush1.msra.mxu0 0.0
      %2837 = vmatprep.subr.mxu0 0.0
      %2838 = vmatpush1.msra.mxu0 0.0
      %2839 = vmatprep.subr.mxu0 0.0
      %2840 = vmatpush1.msra.mxu0 0.0
      %2841 = vmatprep.subr.mxu0 0.0
      %2842 = vmatpush1.msra.mxu0 0.0
      %2843 = vmatprep.subr.mxu0 0.0
      %2844 = vmatpush1.msra.mxu0 0.0
      %2845 = vmatprep.subr.mxu0 0.0
      %2846 = vmatpush1.msra.mxu0 0.0
      %2847 = vmatprep.subr.mxu0 0.0
      %2848 = vmatpush1.msra.mxu0 0.0
      %2849 = vmatprep.subr.mxu0 0.0
      %2850 = vmatpush1.msra.mxu0 0.0
      %2851 = vmatprep.subr.mxu0 0.0
      %2852 = vmatpush1.msra.mxu0 0.0
      %2853 = vmatprep.subr.mxu0 0.0
      %v2854 = vand.u32 %v1347, 4294901760
      %v2855 = vsub.f32 %v1347, %v2854
      %v2856 = vand.u32 %v2855, 4294901760
      %v2857 = vsub.f32 %v2855, %v2856
      %v2858 = vand.u32 %v2857, 4294901760
      %2859 = vmatpush1.msra.mxu0 %v2858
      %2860 = vmatprep.subr.mxu0 0.0
      %v2861 = vand.u32 %v1346, 4294901760
      %v2862 = vsub.f32 %v1346, %v2861
      %v2863 = vand.u32 %v2862, 4294901760
      %v2864 = vsub.f32 %v2862, %v2863
      %v2865 = vand.u32 %v2864, 4294901760
      %2866 = vmatpush1.msra.mxu0 %v2865
      %2867 = vmatprep.subr.mxu0 0.0
      %v2868 = vand.u32 %v1345, 4294901760
      %v2869 = vsub.f32 %v1345, %v2868
      %v2870 = vand.u32 %v2869, 4294901760
      %v2871 = vsub.f32 %v2869, %v2870
      %v2872 = vand.u32 %v2871, 4294901760
      %2873 = vmatpush1.msra.mxu0 %v2872
      %2874 = vmatprep.subr.mxu0 0.0
      %v2875 = vand.u32 %v1344, 4294901760
      %v2876 = vsub.f32 %v1344, %v2875
      %v2877 = vand.u32 %v2876, 4294901760
      %v2878 = vsub.f32 %v2876, %v2877
      %v2879 = vand.u32 %v2878, 4294901760
      %2880 = vmatpush1.msra.mxu0 %v2879
      %2881 = vmatprep.subr.mxu0 0.0
      %2882 = vmatpush2.msra.mxu0 0.0
      %2883 = vmatprep.subr.mxu0 0.0
      %2884 = vmatpush2.msra.mxu0 0.0
      %2885 = vmatprep.subr.mxu0 0.0
      %2886 = vmatpush2.msra.mxu0 0.0
      %2887 = vmatprep.subr.mxu0 0.0
      %2888 = vmatpush2.msra.mxu0 0.0
      %2889 = vmatprep.subr.mxu0 0.0
      %2890 = vmatpush2.msra.mxu0 0.0
      %2891 = vmatprep.subr.mxu0 0.0
      %2892 = vmatpush2.msra.mxu0 0.0
      %2893 = vmatprep.subr.mxu0 0.0
      %2894 = vmatpush2.msra.mxu0 0.0
      %2895 = vmatprep.subr.mxu0 0.0
      %2896 = vmatpush2.msra.mxu0 0.0
      %2897 = vmatprep.subr.mxu0 0.0
      %2898 = vmatpush2.msra.mxu0 0.0
      %2899 = vmatprep.subr.mxu0 0.0
      %2900 = vmatpush2.msra.mxu0 0.0
      %2901 = vmatprep.subr.mxu0 0.0
      %2902 = vmatpush2.msra.mxu0 0.0
      %2903 = vmatprep.subr.mxu0 0.0
      %2904 = vmatpush2.msra.mxu0 0.0
      %2905 = vmatprep.subr.mxu0 0.0
      %2906 = vmatpush2.msra.mxu0 0.0
      %2907 = vmatprep.subr.mxu0 0.0
      %2908 = vmatpush2.msra.mxu0 0.0
      %2909 = vmatprep.subr.mxu0 0.0
      %2910 = vmatpush2.msra.mxu0 0.0
      %2911 = vmatprep.subr.mxu0 0.0
      %2912 = vmatpush2.msra.mxu0 0.0
      %2913 = vmatprep.mubr.f32.mxu0 0.0
      %v2914 = vand.u32 %v2553, 4294901760
      %2915 = vmatmul.mubr.f32.gmra.mxu0 %v2914
      %v2916 = vpop.f32.mrf.mxu0
      %v2917 = vadd.f32 %v2676, %v2916
      %v2918 = vpop.f32.mrf.mxu0
      %2919 = vmatprep.mubr.f32.mxu0 0.0
      %v2920 = vand.u32 %v2556, 4294901760
      %2921 = vmatmul.mubr.f32.gmra.mxu0 %v2920
      %v2922 = vpop.f32.mrf.mxu0
      %v2923 = vadd.f32 %v2686, %v2922
      %v2924 = vpop.f32.mrf.mxu0
      %2925 = vmatprep.mubr.f32.mxu0 0.0
      %v2926 = vand.u32 %v2559, 4294901760
      %2927 = vmatmul.mubr.f32.gmra.mxu0 %v2926
      %v2928 = vpop.f32.mrf.mxu0
      %v2929 = vadd.f32 %v2696, %v2928
      %v2930 = vpop.f32.mrf.mxu0
      %2931 = vmatprep.mubr.f32.mxu0 0.0
      %v2932 = vand.u32 %v2562, 4294901760
      %2933 = vmatmul.mubr.f32.gmra.mxu0 %v2932
      %v2934 = vpop.f32.mrf.mxu0
      %v2935 = vadd.f32 %v2706, %v2934
      %v2936 = vpop.f32.mrf.mxu0
      %2937 = vmatprep.mubr.f32.mxu0 0.0
      %v2938 = vand.u32 %v2565, 4294901760
      %2939 = vmatmul.mubr.f32.gmra.mxu0 %v2938
      %v2940 = vpop.f32.mrf.mxu0
      %v2941 = vadd.f32 %v2716, %v2940
      %v2942 = vpop.f32.mrf.mxu0
      %2943 = vmatprep.mubr.f32.mxu0 0.0
      %v2944 = vand.u32 %v2568, 4294901760
      %2945 = vmatmul.mubr.f32.gmra.mxu0 %v2944
      %v2946 = vpop.f32.mrf.mxu0
      %v2947 = vadd.f32 %v2726, %v2946
      %v2948 = vpop.f32.mrf.mxu0
      %2949 = vmatprep.mubr.f32.mxu0 0.0
      %v2950 = vand.u32 %v2571, 4294901760
      %2951 = vmatmul.mubr.f32.gmra.mxu0 %v2950
      %v2952 = vpop.f32.mrf.mxu0
      %v2953 = vadd.f32 %v2736, %v2952
      %v2954 = vpop.f32.mrf.mxu0
      %2955 = vmatprep.mubr.f32.mxu0 0.0
      %v2956 = vand.u32 %v2574, 4294901760
      %2957 = vmatmul.mubr.f32.gmra.mxu0 %v2956
      %v2958 = vpop.f32.mrf.mxu0
      %v2959 = vadd.f32 %v2746, %v2958
      %v2960 = vpop.f32.mrf.mxu0
      %2961 = vmatprep.mubr.f32.mxu0 0.0
      %v2962 = vand.u32 %v2577, 4294901760
      %2963 = vmatmul.mubr.f32.gmra.mxu0 %v2962
      %v2964 = vpop.f32.mrf.mxu0
      %v2965 = vadd.f32 %v2756, %v2964
      %v2966 = vpop.f32.mrf.mxu0
      %2967 = vmatprep.mubr.f32.mxu0 0.0
      %v2968 = vand.u32 %v2580, 4294901760
      %2969 = vmatmul.mubr.f32.gmra.mxu0 %v2968
      %v2970 = vpop.f32.mrf.mxu0
      %v2971 = vadd.f32 %v2766, %v2970
      %v2972 = vpop.f32.mrf.mxu0
      %2973 = vmatprep.mubr.f32.mxu0 0.0
      %v2974 = vand.u32 %v2583, 4294901760
      %2975 = vmatmul.mubr.f32.gmra.mxu0 %v2974
      %v2976 = vpop.f32.mrf.mxu0
      %v2977 = vadd.f32 %v2776, %v2976
      %v2978 = vpop.f32.mrf.mxu0
      %2979 = vmatprep.mubr.f32.mxu0 0.0
      %v2980 = vand.u32 %v2586, 4294901760
      %2981 = vmatmul.mubr.f32.gmra.mxu0 %v2980
      %v2982 = vpop.f32.mrf.mxu0
      %v2983 = vadd.f32 %v2786, %v2982
      %v2984 = vpop.f32.mrf.mxu0
      %2985 = vmatprep.mubr.f32.mxu0 0.0
      %v2986 = vand.u32 %v2589, 4294901760
      %2987 = vmatmul.mubr.f32.gmra.mxu0 %v2986
      %v2988 = vpop.f32.mrf.mxu0
      %v2989 = vadd.f32 %v2796, %v2988
      %v2990 = vpop.f32.mrf.mxu0
      %2991 = vmatprep.mubr.f32.mxu0 0.0
      %v2992 = vand.u32 %v2592, 4294901760
      %2993 = vmatmul.mubr.f32.gmra.mxu0 %v2992
      %v2994 = vpop.f32.mrf.mxu0
      %v2995 = vadd.f32 %v2806, %v2994
      %v2996 = vpop.f32.mrf.mxu0
      %2997 = vmatprep.mubr.f32.mxu0 0.0
      %v2998 = vand.u32 %v2595, 4294901760
      %2999 = vmatmul.mubr.f32.gmra.mxu0 %v2998
      %v3000 = vpop.f32.mrf.mxu0
      %v3001 = vadd.f32 %v2816, %v3000
      %v3002 = vpop.f32.mrf.mxu0
      %3003 = vmatprep.mubr.f32.mxu0 0.0
      %v3004 = vand.u32 %v2598, 4294901760
      %3005 = vmatmul.mubr.f32.gmra.mxu0 %v3004
      %v3006 = vpop.f32.mrf.mxu0
      %v3007 = vadd.f32 %v2826, %v3006
      %v3008 = vpop.f32.mrf.mxu0
      %3009 = vdwg.mxu0
      %3010 = vmatprep.subr.mxu0 0.0
      %3011 = vmatpush1.msra.mxu0 0.0
      %3012 = vmatprep.subr.mxu0 0.0
      %3013 = vmatpush1.msra.mxu0 0.0
      %3014 = vmatprep.subr.mxu0 0.0
      %3015 = vmatpush1.msra.mxu0 0.0
      %3016 = vmatprep.subr.mxu0 0.0
      %3017 = vmatpush1.msra.mxu0 0.0
      %3018 = vmatprep.subr.mxu0 0.0
      %3019 = vmatpush1.msra.mxu0 0.0
      %3020 = vmatprep.subr.mxu0 0.0
      %3021 = vmatpush1.msra.mxu0 0.0
      %3022 = vmatprep.subr.mxu0 0.0
      %3023 = vmatpush1.msra.mxu0 0.0
      %3024 = vmatprep.subr.mxu0 0.0
      %3025 = vmatpush1.msra.mxu0 0.0
      %3026 = vmatprep.subr.mxu0 0.0
      %3027 = vmatpush1.msra.mxu0 0.0
      %3028 = vmatprep.subr.mxu0 0.0
      %3029 = vmatpush1.msra.mxu0 0.0
      %3030 = vmatprep.subr.mxu0 0.0
      %3031 = vmatpush1.msra.mxu0 0.0
      %3032 = vmatprep.subr.mxu0 0.0
      %3033 = vmatpush1.msra.mxu0 0.0
      %3034 = vmatprep.subr.mxu0 0.0
      %v3035 = vand.u32 %v1347, 4294901760
      %v3036 = vsub.f32 %v1347, %v3035
      %3037 = vmatpush1.msra.mxu0 %v3036
      %3038 = vmatprep.subr.mxu0 0.0
      %v3039 = vand.u32 %v1346, 4294901760
      %v3040 = vsub.f32 %v1346, %v3039
      %3041 = vmatpush1.msra.mxu0 %v3040
      %3042 = vmatprep.subr.mxu0 0.0
      %v3043 = vand.u32 %v1345, 4294901760
      %v3044 = vsub.f32 %v1345, %v3043
      %3045 = vmatpush1.msra.mxu0 %v3044
      %3046 = vmatprep.subr.mxu0 0.0
      %v3047 = vand.u32 %v1344, 4294901760
      %v3048 = vsub.f32 %v1344, %v3047
      %3049 = vmatpush1.msra.mxu0 %v3048
      %3050 = vmatprep.subr.mxu0 0.0
      %3051 = vmatpush2.msra.mxu0 0.0
      %3052 = vmatprep.subr.mxu0 0.0
      %3053 = vmatpush2.msra.mxu0 0.0
      %3054 = vmatprep.subr.mxu0 0.0
      %3055 = vmatpush2.msra.mxu0 0.0
      %3056 = vmatprep.subr.mxu0 0.0
      %3057 = vmatpush2.msra.mxu0 0.0
      %3058 = vmatprep.subr.mxu0 0.0
      %3059 = vmatpush2.msra.mxu0 0.0
      %3060 = vmatprep.subr.mxu0 0.0
      %3061 = vmatpush2.msra.mxu0 0.0
      %3062 = vmatprep.subr.mxu0 0.0
      %3063 = vmatpush2.msra.mxu0 0.0
      %3064 = vmatprep.subr.mxu0 0.0
      %3065 = vmatpush2.msra.mxu0 0.0
      %3066 = vmatprep.subr.mxu0 0.0
      %3067 = vmatpush2.msra.mxu0 0.0
      %3068 = vmatprep.subr.mxu0 0.0
      %3069 = vmatpush2.msra.mxu0 0.0
      %3070 = vmatprep.subr.mxu0 0.0
      %3071 = vmatpush2.msra.mxu0 0.0
      %3072 = vmatprep.subr.mxu0 0.0
      %3073 = vmatpush2.msra.mxu0 0.0
      %3074 = vmatprep.subr.mxu0 0.0
      %3075 = vmatpush2.msra.mxu0 0.0
      %3076 = vmatprep.subr.mxu0 0.0
      %3077 = vmatpush2.msra.mxu0 0.0
      %3078 = vmatprep.subr.mxu0 0.0
      %3079 = vmatpush2.msra.mxu0 0.0
      %3080 = vmatprep.subr.mxu0 0.0
      %3081 = vmatpush2.msra.mxu0 0.0
      %3082 = vmatprep.mubr.f32.mxu0 0.0
      %v3083 = vand.u32 %v2553, 4294901760
      %v3084 = vsub.f32 %v2553, %v3083
      %3085 = vmatmul.mubr.f32.gmra.mxu0 %v3084
      %v3086 = vpop.f32.mrf.mxu0
      %v3087 = vadd.f32 %v2917, %v3086
      %v3088 = vpop.f32.mrf.mxu0
      %3089 = vmatprep.mubr.f32.mxu0 0.0
      %v3090 = vand.u32 %v2556, 4294901760
      %v3091 = vsub.f32 %v2556, %v3090
      %3092 = vmatmul.mubr.f32.gmra.mxu0 %v3091
      %v3093 = vpop.f32.mrf.mxu0
      %v3094 = vadd.f32 %v2923, %v3093
      %v3095 = vpop.f32.mrf.mxu0
      %3096 = vmatprep.mubr.f32.mxu0 0.0
      %v3097 = vand.u32 %v2559, 4294901760
      %v3098 = vsub.f32 %v2559, %v3097
      %3099 = vmatmul.mubr.f32.gmra.mxu0 %v3098
      %v3100 = vpop.f32.mrf.mxu0
      %v3101 = vadd.f32 %v2929, %v3100
      %v3102 = vpop.f32.mrf.mxu0
      %3103 = vmatprep.mubr.f32.mxu0 0.0
      %v3104 = vand.u32 %v2562, 4294901760
      %v3105 = vsub.f32 %v2562, %v3104
      %3106 = vmatmul.mubr.f32.gmra.mxu0 %v3105
      %v3107 = vpop.f32.mrf.mxu0
      %v3108 = vadd.f32 %v2935, %v3107
      %v3109 = vpop.f32.mrf.mxu0
      %3110 = vmatprep.mubr.f32.mxu0 0.0
      %v3111 = vand.u32 %v2565, 4294901760
      %v3112 = vsub.f32 %v2565, %v3111
      %3113 = vmatmul.mubr.f32.gmra.mxu0 %v3112
      %v3114 = vpop.f32.mrf.mxu0
      %v3115 = vadd.f32 %v2941, %v3114
      %v3116 = vpop.f32.mrf.mxu0
      %3117 = vmatprep.mubr.f32.mxu0 0.0
      %v3118 = vand.u32 %v2568, 4294901760
      %v3119 = vsub.f32 %v2568, %v3118
      %3120 = vmatmul.mubr.f32.gmra.mxu0 %v3119
      %v3121 = vpop.f32.mrf.mxu0
      %v3122 = vadd.f32 %v2947, %v3121
      %v3123 = vpop.f32.mrf.mxu0
      %3124 = vmatprep.mubr.f32.mxu0 0.0
      %v3125 = vand.u32 %v2571, 4294901760
      %v3126 = vsub.f32 %v2571, %v3125
      %3127 = vmatmul.mubr.f32.gmra.mxu0 %v3126
      %v3128 = vpop.f32.mrf.mxu0
      %v3129 = vadd.f32 %v2953, %v3128
      %v3130 = vpop.f32.mrf.mxu0
      %3131 = vmatprep.mubr.f32.mxu0 0.0
      %v3132 = vand.u32 %v2574, 4294901760
      %v3133 = vsub.f32 %v2574, %v3132
      %3134 = vmatmul.mubr.f32.gmra.mxu0 %v3133
      %v3135 = vpop.f32.mrf.mxu0
      %v3136 = vadd.f32 %v2959, %v3135
      %v3137 = vpop.f32.mrf.mxu0
      %3138 = vmatprep.mubr.f32.mxu0 0.0
      %v3139 = vand.u32 %v2577, 4294901760
      %v3140 = vsub.f32 %v2577, %v3139
      %3141 = vmatmul.mubr.f32.gmra.mxu0 %v3140
      %v3142 = vpop.f32.mrf.mxu0
      %v3143 = vadd.f32 %v2965, %v3142
      %v3144 = vpop.f32.mrf.mxu0
      %3145 = vmatprep.mubr.f32.mxu0 0.0
      %v3146 = vand.u32 %v2580, 4294901760
      %v3147 = vsub.f32 %v2580, %v3146
      %3148 = vmatmul.mubr.f32.gmra.mxu0 %v3147
      %v3149 = vpop.f32.mrf.mxu0
      %v3150 = vadd.f32 %v2971, %v3149
      %v3151 = vpop.f32.mrf.mxu0
      %3152 = vmatprep.mubr.f32.mxu0 0.0
      %v3153 = vand.u32 %v2583, 4294901760
      %v3154 = vsub.f32 %v2583, %v3153
      %3155 = vmatmul.mubr.f32.gmra.mxu0 %v3154
      %v3156 = vpop.f32.mrf.mxu0
      %v3157 = vadd.f32 %v2977, %v3156
      %v3158 = vpop.f32.mrf.mxu0
      %3159 = vmatprep.mubr.f32.mxu0 0.0
      %v3160 = vand.u32 %v2586, 4294901760
      %v3161 = vsub.f32 %v2586, %v3160
      %3162 = vmatmul.mubr.f32.gmra.mxu0 %v3161
      %v3163 = vpop.f32.mrf.mxu0
      %v3164 = vadd.f32 %v2983, %v3163
      %v3165 = vpop.f32.mrf.mxu0
      %3166 = vmatprep.mubr.f32.mxu0 0.0
      %v3167 = vand.u32 %v2589, 4294901760
      %v3168 = vsub.f32 %v2589, %v3167
      %3169 = vmatmul.mubr.f32.gmra.mxu0 %v3168
      %v3170 = vpop.f32.mrf.mxu0
      %v3171 = vadd.f32 %v2989, %v3170
      %v3172 = vpop.f32.mrf.mxu0
      %3173 = vmatprep.mubr.f32.mxu0 0.0
      %v3174 = vand.u32 %v2592, 4294901760
      %v3175 = vsub.f32 %v2592, %v3174
      %3176 = vmatmul.mubr.f32.gmra.mxu0 %v3175
      %v3177 = vpop.f32.mrf.mxu0
      %v3178 = vadd.f32 %v2995, %v3177
      %v3179 = vpop.f32.mrf.mxu0
      %3180 = vmatprep.mubr.f32.mxu0 0.0
      %v3181 = vand.u32 %v2595, 4294901760
      %v3182 = vsub.f32 %v2595, %v3181
      %3183 = vmatmul.mubr.f32.gmra.mxu0 %v3182
      %v3184 = vpop.f32.mrf.mxu0
      %v3185 = vadd.f32 %v3001, %v3184
      %v3186 = vpop.f32.mrf.mxu0
      %3187 = vmatprep.mubr.f32.mxu0 0.0
      %v3188 = vand.u32 %v2598, 4294901760
      %v3189 = vsub.f32 %v2598, %v3188
      %3190 = vmatmul.mubr.f32.gmra.mxu0 %v3189
      %v3191 = vpop.f32.mrf.mxu0
      %v3192 = vadd.f32 %v3007, %v3191
      %v3193 = vpop.f32.mrf.mxu0
      %3194 = vdwg.mxu0
      %3195 = vmatprep.subr.mxu0 0.0
      %3196 = vmatpush1.msra.mxu0 0.0
      %3197 = vmatprep.subr.mxu0 0.0
      %3198 = vmatpush1.msra.mxu0 0.0
      %3199 = vmatprep.subr.mxu0 0.0
      %3200 = vmatpush1.msra.mxu0 0.0
      %3201 = vmatprep.subr.mxu0 0.0
      %3202 = vmatpush1.msra.mxu0 0.0
      %3203 = vmatprep.subr.mxu0 0.0
      %3204 = vmatpush1.msra.mxu0 0.0
      %3205 = vmatprep.subr.mxu0 0.0
      %3206 = vmatpush1.msra.mxu0 0.0
      %3207 = vmatprep.subr.mxu0 0.0
      %3208 = vmatpush1.msra.mxu0 0.0
      %3209 = vmatprep.subr.mxu0 0.0
      %3210 = vmatpush1.msra.mxu0 0.0
      %3211 = vmatprep.subr.mxu0 0.0
      %3212 = vmatpush1.msra.mxu0 0.0
      %3213 = vmatprep.subr.mxu0 0.0
      %3214 = vmatpush1.msra.mxu0 0.0
      %3215 = vmatprep.subr.mxu0 0.0
      %3216 = vmatpush1.msra.mxu0 0.0
      %3217 = vmatprep.subr.mxu0 0.0
      %3218 = vmatpush1.msra.mxu0 0.0
      %3219 = vmatprep.subr.mxu0 0.0
      %v3220 = vand.u32 %v1347, 4294901760
      %3221 = vmatpush1.msra.mxu0 %v3220
      %3222 = vmatprep.subr.mxu0 0.0
      %v3223 = vand.u32 %v1346, 4294901760
      %3224 = vmatpush1.msra.mxu0 %v3223
      %3225 = vmatprep.subr.mxu0 0.0
      %v3226 = vand.u32 %v1345, 4294901760
      %3227 = vmatpush1.msra.mxu0 %v3226
      %3228 = vmatprep.subr.mxu0 0.0
      %v3229 = vand.u32 %v1344, 4294901760
      %3230 = vmatpush1.msra.mxu0 %v3229
      %3231 = vmatprep.subr.mxu0 0.0
      %3232 = vmatpush2.msra.mxu0 0.0
      %3233 = vmatprep.subr.mxu0 0.0
      %3234 = vmatpush2.msra.mxu0 0.0
      %3235 = vmatprep.subr.mxu0 0.0
      %3236 = vmatpush2.msra.mxu0 0.0
      %3237 = vmatprep.subr.mxu0 0.0
      %3238 = vmatpush2.msra.mxu0 0.0
      %3239 = vmatprep.subr.mxu0 0.0
      %3240 = vmatpush2.msra.mxu0 0.0
      %3241 = vmatprep.subr.mxu0 0.0
      %3242 = vmatpush2.msra.mxu0 0.0
      %3243 = vmatprep.subr.mxu0 0.0
      %3244 = vmatpush2.msra.mxu0 0.0
      %3245 = vmatprep.subr.mxu0 0.0
      %3246 = vmatpush2.msra.mxu0 0.0
      %3247 = vmatprep.subr.mxu0 0.0
      %3248 = vmatpush2.msra.mxu0 0.0
      %3249 = vmatprep.subr.mxu0 0.0
      %3250 = vmatpush2.msra.mxu0 0.0
      %3251 = vmatprep.subr.mxu0 0.0
      %3252 = vmatpush2.msra.mxu0 0.0
      %3253 = vmatprep.subr.mxu0 0.0
      %3254 = vmatpush2.msra.mxu0 0.0
      %3255 = vmatprep.subr.mxu0 0.0
      %3256 = vmatpush2.msra.mxu0 0.0
      %3257 = vmatprep.subr.mxu0 0.0
      %3258 = vmatpush2.msra.mxu0 0.0
      %3259 = vmatprep.subr.mxu0 0.0
      %3260 = vmatpush2.msra.mxu0 0.0
      %3261 = vmatprep.subr.mxu0 0.0
      %3262 = vmatpush2.msra.mxu0 0.0
      %3263 = vmatprep.mubr.f32.mxu0 0.0
      %v3264 = vand.u32 %v2553, 4294901760
      %v3265 = vsub.f32 %v2553, %v3264
      %v3266 = vand.u32 %v3265, 4294901760
      %3267 = vmatmul.mubr.f32.gmra.mxu0 %v3266
      %v3268 = vpop.f32.mrf.mxu0
      %v3269 = vadd.f32 %v3087, %v3268
      %v3270 = vpop.f32.mrf.mxu0
      %3271 = vmatprep.mubr.f32.mxu0 0.0
      %v3272 = vand.u32 %v2556, 4294901760
      %v3273 = vsub.f32 %v2556, %v3272
      %v3274 = vand.u32 %v3273, 4294901760
      %3275 = vmatmul.mubr.f32.gmra.mxu0 %v3274
      %v3276 = vpop.f32.mrf.mxu0
      %v3277 = vadd.f32 %v3094, %v3276
      %v3278 = vpop.f32.mrf.mxu0
      %3279 = vmatprep.mubr.f32.mxu0 0.0
      %v3280 = vand.u32 %v2559, 4294901760
      %v3281 = vsub.f32 %v2559, %v3280
      %v3282 = vand.u32 %v3281, 4294901760
      %3283 = vmatmul.mubr.f32.gmra.mxu0 %v3282
      %v3284 = vpop.f32.mrf.mxu0
      %v3285 = vadd.f32 %v3101, %v3284
      %v3286 = vpop.f32.mrf.mxu0
      %3287 = vmatprep.mubr.f32.mxu0 0.0
      %v3288 = vand.u32 %v2562, 4294901760
      %v3289 = vsub.f32 %v2562, %v3288
      %v3290 = vand.u32 %v3289, 4294901760
      %3291 = vmatmul.mubr.f32.gmra.mxu0 %v3290
      %v3292 = vpop.f32.mrf.mxu0
      %v3293 = vadd.f32 %v3108, %v3292
      %v3294 = vpop.f32.mrf.mxu0
      %3295 = vmatprep.mubr.f32.mxu0 0.0
      %v3296 = vand.u32 %v2565, 4294901760
      %v3297 = vsub.f32 %v2565, %v3296
      %v3298 = vand.u32 %v3297, 4294901760
      %3299 = vmatmul.mubr.f32.gmra.mxu0 %v3298
      %v3300 = vpop.f32.mrf.mxu0
      %v3301 = vadd.f32 %v3115, %v3300
      %v3302 = vpop.f32.mrf.mxu0
      %3303 = vmatprep.mubr.f32.mxu0 0.0
      %v3304 = vand.u32 %v2568, 4294901760
      %v3305 = vsub.f32 %v2568, %v3304
      %v3306 = vand.u32 %v3305, 4294901760
      %3307 = vmatmul.mubr.f32.gmra.mxu0 %v3306
      %v3308 = vpop.f32.mrf.mxu0
      %v3309 = vadd.f32 %v3122, %v3308
      %v3310 = vpop.f32.mrf.mxu0
      %3311 = vmatprep.mubr.f32.mxu0 0.0
      %v3312 = vand.u32 %v2571, 4294901760
      %v3313 = vsub.f32 %v2571, %v3312
      %v3314 = vand.u32 %v3313, 4294901760
      %3315 = vmatmul.mubr.f32.gmra.mxu0 %v3314
      %v3316 = vpop.f32.mrf.mxu0
      %v3317 = vadd.f32 %v3129, %v3316
      %v3318 = vpop.f32.mrf.mxu0
      %3319 = vmatprep.mubr.f32.mxu0 0.0
      %v3320 = vand.u32 %v2574, 4294901760
      %v3321 = vsub.f32 %v2574, %v3320
      %v3322 = vand.u32 %v3321, 4294901760
      %3323 = vmatmul.mubr.f32.gmra.mxu0 %v3322
      %v3324 = vpop.f32.mrf.mxu0
      %v3325 = vadd.f32 %v3136, %v3324
      %v3326 = vpop.f32.mrf.mxu0
      %3327 = vmatprep.mubr.f32.mxu0 0.0
      %v3328 = vand.u32 %v2577, 4294901760
      %v3329 = vsub.f32 %v2577, %v3328
      %v3330 = vand.u32 %v3329, 4294901760
      %3331 = vmatmul.mubr.f32.gmra.mxu0 %v3330
      %v3332 = vpop.f32.mrf.mxu0
      %v3333 = vadd.f32 %v3143, %v3332
      %v3334 = vpop.f32.mrf.mxu0
      %3335 = vmatprep.mubr.f32.mxu0 0.0
      %v3336 = vand.u32 %v2580, 4294901760
      %v3337 = vsub.f32 %v2580, %v3336
      %v3338 = vand.u32 %v3337, 4294901760
      %3339 = vmatmul.mubr.f32.gmra.mxu0 %v3338
      %v3340 = vpop.f32.mrf.mxu0
      %v3341 = vadd.f32 %v3150, %v3340
      %v3342 = vpop.f32.mrf.mxu0
      %3343 = vmatprep.mubr.f32.mxu0 0.0
      %v3344 = vand.u32 %v2583, 4294901760
      %v3345 = vsub.f32 %v2583, %v3344
      %v3346 = vand.u32 %v3345, 4294901760
      %3347 = vmatmul.mubr.f32.gmra.mxu0 %v3346
      %v3348 = vpop.f32.mrf.mxu0
      %v3349 = vadd.f32 %v3157, %v3348
      %v3350 = vpop.f32.mrf.mxu0
      %3351 = vmatprep.mubr.f32.mxu0 0.0
      %v3352 = vand.u32 %v2586, 4294901760
      %v3353 = vsub.f32 %v2586, %v3352
      %v3354 = vand.u32 %v3353, 4294901760
      %3355 = vmatmul.mubr.f32.gmra.mxu0 %v3354
      %v3356 = vpop.f32.mrf.mxu0
      %v3357 = vadd.f32 %v3164, %v3356
      %v3358 = vpop.f32.mrf.mxu0
      %3359 = vmatprep.mubr.f32.mxu0 0.0
      %v3360 = vand.u32 %v2589, 4294901760
      %v3361 = vsub.f32 %v2589, %v3360
      %v3362 = vand.u32 %v3361, 4294901760
      %3363 = vmatmul.mubr.f32.gmra.mxu0 %v3362
      %v3364 = vpop.f32.mrf.mxu0
      %v3365 = vadd.f32 %v3171, %v3364
      %v3366 = vpop.f32.mrf.mxu0
      %3367 = vmatprep.mubr.f32.mxu0 0.0
      %v3368 = vand.u32 %v2592, 4294901760
      %v3369 = vsub.f32 %v2592, %v3368
      %v3370 = vand.u32 %v3369, 4294901760
      %3371 = vmatmul.mubr.f32.gmra.mxu0 %v3370
      %v3372 = vpop.f32.mrf.mxu0
      %v3373 = vadd.f32 %v3178, %v3372
      %v3374 = vpop.f32.mrf.mxu0
      %3375 = vmatprep.mubr.f32.mxu0 0.0
      %v3376 = vand.u32 %v2595, 4294901760
      %v3377 = vsub.f32 %v2595, %v3376
      %v3378 = vand.u32 %v3377, 4294901760
      %3379 = vmatmul.mubr.f32.gmra.mxu0 %v3378
      %v3380 = vpop.f32.mrf.mxu0
      %v3381 = vadd.f32 %v3185, %v3380
      %v3382 = vpop.f32.mrf.mxu0
      %3383 = vmatprep.mubr.f32.mxu0 0.0
      %v3384 = vand.u32 %v2598, 4294901760
      %v3385 = vsub.f32 %v2598, %v3384
      %v3386 = vand.u32 %v3385, 4294901760
      %3387 = vmatmul.mubr.f32.gmra.mxu0 %v3386
      %v3388 = vpop.f32.mrf.mxu0
      %v3389 = vadd.f32 %v3192, %v3388
      %v3390 = vpop.f32.mrf.mxu0
      %3391 = vdwg.mxu0
      %3392 = vmatprep.subr.mxu0 0.0
      %3393 = vmatpush1.msra.mxu0 0.0
      %3394 = vmatprep.subr.mxu0 0.0
      %3395 = vmatpush1.msra.mxu0 0.0
      %3396 = vmatprep.subr.mxu0 0.0
      %3397 = vmatpush1.msra.mxu0 0.0
      %3398 = vmatprep.subr.mxu0 0.0
      %3399 = vmatpush1.msra.mxu0 0.0
      %3400 = vmatprep.subr.mxu0 0.0
      %3401 = vmatpush1.msra.mxu0 0.0
      %3402 = vmatprep.subr.mxu0 0.0
      %3403 = vmatpush1.msra.mxu0 0.0
      %3404 = vmatprep.subr.mxu0 0.0
      %3405 = vmatpush1.msra.mxu0 0.0
      %3406 = vmatprep.subr.mxu0 0.0
      %3407 = vmatpush1.msra.mxu0 0.0
      %3408 = vmatprep.subr.mxu0 0.0
      %3409 = vmatpush1.msra.mxu0 0.0
      %3410 = vmatprep.subr.mxu0 0.0
      %3411 = vmatpush1.msra.mxu0 0.0
      %3412 = vmatprep.subr.mxu0 0.0
      %3413 = vmatpush1.msra.mxu0 0.0
      %3414 = vmatprep.subr.mxu0 0.0
      %3415 = vmatpush1.msra.mxu0 0.0
      %3416 = vmatprep.subr.mxu0 0.0
      %v3417 = vand.u32 %v1347, 4294901760
      %v3418 = vsub.f32 %v1347, %v3417
      %v3419 = vand.u32 %v3418, 4294901760
      %3420 = vmatpush1.msra.mxu0 %v3419
      %3421 = vmatprep.subr.mxu0 0.0
      %v3422 = vand.u32 %v1346, 4294901760
      %v3423 = vsub.f32 %v1346, %v3422
      %v3424 = vand.u32 %v3423, 4294901760
      %3425 = vmatpush1.msra.mxu0 %v3424
      %3426 = vmatprep.subr.mxu0 0.0
      %v3427 = vand.u32 %v1345, 4294901760
      %v3428 = vsub.f32 %v1345, %v3427
      %v3429 = vand.u32 %v3428, 4294901760
      %3430 = vmatpush1.msra.mxu0 %v3429
      %3431 = vmatprep.subr.mxu0 0.0
      %v3432 = vand.u32 %v1344, 4294901760
      %v3433 = vsub.f32 %v1344, %v3432
      %v3434 = vand.u32 %v3433, 4294901760
      %3435 = vmatpush1.msra.mxu0 %v3434
      %3436 = vmatprep.subr.mxu0 0.0
      %3437 = vmatpush2.msra.mxu0 0.0
      %3438 = vmatprep.subr.mxu0 0.0
      %3439 = vmatpush2.msra.mxu0 0.0
      %3440 = vmatprep.subr.mxu0 0.0
      %3441 = vmatpush2.msra.mxu0 0.0
      %3442 = vmatprep.subr.mxu0 0.0
      %3443 = vmatpush2.msra.mxu0 0.0
      %3444 = vmatprep.subr.mxu0 0.0
      %3445 = vmatpush2.msra.mxu0 0.0
      %3446 = vmatprep.subr.mxu0 0.0
      %3447 = vmatpush2.msra.mxu0 0.0
      %3448 = vmatprep.subr.mxu0 0.0
      %3449 = vmatpush2.msra.mxu0 0.0
      %3450 = vmatprep.subr.mxu0 0.0
      %3451 = vmatpush2.msra.mxu0 0.0
      %3452 = vmatprep.subr.mxu0 0.0
      %3453 = vmatpush2.msra.mxu0 0.0
      %3454 = vmatprep.subr.mxu0 0.0
      %3455 = vmatpush2.msra.mxu0 0.0
      %3456 = vmatprep.subr.mxu0 0.0
      %3457 = vmatpush2.msra.mxu0 0.0
      %3458 = vmatprep.subr.mxu0 0.0
      %3459 = vmatpush2.msra.mxu0 0.0
      %3460 = vmatprep.subr.mxu0 0.0
      %3461 = vmatpush2.msra.mxu0 0.0
      %3462 = vmatprep.subr.mxu0 0.0
      %3463 = vmatpush2.msra.mxu0 0.0
      %3464 = vmatprep.subr.mxu0 0.0
      %3465 = vmatpush2.msra.mxu0 0.0
      %3466 = vmatprep.subr.mxu0 0.0
      %3467 = vmatpush2.msra.mxu0 0.0
      %3468 = vmatprep.mubr.f32.mxu0 0.0
      %v3469 = vand.u32 %v2553, 4294901760
      %3470 = vmatmul.mubr.f32.gmra.mxu0 %v3469
      %v3471 = vpop.f32.mrf.mxu0
      %v3472 = vadd.f32 %v3269, %v3471
      %v3473 = vpop.f32.mrf.mxu0
      %3474 = vmatprep.mubr.f32.mxu0 0.0
      %v3475 = vand.u32 %v2556, 4294901760
      %3476 = vmatmul.mubr.f32.gmra.mxu0 %v3475
      %v3477 = vpop.f32.mrf.mxu0
      %v3478 = vadd.f32 %v3277, %v3477
      %v3479 = vpop.f32.mrf.mxu0
      %3480 = vmatprep.mubr.f32.mxu0 0.0
      %v3481 = vand.u32 %v2559, 4294901760
      %3482 = vmatmul.mubr.f32.gmra.mxu0 %v3481
      %v3483 = vpop.f32.mrf.mxu0
      %v3484 = vadd.f32 %v3285, %v3483
      %v3485 = vpop.f32.mrf.mxu0
      %3486 = vmatprep.mubr.f32.mxu0 0.0
      %v3487 = vand.u32 %v2562, 4294901760
      %3488 = vmatmul.mubr.f32.gmra.mxu0 %v3487
      %v3489 = vpop.f32.mrf.mxu0
      %v3490 = vadd.f32 %v3293, %v3489
      %v3491 = vpop.f32.mrf.mxu0
      %3492 = vmatprep.mubr.f32.mxu0 0.0
      %v3493 = vand.u32 %v2565, 4294901760
      %3494 = vmatmul.mubr.f32.gmra.mxu0 %v3493
      %v3495 = vpop.f32.mrf.mxu0
      %v3496 = vadd.f32 %v3301, %v3495
      %v3497 = vpop.f32.mrf.mxu0
      %3498 = vmatprep.mubr.f32.mxu0 0.0
      %v3499 = vand.u32 %v2568, 4294901760
      %3500 = vmatmul.mubr.f32.gmra.mxu0 %v3499
      %v3501 = vpop.f32.mrf.mxu0
      %v3502 = vadd.f32 %v3309, %v3501
      %v3503 = vpop.f32.mrf.mxu0
      %3504 = vmatprep.mubr.f32.mxu0 0.0
      %v3505 = vand.u32 %v2571, 4294901760
      %3506 = vmatmul.mubr.f32.gmra.mxu0 %v3505
      %v3507 = vpop.f32.mrf.mxu0
      %v3508 = vadd.f32 %v3317, %v3507
      %v3509 = vpop.f32.mrf.mxu0
      %3510 = vmatprep.mubr.f32.mxu0 0.0
      %v3511 = vand.u32 %v2574, 4294901760
      %3512 = vmatmul.mubr.f32.gmra.mxu0 %v3511
      %v3513 = vpop.f32.mrf.mxu0
      %v3514 = vadd.f32 %v3325, %v3513
      %v3515 = vpop.f32.mrf.mxu0
      %3516 = vmatprep.mubr.f32.mxu0 0.0
      %v3517 = vand.u32 %v2577, 4294901760
      %3518 = vmatmul.mubr.f32.gmra.mxu0 %v3517
      %v3519 = vpop.f32.mrf.mxu0
      %v3520 = vadd.f32 %v3333, %v3519
      %v3521 = vpop.f32.mrf.mxu0
      %3522 = vmatprep.mubr.f32.mxu0 0.0
      %v3523 = vand.u32 %v2580, 4294901760
      %3524 = vmatmul.mubr.f32.gmra.mxu0 %v3523
      %v3525 = vpop.f32.mrf.mxu0
      %v3526 = vadd.f32 %v3341, %v3525
      %v3527 = vpop.f32.mrf.mxu0
      %3528 = vmatprep.mubr.f32.mxu0 0.0
      %v3529 = vand.u32 %v2583, 4294901760
      %3530 = vmatmul.mubr.f32.gmra.mxu0 %v3529
      %v3531 = vpop.f32.mrf.mxu0
      %v3532 = vadd.f32 %v3349, %v3531
      %v3533 = vpop.f32.mrf.mxu0
      %3534 = vmatprep.mubr.f32.mxu0 0.0
      %v3535 = vand.u32 %v2586, 4294901760
      %3536 = vmatmul.mubr.f32.gmra.mxu0 %v3535
      %v3537 = vpop.f32.mrf.mxu0
      %v3538 = vadd.f32 %v3357, %v3537
      %v3539 = vpop.f32.mrf.mxu0
      %3540 = vmatprep.mubr.f32.mxu0 0.0
      %v3541 = vand.u32 %v2589, 4294901760
      %3542 = vmatmul.mubr.f32.gmra.mxu0 %v3541
      %v3543 = vpop.f32.mrf.mxu0
      %v3544 = vadd.f32 %v3365, %v3543
      %v3545 = vpop.f32.mrf.mxu0
      %3546 = vmatprep.mubr.f32.mxu0 0.0
      %v3547 = vand.u32 %v2592, 4294901760
      %3548 = vmatmul.mubr.f32.gmra.mxu0 %v3547
      %v3549 = vpop.f32.mrf.mxu0
      %v3550 = vadd.f32 %v3373, %v3549
      %v3551 = vpop.f32.mrf.mxu0
      %3552 = vmatprep.mubr.f32.mxu0 0.0
      %v3553 = vand.u32 %v2595, 4294901760
      %3554 = vmatmul.mubr.f32.gmra.mxu0 %v3553
      %v3555 = vpop.f32.mrf.mxu0
      %v3556 = vadd.f32 %v3381, %v3555
      %v3557 = vpop.f32.mrf.mxu0
      %3558 = vmatprep.mubr.f32.mxu0 0.0
      %v3559 = vand.u32 %v2598, 4294901760
      %3560 = vmatmul.mubr.f32.gmra.mxu0 %v3559
      %v3561 = vpop.f32.mrf.mxu0
      %v3562 = vadd.f32 %v3389, %v3561
      %v3563 = vpop.f32.mrf.mxu0
      %3564 = vdwg.mxu0
      %3565 = vmatprep.subr.mxu0 0.0
      %3566 = vmatpush1.msra.mxu0 0.0
      %3567 = vmatprep.subr.mxu0 0.0
      %3568 = vmatpush1.msra.mxu0 0.0
      %3569 = vmatprep.subr.mxu0 0.0
      %3570 = vmatpush1.msra.mxu0 0.0
      %3571 = vmatprep.subr.mxu0 0.0
      %3572 = vmatpush1.msra.mxu0 0.0
      %3573 = vmatprep.subr.mxu0 0.0
      %3574 = vmatpush1.msra.mxu0 0.0
      %3575 = vmatprep.subr.mxu0 0.0
      %3576 = vmatpush1.msra.mxu0 0.0
      %3577 = vmatprep.subr.mxu0 0.0
      %3578 = vmatpush1.msra.mxu0 0.0
      %3579 = vmatprep.subr.mxu0 0.0
      %3580 = vmatpush1.msra.mxu0 0.0
      %3581 = vmatprep.subr.mxu0 0.0
      %3582 = vmatpush1.msra.mxu0 0.0
      %3583 = vmatprep.subr.mxu0 0.0
      %3584 = vmatpush1.msra.mxu0 0.0
      %3585 = vmatprep.subr.mxu0 0.0
      %3586 = vmatpush1.msra.mxu0 0.0
      %3587 = vmatprep.subr.mxu0 0.0
      %3588 = vmatpush1.msra.mxu0 0.0
      %3589 = vmatprep.subr.mxu0 0.0
      %v3590 = vand.u32 %v1347, 4294901760
      %3591 = vmatpush1.msra.mxu0 %v3590
      %3592 = vmatprep.subr.mxu0 0.0
      %v3593 = vand.u32 %v1346, 4294901760
      %3594 = vmatpush1.msra.mxu0 %v3593
      %3595 = vmatprep.subr.mxu0 0.0
      %v3596 = vand.u32 %v1345, 4294901760
      %3597 = vmatpush1.msra.mxu0 %v3596
      %3598 = vmatprep.subr.mxu0 0.0
      %v3599 = vand.u32 %v1344, 4294901760
      %3600 = vmatpush1.msra.mxu0 %v3599
      %3601 = vmatprep.subr.mxu0 0.0
      %3602 = vmatpush2.msra.mxu0 0.0
      %3603 = vmatprep.subr.mxu0 0.0
      %3604 = vmatpush2.msra.mxu0 0.0
      %3605 = vmatprep.subr.mxu0 0.0
      %3606 = vmatpush2.msra.mxu0 0.0
      %3607 = vmatprep.subr.mxu0 0.0
      %3608 = vmatpush2.msra.mxu0 0.0
      %3609 = vmatprep.subr.mxu0 0.0
      %3610 = vmatpush2.msra.mxu0 0.0
      %3611 = vmatprep.subr.mxu0 0.0
      %3612 = vmatpush2.msra.mxu0 0.0
      %3613 = vmatprep.subr.mxu0 0.0
      %3614 = vmatpush2.msra.mxu0 0.0
      %3615 = vmatprep.subr.mxu0 0.0
      %3616 = vmatpush2.msra.mxu0 0.0
      %3617 = vmatprep.subr.mxu0 0.0
      %3618 = vmatpush2.msra.mxu0 0.0
      %3619 = vmatprep.subr.mxu0 0.0
      %3620 = vmatpush2.msra.mxu0 0.0
      %3621 = vmatprep.subr.mxu0 0.0
      %3622 = vmatpush2.msra.mxu0 0.0
      %3623 = vmatprep.subr.mxu0 0.0
      %3624 = vmatpush2.msra.mxu0 0.0
      %3625 = vmatprep.subr.mxu0 0.0
      %3626 = vmatpush2.msra.mxu0 0.0
      %3627 = vmatprep.subr.mxu0 0.0
      %3628 = vmatpush2.msra.mxu0 0.0
      %3629 = vmatprep.subr.mxu0 0.0
      %3630 = vmatpush2.msra.mxu0 0.0
      %3631 = vmatprep.subr.mxu0 0.0
      %3632 = vmatpush2.msra.mxu0 0.0
      %3633 = vmatprep.mubr.f32.mxu0 0.0
      %v3634 = vand.u32 %v2553, 4294901760
      %3635 = vmatmul.mubr.f32.gmra.mxu0 %v3634
      %v3636 = vpop.f32.mrf.mxu0
      %v3637 = vadd.f32 %v3472, %v3636
      %v3638 = vpop.f32.mrf.mxu0
      %3639 = vmatprep.mubr.f32.mxu0 0.0
      %v3640 = vand.u32 %v2556, 4294901760
      %3641 = vmatmul.mubr.f32.gmra.mxu0 %v3640
      %v3642 = vpop.f32.mrf.mxu0
      %v3643 = vadd.f32 %v3478, %v3642
      %v3644 = vpop.f32.mrf.mxu0
      %3645 = vmatprep.mubr.f32.mxu0 0.0
      %v3646 = vand.u32 %v2559, 4294901760
      %3647 = vmatmul.mubr.f32.gmra.mxu0 %v3646
      %v3648 = vpop.f32.mrf.mxu0
      %v3649 = vadd.f32 %v3484, %v3648
      %v3650 = vpop.f32.mrf.mxu0
      %3651 = vmatprep.mubr.f32.mxu0 0.0
      %v3652 = vand.u32 %v2562, 4294901760
      %3653 = vmatmul.mubr.f32.gmra.mxu0 %v3652
      %v3654 = vpop.f32.mrf.mxu0
      %v3655 = vadd.f32 %v3490, %v3654
      %v3656 = vpop.f32.mrf.mxu0
      %3657 = vmatprep.mubr.f32.mxu0 0.0
      %v3658 = vand.u32 %v2565, 4294901760
      %3659 = vmatmul.mubr.f32.gmra.mxu0 %v3658
      %v3660 = vpop.f32.mrf.mxu0
      %v3661 = vadd.f32 %v3496, %v3660
      %v3662 = vpop.f32.mrf.mxu0
      %3663 = vmatprep.mubr.f32.mxu0 0.0
      %v3664 = vand.u32 %v2568, 4294901760
      %3665 = vmatmul.mubr.f32.gmra.mxu0 %v3664
      %v3666 = vpop.f32.mrf.mxu0
      %v3667 = vadd.f32 %v3502, %v3666
      %v3668 = vpop.f32.mrf.mxu0
      %3669 = vmatprep.mubr.f32.mxu0 0.0
      %v3670 = vand.u32 %v2571, 4294901760
      %3671 = vmatmul.mubr.f32.gmra.mxu0 %v3670
      %v3672 = vpop.f32.mrf.mxu0
      %v3673 = vadd.f32 %v3508, %v3672
      %v3674 = vpop.f32.mrf.mxu0
      %3675 = vmatprep.mubr.f32.mxu0 0.0
      %v3676 = vand.u32 %v2574, 4294901760
      %3677 = vmatmul.mubr.f32.gmra.mxu0 %v3676
      %v3678 = vpop.f32.mrf.mxu0
      %v3679 = vadd.f32 %v3514, %v3678
      %v3680 = vpop.f32.mrf.mxu0
      %3681 = vmatprep.mubr.f32.mxu0 0.0
      %v3682 = vand.u32 %v2577, 4294901760
      %3683 = vmatmul.mubr.f32.gmra.mxu0 %v3682
      %v3684 = vpop.f32.mrf.mxu0
      %v3685 = vadd.f32 %v3520, %v3684
      %v3686 = vpop.f32.mrf.mxu0
      %3687 = vmatprep.mubr.f32.mxu0 0.0
      %v3688 = vand.u32 %v2580, 4294901760
      %3689 = vmatmul.mubr.f32.gmra.mxu0 %v3688
      %v3690 = vpop.f32.mrf.mxu0
      %v3691 = vadd.f32 %v3526, %v3690
      %v3692 = vpop.f32.mrf.mxu0
      %3693 = vmatprep.mubr.f32.mxu0 0.0
      %v3694 = vand.u32 %v2583, 4294901760
      %3695 = vmatmul.mubr.f32.gmra.mxu0 %v3694
      %v3696 = vpop.f32.mrf.mxu0
      %v3697 = vadd.f32 %v3532, %v3696
      %v3698 = vpop.f32.mrf.mxu0
      %3699 = vmatprep.mubr.f32.mxu0 0.0
      %v3700 = vand.u32 %v2586, 4294901760
      %3701 = vmatmul.mubr.f32.gmra.mxu0 %v3700
      %v3702 = vpop.f32.mrf.mxu0
      %v3703 = vadd.f32 %v3538, %v3702
      %v3704 = vpop.f32.mrf.mxu0
      %3705 = vmatprep.mubr.f32.mxu0 0.0
      %v3706 = vand.u32 %v2589, 4294901760
      %3707 = vmatmul.mubr.f32.gmra.mxu0 %v3706
      %v3708 = vpop.f32.mrf.mxu0
      %v3709 = vadd.f32 %v3544, %v3708
      %v3710 = vpop.f32.mrf.mxu0
      %3711 = vmatprep.mubr.f32.mxu0 0.0
      %v3712 = vand.u32 %v2592, 4294901760
      %3713 = vmatmul.mubr.f32.gmra.mxu0 %v3712
      %v3714 = vpop.f32.mrf.mxu0
      %v3715 = vadd.f32 %v3550, %v3714
      %v3716 = vpop.f32.mrf.mxu0
      %3717 = vmatprep.mubr.f32.mxu0 0.0
      %v3718 = vand.u32 %v2595, 4294901760
      %3719 = vmatmul.mubr.f32.gmra.mxu0 %v3718
      %v3720 = vpop.f32.mrf.mxu0
      %v3721 = vadd.f32 %v3556, %v3720
      %v3722 = vpop.f32.mrf.mxu0
      %3723 = vmatprep.mubr.f32.mxu0 0.0
      %v3724 = vand.u32 %v2598, 4294901760
      %3725 = vmatmul.mubr.f32.gmra.mxu0 %v3724
      %v3726 = vpop.f32.mrf.mxu0
      %v3727 = vadd.f32 %v3562, %v3726
      %v3728 = vpop.f32.mrf.mxu0
      %3729 = vdwg.mxu0
      %v3730 = vadd.f32 %v3637, %v1323
      %v3731 = vadd.f32 %v3643, %v1324
      %v3732 = vadd.f32 %v3649, %v1325
      %v3733 = vadd.f32 %v3655, %v1326
      %v3734 = vadd.f32 %v3661, %v1327
      %v3735 = vadd.f32 %v3667, %v1328
      %v3736 = vadd.f32 %v3673, %v1329
      %v3737 = vadd.f32 %v3679, %v1330
      %v3738 = vadd.f32 %v3685, %v1331
      %v3739 = vadd.f32 %v3691, %v1332
      %v3740 = vadd.f32 %v3697, %v1333
      %v3741 = vadd.f32 %v3703, %v1334
      %v3742 = vadd.f32 %v3709, %v1335
      %v3743 = vadd.f32 %v3715, %v1336
      %v3744 = vadd.f32 %v3721, %v1337
      %v3745 = vadd.f32 %v3727, %v1338
      %v3746 = vmax.f32 %v3730, 0.0
      %v3747 = vmax.f32 %v3731, 0.0
      %v3748 = vmax.f32 %v3732, 0.0
      %v3749 = vmax.f32 %v3733, 0.0
      %v3750 = vmax.f32 %v3734, 0.0
      %v3751 = vmax.f32 %v3735, 0.0
      %v3752 = vmax.f32 %v3736, 0.0
      %v3753 = vmax.f32 %v3737, 0.0
      %v3754 = vmax.f32 %v3738, 0.0
      %v3755 = vmax.f32 %v3739, 0.0
      %v3756 = vmax.f32 %v3740, 0.0
      %v3757 = vmax.f32 %v3741, 0.0
      %v3758 = vmax.f32 %v3742, 0.0
      %v3759 = vmax.f32 %v3743, 0.0
      %v3760 = vmax.f32 %v3744, 0.0
      %v3761 = vmax.f32 %v3745, 0.0
      %v3762 = vld [vmem:[%s1 + $0x68] sm:$0xff]
      %v3763 = vld [vmem:[%s1 + $0x70] sm:$0xff]
      %v3764 = vld [vmem:[%s1 + $0x78] sm:$0xff]
      %v3765 = vld [vmem:[%s1 + $0x80] sm:$0xff]
      %v3766 = vld [vmem:[%s1 + $0x88] sm:$0x1]
      %v3767 = vld [vmem:[%s1 + $0x90] sm:$0xff]
      %v3768 = vld [vmem:[%s1 + $0x98] sm:$0xff]
      %v3769 = vld [vmem:[%s1 + $0xa0] sm:$0xff]
      %v3770 = vld [vmem:[%s1 + $0xa8] sm:$0xff]
      %v3771 = vld [vmem:[%s1 + $0xb0] sm:$0x1]
      %v3772 = vlaneseq
      %v3773 = vshrl.u32 %v3772, 7
      %v3774 = vsub.s32 0, %v3773
      %v3775 = vrot.slane %v3766, %v3774
      %v3777 = vsel %vm1353, %v3746, 0
      %v3780 = vsel %vm1353, %v3747, 0
      %v3783 = vsel %vm1353, %v3748, 0
      %v3786 = vsel %vm1353, %v3749, 0
      %v3789 = vsel %vm1353, %v3750, 0
      %v3792 = vsel %vm1353, %v3751, 0
      %v3795 = vsel %vm1353, %v3752, 0
      %v3798 = vsel %vm1353, %v3753, 0
      %v3801 = vsel %vm1353, %v3754, 0
      %v3804 = vsel %vm1353, %v3755, 0
      %v3807 = vsel %vm1353, %v3756, 0
      %v3810 = vsel %vm1353, %v3757, 0
      %v3813 = vsel %vm1353, %v3758, 0
      %v3816 = vsel %vm1353, %v3759, 0
      %v3819 = vsel %vm1353, %v3760, 0
      %v3822 = vsel %vm1353, %v3761, 0
      %3824 = vmatprep.subr.mxu0 0.0
      %3825 = vmatpush1.msra.mxu0 0.0
      %3826 = vmatprep.subr.mxu0 0.0
      %3827 = vmatpush1.msra.mxu0 0.0
      %3828 = vmatprep.subr.mxu0 0.0
      %3829 = vmatpush1.msra.mxu0 0.0
      %3830 = vmatprep.subr.mxu0 0.0
      %3831 = vmatpush1.msra.mxu0 0.0
      %3832 = vmatprep.subr.mxu0 0.0
      %3833 = vmatpush1.msra.mxu0 0.0
      %3834 = vmatprep.subr.mxu0 0.0
      %3835 = vmatpush1.msra.mxu0 0.0
      %3836 = vmatprep.subr.mxu0 0.0
      %3837 = vmatpush1.msra.mxu0 0.0
      %3838 = vmatprep.subr.mxu0 0.0
      %3839 = vmatpush1.msra.mxu0 0.0
      %3840 = vmatprep.subr.mxu0 0.0
      %3841 = vmatpush1.msra.mxu0 0.0
      %3842 = vmatprep.subr.mxu0 0.0
      %3843 = vmatpush1.msra.mxu0 0.0
      %3844 = vmatprep.subr.mxu0 0.0
      %3845 = vmatpush1.msra.mxu0 0.0
      %3846 = vmatprep.subr.mxu0 0.0
      %3847 = vmatpush1.msra.mxu0 0.0
      %3848 = vmatprep.subr.mxu0 0.0
      %v3849 = vand.u32 %v3765, 4294901760
      %3850 = vmatpush1.msra.mxu0 %v3849
      %3851 = vmatprep.subr.mxu0 0.0
      %v3852 = vand.u32 %v3764, 4294901760
      %3853 = vmatpush1.msra.mxu0 %v3852
      %3854 = vmatprep.subr.mxu0 0.0
      %v3855 = vand.u32 %v3763, 4294901760
      %3856 = vmatpush1.msra.mxu0 %v3855
      %3857 = vmatprep.subr.mxu0 0.0
      %v3858 = vand.u32 %v3762, 4294901760
      %3859 = vmatpush1.msra.mxu0 %v3858
      %3860 = vmatprep.subr.mxu0 0.0
      %3861 = vmatpush2.msra.mxu0 0.0
      %3862 = vmatprep.subr.mxu0 0.0
      %3863 = vmatpush2.msra.mxu0 0.0
      %3864 = vmatprep.subr.mxu0 0.0
      %3865 = vmatpush2.msra.mxu0 0.0
      %3866 = vmatprep.subr.mxu0 0.0
      %3867 = vmatpush2.msra.mxu0 0.0
      %3868 = vmatprep.subr.mxu0 0.0
      %3869 = vmatpush2.msra.mxu0 0.0
      %3870 = vmatprep.subr.mxu0 0.0
      %3871 = vmatpush2.msra.mxu0 0.0
      %3872 = vmatprep.subr.mxu0 0.0
      %3873 = vmatpush2.msra.mxu0 0.0
      %3874 = vmatprep.subr.mxu0 0.0
      %3875 = vmatpush2.msra.mxu0 0.0
      %3876 = vmatprep.subr.mxu0 0.0
      %3877 = vmatpush2.msra.mxu0 0.0
      %3878 = vmatprep.subr.mxu0 0.0
      %3879 = vmatpush2.msra.mxu0 0.0
      %3880 = vmatprep.subr.mxu0 0.0
      %3881 = vmatpush2.msra.mxu0 0.0
      %3882 = vmatprep.subr.mxu0 0.0
      %3883 = vmatpush2.msra.mxu0 0.0
      %3884 = vmatprep.subr.mxu0 0.0
      %3885 = vmatpush2.msra.mxu0 0.0
      %3886 = vmatprep.subr.mxu0 0.0
      %3887 = vmatpush2.msra.mxu0 0.0
      %3888 = vmatprep.subr.mxu0 0.0
      %3889 = vmatpush2.msra.mxu0 0.0
      %3890 = vmatprep.subr.mxu0 0.0
      %3891 = vmatpush2.msra.mxu0 0.0
      %3892 = vmatprep.mubr.f32.mxu0 0.0
      %v3893 = vand.u32 %v3777, 4294901760
      %v3894 = vsub.f32 %v3777, %v3893
      %v3895 = vand.u32 %v3894, 4294901760
      %v3896 = vsub.f32 %v3894, %v3895
      %v3897 = vand.u32 %v3896, 4294901760
      %3898 = vmatmul.mubr.f32.gmra.mxu0 %v3897
      %v3899 = vpop.f32.mrf.mxu0
      %v3900 = vadd.f32 %v3775, %v3899
      %v3901 = vpop.f32.mrf.mxu0
      %3902 = vmatprep.mubr.f32.mxu0 0.0
      %v3903 = vand.u32 %v3780, 4294901760
      %v3904 = vsub.f32 %v3780, %v3903
      %v3905 = vand.u32 %v3904, 4294901760
      %v3906 = vsub.f32 %v3904, %v3905
      %v3907 = vand.u32 %v3906, 4294901760
      %3908 = vmatmul.mubr.f32.gmra.mxu0 %v3907
      %v3909 = vpop.f32.mrf.mxu0
      %v3910 = vadd.f32 %v3775, %v3909
      %v3911 = vpop.f32.mrf.mxu0
      %3912 = vmatprep.mubr.f32.mxu0 0.0
      %v3913 = vand.u32 %v3783, 4294901760
      %v3914 = vsub.f32 %v3783, %v3913
      %v3915 = vand.u32 %v3914, 4294901760
      %v3916 = vsub.f32 %v3914, %v3915
      %v3917 = vand.u32 %v3916, 4294901760
      %3918 = vmatmul.mubr.f32.gmra.mxu0 %v3917
      %v3919 = vpop.f32.mrf.mxu0
      %v3920 = vadd.f32 %v3775, %v3919
      %v3921 = vpop.f32.mrf.mxu0
      %3922 = vmatprep.mubr.f32.mxu0 0.0
      %v3923 = vand.u32 %v3786, 4294901760
      %v3924 = vsub.f32 %v3786, %v3923
      %v3925 = vand.u32 %v3924, 4294901760
      %v3926 = vsub.f32 %v3924, %v3925
      %v3927 = vand.u32 %v3926, 4294901760
      %3928 = vmatmul.mubr.f32.gmra.mxu0 %v3927
      %v3929 = vpop.f32.mrf.mxu0
      %v3930 = vadd.f32 %v3775, %v3929
      %v3931 = vpop.f32.mrf.mxu0
      %3932 = vmatprep.mubr.f32.mxu0 0.0
      %v3933 = vand.u32 %v3789, 4294901760
      %v3934 = vsub.f32 %v3789, %v3933
      %v3935 = vand.u32 %v3934, 4294901760
      %v3936 = vsub.f32 %v3934, %v3935
      %v3937 = vand.u32 %v3936, 4294901760
      %3938 = vmatmul.mubr.f32.gmra.mxu0 %v3937
      %v3939 = vpop.f32.mrf.mxu0
      %v3940 = vadd.f32 %v3775, %v3939
      %v3941 = vpop.f32.mrf.mxu0
      %3942 = vmatprep.mubr.f32.mxu0 0.0
      %v3943 = vand.u32 %v3792, 4294901760
      %v3944 = vsub.f32 %v3792, %v3943
      %v3945 = vand.u32 %v3944, 4294901760
      %v3946 = vsub.f32 %v3944, %v3945
      %v3947 = vand.u32 %v3946, 4294901760
      %3948 = vmatmul.mubr.f32.gmra.mxu0 %v3947
      %v3949 = vpop.f32.mrf.mxu0
      %v3950 = vadd.f32 %v3775, %v3949
      %v3951 = vpop.f32.mrf.mxu0
      %3952 = vmatprep.mubr.f32.mxu0 0.0
      %v3953 = vand.u32 %v3795, 4294901760
      %v3954 = vsub.f32 %v3795, %v3953
      %v3955 = vand.u32 %v3954, 4294901760
      %v3956 = vsub.f32 %v3954, %v3955
      %v3957 = vand.u32 %v3956, 4294901760
      %3958 = vmatmul.mubr.f32.gmra.mxu0 %v3957
      %v3959 = vpop.f32.mrf.mxu0
      %v3960 = vadd.f32 %v3775, %v3959
      %v3961 = vpop.f32.mrf.mxu0
      %3962 = vmatprep.mubr.f32.mxu0 0.0
      %v3963 = vand.u32 %v3798, 4294901760
      %v3964 = vsub.f32 %v3798, %v3963
      %v3965 = vand.u32 %v3964, 4294901760
      %v3966 = vsub.f32 %v3964, %v3965
      %v3967 = vand.u32 %v3966, 4294901760
      %3968 = vmatmul.mubr.f32.gmra.mxu0 %v3967
      %v3969 = vpop.f32.mrf.mxu0
      %v3970 = vadd.f32 %v3775, %v3969
      %v3971 = vpop.f32.mrf.mxu0
      %3972 = vmatprep.mubr.f32.mxu0 0.0
      %v3973 = vand.u32 %v3801, 4294901760
      %v3974 = vsub.f32 %v3801, %v3973
      %v3975 = vand.u32 %v3974, 4294901760
      %v3976 = vsub.f32 %v3974, %v3975
      %v3977 = vand.u32 %v3976, 4294901760
      %3978 = vmatmul.mubr.f32.gmra.mxu0 %v3977
      %v3979 = vpop.f32.mrf.mxu0
      %v3980 = vadd.f32 %v3775, %v3979
      %v3981 = vpop.f32.mrf.mxu0
      %3982 = vmatprep.mubr.f32.mxu0 0.0
      %v3983 = vand.u32 %v3804, 4294901760
      %v3984 = vsub.f32 %v3804, %v3983
      %v3985 = vand.u32 %v3984, 4294901760
      %v3986 = vsub.f32 %v3984, %v3985
      %v3987 = vand.u32 %v3986, 4294901760
      %3988 = vmatmul.mubr.f32.gmra.mxu0 %v3987
      %v3989 = vpop.f32.mrf.mxu0
      %v3990 = vadd.f32 %v3775, %v3989
      %v3991 = vpop.f32.mrf.mxu0
      %3992 = vmatprep.mubr.f32.mxu0 0.0
      %v3993 = vand.u32 %v3807, 4294901760
      %v3994 = vsub.f32 %v3807, %v3993
      %v3995 = vand.u32 %v3994, 4294901760
      %v3996 = vsub.f32 %v3994, %v3995
      %v3997 = vand.u32 %v3996, 4294901760
      %3998 = vmatmul.mubr.f32.gmra.mxu0 %v3997
      %v3999 = vpop.f32.mrf.mxu0
      %v4000 = vadd.f32 %v3775, %v3999
      %v4001 = vpop.f32.mrf.mxu0
      %4002 = vmatprep.mubr.f32.mxu0 0.0
      %v4003 = vand.u32 %v3810, 4294901760
      %v4004 = vsub.f32 %v3810, %v4003
      %v4005 = vand.u32 %v4004, 4294901760
      %v4006 = vsub.f32 %v4004, %v4005
      %v4007 = vand.u32 %v4006, 4294901760
      %4008 = vmatmul.mubr.f32.gmra.mxu0 %v4007
      %v4009 = vpop.f32.mrf.mxu0
      %v4010 = vadd.f32 %v3775, %v4009
      %v4011 = vpop.f32.mrf.mxu0
      %4012 = vmatprep.mubr.f32.mxu0 0.0
      %v4013 = vand.u32 %v3813, 4294901760
      %v4014 = vsub.f32 %v3813, %v4013
      %v4015 = vand.u32 %v4014, 4294901760
      %v4016 = vsub.f32 %v4014, %v4015
      %v4017 = vand.u32 %v4016, 4294901760
      %4018 = vmatmul.mubr.f32.gmra.mxu0 %v4017
      %v4019 = vpop.f32.mrf.mxu0
      %v4020 = vadd.f32 %v3775, %v4019
      %v4021 = vpop.f32.mrf.mxu0
      %4022 = vmatprep.mubr.f32.mxu0 0.0
      %v4023 = vand.u32 %v3816, 4294901760
      %v4024 = vsub.f32 %v3816, %v4023
      %v4025 = vand.u32 %v4024, 4294901760
      %v4026 = vsub.f32 %v4024, %v4025
      %v4027 = vand.u32 %v4026, 4294901760
      %4028 = vmatmul.mubr.f32.gmra.mxu0 %v4027
      %v4029 = vpop.f32.mrf.mxu0
      %v4030 = vadd.f32 %v3775, %v4029
      %v4031 = vpop.f32.mrf.mxu0
      %4032 = vmatprep.mubr.f32.mxu0 0.0
      %v4033 = vand.u32 %v3819, 4294901760
      %v4034 = vsub.f32 %v3819, %v4033
      %v4035 = vand.u32 %v4034, 4294901760
      %v4036 = vsub.f32 %v4034, %v4035
      %v4037 = vand.u32 %v4036, 4294901760
      %4038 = vmatmul.mubr.f32.gmra.mxu0 %v4037
      %v4039 = vpop.f32.mrf.mxu0
      %v4040 = vadd.f32 %v3775, %v4039
      %v4041 = vpop.f32.mrf.mxu0
      %4042 = vmatprep.mubr.f32.mxu0 0.0
      %v4043 = vand.u32 %v3822, 4294901760
      %v4044 = vsub.f32 %v3822, %v4043
      %v4045 = vand.u32 %v4044, 4294901760
      %v4046 = vsub.f32 %v4044, %v4045
      %v4047 = vand.u32 %v4046, 4294901760
      %4048 = vmatmul.mubr.f32.gmra.mxu0 %v4047
      %v4049 = vpop.f32.mrf.mxu0
      %v4050 = vadd.f32 %v3775, %v4049
      %v4051 = vpop.f32.mrf.mxu0
      %4052 = vdwg.mxu0
      %4053 = vmatprep.subr.mxu0 0.0
      %4054 = vmatpush1.msra.mxu0 0.0
      %4055 = vmatprep.subr.mxu0 0.0
      %4056 = vmatpush1.msra.mxu0 0.0
      %4057 = vmatprep.subr.mxu0 0.0
      %4058 = vmatpush1.msra.mxu0 0.0
      %4059 = vmatprep.subr.mxu0 0.0
      %4060 = vmatpush1.msra.mxu0 0.0
      %4061 = vmatprep.subr.mxu0 0.0
      %4062 = vmatpush1.msra.mxu0 0.0
      %4063 = vmatprep.subr.mxu0 0.0
      %4064 = vmatpush1.msra.mxu0 0.0
      %4065 = vmatprep.subr.mxu0 0.0
      %4066 = vmatpush1.msra.mxu0 0.0
      %4067 = vmatprep.subr.mxu0 0.0
      %4068 = vmatpush1.msra.mxu0 0.0
      %4069 = vmatprep.subr.mxu0 0.0
      %4070 = vmatpush1.msra.mxu0 0.0
      %4071 = vmatprep.subr.mxu0 0.0
      %4072 = vmatpush1.msra.mxu0 0.0
      %4073 = vmatprep.subr.mxu0 0.0
      %4074 = vmatpush1.msra.mxu0 0.0
      %4075 = vmatprep.subr.mxu0 0.0
      %4076 = vmatpush1.msra.mxu0 0.0
      %4077 = vmatprep.subr.mxu0 0.0
      %v4078 = vand.u32 %v3765, 4294901760
      %v4079 = vsub.f32 %v3765, %v4078
      %v4080 = vand.u32 %v4079, 4294901760
      %v4081 = vsub.f32 %v4079, %v4080
      %v4082 = vand.u32 %v4081, 4294901760
      %4083 = vmatpush1.msra.mxu0 %v4082
      %4084 = vmatprep.subr.mxu0 0.0
      %v4085 = vand.u32 %v3764, 4294901760
      %v4086 = vsub.f32 %v3764, %v4085
      %v4087 = vand.u32 %v4086, 4294901760
      %v4088 = vsub.f32 %v4086, %v4087
      %v4089 = vand.u32 %v4088, 4294901760
      %4090 = vmatpush1.msra.mxu0 %v4089
      %4091 = vmatprep.subr.mxu0 0.0
      %v4092 = vand.u32 %v3763, 4294901760
      %v4093 = vsub.f32 %v3763, %v4092
      %v4094 = vand.u32 %v4093, 4294901760
      %v4095 = vsub.f32 %v4093, %v4094
      %v4096 = vand.u32 %v4095, 4294901760
      %4097 = vmatpush1.msra.mxu0 %v4096
      %4098 = vmatprep.subr.mxu0 0.0
      %v4099 = vand.u32 %v3762, 4294901760
      %v4100 = vsub.f32 %v3762, %v4099
      %v4101 = vand.u32 %v4100, 4294901760
      %v4102 = vsub.f32 %v4100, %v4101
      %v4103 = vand.u32 %v4102, 4294901760
      %4104 = vmatpush1.msra.mxu0 %v4103
      %4105 = vmatprep.subr.mxu0 0.0
      %4106 = vmatpush2.msra.mxu0 0.0
      %4107 = vmatprep.subr.mxu0 0.0
      %4108 = vmatpush2.msra.mxu0 0.0
      %4109 = vmatprep.subr.mxu0 0.0
      %4110 = vmatpush2.msra.mxu0 0.0
      %4111 = vmatprep.subr.mxu0 0.0
      %4112 = vmatpush2.msra.mxu0 0.0
      %4113 = vmatprep.subr.mxu0 0.0
      %4114 = vmatpush2.msra.mxu0 0.0
      %4115 = vmatprep.subr.mxu0 0.0
      %4116 = vmatpush2.msra.mxu0 0.0
      %4117 = vmatprep.subr.mxu0 0.0
      %4118 = vmatpush2.msra.mxu0 0.0
      %4119 = vmatprep.subr.mxu0 0.0
      %4120 = vmatpush2.msra.mxu0 0.0
      %4121 = vmatprep.subr.mxu0 0.0
      %4122 = vmatpush2.msra.mxu0 0.0
      %4123 = vmatprep.subr.mxu0 0.0
      %4124 = vmatpush2.msra.mxu0 0.0
      %4125 = vmatprep.subr.mxu0 0.0
      %4126 = vmatpush2.msra.mxu0 0.0
      %4127 = vmatprep.subr.mxu0 0.0
      %4128 = vmatpush2.msra.mxu0 0.0
      %4129 = vmatprep.subr.mxu0 0.0
      %4130 = vmatpush2.msra.mxu0 0.0
      %4131 = vmatprep.subr.mxu0 0.0
      %4132 = vmatpush2.msra.mxu0 0.0
      %4133 = vmatprep.subr.mxu0 0.0
      %4134 = vmatpush2.msra.mxu0 0.0
      %4135 = vmatprep.subr.mxu0 0.0
      %4136 = vmatpush2.msra.mxu0 0.0
      %4137 = vmatprep.mubr.f32.mxu0 0.0
      %v4138 = vand.u32 %v3777, 4294901760
      %4139 = vmatmul.mubr.f32.gmra.mxu0 %v4138
      %v4140 = vpop.f32.mrf.mxu0
      %v4141 = vadd.f32 %v3900, %v4140
      %v4142 = vpop.f32.mrf.mxu0
      %4143 = vmatprep.mubr.f32.mxu0 0.0
      %v4144 = vand.u32 %v3780, 4294901760
      %4145 = vmatmul.mubr.f32.gmra.mxu0 %v4144
      %v4146 = vpop.f32.mrf.mxu0
      %v4147 = vadd.f32 %v3910, %v4146
      %v4148 = vpop.f32.mrf.mxu0
      %4149 = vmatprep.mubr.f32.mxu0 0.0
      %v4150 = vand.u32 %v3783, 4294901760
      %4151 = vmatmul.mubr.f32.gmra.mxu0 %v4150
      %v4152 = vpop.f32.mrf.mxu0
      %v4153 = vadd.f32 %v3920, %v4152
      %v4154 = vpop.f32.mrf.mxu0
      %4155 = vmatprep.mubr.f32.mxu0 0.0
      %v4156 = vand.u32 %v3786, 4294901760
      %4157 = vmatmul.mubr.f32.gmra.mxu0 %v4156
      %v4158 = vpop.f32.mrf.mxu0
      %v4159 = vadd.f32 %v3930, %v4158
      %v4160 = vpop.f32.mrf.mxu0
      %4161 = vmatprep.mubr.f32.mxu0 0.0
      %v4162 = vand.u32 %v3789, 4294901760
      %4163 = vmatmul.mubr.f32.gmra.mxu0 %v4162
      %v4164 = vpop.f32.mrf.mxu0
      %v4165 = vadd.f32 %v3940, %v4164
      %v4166 = vpop.f32.mrf.mxu0
      %4167 = vmatprep.mubr.f32.mxu0 0.0
      %v4168 = vand.u32 %v3792, 4294901760
      %4169 = vmatmul.mubr.f32.gmra.mxu0 %v4168
      %v4170 = vpop.f32.mrf.mxu0
      %v4171 = vadd.f32 %v3950, %v4170
      %v4172 = vpop.f32.mrf.mxu0
      %4173 = vmatprep.mubr.f32.mxu0 0.0
      %v4174 = vand.u32 %v3795, 4294901760
      %4175 = vmatmul.mubr.f32.gmra.mxu0 %v4174
      %v4176 = vpop.f32.mrf.mxu0
      %v4177 = vadd.f32 %v3960, %v4176
      %v4178 = vpop.f32.mrf.mxu0
      %4179 = vmatprep.mubr.f32.mxu0 0.0
      %v4180 = vand.u32 %v3798, 4294901760
      %4181 = vmatmul.mubr.f32.gmra.mxu0 %v4180
      %v4182 = vpop.f32.mrf.mxu0
      %v4183 = vadd.f32 %v3970, %v4182
      %v4184 = vpop.f32.mrf.mxu0
      %4185 = vmatprep.mubr.f32.mxu0 0.0
      %v4186 = vand.u32 %v3801, 4294901760
      %4187 = vmatmul.mubr.f32.gmra.mxu0 %v4186
      %v4188 = vpop.f32.mrf.mxu0
      %v4189 = vadd.f32 %v3980, %v4188
      %v4190 = vpop.f32.mrf.mxu0
      %4191 = vmatprep.mubr.f32.mxu0 0.0
      %v4192 = vand.u32 %v3804, 4294901760
      %4193 = vmatmul.mubr.f32.gmra.mxu0 %v4192
      %v4194 = vpop.f32.mrf.mxu0
      %v4195 = vadd.f32 %v3990, %v4194
      %v4196 = vpop.f32.mrf.mxu0
      %4197 = vmatprep.mubr.f32.mxu0 0.0
      %v4198 = vand.u32 %v3807, 4294901760
      %4199 = vmatmul.mubr.f32.gmra.mxu0 %v4198
      %v4200 = vpop.f32.mrf.mxu0
      %v4201 = vadd.f32 %v4000, %v4200
      %v4202 = vpop.f32.mrf.mxu0
      %4203 = vmatprep.mubr.f32.mxu0 0.0
      %v4204 = vand.u32 %v3810, 4294901760
      %4205 = vmatmul.mubr.f32.gmra.mxu0 %v4204
      %v4206 = vpop.f32.mrf.mxu0
      %v4207 = vadd.f32 %v4010, %v4206
      %v4208 = vpop.f32.mrf.mxu0
      %4209 = vmatprep.mubr.f32.mxu0 0.0
      %v4210 = vand.u32 %v3813, 4294901760
      %4211 = vmatmul.mubr.f32.gmra.mxu0 %v4210
      %v4212 = vpop.f32.mrf.mxu0
      %v4213 = vadd.f32 %v4020, %v4212
      %v4214 = vpop.f32.mrf.mxu0
      %4215 = vmatprep.mubr.f32.mxu0 0.0
      %v4216 = vand.u32 %v3816, 4294901760
      %4217 = vmatmul.mubr.f32.gmra.mxu0 %v4216
      %v4218 = vpop.f32.mrf.mxu0
      %v4219 = vadd.f32 %v4030, %v4218
      %v4220 = vpop.f32.mrf.mxu0
      %4221 = vmatprep.mubr.f32.mxu0 0.0
      %v4222 = vand.u32 %v3819, 4294901760
      %4223 = vmatmul.mubr.f32.gmra.mxu0 %v4222
      %v4224 = vpop.f32.mrf.mxu0
      %v4225 = vadd.f32 %v4040, %v4224
      %v4226 = vpop.f32.mrf.mxu0
      %4227 = vmatprep.mubr.f32.mxu0 0.0
      %v4228 = vand.u32 %v3822, 4294901760
      %4229 = vmatmul.mubr.f32.gmra.mxu0 %v4228
      %v4230 = vpop.f32.mrf.mxu0
      %v4231 = vadd.f32 %v4050, %v4230
      %v4232 = vpop.f32.mrf.mxu0
      %4233 = vdwg.mxu0
      %4234 = vmatprep.subr.mxu0 0.0
      %4235 = vmatpush1.msra.mxu0 0.0
      %4236 = vmatprep.subr.mxu0 0.0
      %4237 = vmatpush1.msra.mxu0 0.0
      %4238 = vmatprep.subr.mxu0 0.0
      %4239 = vmatpush1.msra.mxu0 0.0
      %4240 = vmatprep.subr.mxu0 0.0
      %4241 = vmatpush1.msra.mxu0 0.0
      %4242 = vmatprep.subr.mxu0 0.0
      %4243 = vmatpush1.msra.mxu0 0.0
      %4244 = vmatprep.subr.mxu0 0.0
      %4245 = vmatpush1.msra.mxu0 0.0
      %4246 = vmatprep.subr.mxu0 0.0
      %4247 = vmatpush1.msra.mxu0 0.0
      %4248 = vmatprep.subr.mxu0 0.0
      %4249 = vmatpush1.msra.mxu0 0.0
      %4250 = vmatprep.subr.mxu0 0.0
      %4251 = vmatpush1.msra.mxu0 0.0
      %4252 = vmatprep.subr.mxu0 0.0
      %4253 = vmatpush1.msra.mxu0 0.0
      %4254 = vmatprep.subr.mxu0 0.0
      %4255 = vmatpush1.msra.mxu0 0.0
      %4256 = vmatprep.subr.mxu0 0.0
      %4257 = vmatpush1.msra.mxu0 0.0
      %4258 = vmatprep.subr.mxu0 0.0
      %v4259 = vand.u32 %v3765, 4294901760
      %v4260 = vsub.f32 %v3765, %v4259
      %4261 = vmatpush1.msra.mxu0 %v4260
      %4262 = vmatprep.subr.mxu0 0.0
      %v4263 = vand.u32 %v3764, 4294901760
      %v4264 = vsub.f32 %v3764, %v4263
      %4265 = vmatpush1.msra.mxu0 %v4264
      %4266 = vmatprep.subr.mxu0 0.0
      %v4267 = vand.u32 %v3763, 4294901760
      %v4268 = vsub.f32 %v3763, %v4267
      %4269 = vmatpush1.msra.mxu0 %v4268
      %4270 = vmatprep.subr.mxu0 0.0
      %v4271 = vand.u32 %v3762, 4294901760
      %v4272 = vsub.f32 %v3762, %v4271
      %4273 = vmatpush1.msra.mxu0 %v4272
      %4274 = vmatprep.subr.mxu0 0.0
      %4275 = vmatpush2.msra.mxu0 0.0
      %4276 = vmatprep.subr.mxu0 0.0
      %4277 = vmatpush2.msra.mxu0 0.0
      %4278 = vmatprep.subr.mxu0 0.0
      %4279 = vmatpush2.msra.mxu0 0.0
      %4280 = vmatprep.subr.mxu0 0.0
      %4281 = vmatpush2.msra.mxu0 0.0
      %4282 = vmatprep.subr.mxu0 0.0
      %4283 = vmatpush2.msra.mxu0 0.0
      %4284 = vmatprep.subr.mxu0 0.0
      %4285 = vmatpush2.msra.mxu0 0.0
      %4286 = vmatprep.subr.mxu0 0.0
      %4287 = vmatpush2.msra.mxu0 0.0
      %4288 = vmatprep.subr.mxu0 0.0
      %4289 = vmatpush2.msra.mxu0 0.0
      %4290 = vmatprep.subr.mxu0 0.0
      %4291 = vmatpush2.msra.mxu0 0.0
      %4292 = vmatprep.subr.mxu0 0.0
      %4293 = vmatpush2.msra.mxu0 0.0
      %4294 = vmatprep.subr.mxu0 0.0
      %4295 = vmatpush2.msra.mxu0 0.0
      %4296 = vmatprep.subr.mxu0 0.0
      %4297 = vmatpush2.msra.mxu0 0.0
      %4298 = vmatprep.subr.mxu0 0.0
      %4299 = vmatpush2.msra.mxu0 0.0
      %4300 = vmatprep.subr.mxu0 0.0
      %4301 = vmatpush2.msra.mxu0 0.0
      %4302 = vmatprep.subr.mxu0 0.0
      %4303 = vmatpush2.msra.mxu0 0.0
      %4304 = vmatprep.subr.mxu0 0.0
      %4305 = vmatpush2.msra.mxu0 0.0
      %4306 = vmatprep.mubr.f32.mxu0 0.0
      %v4307 = vand.u32 %v3777, 4294901760
      %v4308 = vsub.f32 %v3777, %v4307
      %4309 = vmatmul.mubr.f32.gmra.mxu0 %v4308
      %v4310 = vpop.f32.mrf.mxu0
      %v4311 = vadd.f32 %v4141, %v4310
      %v4312 = vpop.f32.mrf.mxu0
      %4313 = vmatprep.mubr.f32.mxu0 0.0
      %v4314 = vand.u32 %v3780, 4294901760
      %v4315 = vsub.f32 %v3780, %v4314
      %4316 = vmatmul.mubr.f32.gmra.mxu0 %v4315
      %v4317 = vpop.f32.mrf.mxu0
      %v4318 = vadd.f32 %v4147, %v4317
      %v4319 = vpop.f32.mrf.mxu0
      %4320 = vmatprep.mubr.f32.mxu0 0.0
      %v4321 = vand.u32 %v3783, 4294901760
      %v4322 = vsub.f32 %v3783, %v4321
      %4323 = vmatmul.mubr.f32.gmra.mxu0 %v4322
      %v4324 = vpop.f32.mrf.mxu0
      %v4325 = vadd.f32 %v4153, %v4324
      %v4326 = vpop.f32.mrf.mxu0
      %4327 = vmatprep.mubr.f32.mxu0 0.0
      %v4328 = vand.u32 %v3786, 4294901760
      %v4329 = vsub.f32 %v3786, %v4328
      %4330 = vmatmul.mubr.f32.gmra.mxu0 %v4329
      %v4331 = vpop.f32.mrf.mxu0
      %v4332 = vadd.f32 %v4159, %v4331
      %v4333 = vpop.f32.mrf.mxu0
      %4334 = vmatprep.mubr.f32.mxu0 0.0
      %v4335 = vand.u32 %v3789, 4294901760
      %v4336 = vsub.f32 %v3789, %v4335
      %4337 = vmatmul.mubr.f32.gmra.mxu0 %v4336
      %v4338 = vpop.f32.mrf.mxu0
      %v4339 = vadd.f32 %v4165, %v4338
      %v4340 = vpop.f32.mrf.mxu0
      %4341 = vmatprep.mubr.f32.mxu0 0.0
      %v4342 = vand.u32 %v3792, 4294901760
      %v4343 = vsub.f32 %v3792, %v4342
      %4344 = vmatmul.mubr.f32.gmra.mxu0 %v4343
      %v4345 = vpop.f32.mrf.mxu0
      %v4346 = vadd.f32 %v4171, %v4345
      %v4347 = vpop.f32.mrf.mxu0
      %4348 = vmatprep.mubr.f32.mxu0 0.0
      %v4349 = vand.u32 %v3795, 4294901760
      %v4350 = vsub.f32 %v3795, %v4349
      %4351 = vmatmul.mubr.f32.gmra.mxu0 %v4350
      %v4352 = vpop.f32.mrf.mxu0
      %v4353 = vadd.f32 %v4177, %v4352
      %v4354 = vpop.f32.mrf.mxu0
      %4355 = vmatprep.mubr.f32.mxu0 0.0
      %v4356 = vand.u32 %v3798, 4294901760
      %v4357 = vsub.f32 %v3798, %v4356
      %4358 = vmatmul.mubr.f32.gmra.mxu0 %v4357
      %v4359 = vpop.f32.mrf.mxu0
      %v4360 = vadd.f32 %v4183, %v4359
      %v4361 = vpop.f32.mrf.mxu0
      %4362 = vmatprep.mubr.f32.mxu0 0.0
      %v4363 = vand.u32 %v3801, 4294901760
      %v4364 = vsub.f32 %v3801, %v4363
      %4365 = vmatmul.mubr.f32.gmra.mxu0 %v4364
      %v4366 = vpop.f32.mrf.mxu0
      %v4367 = vadd.f32 %v4189, %v4366
      %v4368 = vpop.f32.mrf.mxu0
      %4369 = vmatprep.mubr.f32.mxu0 0.0
      %v4370 = vand.u32 %v3804, 4294901760
      %v4371 = vsub.f32 %v3804, %v4370
      %4372 = vmatmul.mubr.f32.gmra.mxu0 %v4371
      %v4373 = vpop.f32.mrf.mxu0
      %v4374 = vadd.f32 %v4195, %v4373
      %v4375 = vpop.f32.mrf.mxu0
      %4376 = vmatprep.mubr.f32.mxu0 0.0
      %v4377 = vand.u32 %v3807, 4294901760
      %v4378 = vsub.f32 %v3807, %v4377
      %4379 = vmatmul.mubr.f32.gmra.mxu0 %v4378
      %v4380 = vpop.f32.mrf.mxu0
      %v4381 = vadd.f32 %v4201, %v4380
      %v4382 = vpop.f32.mrf.mxu0
      %4383 = vmatprep.mubr.f32.mxu0 0.0
      %v4384 = vand.u32 %v3810, 4294901760
      %v4385 = vsub.f32 %v3810, %v4384
      %4386 = vmatmul.mubr.f32.gmra.mxu0 %v4385
      %v4387 = vpop.f32.mrf.mxu0
      %v4388 = vadd.f32 %v4207, %v4387
      %v4389 = vpop.f32.mrf.mxu0
      %4390 = vmatprep.mubr.f32.mxu0 0.0
      %v4391 = vand.u32 %v3813, 4294901760
      %v4392 = vsub.f32 %v3813, %v4391
      %4393 = vmatmul.mubr.f32.gmra.mxu0 %v4392
      %v4394 = vpop.f32.mrf.mxu0
      %v4395 = vadd.f32 %v4213, %v4394
      %v4396 = vpop.f32.mrf.mxu0
      %4397 = vmatprep.mubr.f32.mxu0 0.0
      %v4398 = vand.u32 %v3816, 4294901760
      %v4399 = vsub.f32 %v3816, %v4398
      %4400 = vmatmul.mubr.f32.gmra.mxu0 %v4399
      %v4401 = vpop.f32.mrf.mxu0
      %v4402 = vadd.f32 %v4219, %v4401
      %v4403 = vpop.f32.mrf.mxu0
      %4404 = vmatprep.mubr.f32.mxu0 0.0
      %v4405 = vand.u32 %v3819, 4294901760
      %v4406 = vsub.f32 %v3819, %v4405
      %4407 = vmatmul.mubr.f32.gmra.mxu0 %v4406
      %v4408 = vpop.f32.mrf.mxu0
      %v4409 = vadd.f32 %v4225, %v4408
      %v4410 = vpop.f32.mrf.mxu0
      %4411 = vmatprep.mubr.f32.mxu0 0.0
      %v4412 = vand.u32 %v3822, 4294901760
      %v4413 = vsub.f32 %v3822, %v4412
      %4414 = vmatmul.mubr.f32.gmra.mxu0 %v4413
      %v4415 = vpop.f32.mrf.mxu0
      %v4416 = vadd.f32 %v4231, %v4415
      %v4417 = vpop.f32.mrf.mxu0
      %4418 = vdwg.mxu0
      %4419 = vmatprep.subr.mxu0 0.0
      %4420 = vmatpush1.msra.mxu0 0.0
      %4421 = vmatprep.subr.mxu0 0.0
      %4422 = vmatpush1.msra.mxu0 0.0
      %4423 = vmatprep.subr.mxu0 0.0
      %4424 = vmatpush1.msra.mxu0 0.0
      %4425 = vmatprep.subr.mxu0 0.0
      %4426 = vmatpush1.msra.mxu0 0.0
      %4427 = vmatprep.subr.mxu0 0.0
      %4428 = vmatpush1.msra.mxu0 0.0
      %4429 = vmatprep.subr.mxu0 0.0
      %4430 = vmatpush1.msra.mxu0 0.0
      %4431 = vmatprep.subr.mxu0 0.0
      %4432 = vmatpush1.msra.mxu0 0.0
      %4433 = vmatprep.subr.mxu0 0.0
      %4434 = vmatpush1.msra.mxu0 0.0
      %4435 = vmatprep.subr.mxu0 0.0
      %4436 = vmatpush1.msra.mxu0 0.0
      %4437 = vmatprep.subr.mxu0 0.0
      %4438 = vmatpush1.msra.mxu0 0.0
      %4439 = vmatprep.subr.mxu0 0.0
      %4440 = vmatpush1.msra.mxu0 0.0
      %4441 = vmatprep.subr.mxu0 0.0
      %4442 = vmatpush1.msra.mxu0 0.0
      %4443 = vmatprep.subr.mxu0 0.0
      %v4444 = vand.u32 %v3765, 4294901760
      %4445 = vmatpush1.msra.mxu0 %v4444
      %4446 = vmatprep.subr.mxu0 0.0
      %v4447 = vand.u32 %v3764, 4294901760
      %4448 = vmatpush1.msra.mxu0 %v4447
      %4449 = vmatprep.subr.mxu0 0.0
      %v4450 = vand.u32 %v3763, 4294901760
      %4451 = vmatpush1.msra.mxu0 %v4450
      %4452 = vmatprep.subr.mxu0 0.0
      %v4453 = vand.u32 %v3762, 4294901760
      %4454 = vmatpush1.msra.mxu0 %v4453
      %4455 = vmatprep.subr.mxu0 0.0
      %4456 = vmatpush2.msra.mxu0 0.0
      %4457 = vmatprep.subr.mxu0 0.0
      %4458 = vmatpush2.msra.mxu0 0.0
      %4459 = vmatprep.subr.mxu0 0.0
      %4460 = vmatpush2.msra.mxu0 0.0
      %4461 = vmatprep.subr.mxu0 0.0
      %4462 = vmatpush2.msra.mxu0 0.0
      %4463 = vmatprep.subr.mxu0 0.0
      %4464 = vmatpush2.msra.mxu0 0.0
      %4465 = vmatprep.subr.mxu0 0.0
      %4466 = vmatpush2.msra.mxu0 0.0
      %4467 = vmatprep.subr.mxu0 0.0
      %4468 = vmatpush2.msra.mxu0 0.0
      %4469 = vmatprep.subr.mxu0 0.0
      %4470 = vmatpush2.msra.mxu0 0.0
      %4471 = vmatprep.subr.mxu0 0.0
      %4472 = vmatpush2.msra.mxu0 0.0
      %4473 = vmatprep.subr.mxu0 0.0
      %4474 = vmatpush2.msra.mxu0 0.0
      %4475 = vmatprep.subr.mxu0 0.0
      %4476 = vmatpush2.msra.mxu0 0.0
      %4477 = vmatprep.subr.mxu0 0.0
      %4478 = vmatpush2.msra.mxu0 0.0
      %4479 = vmatprep.subr.mxu0 0.0
      %4480 = vmatpush2.msra.mxu0 0.0
      %4481 = vmatprep.subr.mxu0 0.0
      %4482 = vmatpush2.msra.mxu0 0.0
      %4483 = vmatprep.subr.mxu0 0.0
      %4484 = vmatpush2.msra.mxu0 0.0
      %4485 = vmatprep.subr.mxu0 0.0
      %4486 = vmatpush2.msra.mxu0 0.0
      %4487 = vmatprep.mubr.f32.mxu0 0.0
      %v4488 = vand.u32 %v3777, 4294901760
      %v4489 = vsub.f32 %v3777, %v4488
      %v4490 = vand.u32 %v4489, 4294901760
      %4491 = vmatmul.mubr.f32.gmra.mxu0 %v4490
      %v4492 = vpop.f32.mrf.mxu0
      %v4493 = vadd.f32 %v4311, %v4492
      %v4494 = vpop.f32.mrf.mxu0
      %4495 = vmatprep.mubr.f32.mxu0 0.0
      %v4496 = vand.u32 %v3780, 4294901760
      %v4497 = vsub.f32 %v3780, %v4496
      %v4498 = vand.u32 %v4497, 4294901760
      %4499 = vmatmul.mubr.f32.gmra.mxu0 %v4498
      %v4500 = vpop.f32.mrf.mxu0
      %v4501 = vadd.f32 %v4318, %v4500
      %v4502 = vpop.f32.mrf.mxu0
      %4503 = vmatprep.mubr.f32.mxu0 0.0
      %v4504 = vand.u32 %v3783, 4294901760
      %v4505 = vsub.f32 %v3783, %v4504
      %v4506 = vand.u32 %v4505, 4294901760
      %4507 = vmatmul.mubr.f32.gmra.mxu0 %v4506
      %v4508 = vpop.f32.mrf.mxu0
      %v4509 = vadd.f32 %v4325, %v4508
      %v4510 = vpop.f32.mrf.mxu0
      %4511 = vmatprep.mubr.f32.mxu0 0.0
      %v4512 = vand.u32 %v3786, 4294901760
      %v4513 = vsub.f32 %v3786, %v4512
      %v4514 = vand.u32 %v4513, 4294901760
      %4515 = vmatmul.mubr.f32.gmra.mxu0 %v4514
      %v4516 = vpop.f32.mrf.mxu0
      %v4517 = vadd.f32 %v4332, %v4516
      %v4518 = vpop.f32.mrf.mxu0
      %4519 = vmatprep.mubr.f32.mxu0 0.0
      %v4520 = vand.u32 %v3789, 4294901760
      %v4521 = vsub.f32 %v3789, %v4520
      %v4522 = vand.u32 %v4521, 4294901760
      %4523 = vmatmul.mubr.f32.gmra.mxu0 %v4522
      %v4524 = vpop.f32.mrf.mxu0
      %v4525 = vadd.f32 %v4339, %v4524
      %v4526 = vpop.f32.mrf.mxu0
      %4527 = vmatprep.mubr.f32.mxu0 0.0
      %v4528 = vand.u32 %v3792, 4294901760
      %v4529 = vsub.f32 %v3792, %v4528
      %v4530 = vand.u32 %v4529, 4294901760
      %4531 = vmatmul.mubr.f32.gmra.mxu0 %v4530
      %v4532 = vpop.f32.mrf.mxu0
      %v4533 = vadd.f32 %v4346, %v4532
      %v4534 = vpop.f32.mrf.mxu0
      %4535 = vmatprep.mubr.f32.mxu0 0.0
      %v4536 = vand.u32 %v3795, 4294901760
      %v4537 = vsub.f32 %v3795, %v4536
      %v4538 = vand.u32 %v4537, 4294901760
      %4539 = vmatmul.mubr.f32.gmra.mxu0 %v4538
      %v4540 = vpop.f32.mrf.mxu0
      %v4541 = vadd.f32 %v4353, %v4540
      %v4542 = vpop.f32.mrf.mxu0
      %4543 = vmatprep.mubr.f32.mxu0 0.0
      %v4544 = vand.u32 %v3798, 4294901760
      %v4545 = vsub.f32 %v3798, %v4544
      %v4546 = vand.u32 %v4545, 4294901760
      %4547 = vmatmul.mubr.f32.gmra.mxu0 %v4546
      %v4548 = vpop.f32.mrf.mxu0
      %v4549 = vadd.f32 %v4360, %v4548
      %v4550 = vpop.f32.mrf.mxu0
      %4551 = vmatprep.mubr.f32.mxu0 0.0
      %v4552 = vand.u32 %v3801, 4294901760
      %v4553 = vsub.f32 %v3801, %v4552
      %v4554 = vand.u32 %v4553, 4294901760
      %4555 = vmatmul.mubr.f32.gmra.mxu0 %v4554
      %v4556 = vpop.f32.mrf.mxu0
      %v4557 = vadd.f32 %v4367, %v4556
      %v4558 = vpop.f32.mrf.mxu0
      %4559 = vmatprep.mubr.f32.mxu0 0.0
      %v4560 = vand.u32 %v3804, 4294901760
      %v4561 = vsub.f32 %v3804, %v4560
      %v4562 = vand.u32 %v4561, 4294901760
      %4563 = vmatmul.mubr.f32.gmra.mxu0 %v4562
      %v4564 = vpop.f32.mrf.mxu0
      %v4565 = vadd.f32 %v4374, %v4564
      %v4566 = vpop.f32.mrf.mxu0
      %4567 = vmatprep.mubr.f32.mxu0 0.0
      %v4568 = vand.u32 %v3807, 4294901760
      %v4569 = vsub.f32 %v3807, %v4568
      %v4570 = vand.u32 %v4569, 4294901760
      %4571 = vmatmul.mubr.f32.gmra.mxu0 %v4570
      %v4572 = vpop.f32.mrf.mxu0
      %v4573 = vadd.f32 %v4381, %v4572
      %v4574 = vpop.f32.mrf.mxu0
      %4575 = vmatprep.mubr.f32.mxu0 0.0
      %v4576 = vand.u32 %v3810, 4294901760
      %v4577 = vsub.f32 %v3810, %v4576
      %v4578 = vand.u32 %v4577, 4294901760
      %4579 = vmatmul.mubr.f32.gmra.mxu0 %v4578
      %v4580 = vpop.f32.mrf.mxu0
      %v4581 = vadd.f32 %v4388, %v4580
      %v4582 = vpop.f32.mrf.mxu0
      %4583 = vmatprep.mubr.f32.mxu0 0.0
      %v4584 = vand.u32 %v3813, 4294901760
      %v4585 = vsub.f32 %v3813, %v4584
      %v4586 = vand.u32 %v4585, 4294901760
      %4587 = vmatmul.mubr.f32.gmra.mxu0 %v4586
      %v4588 = vpop.f32.mrf.mxu0
      %v4589 = vadd.f32 %v4395, %v4588
      %v4590 = vpop.f32.mrf.mxu0
      %4591 = vmatprep.mubr.f32.mxu0 0.0
      %v4592 = vand.u32 %v3816, 4294901760
      %v4593 = vsub.f32 %v3816, %v4592
      %v4594 = vand.u32 %v4593, 4294901760
      %4595 = vmatmul.mubr.f32.gmra.mxu0 %v4594
      %v4596 = vpop.f32.mrf.mxu0
      %v4597 = vadd.f32 %v4402, %v4596
      %v4598 = vpop.f32.mrf.mxu0
      %4599 = vmatprep.mubr.f32.mxu0 0.0
      %v4600 = vand.u32 %v3819, 4294901760
      %v4601 = vsub.f32 %v3819, %v4600
      %v4602 = vand.u32 %v4601, 4294901760
      %4603 = vmatmul.mubr.f32.gmra.mxu0 %v4602
      %v4604 = vpop.f32.mrf.mxu0
      %v4605 = vadd.f32 %v4409, %v4604
      %v4606 = vpop.f32.mrf.mxu0
      %4607 = vmatprep.mubr.f32.mxu0 0.0
      %v4608 = vand.u32 %v3822, 4294901760
      %v4609 = vsub.f32 %v3822, %v4608
      %v4610 = vand.u32 %v4609, 4294901760
      %4611 = vmatmul.mubr.f32.gmra.mxu0 %v4610
      %v4612 = vpop.f32.mrf.mxu0
      %v4613 = vadd.f32 %v4416, %v4612
      %v4614 = vpop.f32.mrf.mxu0
      %4615 = vdwg.mxu0
      %4616 = vmatprep.subr.mxu0 0.0
      %4617 = vmatpush1.msra.mxu0 0.0
      %4618 = vmatprep.subr.mxu0 0.0
      %4619 = vmatpush1.msra.mxu0 0.0
      %4620 = vmatprep.subr.mxu0 0.0
      %4621 = vmatpush1.msra.mxu0 0.0
      %4622 = vmatprep.subr.mxu0 0.0
      %4623 = vmatpush1.msra.mxu0 0.0
      %4624 = vmatprep.subr.mxu0 0.0
      %4625 = vmatpush1.msra.mxu0 0.0
      %4626 = vmatprep.subr.mxu0 0.0
      %4627 = vmatpush1.msra.mxu0 0.0
      %4628 = vmatprep.subr.mxu0 0.0
      %4629 = vmatpush1.msra.mxu0 0.0
      %4630 = vmatprep.subr.mxu0 0.0
      %4631 = vmatpush1.msra.mxu0 0.0
      %4632 = vmatprep.subr.mxu0 0.0
      %4633 = vmatpush1.msra.mxu0 0.0
      %4634 = vmatprep.subr.mxu0 0.0
      %4635 = vmatpush1.msra.mxu0 0.0
      %4636 = vmatprep.subr.mxu0 0.0
      %4637 = vmatpush1.msra.mxu0 0.0
      %4638 = vmatprep.subr.mxu0 0.0
      %4639 = vmatpush1.msra.mxu0 0.0
      %4640 = vmatprep.subr.mxu0 0.0
      %v4641 = vand.u32 %v3765, 4294901760
      %v4642 = vsub.f32 %v3765, %v4641
      %v4643 = vand.u32 %v4642, 4294901760
      %4644 = vmatpush1.msra.mxu0 %v4643
      %4645 = vmatprep.subr.mxu0 0.0
      %v4646 = vand.u32 %v3764, 4294901760
      %v4647 = vsub.f32 %v3764, %v4646
      %v4648 = vand.u32 %v4647, 4294901760
      %4649 = vmatpush1.msra.mxu0 %v4648
      %4650 = vmatprep.subr.mxu0 0.0
      %v4651 = vand.u32 %v3763, 4294901760
      %v4652 = vsub.f32 %v3763, %v4651
      %v4653 = vand.u32 %v4652, 4294901760
      %4654 = vmatpush1.msra.mxu0 %v4653
      %4655 = vmatprep.subr.mxu0 0.0
      %v4656 = vand.u32 %v3762, 4294901760
      %v4657 = vsub.f32 %v3762, %v4656
      %v4658 = vand.u32 %v4657, 4294901760
      %4659 = vmatpush1.msra.mxu0 %v4658
      %4660 = vmatprep.subr.mxu0 0.0
      %4661 = vmatpush2.msra.mxu0 0.0
      %4662 = vmatprep.subr.mxu0 0.0
      %4663 = vmatpush2.msra.mxu0 0.0
      %4664 = vmatprep.subr.mxu0 0.0
      %4665 = vmatpush2.msra.mxu0 0.0
      %4666 = vmatprep.subr.mxu0 0.0
      %4667 = vmatpush2.msra.mxu0 0.0
      %4668 = vmatprep.subr.mxu0 0.0
      %4669 = vmatpush2.msra.mxu0 0.0
      %4670 = vmatprep.subr.mxu0 0.0
      %4671 = vmatpush2.msra.mxu0 0.0
      %4672 = vmatprep.subr.mxu0 0.0
      %4673 = vmatpush2.msra.mxu0 0.0
      %4674 = vmatprep.subr.mxu0 0.0
      %4675 = vmatpush2.msra.mxu0 0.0
      %4676 = vmatprep.subr.mxu0 0.0
      %4677 = vmatpush2.msra.mxu0 0.0
      %4678 = vmatprep.subr.mxu0 0.0
      %4679 = vmatpush2.msra.mxu0 0.0
      %4680 = vmatprep.subr.mxu0 0.0
      %4681 = vmatpush2.msra.mxu0 0.0
      %4682 = vmatprep.subr.mxu0 0.0
      %4683 = vmatpush2.msra.mxu0 0.0
      %4684 = vmatprep.subr.mxu0 0.0
      %4685 = vmatpush2.msra.mxu0 0.0
      %4686 = vmatprep.subr.mxu0 0.0
      %4687 = vmatpush2.msra.mxu0 0.0
      %4688 = vmatprep.subr.mxu0 0.0
      %4689 = vmatpush2.msra.mxu0 0.0
      %4690 = vmatprep.subr.mxu0 0.0
      %4691 = vmatpush2.msra.mxu0 0.0
      %4692 = vmatprep.mubr.f32.mxu0 0.0
      %v4693 = vand.u32 %v3777, 4294901760
      %4694 = vmatmul.mubr.f32.gmra.mxu0 %v4693
      %v4695 = vpop.f32.mrf.mxu0
      %v4696 = vadd.f32 %v4493, %v4695
      %v4697 = vpop.f32.mrf.mxu0
      %4698 = vmatprep.mubr.f32.mxu0 0.0
      %v4699 = vand.u32 %v3780, 4294901760
      %4700 = vmatmul.mubr.f32.gmra.mxu0 %v4699
      %v4701 = vpop.f32.mrf.mxu0
      %v4702 = vadd.f32 %v4501, %v4701
      %v4703 = vpop.f32.mrf.mxu0
      %4704 = vmatprep.mubr.f32.mxu0 0.0
      %v4705 = vand.u32 %v3783, 4294901760
      %4706 = vmatmul.mubr.f32.gmra.mxu0 %v4705
      %v4707 = vpop.f32.mrf.mxu0
      %v4708 = vadd.f32 %v4509, %v4707
      %v4709 = vpop.f32.mrf.mxu0
      %4710 = vmatprep.mubr.f32.mxu0 0.0
      %v4711 = vand.u32 %v3786, 4294901760
      %4712 = vmatmul.mubr.f32.gmra.mxu0 %v4711
      %v4713 = vpop.f32.mrf.mxu0
      %v4714 = vadd.f32 %v4517, %v4713
      %v4715 = vpop.f32.mrf.mxu0
      %4716 = vmatprep.mubr.f32.mxu0 0.0
      %v4717 = vand.u32 %v3789, 4294901760
      %4718 = vmatmul.mubr.f32.gmra.mxu0 %v4717
      %v4719 = vpop.f32.mrf.mxu0
      %v4720 = vadd.f32 %v4525, %v4719
      %v4721 = vpop.f32.mrf.mxu0
      %4722 = vmatprep.mubr.f32.mxu0 0.0
      %v4723 = vand.u32 %v3792, 4294901760
      %4724 = vmatmul.mubr.f32.gmra.mxu0 %v4723
      %v4725 = vpop.f32.mrf.mxu0
      %v4726 = vadd.f32 %v4533, %v4725
      %v4727 = vpop.f32.mrf.mxu0
      %4728 = vmatprep.mubr.f32.mxu0 0.0
      %v4729 = vand.u32 %v3795, 4294901760
      %4730 = vmatmul.mubr.f32.gmra.mxu0 %v4729
      %v4731 = vpop.f32.mrf.mxu0
      %v4732 = vadd.f32 %v4541, %v4731
      %v4733 = vpop.f32.mrf.mxu0
      %4734 = vmatprep.mubr.f32.mxu0 0.0
      %v4735 = vand.u32 %v3798, 4294901760
      %4736 = vmatmul.mubr.f32.gmra.mxu0 %v4735
      %v4737 = vpop.f32.mrf.mxu0
      %v4738 = vadd.f32 %v4549, %v4737
      %v4739 = vpop.f32.mrf.mxu0
      %4740 = vmatprep.mubr.f32.mxu0 0.0
      %v4741 = vand.u32 %v3801, 4294901760
      %4742 = vmatmul.mubr.f32.gmra.mxu0 %v4741
      %v4743 = vpop.f32.mrf.mxu0
      %v4744 = vadd.f32 %v4557, %v4743
      %v4745 = vpop.f32.mrf.mxu0
      %4746 = vmatprep.mubr.f32.mxu0 0.0
      %v4747 = vand.u32 %v3804, 4294901760
      %4748 = vmatmul.mubr.f32.gmra.mxu0 %v4747
      %v4749 = vpop.f32.mrf.mxu0
      %v4750 = vadd.f32 %v4565, %v4749
      %v4751 = vpop.f32.mrf.mxu0
      %4752 = vmatprep.mubr.f32.mxu0 0.0
      %v4753 = vand.u32 %v3807, 4294901760
      %4754 = vmatmul.mubr.f32.gmra.mxu0 %v4753
      %v4755 = vpop.f32.mrf.mxu0
      %v4756 = vadd.f32 %v4573, %v4755
      %v4757 = vpop.f32.mrf.mxu0
      %4758 = vmatprep.mubr.f32.mxu0 0.0
      %v4759 = vand.u32 %v3810, 4294901760
      %4760 = vmatmul.mubr.f32.gmra.mxu0 %v4759
      %v4761 = vpop.f32.mrf.mxu0
      %v4762 = vadd.f32 %v4581, %v4761
      %v4763 = vpop.f32.mrf.mxu0
      %4764 = vmatprep.mubr.f32.mxu0 0.0
      %v4765 = vand.u32 %v3813, 4294901760
      %4766 = vmatmul.mubr.f32.gmra.mxu0 %v4765
      %v4767 = vpop.f32.mrf.mxu0
      %v4768 = vadd.f32 %v4589, %v4767
      %v4769 = vpop.f32.mrf.mxu0
      %4770 = vmatprep.mubr.f32.mxu0 0.0
      %v4771 = vand.u32 %v3816, 4294901760
      %4772 = vmatmul.mubr.f32.gmra.mxu0 %v4771
      %v4773 = vpop.f32.mrf.mxu0
      %v4774 = vadd.f32 %v4597, %v4773
      %v4775 = vpop.f32.mrf.mxu0
      %4776 = vmatprep.mubr.f32.mxu0 0.0
      %v4777 = vand.u32 %v3819, 4294901760
      %4778 = vmatmul.mubr.f32.gmra.mxu0 %v4777
      %v4779 = vpop.f32.mrf.mxu0
      %v4780 = vadd.f32 %v4605, %v4779
      %v4781 = vpop.f32.mrf.mxu0
      %4782 = vmatprep.mubr.f32.mxu0 0.0
      %v4783 = vand.u32 %v3822, 4294901760
      %4784 = vmatmul.mubr.f32.gmra.mxu0 %v4783
      %v4785 = vpop.f32.mrf.mxu0
      %v4786 = vadd.f32 %v4613, %v4785
      %v4787 = vpop.f32.mrf.mxu0
      %4788 = vdwg.mxu0
      %4789 = vmatprep.subr.mxu0 0.0
      %4790 = vmatpush1.msra.mxu0 0.0
      %4791 = vmatprep.subr.mxu0 0.0
      %4792 = vmatpush1.msra.mxu0 0.0
      %4793 = vmatprep.subr.mxu0 0.0
      %4794 = vmatpush1.msra.mxu0 0.0
      %4795 = vmatprep.subr.mxu0 0.0
      %4796 = vmatpush1.msra.mxu0 0.0
      %4797 = vmatprep.subr.mxu0 0.0
      %4798 = vmatpush1.msra.mxu0 0.0
      %4799 = vmatprep.subr.mxu0 0.0
      %4800 = vmatpush1.msra.mxu0 0.0
      %4801 = vmatprep.subr.mxu0 0.0
      %4802 = vmatpush1.msra.mxu0 0.0
      %4803 = vmatprep.subr.mxu0 0.0
      %4804 = vmatpush1.msra.mxu0 0.0
      %4805 = vmatprep.subr.mxu0 0.0
      %4806 = vmatpush1.msra.mxu0 0.0
      %4807 = vmatprep.subr.mxu0 0.0
      %4808 = vmatpush1.msra.mxu0 0.0
      %4809 = vmatprep.subr.mxu0 0.0
      %4810 = vmatpush1.msra.mxu0 0.0
      %4811 = vmatprep.subr.mxu0 0.0
      %4812 = vmatpush1.msra.mxu0 0.0
      %4813 = vmatprep.subr.mxu0 0.0
      %v4814 = vand.u32 %v3765, 4294901760
      %4815 = vmatpush1.msra.mxu0 %v4814
      %4816 = vmatprep.subr.mxu0 0.0
      %v4817 = vand.u32 %v3764, 4294901760
      %4818 = vmatpush1.msra.mxu0 %v4817
      %4819 = vmatprep.subr.mxu0 0.0
      %v4820 = vand.u32 %v3763, 4294901760
      %4821 = vmatpush1.msra.mxu0 %v4820
      %4822 = vmatprep.subr.mxu0 0.0
      %v4823 = vand.u32 %v3762, 4294901760
      %4824 = vmatpush1.msra.mxu0 %v4823
      %4825 = vmatprep.subr.mxu0 0.0
      %4826 = vmatpush2.msra.mxu0 0.0
      %4827 = vmatprep.subr.mxu0 0.0
      %4828 = vmatpush2.msra.mxu0 0.0
      %4829 = vmatprep.subr.mxu0 0.0
      %4830 = vmatpush2.msra.mxu0 0.0
      %4831 = vmatprep.subr.mxu0 0.0
      %4832 = vmatpush2.msra.mxu0 0.0
      %4833 = vmatprep.subr.mxu0 0.0
      %4834 = vmatpush2.msra.mxu0 0.0
      %4835 = vmatprep.subr.mxu0 0.0
      %4836 = vmatpush2.msra.mxu0 0.0
      %4837 = vmatprep.subr.mxu0 0.0
      %4838 = vmatpush2.msra.mxu0 0.0
      %4839 = vmatprep.subr.mxu0 0.0
      %4840 = vmatpush2.msra.mxu0 0.0
      %4841 = vmatprep.subr.mxu0 0.0
      %4842 = vmatpush2.msra.mxu0 0.0
      %4843 = vmatprep.subr.mxu0 0.0
      %4844 = vmatpush2.msra.mxu0 0.0
      %4845 = vmatprep.subr.mxu0 0.0
      %4846 = vmatpush2.msra.mxu0 0.0
      %4847 = vmatprep.subr.mxu0 0.0
      %4848 = vmatpush2.msra.mxu0 0.0
      %4849 = vmatprep.subr.mxu0 0.0
      %4850 = vmatpush2.msra.mxu0 0.0
      %4851 = vmatprep.subr.mxu0 0.0
      %4852 = vmatpush2.msra.mxu0 0.0
      %4853 = vmatprep.subr.mxu0 0.0
      %4854 = vmatpush2.msra.mxu0 0.0
      %4855 = vmatprep.subr.mxu0 0.0
      %4856 = vmatpush2.msra.mxu0 0.0
      %4857 = vmatprep.mubr.f32.mxu0 0.0
      %v4858 = vand.u32 %v3777, 4294901760
      %4859 = vmatmul.mubr.f32.gmra.mxu0 %v4858
      %v4860 = vpop.f32.mrf.mxu0
      %v4861 = vadd.f32 %v4696, %v4860
      %v4862 = vpop.f32.mrf.mxu0
      %4863 = vmatprep.mubr.f32.mxu0 0.0
      %v4864 = vand.u32 %v3780, 4294901760
      %4865 = vmatmul.mubr.f32.gmra.mxu0 %v4864
      %v4866 = vpop.f32.mrf.mxu0
      %v4867 = vadd.f32 %v4702, %v4866
      %v4868 = vpop.f32.mrf.mxu0
      %4869 = vmatprep.mubr.f32.mxu0 0.0
      %v4870 = vand.u32 %v3783, 4294901760
      %4871 = vmatmul.mubr.f32.gmra.mxu0 %v4870
      %v4872 = vpop.f32.mrf.mxu0
      %v4873 = vadd.f32 %v4708, %v4872
      %v4874 = vpop.f32.mrf.mxu0
      %4875 = vmatprep.mubr.f32.mxu0 0.0
      %v4876 = vand.u32 %v3786, 4294901760
      %4877 = vmatmul.mubr.f32.gmra.mxu0 %v4876
      %v4878 = vpop.f32.mrf.mxu0
      %v4879 = vadd.f32 %v4714, %v4878
      %v4880 = vpop.f32.mrf.mxu0
      %4881 = vmatprep.mubr.f32.mxu0 0.0
      %v4882 = vand.u32 %v3789, 4294901760
      %4883 = vmatmul.mubr.f32.gmra.mxu0 %v4882
      %v4884 = vpop.f32.mrf.mxu0
      %v4885 = vadd.f32 %v4720, %v4884
      %v4886 = vpop.f32.mrf.mxu0
      %4887 = vmatprep.mubr.f32.mxu0 0.0
      %v4888 = vand.u32 %v3792, 4294901760
      %4889 = vmatmul.mubr.f32.gmra.mxu0 %v4888
      %v4890 = vpop.f32.mrf.mxu0
      %v4891 = vadd.f32 %v4726, %v4890
      %v4892 = vpop.f32.mrf.mxu0
      %4893 = vmatprep.mubr.f32.mxu0 0.0
      %v4894 = vand.u32 %v3795, 4294901760
      %4895 = vmatmul.mubr.f32.gmra.mxu0 %v4894
      %v4896 = vpop.f32.mrf.mxu0
      %v4897 = vadd.f32 %v4732, %v4896
      %v4898 = vpop.f32.mrf.mxu0
      %4899 = vmatprep.mubr.f32.mxu0 0.0
      %v4900 = vand.u32 %v3798, 4294901760
      %4901 = vmatmul.mubr.f32.gmra.mxu0 %v4900
      %v4902 = vpop.f32.mrf.mxu0
      %v4903 = vadd.f32 %v4738, %v4902
      %v4904 = vpop.f32.mrf.mxu0
      %4905 = vmatprep.mubr.f32.mxu0 0.0
      %v4906 = vand.u32 %v3801, 4294901760
      %4907 = vmatmul.mubr.f32.gmra.mxu0 %v4906
      %v4908 = vpop.f32.mrf.mxu0
      %v4909 = vadd.f32 %v4744, %v4908
      %v4910 = vpop.f32.mrf.mxu0
      %4911 = vmatprep.mubr.f32.mxu0 0.0
      %v4912 = vand.u32 %v3804, 4294901760
      %4913 = vmatmul.mubr.f32.gmra.mxu0 %v4912
      %v4914 = vpop.f32.mrf.mxu0
      %v4915 = vadd.f32 %v4750, %v4914
      %v4916 = vpop.f32.mrf.mxu0
      %4917 = vmatprep.mubr.f32.mxu0 0.0
      %v4918 = vand.u32 %v3807, 4294901760
      %4919 = vmatmul.mubr.f32.gmra.mxu0 %v4918
      %v4920 = vpop.f32.mrf.mxu0
      %v4921 = vadd.f32 %v4756, %v4920
      %v4922 = vpop.f32.mrf.mxu0
      %4923 = vmatprep.mubr.f32.mxu0 0.0
      %v4924 = vand.u32 %v3810, 4294901760
      %4925 = vmatmul.mubr.f32.gmra.mxu0 %v4924
      %v4926 = vpop.f32.mrf.mxu0
      %v4927 = vadd.f32 %v4762, %v4926
      %v4928 = vpop.f32.mrf.mxu0
      %4929 = vmatprep.mubr.f32.mxu0 0.0
      %v4930 = vand.u32 %v3813, 4294901760
      %4931 = vmatmul.mubr.f32.gmra.mxu0 %v4930
      %v4932 = vpop.f32.mrf.mxu0
      %v4933 = vadd.f32 %v4768, %v4932
      %v4934 = vpop.f32.mrf.mxu0
      %4935 = vmatprep.mubr.f32.mxu0 0.0
      %v4936 = vand.u32 %v3816, 4294901760
      %4937 = vmatmul.mubr.f32.gmra.mxu0 %v4936
      %v4938 = vpop.f32.mrf.mxu0
      %v4939 = vadd.f32 %v4774, %v4938
      %v4940 = vpop.f32.mrf.mxu0
      %4941 = vmatprep.mubr.f32.mxu0 0.0
      %v4942 = vand.u32 %v3819, 4294901760
      %4943 = vmatmul.mubr.f32.gmra.mxu0 %v4942
      %v4944 = vpop.f32.mrf.mxu0
      %v4945 = vadd.f32 %v4780, %v4944
      %v4946 = vpop.f32.mrf.mxu0
      %4947 = vmatprep.mubr.f32.mxu0 0.0
      %v4948 = vand.u32 %v3822, 4294901760
      %4949 = vmatmul.mubr.f32.gmra.mxu0 %v4948
      %v4950 = vpop.f32.mrf.mxu0
      %v4951 = vadd.f32 %v4786, %v4950
      %v4952 = vpop.f32.mrf.mxu0
      %4953 = vdwg.mxu0
      %v4954 = vmax.f32 %v4861, 0.0
      %v4955 = vmax.f32 %v4867, 0.0
      %v4956 = vmax.f32 %v4873, 0.0
      %v4957 = vmax.f32 %v4879, 0.0
      %v4958 = vmax.f32 %v4885, 0.0
      %v4959 = vmax.f32 %v4891, 0.0
      %v4960 = vmax.f32 %v4897, 0.0
      %v4961 = vmax.f32 %v4903, 0.0
      %v4962 = vmax.f32 %v4909, 0.0
      %v4963 = vmax.f32 %v4915, 0.0
      %v4964 = vmax.f32 %v4921, 0.0
      %v4965 = vmax.f32 %v4927, 0.0
      %v4966 = vmax.f32 %v4933, 0.0
      %v4967 = vmax.f32 %v4939, 0.0
      %v4968 = vmax.f32 %v4945, 0.0
      %v4969 = vmax.f32 %v4951, 0.0
      %v4970 = vlaneseq
      %v4971 = vshrl.u32 %v4970, 7
      %v4972 = vsub.s32 0, %v4971
      %v4973 = vrot.slane %v3771, %v4972
      %v4975 = vsel %vm1353, %v4954, 0
      %v4978 = vsel %vm1353, %v4955, 0
      %v4981 = vsel %vm1353, %v4956, 0
      %v4984 = vsel %vm1353, %v4957, 0
      %v4987 = vsel %vm1353, %v4958, 0
      %v4990 = vsel %vm1353, %v4959, 0
      %v4993 = vsel %vm1353, %v4960, 0
      %v4996 = vsel %vm1353, %v4961, 0
      %v4999 = vsel %vm1353, %v4962, 0
      %v5002 = vsel %vm1353, %v4963, 0
      %v5005 = vsel %vm1353, %v4964, 0
      %v5008 = vsel %vm1353, %v4965, 0
      %v5011 = vsel %vm1353, %v4966, 0
      %v5014 = vsel %vm1353, %v4967, 0
      %v5017 = vsel %vm1353, %v4968, 0
      %v5020 = vsel %vm1353, %v4969, 0
      %5022 = vmatprep.subr.mxu0 0.0
      %5023 = vmatpush1.msra.mxu0 0.0
      %5024 = vmatprep.subr.mxu0 0.0
      %5025 = vmatpush1.msra.mxu0 0.0
      %5026 = vmatprep.subr.mxu0 0.0
      %5027 = vmatpush1.msra.mxu0 0.0
      %5028 = vmatprep.subr.mxu0 0.0
      %5029 = vmatpush1.msra.mxu0 0.0
      %5030 = vmatprep.subr.mxu0 0.0
      %5031 = vmatpush1.msra.mxu0 0.0
      %5032 = vmatprep.subr.mxu0 0.0
      %5033 = vmatpush1.msra.mxu0 0.0
      %5034 = vmatprep.subr.mxu0 0.0
      %5035 = vmatpush1.msra.mxu0 0.0
      %5036 = vmatprep.subr.mxu0 0.0
      %5037 = vmatpush1.msra.mxu0 0.0
      %5038 = vmatprep.subr.mxu0 0.0
      %5039 = vmatpush1.msra.mxu0 0.0
      %5040 = vmatprep.subr.mxu0 0.0
      %5041 = vmatpush1.msra.mxu0 0.0
      %5042 = vmatprep.subr.mxu0 0.0
      %5043 = vmatpush1.msra.mxu0 0.0
      %5044 = vmatprep.subr.mxu0 0.0
      %5045 = vmatpush1.msra.mxu0 0.0
      %5046 = vmatprep.subr.mxu0 0.0
      %v5047 = vand.u32 %v3770, 4294901760
      %5048 = vmatpush1.msra.mxu0 %v5047
      %5049 = vmatprep.subr.mxu0 0.0
      %v5050 = vand.u32 %v3769, 4294901760
      %5051 = vmatpush1.msra.mxu0 %v5050
      %5052 = vmatprep.subr.mxu0 0.0
      %v5053 = vand.u32 %v3768, 4294901760
      %5054 = vmatpush1.msra.mxu0 %v5053
      %5055 = vmatprep.subr.mxu0 0.0
      %v5056 = vand.u32 %v3767, 4294901760
      %5057 = vmatpush1.msra.mxu0 %v5056
      %5058 = vmatprep.subr.mxu0 0.0
      %5059 = vmatpush2.msra.mxu0 0.0
      %5060 = vmatprep.subr.mxu0 0.0
      %5061 = vmatpush2.msra.mxu0 0.0
      %5062 = vmatprep.subr.mxu0 0.0
      %5063 = vmatpush2.msra.mxu0 0.0
      %5064 = vmatprep.subr.mxu0 0.0
      %5065 = vmatpush2.msra.mxu0 0.0
      %5066 = vmatprep.subr.mxu0 0.0
      %5067 = vmatpush2.msra.mxu0 0.0
      %5068 = vmatprep.subr.mxu0 0.0
      %5069 = vmatpush2.msra.mxu0 0.0
      %5070 = vmatprep.subr.mxu0 0.0
      %5071 = vmatpush2.msra.mxu0 0.0
      %5072 = vmatprep.subr.mxu0 0.0
      %5073 = vmatpush2.msra.mxu0 0.0
      %5074 = vmatprep.subr.mxu0 0.0
      %5075 = vmatpush2.msra.mxu0 0.0
      %5076 = vmatprep.subr.mxu0 0.0
      %5077 = vmatpush2.msra.mxu0 0.0
      %5078 = vmatprep.subr.mxu0 0.0
      %5079 = vmatpush2.msra.mxu0 0.0
      %5080 = vmatprep.subr.mxu0 0.0
      %5081 = vmatpush2.msra.mxu0 0.0
      %5082 = vmatprep.subr.mxu0 0.0
      %5083 = vmatpush2.msra.mxu0 0.0
      %5084 = vmatprep.subr.mxu0 0.0
      %5085 = vmatpush2.msra.mxu0 0.0
      %5086 = vmatprep.subr.mxu0 0.0
      %5087 = vmatpush2.msra.mxu0 0.0
      %5088 = vmatprep.subr.mxu0 0.0
      %5089 = vmatpush2.msra.mxu0 0.0
      %5090 = vmatprep.mubr.f32.mxu0 0.0
      %v5091 = vand.u32 %v4975, 4294901760
      %v5092 = vsub.f32 %v4975, %v5091
      %v5093 = vand.u32 %v5092, 4294901760
      %v5094 = vsub.f32 %v5092, %v5093
      %v5095 = vand.u32 %v5094, 4294901760
      %5096 = vmatmul.mubr.f32.gmra.mxu0 %v5095
      %v5097 = vpop.f32.mrf.mxu0
      %v5098 = vadd.f32 %v4973, %v5097
      %v5099 = vpop.f32.mrf.mxu0
      %5100 = vmatprep.mubr.f32.mxu0 0.0
      %v5101 = vand.u32 %v4978, 4294901760
      %v5102 = vsub.f32 %v4978, %v5101
      %v5103 = vand.u32 %v5102, 4294901760
      %v5104 = vsub.f32 %v5102, %v5103
      %v5105 = vand.u32 %v5104, 4294901760
      %5106 = vmatmul.mubr.f32.gmra.mxu0 %v5105
      %v5107 = vpop.f32.mrf.mxu0
      %v5108 = vadd.f32 %v4973, %v5107
      %v5109 = vpop.f32.mrf.mxu0
      %5110 = vmatprep.mubr.f32.mxu0 0.0
      %v5111 = vand.u32 %v4981, 4294901760
      %v5112 = vsub.f32 %v4981, %v5111
      %v5113 = vand.u32 %v5112, 4294901760
      %v5114 = vsub.f32 %v5112, %v5113
      %v5115 = vand.u32 %v5114, 4294901760
      %5116 = vmatmul.mubr.f32.gmra.mxu0 %v5115
      %v5117 = vpop.f32.mrf.mxu0
      %v5118 = vadd.f32 %v4973, %v5117
      %v5119 = vpop.f32.mrf.mxu0
      %5120 = vmatprep.mubr.f32.mxu0 0.0
      %v5121 = vand.u32 %v4984, 4294901760
      %v5122 = vsub.f32 %v4984, %v5121
      %v5123 = vand.u32 %v5122, 4294901760
      %v5124 = vsub.f32 %v5122, %v5123
      %v5125 = vand.u32 %v5124, 4294901760
      %5126 = vmatmul.mubr.f32.gmra.mxu0 %v5125
      %v5127 = vpop.f32.mrf.mxu0
      %v5128 = vadd.f32 %v4973, %v5127
      %v5129 = vpop.f32.mrf.mxu0
      %5130 = vmatprep.mubr.f32.mxu0 0.0
      %v5131 = vand.u32 %v4987, 4294901760
      %v5132 = vsub.f32 %v4987, %v5131
      %v5133 = vand.u32 %v5132, 4294901760
      %v5134 = vsub.f32 %v5132, %v5133
      %v5135 = vand.u32 %v5134, 4294901760
      %5136 = vmatmul.mubr.f32.gmra.mxu0 %v5135
      %v5137 = vpop.f32.mrf.mxu0
      %v5138 = vadd.f32 %v4973, %v5137
      %v5139 = vpop.f32.mrf.mxu0
      %5140 = vmatprep.mubr.f32.mxu0 0.0
      %v5141 = vand.u32 %v4990, 4294901760
      %v5142 = vsub.f32 %v4990, %v5141
      %v5143 = vand.u32 %v5142, 4294901760
      %v5144 = vsub.f32 %v5142, %v5143
      %v5145 = vand.u32 %v5144, 4294901760
      %5146 = vmatmul.mubr.f32.gmra.mxu0 %v5145
      %v5147 = vpop.f32.mrf.mxu0
      %v5148 = vadd.f32 %v4973, %v5147
      %v5149 = vpop.f32.mrf.mxu0
      %5150 = vmatprep.mubr.f32.mxu0 0.0
      %v5151 = vand.u32 %v4993, 4294901760
      %v5152 = vsub.f32 %v4993, %v5151
      %v5153 = vand.u32 %v5152, 4294901760
      %v5154 = vsub.f32 %v5152, %v5153
      %v5155 = vand.u32 %v5154, 4294901760
      %5156 = vmatmul.mubr.f32.gmra.mxu0 %v5155
      %v5157 = vpop.f32.mrf.mxu0
      %v5158 = vadd.f32 %v4973, %v5157
      %v5159 = vpop.f32.mrf.mxu0
      %5160 = vmatprep.mubr.f32.mxu0 0.0
      %v5161 = vand.u32 %v4996, 4294901760
      %v5162 = vsub.f32 %v4996, %v5161
      %v5163 = vand.u32 %v5162, 4294901760
      %v5164 = vsub.f32 %v5162, %v5163
      %v5165 = vand.u32 %v5164, 4294901760
      %5166 = vmatmul.mubr.f32.gmra.mxu0 %v5165
      %v5167 = vpop.f32.mrf.mxu0
      %v5168 = vadd.f32 %v4973, %v5167
      %v5169 = vpop.f32.mrf.mxu0
      %5170 = vmatprep.mubr.f32.mxu0 0.0
      %v5171 = vand.u32 %v4999, 4294901760
      %v5172 = vsub.f32 %v4999, %v5171
      %v5173 = vand.u32 %v5172, 4294901760
      %v5174 = vsub.f32 %v5172, %v5173
      %v5175 = vand.u32 %v5174, 4294901760
      %5176 = vmatmul.mubr.f32.gmra.mxu0 %v5175
      %v5177 = vpop.f32.mrf.mxu0
      %v5178 = vadd.f32 %v4973, %v5177
      %v5179 = vpop.f32.mrf.mxu0
      %5180 = vmatprep.mubr.f32.mxu0 0.0
      %v5181 = vand.u32 %v5002, 4294901760
      %v5182 = vsub.f32 %v5002, %v5181
      %v5183 = vand.u32 %v5182, 4294901760
      %v5184 = vsub.f32 %v5182, %v5183
      %v5185 = vand.u32 %v5184, 4294901760
      %5186 = vmatmul.mubr.f32.gmra.mxu0 %v5185
      %v5187 = vpop.f32.mrf.mxu0
      %v5188 = vadd.f32 %v4973, %v5187
      %v5189 = vpop.f32.mrf.mxu0
      %5190 = vmatprep.mubr.f32.mxu0 0.0
      %v5191 = vand.u32 %v5005, 4294901760
      %v5192 = vsub.f32 %v5005, %v5191
      %v5193 = vand.u32 %v5192, 4294901760
      %v5194 = vsub.f32 %v5192, %v5193
      %v5195 = vand.u32 %v5194, 4294901760
      %5196 = vmatmul.mubr.f32.gmra.mxu0 %v5195
      %v5197 = vpop.f32.mrf.mxu0
      %v5198 = vadd.f32 %v4973, %v5197
      %v5199 = vpop.f32.mrf.mxu0
      %5200 = vmatprep.mubr.f32.mxu0 0.0
      %v5201 = vand.u32 %v5008, 4294901760
      %v5202 = vsub.f32 %v5008, %v5201
      %v5203 = vand.u32 %v5202, 4294901760
      %v5204 = vsub.f32 %v5202, %v5203
      %v5205 = vand.u32 %v5204, 4294901760
      %5206 = vmatmul.mubr.f32.gmra.mxu0 %v5205
      %v5207 = vpop.f32.mrf.mxu0
      %v5208 = vadd.f32 %v4973, %v5207
      %v5209 = vpop.f32.mrf.mxu0
      %5210 = vmatprep.mubr.f32.mxu0 0.0
      %v5211 = vand.u32 %v5011, 4294901760
      %v5212 = vsub.f32 %v5011, %v5211
      %v5213 = vand.u32 %v5212, 4294901760
      %v5214 = vsub.f32 %v5212, %v5213
      %v5215 = vand.u32 %v5214, 4294901760
      %5216 = vmatmul.mubr.f32.gmra.mxu0 %v5215
      %v5217 = vpop.f32.mrf.mxu0
      %v5218 = vadd.f32 %v4973, %v5217
      %v5219 = vpop.f32.mrf.mxu0
      %5220 = vmatprep.mubr.f32.mxu0 0.0
      %v5221 = vand.u32 %v5014, 4294901760
      %v5222 = vsub.f32 %v5014, %v5221
      %v5223 = vand.u32 %v5222, 4294901760
      %v5224 = vsub.f32 %v5222, %v5223
      %v5225 = vand.u32 %v5224, 4294901760
      %5226 = vmatmul.mubr.f32.gmra.mxu0 %v5225
      %v5227 = vpop.f32.mrf.mxu0
      %v5228 = vadd.f32 %v4973, %v5227
      %v5229 = vpop.f32.mrf.mxu0
      %5230 = vmatprep.mubr.f32.mxu0 0.0
      %v5231 = vand.u32 %v5017, 4294901760
      %v5232 = vsub.f32 %v5017, %v5231
      %v5233 = vand.u32 %v5232, 4294901760
      %v5234 = vsub.f32 %v5232, %v5233
      %v5235 = vand.u32 %v5234, 4294901760
      %5236 = vmatmul.mubr.f32.gmra.mxu0 %v5235
      %v5237 = vpop.f32.mrf.mxu0
      %v5238 = vadd.f32 %v4973, %v5237
      %v5239 = vpop.f32.mrf.mxu0
      %5240 = vmatprep.mubr.f32.mxu0 0.0
      %v5241 = vand.u32 %v5020, 4294901760
      %v5242 = vsub.f32 %v5020, %v5241
      %v5243 = vand.u32 %v5242, 4294901760
      %v5244 = vsub.f32 %v5242, %v5243
      %v5245 = vand.u32 %v5244, 4294901760
      %5246 = vmatmul.mubr.f32.gmra.mxu0 %v5245
      %v5247 = vpop.f32.mrf.mxu0
      %v5248 = vadd.f32 %v4973, %v5247
      %v5249 = vpop.f32.mrf.mxu0
      %5250 = vdwg.mxu0
      %5251 = vmatprep.subr.mxu0 0.0
      %5252 = vmatpush1.msra.mxu0 0.0
      %5253 = vmatprep.subr.mxu0 0.0
      %5254 = vmatpush1.msra.mxu0 0.0
      %5255 = vmatprep.subr.mxu0 0.0
      %5256 = vmatpush1.msra.mxu0 0.0
      %5257 = vmatprep.subr.mxu0 0.0
      %5258 = vmatpush1.msra.mxu0 0.0
      %5259 = vmatprep.subr.mxu0 0.0
      %5260 = vmatpush1.msra.mxu0 0.0
      %5261 = vmatprep.subr.mxu0 0.0
      %5262 = vmatpush1.msra.mxu0 0.0
      %5263 = vmatprep.subr.mxu0 0.0
      %5264 = vmatpush1.msra.mxu0 0.0
      %5265 = vmatprep.subr.mxu0 0.0
      %5266 = vmatpush1.msra.mxu0 0.0
      %5267 = vmatprep.subr.mxu0 0.0
      %5268 = vmatpush1.msra.mxu0 0.0
      %5269 = vmatprep.subr.mxu0 0.0
      %5270 = vmatpush1.msra.mxu0 0.0
      %5271 = vmatprep.subr.mxu0 0.0
      %5272 = vmatpush1.msra.mxu0 0.0
      %5273 = vmatprep.subr.mxu0 0.0
      %5274 = vmatpush1.msra.mxu0 0.0
      %5275 = vmatprep.subr.mxu0 0.0
      %v5276 = vand.u32 %v3770, 4294901760
      %v5277 = vsub.f32 %v3770, %v5276
      %v5278 = vand.u32 %v5277, 4294901760
      %v5279 = vsub.f32 %v5277, %v5278
      %v5280 = vand.u32 %v5279, 4294901760
      %5281 = vmatpush1.msra.mxu0 %v5280
      %5282 = vmatprep.subr.mxu0 0.0
      %v5283 = vand.u32 %v3769, 4294901760
      %v5284 = vsub.f32 %v3769, %v5283
      %v5285 = vand.u32 %v5284, 4294901760
      %v5286 = vsub.f32 %v5284, %v5285
      %v5287 = vand.u32 %v5286, 4294901760
      %5288 = vmatpush1.msra.mxu0 %v5287
      %5289 = vmatprep.subr.mxu0 0.0
      %v5290 = vand.u32 %v3768, 4294901760
      %v5291 = vsub.f32 %v3768, %v5290
      %v5292 = vand.u32 %v5291, 4294901760
      %v5293 = vsub.f32 %v5291, %v5292
      %v5294 = vand.u32 %v5293, 4294901760
      %5295 = vmatpush1.msra.mxu0 %v5294
      %5296 = vmatprep.subr.mxu0 0.0
      %v5297 = vand.u32 %v3767, 4294901760
      %v5298 = vsub.f32 %v3767, %v5297
      %v5299 = vand.u32 %v5298, 4294901760
      %v5300 = vsub.f32 %v5298, %v5299
      %v5301 = vand.u32 %v5300, 4294901760
      %5302 = vmatpush1.msra.mxu0 %v5301
      %5303 = vmatprep.subr.mxu0 0.0
      %5304 = vmatpush2.msra.mxu0 0.0
      %5305 = vmatprep.subr.mxu0 0.0
      %5306 = vmatpush2.msra.mxu0 0.0
      %5307 = vmatprep.subr.mxu0 0.0
      %5308 = vmatpush2.msra.mxu0 0.0
      %5309 = vmatprep.subr.mxu0 0.0
      %5310 = vmatpush2.msra.mxu0 0.0
      %5311 = vmatprep.subr.mxu0 0.0
      %5312 = vmatpush2.msra.mxu0 0.0
      %5313 = vmatprep.subr.mxu0 0.0
      %5314 = vmatpush2.msra.mxu0 0.0
      %5315 = vmatprep.subr.mxu0 0.0
      %5316 = vmatpush2.msra.mxu0 0.0
      %5317 = vmatprep.subr.mxu0 0.0
      %5318 = vmatpush2.msra.mxu0 0.0
      %5319 = vmatprep.subr.mxu0 0.0
      %5320 = vmatpush2.msra.mxu0 0.0
      %5321 = vmatprep.subr.mxu0 0.0
      %5322 = vmatpush2.msra.mxu0 0.0
      %5323 = vmatprep.subr.mxu0 0.0
      %5324 = vmatpush2.msra.mxu0 0.0
      %5325 = vmatprep.subr.mxu0 0.0
      %5326 = vmatpush2.msra.mxu0 0.0
      %5327 = vmatprep.subr.mxu0 0.0
      %5328 = vmatpush2.msra.mxu0 0.0
      %5329 = vmatprep.subr.mxu0 0.0
      %5330 = vmatpush2.msra.mxu0 0.0
      %5331 = vmatprep.subr.mxu0 0.0
      %5332 = vmatpush2.msra.mxu0 0.0
      %5333 = vmatprep.subr.mxu0 0.0
      %5334 = vmatpush2.msra.mxu0 0.0
      %5335 = vmatprep.mubr.f32.mxu0 0.0
      %v5336 = vand.u32 %v4975, 4294901760
      %5337 = vmatmul.mubr.f32.gmra.mxu0 %v5336
      %v5338 = vpop.f32.mrf.mxu0
      %v5339 = vadd.f32 %v5098, %v5338
      %v5340 = vpop.f32.mrf.mxu0
      %5341 = vmatprep.mubr.f32.mxu0 0.0
      %v5342 = vand.u32 %v4978, 4294901760
      %5343 = vmatmul.mubr.f32.gmra.mxu0 %v5342
      %v5344 = vpop.f32.mrf.mxu0
      %v5345 = vadd.f32 %v5108, %v5344
      %v5346 = vpop.f32.mrf.mxu0
      %5347 = vmatprep.mubr.f32.mxu0 0.0
      %v5348 = vand.u32 %v4981, 4294901760
      %5349 = vmatmul.mubr.f32.gmra.mxu0 %v5348
      %v5350 = vpop.f32.mrf.mxu0
      %v5351 = vadd.f32 %v5118, %v5350
      %v5352 = vpop.f32.mrf.mxu0
      %5353 = vmatprep.mubr.f32.mxu0 0.0
      %v5354 = vand.u32 %v4984, 4294901760
      %5355 = vmatmul.mubr.f32.gmra.mxu0 %v5354
      %v5356 = vpop.f32.mrf.mxu0
      %v5357 = vadd.f32 %v5128, %v5356
      %v5358 = vpop.f32.mrf.mxu0
      %5359 = vmatprep.mubr.f32.mxu0 0.0
      %v5360 = vand.u32 %v4987, 4294901760
      %5361 = vmatmul.mubr.f32.gmra.mxu0 %v5360
      %v5362 = vpop.f32.mrf.mxu0
      %v5363 = vadd.f32 %v5138, %v5362
      %v5364 = vpop.f32.mrf.mxu0
      %5365 = vmatprep.mubr.f32.mxu0 0.0
      %v5366 = vand.u32 %v4990, 4294901760
      %5367 = vmatmul.mubr.f32.gmra.mxu0 %v5366
      %v5368 = vpop.f32.mrf.mxu0
      %v5369 = vadd.f32 %v5148, %v5368
      %v5370 = vpop.f32.mrf.mxu0
      %5371 = vmatprep.mubr.f32.mxu0 0.0
      %v5372 = vand.u32 %v4993, 4294901760
      %5373 = vmatmul.mubr.f32.gmra.mxu0 %v5372
      %v5374 = vpop.f32.mrf.mxu0
      %v5375 = vadd.f32 %v5158, %v5374
      %v5376 = vpop.f32.mrf.mxu0
      %5377 = vmatprep.mubr.f32.mxu0 0.0
      %v5378 = vand.u32 %v4996, 4294901760
      %5379 = vmatmul.mubr.f32.gmra.mxu0 %v5378
      %v5380 = vpop.f32.mrf.mxu0
      %v5381 = vadd.f32 %v5168, %v5380
      %v5382 = vpop.f32.mrf.mxu0
      %5383 = vmatprep.mubr.f32.mxu0 0.0
      %v5384 = vand.u32 %v4999, 4294901760
      %5385 = vmatmul.mubr.f32.gmra.mxu0 %v5384
      %v5386 = vpop.f32.mrf.mxu0
      %v5387 = vadd.f32 %v5178, %v5386
      %v5388 = vpop.f32.mrf.mxu0
      %5389 = vmatprep.mubr.f32.mxu0 0.0
      %v5390 = vand.u32 %v5002, 4294901760
      %5391 = vmatmul.mubr.f32.gmra.mxu0 %v5390
      %v5392 = vpop.f32.mrf.mxu0
      %v5393 = vadd.f32 %v5188, %v5392
      %v5394 = vpop.f32.mrf.mxu0
      %5395 = vmatprep.mubr.f32.mxu0 0.0
      %v5396 = vand.u32 %v5005, 4294901760
      %5397 = vmatmul.mubr.f32.gmra.mxu0 %v5396
      %v5398 = vpop.f32.mrf.mxu0
      %v5399 = vadd.f32 %v5198, %v5398
      %v5400 = vpop.f32.mrf.mxu0
      %5401 = vmatprep.mubr.f32.mxu0 0.0
      %v5402 = vand.u32 %v5008, 4294901760
      %5403 = vmatmul.mubr.f32.gmra.mxu0 %v5402
      %v5404 = vpop.f32.mrf.mxu0
      %v5405 = vadd.f32 %v5208, %v5404
      %v5406 = vpop.f32.mrf.mxu0
      %5407 = vmatprep.mubr.f32.mxu0 0.0
      %v5408 = vand.u32 %v5011, 4294901760
      %5409 = vmatmul.mubr.f32.gmra.mxu0 %v5408
      %v5410 = vpop.f32.mrf.mxu0
      %v5411 = vadd.f32 %v5218, %v5410
      %v5412 = vpop.f32.mrf.mxu0
      %5413 = vmatprep.mubr.f32.mxu0 0.0
      %v5414 = vand.u32 %v5014, 4294901760
      %5415 = vmatmul.mubr.f32.gmra.mxu0 %v5414
      %v5416 = vpop.f32.mrf.mxu0
      %v5417 = vadd.f32 %v5228, %v5416
      %v5418 = vpop.f32.mrf.mxu0
      %5419 = vmatprep.mubr.f32.mxu0 0.0
      %v5420 = vand.u32 %v5017, 4294901760
      %5421 = vmatmul.mubr.f32.gmra.mxu0 %v5420
      %v5422 = vpop.f32.mrf.mxu0
      %v5423 = vadd.f32 %v5238, %v5422
      %v5424 = vpop.f32.mrf.mxu0
      %5425 = vmatprep.mubr.f32.mxu0 0.0
      %v5426 = vand.u32 %v5020, 4294901760
      %5427 = vmatmul.mubr.f32.gmra.mxu0 %v5426
      %v5428 = vpop.f32.mrf.mxu0
      %v5429 = vadd.f32 %v5248, %v5428
      %v5430 = vpop.f32.mrf.mxu0
      %5431 = vdwg.mxu0
      %5432 = vmatprep.subr.mxu0 0.0
      %5433 = vmatpush1.msra.mxu0 0.0
      %5434 = vmatprep.subr.mxu0 0.0
      %5435 = vmatpush1.msra.mxu0 0.0
      %5436 = vmatprep.subr.mxu0 0.0
      %5437 = vmatpush1.msra.mxu0 0.0
      %5438 = vmatprep.subr.mxu0 0.0
      %5439 = vmatpush1.msra.mxu0 0.0
      %5440 = vmatprep.subr.mxu0 0.0
      %5441 = vmatpush1.msra.mxu0 0.0
      %5442 = vmatprep.subr.mxu0 0.0
      %5443 = vmatpush1.msra.mxu0 0.0
      %5444 = vmatprep.subr.mxu0 0.0
      %5445 = vmatpush1.msra.mxu0 0.0
      %5446 = vmatprep.subr.mxu0 0.0
      %5447 = vmatpush1.msra.mxu0 0.0
      %5448 = vmatprep.subr.mxu0 0.0
      %5449 = vmatpush1.msra.mxu0 0.0
      %5450 = vmatprep.subr.mxu0 0.0
      %5451 = vmatpush1.msra.mxu0 0.0
      %5452 = vmatprep.subr.mxu0 0.0
      %5453 = vmatpush1.msra.mxu0 0.0
      %5454 = vmatprep.subr.mxu0 0.0
      %5455 = vmatpush1.msra.mxu0 0.0
      %5456 = vmatprep.subr.mxu0 0.0
      %v5457 = vand.u32 %v3770, 4294901760
      %v5458 = vsub.f32 %v3770, %v5457
      %5459 = vmatpush1.msra.mxu0 %v5458
      %5460 = vmatprep.subr.mxu0 0.0
      %v5461 = vand.u32 %v3769, 4294901760
      %v5462 = vsub.f32 %v3769, %v5461
      %5463 = vmatpush1.msra.mxu0 %v5462
      %5464 = vmatprep.subr.mxu0 0.0
      %v5465 = vand.u32 %v3768, 4294901760
      %v5466 = vsub.f32 %v3768, %v5465
      %5467 = vmatpush1.msra.mxu0 %v5466
      %5468 = vmatprep.subr.mxu0 0.0
      %v5469 = vand.u32 %v3767, 4294901760
      %v5470 = vsub.f32 %v3767, %v5469
      %5471 = vmatpush1.msra.mxu0 %v5470
      %5472 = vmatprep.subr.mxu0 0.0
      %5473 = vmatpush2.msra.mxu0 0.0
      %5474 = vmatprep.subr.mxu0 0.0
      %5475 = vmatpush2.msra.mxu0 0.0
      %5476 = vmatprep.subr.mxu0 0.0
      %5477 = vmatpush2.msra.mxu0 0.0
      %5478 = vmatprep.subr.mxu0 0.0
      %5479 = vmatpush2.msra.mxu0 0.0
      %5480 = vmatprep.subr.mxu0 0.0
      %5481 = vmatpush2.msra.mxu0 0.0
      %5482 = vmatprep.subr.mxu0 0.0
      %5483 = vmatpush2.msra.mxu0 0.0
      %5484 = vmatprep.subr.mxu0 0.0
      %5485 = vmatpush2.msra.mxu0 0.0
      %5486 = vmatprep.subr.mxu0 0.0
      %5487 = vmatpush2.msra.mxu0 0.0
      %5488 = vmatprep.subr.mxu0 0.0
      %5489 = vmatpush2.msra.mxu0 0.0
      %5490 = vmatprep.subr.mxu0 0.0
      %5491 = vmatpush2.msra.mxu0 0.0
      %5492 = vmatprep.subr.mxu0 0.0
      %5493 = vmatpush2.msra.mxu0 0.0
      %5494 = vmatprep.subr.mxu0 0.0
      %5495 = vmatpush2.msra.mxu0 0.0
      %5496 = vmatprep.subr.mxu0 0.0
      %5497 = vmatpush2.msra.mxu0 0.0
      %5498 = vmatprep.subr.mxu0 0.0
      %5499 = vmatpush2.msra.mxu0 0.0
      %5500 = vmatprep.subr.mxu0 0.0
      %5501 = vmatpush2.msra.mxu0 0.0
      %5502 = vmatprep.subr.mxu0 0.0
      %5503 = vmatpush2.msra.mxu0 0.0
      %5504 = vmatprep.mubr.f32.mxu0 0.0
      %v5505 = vand.u32 %v4975, 4294901760
      %v5506 = vsub.f32 %v4975, %v5505
      %5507 = vmatmul.mubr.f32.gmra.mxu0 %v5506
      %v5508 = vpop.f32.mrf.mxu0
      %v5509 = vadd.f32 %v5339, %v5508
      %v5510 = vpop.f32.mrf.mxu0
      %5511 = vmatprep.mubr.f32.mxu0 0.0
      %v5512 = vand.u32 %v4978, 4294901760
      %v5513 = vsub.f32 %v4978, %v5512
      %5514 = vmatmul.mubr.f32.gmra.mxu0 %v5513
      %v5515 = vpop.f32.mrf.mxu0
      %v5516 = vadd.f32 %v5345, %v5515
      %v5517 = vpop.f32.mrf.mxu0
      %5518 = vmatprep.mubr.f32.mxu0 0.0
      %v5519 = vand.u32 %v4981, 4294901760
      %v5520 = vsub.f32 %v4981, %v5519
      %5521 = vmatmul.mubr.f32.gmra.mxu0 %v5520
      %v5522 = vpop.f32.mrf.mxu0
      %v5523 = vadd.f32 %v5351, %v5522
      %v5524 = vpop.f32.mrf.mxu0
      %5525 = vmatprep.mubr.f32.mxu0 0.0
      %v5526 = vand.u32 %v4984, 4294901760
      %v5527 = vsub.f32 %v4984, %v5526
      %5528 = vmatmul.mubr.f32.gmra.mxu0 %v5527
      %v5529 = vpop.f32.mrf.mxu0
      %v5530 = vadd.f32 %v5357, %v5529
      %v5531 = vpop.f32.mrf.mxu0
      %5532 = vmatprep.mubr.f32.mxu0 0.0
      %v5533 = vand.u32 %v4987, 4294901760
      %v5534 = vsub.f32 %v4987, %v5533
      %5535 = vmatmul.mubr.f32.gmra.mxu0 %v5534
      %v5536 = vpop.f32.mrf.mxu0
      %v5537 = vadd.f32 %v5363, %v5536
      %v5538 = vpop.f32.mrf.mxu0
      %5539 = vmatprep.mubr.f32.mxu0 0.0
      %v5540 = vand.u32 %v4990, 4294901760
      %v5541 = vsub.f32 %v4990, %v5540
      %5542 = vmatmul.mubr.f32.gmra.mxu0 %v5541
      %v5543 = vpop.f32.mrf.mxu0
      %v5544 = vadd.f32 %v5369, %v5543
      %v5545 = vpop.f32.mrf.mxu0
      %5546 = vmatprep.mubr.f32.mxu0 0.0
      %v5547 = vand.u32 %v4993, 4294901760
      %v5548 = vsub.f32 %v4993, %v5547
      %5549 = vmatmul.mubr.f32.gmra.mxu0 %v5548
      %v5550 = vpop.f32.mrf.mxu0
      %v5551 = vadd.f32 %v5375, %v5550
      %v5552 = vpop.f32.mrf.mxu0
      %5553 = vmatprep.mubr.f32.mxu0 0.0
      %v5554 = vand.u32 %v4996, 4294901760
      %v5555 = vsub.f32 %v4996, %v5554
      %5556 = vmatmul.mubr.f32.gmra.mxu0 %v5555
      %v5557 = vpop.f32.mrf.mxu0
      %v5558 = vadd.f32 %v5381, %v5557
      %v5559 = vpop.f32.mrf.mxu0
      %5560 = vmatprep.mubr.f32.mxu0 0.0
      %v5561 = vand.u32 %v4999, 4294901760
      %v5562 = vsub.f32 %v4999, %v5561
      %5563 = vmatmul.mubr.f32.gmra.mxu0 %v5562
      %v5564 = vpop.f32.mrf.mxu0
      %v5565 = vadd.f32 %v5387, %v5564
      %v5566 = vpop.f32.mrf.mxu0
      %5567 = vmatprep.mubr.f32.mxu0 0.0
      %v5568 = vand.u32 %v5002, 4294901760
      %v5569 = vsub.f32 %v5002, %v5568
      %5570 = vmatmul.mubr.f32.gmra.mxu0 %v5569
      %v5571 = vpop.f32.mrf.mxu0
      %v5572 = vadd.f32 %v5393, %v5571
      %v5573 = vpop.f32.mrf.mxu0
      %5574 = vmatprep.mubr.f32.mxu0 0.0
      %v5575 = vand.u32 %v5005, 4294901760
      %v5576 = vsub.f32 %v5005, %v5575
      %5577 = vmatmul.mubr.f32.gmra.mxu0 %v5576
      %v5578 = vpop.f32.mrf.mxu0
      %v5579 = vadd.f32 %v5399, %v5578
      %v5580 = vpop.f32.mrf.mxu0
      %5581 = vmatprep.mubr.f32.mxu0 0.0
      %v5582 = vand.u32 %v5008, 4294901760
      %v5583 = vsub.f32 %v5008, %v5582
      %5584 = vmatmul.mubr.f32.gmra.mxu0 %v5583
      %v5585 = vpop.f32.mrf.mxu0
      %v5586 = vadd.f32 %v5405, %v5585
      %v5587 = vpop.f32.mrf.mxu0
      %5588 = vmatprep.mubr.f32.mxu0 0.0
      %v5589 = vand.u32 %v5011, 4294901760
      %v5590 = vsub.f32 %v5011, %v5589
      %5591 = vmatmul.mubr.f32.gmra.mxu0 %v5590
      %v5592 = vpop.f32.mrf.mxu0
      %v5593 = vadd.f32 %v5411, %v5592
      %v5594 = vpop.f32.mrf.mxu0
      %5595 = vmatprep.mubr.f32.mxu0 0.0
      %v5596 = vand.u32 %v5014, 4294901760
      %v5597 = vsub.f32 %v5014, %v5596
      %5598 = vmatmul.mubr.f32.gmra.mxu0 %v5597
      %v5599 = vpop.f32.mrf.mxu0
      %v5600 = vadd.f32 %v5417, %v5599
      %v5601 = vpop.f32.mrf.mxu0
      %5602 = vmatprep.mubr.f32.mxu0 0.0
      %v5603 = vand.u32 %v5017, 4294901760
      %v5604 = vsub.f32 %v5017, %v5603
      %5605 = vmatmul.mubr.f32.gmra.mxu0 %v5604
      %v5606 = vpop.f32.mrf.mxu0
      %v5607 = vadd.f32 %v5423, %v5606
      %v5608 = vpop.f32.mrf.mxu0
      %5609 = vmatprep.mubr.f32.mxu0 0.0
      %v5610 = vand.u32 %v5020, 4294901760
      %v5611 = vsub.f32 %v5020, %v5610
      %5612 = vmatmul.mubr.f32.gmra.mxu0 %v5611
      %v5613 = vpop.f32.mrf.mxu0
      %v5614 = vadd.f32 %v5429, %v5613
      %v5615 = vpop.f32.mrf.mxu0
      %5616 = vdwg.mxu0
      %5617 = vmatprep.subr.mxu0 0.0
      %5618 = vmatpush1.msra.mxu0 0.0
      %5619 = vmatprep.subr.mxu0 0.0
      %5620 = vmatpush1.msra.mxu0 0.0
      %5621 = vmatprep.subr.mxu0 0.0
      %5622 = vmatpush1.msra.mxu0 0.0
      %5623 = vmatprep.subr.mxu0 0.0
      %5624 = vmatpush1.msra.mxu0 0.0
      %5625 = vmatprep.subr.mxu0 0.0
      %5626 = vmatpush1.msra.mxu0 0.0
      %5627 = vmatprep.subr.mxu0 0.0
      %5628 = vmatpush1.msra.mxu0 0.0
      %5629 = vmatprep.subr.mxu0 0.0
      %5630 = vmatpush1.msra.mxu0 0.0
      %5631 = vmatprep.subr.mxu0 0.0
      %5632 = vmatpush1.msra.mxu0 0.0
      %5633 = vmatprep.subr.mxu0 0.0
      %5634 = vmatpush1.msra.mxu0 0.0
      %5635 = vmatprep.subr.mxu0 0.0
      %5636 = vmatpush1.msra.mxu0 0.0
      %5637 = vmatprep.subr.mxu0 0.0
      %5638 = vmatpush1.msra.mxu0 0.0
      %5639 = vmatprep.subr.mxu0 0.0
      %5640 = vmatpush1.msra.mxu0 0.0
      %5641 = vmatprep.subr.mxu0 0.0
      %v5642 = vand.u32 %v3770, 4294901760
      %5643 = vmatpush1.msra.mxu0 %v5642
      %5644 = vmatprep.subr.mxu0 0.0
      %v5645 = vand.u32 %v3769, 4294901760
      %5646 = vmatpush1.msra.mxu0 %v5645
      %5647 = vmatprep.subr.mxu0 0.0
      %v5648 = vand.u32 %v3768, 4294901760
      %5649 = vmatpush1.msra.mxu0 %v5648
      %5650 = vmatprep.subr.mxu0 0.0
      %v5651 = vand.u32 %v3767, 4294901760
      %5652 = vmatpush1.msra.mxu0 %v5651
      %5653 = vmatprep.subr.mxu0 0.0
      %5654 = vmatpush2.msra.mxu0 0.0
      %5655 = vmatprep.subr.mxu0 0.0
      %5656 = vmatpush2.msra.mxu0 0.0
      %5657 = vmatprep.subr.mxu0 0.0
      %5658 = vmatpush2.msra.mxu0 0.0
      %5659 = vmatprep.subr.mxu0 0.0
      %5660 = vmatpush2.msra.mxu0 0.0
      %5661 = vmatprep.subr.mxu0 0.0
      %5662 = vmatpush2.msra.mxu0 0.0
      %5663 = vmatprep.subr.mxu0 0.0
      %5664 = vmatpush2.msra.mxu0 0.0
      %5665 = vmatprep.subr.mxu0 0.0
      %5666 = vmatpush2.msra.mxu0 0.0
      %5667 = vmatprep.subr.mxu0 0.0
      %5668 = vmatpush2.msra.mxu0 0.0
      %5669 = vmatprep.subr.mxu0 0.0
      %5670 = vmatpush2.msra.mxu0 0.0
      %5671 = vmatprep.subr.mxu0 0.0
      %5672 = vmatpush2.msra.mxu0 0.0
      %5673 = vmatprep.subr.mxu0 0.0
      %5674 = vmatpush2.msra.mxu0 0.0
      %5675 = vmatprep.subr.mxu0 0.0
      %5676 = vmatpush2.msra.mxu0 0.0
      %5677 = vmatprep.subr.mxu0 0.0
      %5678 = vmatpush2.msra.mxu0 0.0
      %5679 = vmatprep.subr.mxu0 0.0
      %5680 = vmatpush2.msra.mxu0 0.0
      %5681 = vmatprep.subr.mxu0 0.0
      %5682 = vmatpush2.msra.mxu0 0.0
      %5683 = vmatprep.subr.mxu0 0.0
      %5684 = vmatpush2.msra.mxu0 0.0
      %5685 = vmatprep.mubr.f32.mxu0 0.0
      %v5686 = vand.u32 %v4975, 4294901760
      %v5687 = vsub.f32 %v4975, %v5686
      %v5688 = vand.u32 %v5687, 4294901760
      %5689 = vmatmul.mubr.f32.gmra.mxu0 %v5688
      %v5690 = vpop.f32.mrf.mxu0
      %v5691 = vadd.f32 %v5509, %v5690
      %v5692 = vpop.f32.mrf.mxu0
      %5693 = vmatprep.mubr.f32.mxu0 0.0
      %v5694 = vand.u32 %v4978, 4294901760
      %v5695 = vsub.f32 %v4978, %v5694
      %v5696 = vand.u32 %v5695, 4294901760
      %5697 = vmatmul.mubr.f32.gmra.mxu0 %v5696
      %v5698 = vpop.f32.mrf.mxu0
      %v5699 = vadd.f32 %v5516, %v5698
      %v5700 = vpop.f32.mrf.mxu0
      %5701 = vmatprep.mubr.f32.mxu0 0.0
      %v5702 = vand.u32 %v4981, 4294901760
      %v5703 = vsub.f32 %v4981, %v5702
      %v5704 = vand.u32 %v5703, 4294901760
      %5705 = vmatmul.mubr.f32.gmra.mxu0 %v5704
      %v5706 = vpop.f32.mrf.mxu0
      %v5707 = vadd.f32 %v5523, %v5706
      %v5708 = vpop.f32.mrf.mxu0
      %5709 = vmatprep.mubr.f32.mxu0 0.0
      %v5710 = vand.u32 %v4984, 4294901760
      %v5711 = vsub.f32 %v4984, %v5710
      %v5712 = vand.u32 %v5711, 4294901760
      %5713 = vmatmul.mubr.f32.gmra.mxu0 %v5712
      %v5714 = vpop.f32.mrf.mxu0
      %v5715 = vadd.f32 %v5530, %v5714
      %v5716 = vpop.f32.mrf.mxu0
      %5717 = vmatprep.mubr.f32.mxu0 0.0
      %v5718 = vand.u32 %v4987, 4294901760
      %v5719 = vsub.f32 %v4987, %v5718
      %v5720 = vand.u32 %v5719, 4294901760
      %5721 = vmatmul.mubr.f32.gmra.mxu0 %v5720
      %v5722 = vpop.f32.mrf.mxu0
      %v5723 = vadd.f32 %v5537, %v5722
      %v5724 = vpop.f32.mrf.mxu0
      %5725 = vmatprep.mubr.f32.mxu0 0.0
      %v5726 = vand.u32 %v4990, 4294901760
      %v5727 = vsub.f32 %v4990, %v5726
      %v5728 = vand.u32 %v5727, 4294901760
      %5729 = vmatmul.mubr.f32.gmra.mxu0 %v5728
      %v5730 = vpop.f32.mrf.mxu0
      %v5731 = vadd.f32 %v5544, %v5730
      %v5732 = vpop.f32.mrf.mxu0
      %5733 = vmatprep.mubr.f32.mxu0 0.0
      %v5734 = vand.u32 %v4993, 4294901760
      %v5735 = vsub.f32 %v4993, %v5734
      %v5736 = vand.u32 %v5735, 4294901760
      %5737 = vmatmul.mubr.f32.gmra.mxu0 %v5736
      %v5738 = vpop.f32.mrf.mxu0
      %v5739 = vadd.f32 %v5551, %v5738
      %v5740 = vpop.f32.mrf.mxu0
      %5741 = vmatprep.mubr.f32.mxu0 0.0
      %v5742 = vand.u32 %v4996, 4294901760
      %v5743 = vsub.f32 %v4996, %v5742
      %v5744 = vand.u32 %v5743, 4294901760
      %5745 = vmatmul.mubr.f32.gmra.mxu0 %v5744
      %v5746 = vpop.f32.mrf.mxu0
      %v5747 = vadd.f32 %v5558, %v5746
      %v5748 = vpop.f32.mrf.mxu0
      %5749 = vmatprep.mubr.f32.mxu0 0.0
      %v5750 = vand.u32 %v4999, 4294901760
      %v5751 = vsub.f32 %v4999, %v5750
      %v5752 = vand.u32 %v5751, 4294901760
      %5753 = vmatmul.mubr.f32.gmra.mxu0 %v5752
      %v5754 = vpop.f32.mrf.mxu0
      %v5755 = vadd.f32 %v5565, %v5754
      %v5756 = vpop.f32.mrf.mxu0
      %5757 = vmatprep.mubr.f32.mxu0 0.0
      %v5758 = vand.u32 %v5002, 4294901760
      %v5759 = vsub.f32 %v5002, %v5758
      %v5760 = vand.u32 %v5759, 4294901760
      %5761 = vmatmul.mubr.f32.gmra.mxu0 %v5760
      %v5762 = vpop.f32.mrf.mxu0
      %v5763 = vadd.f32 %v5572, %v5762
      %v5764 = vpop.f32.mrf.mxu0
      %5765 = vmatprep.mubr.f32.mxu0 0.0
      %v5766 = vand.u32 %v5005, 4294901760
      %v5767 = vsub.f32 %v5005, %v5766
      %v5768 = vand.u32 %v5767, 4294901760
      %5769 = vmatmul.mubr.f32.gmra.mxu0 %v5768
      %v5770 = vpop.f32.mrf.mxu0
      %v5771 = vadd.f32 %v5579, %v5770
      %v5772 = vpop.f32.mrf.mxu0
      %5773 = vmatprep.mubr.f32.mxu0 0.0
      %v5774 = vand.u32 %v5008, 4294901760
      %v5775 = vsub.f32 %v5008, %v5774
      %v5776 = vand.u32 %v5775, 4294901760
      %5777 = vmatmul.mubr.f32.gmra.mxu0 %v5776
      %v5778 = vpop.f32.mrf.mxu0
      %v5779 = vadd.f32 %v5586, %v5778
      %v5780 = vpop.f32.mrf.mxu0
      %5781 = vmatprep.mubr.f32.mxu0 0.0
      %v5782 = vand.u32 %v5011, 4294901760
      %v5783 = vsub.f32 %v5011, %v5782
      %v5784 = vand.u32 %v5783, 4294901760
      %5785 = vmatmul.mubr.f32.gmra.mxu0 %v5784
      %v5786 = vpop.f32.mrf.mxu0
      %v5787 = vadd.f32 %v5593, %v5786
      %v5788 = vpop.f32.mrf.mxu0
      %5789 = vmatprep.mubr.f32.mxu0 0.0
      %v5790 = vand.u32 %v5014, 4294901760
      %v5791 = vsub.f32 %v5014, %v5790
      %v5792 = vand.u32 %v5791, 4294901760
      %5793 = vmatmul.mubr.f32.gmra.mxu0 %v5792
      %v5794 = vpop.f32.mrf.mxu0
      %v5795 = vadd.f32 %v5600, %v5794
      %v5796 = vpop.f32.mrf.mxu0
      %5797 = vmatprep.mubr.f32.mxu0 0.0
      %v5798 = vand.u32 %v5017, 4294901760
      %v5799 = vsub.f32 %v5017, %v5798
      %v5800 = vand.u32 %v5799, 4294901760
      %5801 = vmatmul.mubr.f32.gmra.mxu0 %v5800
      %v5802 = vpop.f32.mrf.mxu0
      %v5803 = vadd.f32 %v5607, %v5802
      %v5804 = vpop.f32.mrf.mxu0
      %5805 = vmatprep.mubr.f32.mxu0 0.0
      %v5806 = vand.u32 %v5020, 4294901760
      %v5807 = vsub.f32 %v5020, %v5806
      %v5808 = vand.u32 %v5807, 4294901760
      %5809 = vmatmul.mubr.f32.gmra.mxu0 %v5808
      %v5810 = vpop.f32.mrf.mxu0
      %v5811 = vadd.f32 %v5614, %v5810
      %v5812 = vpop.f32.mrf.mxu0
      %5813 = vdwg.mxu0
      %5814 = vmatprep.subr.mxu0 0.0
      %5815 = vmatpush1.msra.mxu0 0.0
      %5816 = vmatprep.subr.mxu0 0.0
      %5817 = vmatpush1.msra.mxu0 0.0
      %5818 = vmatprep.subr.mxu0 0.0
      %5819 = vmatpush1.msra.mxu0 0.0
      %5820 = vmatprep.subr.mxu0 0.0
      %5821 = vmatpush1.msra.mxu0 0.0
      %5822 = vmatprep.subr.mxu0 0.0
      %5823 = vmatpush1.msra.mxu0 0.0
      %5824 = vmatprep.subr.mxu0 0.0
      %5825 = vmatpush1.msra.mxu0 0.0
      %5826 = vmatprep.subr.mxu0 0.0
      %5827 = vmatpush1.msra.mxu0 0.0
      %5828 = vmatprep.subr.mxu0 0.0
      %5829 = vmatpush1.msra.mxu0 0.0
      %5830 = vmatprep.subr.mxu0 0.0
      %5831 = vmatpush1.msra.mxu0 0.0
      %5832 = vmatprep.subr.mxu0 0.0
      %5833 = vmatpush1.msra.mxu0 0.0
      %5834 = vmatprep.subr.mxu0 0.0
      %5835 = vmatpush1.msra.mxu0 0.0
      %5836 = vmatprep.subr.mxu0 0.0
      %5837 = vmatpush1.msra.mxu0 0.0
      %5838 = vmatprep.subr.mxu0 0.0
      %v5839 = vand.u32 %v3770, 4294901760
      %v5840 = vsub.f32 %v3770, %v5839
      %v5841 = vand.u32 %v5840, 4294901760
      %5842 = vmatpush1.msra.mxu0 %v5841
      %5843 = vmatprep.subr.mxu0 0.0
      %v5844 = vand.u32 %v3769, 4294901760
      %v5845 = vsub.f32 %v3769, %v5844
      %v5846 = vand.u32 %v5845, 4294901760
      %5847 = vmatpush1.msra.mxu0 %v5846
      %5848 = vmatprep.subr.mxu0 0.0
      %v5849 = vand.u32 %v3768, 4294901760
      %v5850 = vsub.f32 %v3768, %v5849
      %v5851 = vand.u32 %v5850, 4294901760
      %5852 = vmatpush1.msra.mxu0 %v5851
      %5853 = vmatprep.subr.mxu0 0.0
      %v5854 = vand.u32 %v3767, 4294901760
      %v5855 = vsub.f32 %v3767, %v5854
      %v5856 = vand.u32 %v5855, 4294901760
      %5857 = vmatpush1.msra.mxu0 %v5856
      %5858 = vmatprep.subr.mxu0 0.0
      %5859 = vmatpush2.msra.mxu0 0.0
      %5860 = vmatprep.subr.mxu0 0.0
      %5861 = vmatpush2.msra.mxu0 0.0
      %5862 = vmatprep.subr.mxu0 0.0
      %5863 = vmatpush2.msra.mxu0 0.0
      %5864 = vmatprep.subr.mxu0 0.0
      %5865 = vmatpush2.msra.mxu0 0.0
      %5866 = vmatprep.subr.mxu0 0.0
      %5867 = vmatpush2.msra.mxu0 0.0
      %5868 = vmatprep.subr.mxu0 0.0
      %5869 = vmatpush2.msra.mxu0 0.0
      %5870 = vmatprep.subr.mxu0 0.0
      %5871 = vmatpush2.msra.mxu0 0.0
      %5872 = vmatprep.subr.mxu0 0.0
      %5873 = vmatpush2.msra.mxu0 0.0
      %5874 = vmatprep.subr.mxu0 0.0
      %5875 = vmatpush2.msra.mxu0 0.0
      %5876 = vmatprep.subr.mxu0 0.0
      %5877 = vmatpush2.msra.mxu0 0.0
      %5878 = vmatprep.subr.mxu0 0.0
      %5879 = vmatpush2.msra.mxu0 0.0
      %5880 = vmatprep.subr.mxu0 0.0
      %5881 = vmatpush2.msra.mxu0 0.0
      %5882 = vmatprep.subr.mxu0 0.0
      %5883 = vmatpush2.msra.mxu0 0.0
      %5884 = vmatprep.subr.mxu0 0.0
      %5885 = vmatpush2.msra.mxu0 0.0
      %5886 = vmatprep.subr.mxu0 0.0
      %5887 = vmatpush2.msra.mxu0 0.0
      %5888 = vmatprep.subr.mxu0 0.0
      %5889 = vmatpush2.msra.mxu0 0.0
      %5890 = vmatprep.mubr.f32.mxu0 0.0
      %v5891 = vand.u32 %v4975, 4294901760
      %5892 = vmatmul.mubr.f32.gmra.mxu0 %v5891
      %v5893 = vpop.f32.mrf.mxu0
      %v5894 = vadd.f32 %v5691, %v5893
      %v5895 = vpop.f32.mrf.mxu0
      %5896 = vmatprep.mubr.f32.mxu0 0.0
      %v5897 = vand.u32 %v4978, 4294901760
      %5898 = vmatmul.mubr.f32.gmra.mxu0 %v5897
      %v5899 = vpop.f32.mrf.mxu0
      %v5900 = vadd.f32 %v5699, %v5899
      %v5901 = vpop.f32.mrf.mxu0
      %5902 = vmatprep.mubr.f32.mxu0 0.0
      %v5903 = vand.u32 %v4981, 4294901760
      %5904 = vmatmul.mubr.f32.gmra.mxu0 %v5903
      %v5905 = vpop.f32.mrf.mxu0
      %v5906 = vadd.f32 %v5707, %v5905
      %v5907 = vpop.f32.mrf.mxu0
      %5908 = vmatprep.mubr.f32.mxu0 0.0
      %v5909 = vand.u32 %v4984, 4294901760
      %5910 = vmatmul.mubr.f32.gmra.mxu0 %v5909
      %v5911 = vpop.f32.mrf.mxu0
      %v5912 = vadd.f32 %v5715, %v5911
      %v5913 = vpop.f32.mrf.mxu0
      %5914 = vmatprep.mubr.f32.mxu0 0.0
      %v5915 = vand.u32 %v4987, 4294901760
      %5916 = vmatmul.mubr.f32.gmra.mxu0 %v5915
      %v5917 = vpop.f32.mrf.mxu0
      %v5918 = vadd.f32 %v5723, %v5917
      %v5919 = vpop.f32.mrf.mxu0
      %5920 = vmatprep.mubr.f32.mxu0 0.0
      %v5921 = vand.u32 %v4990, 4294901760
      %5922 = vmatmul.mubr.f32.gmra.mxu0 %v5921
      %v5923 = vpop.f32.mrf.mxu0
      %v5924 = vadd.f32 %v5731, %v5923
      %v5925 = vpop.f32.mrf.mxu0
      %5926 = vmatprep.mubr.f32.mxu0 0.0
      %v5927 = vand.u32 %v4993, 4294901760
      %5928 = vmatmul.mubr.f32.gmra.mxu0 %v5927
      %v5929 = vpop.f32.mrf.mxu0
      %v5930 = vadd.f32 %v5739, %v5929
      %v5931 = vpop.f32.mrf.mxu0
      %5932 = vmatprep.mubr.f32.mxu0 0.0
      %v5933 = vand.u32 %v4996, 4294901760
      %5934 = vmatmul.mubr.f32.gmra.mxu0 %v5933
      %v5935 = vpop.f32.mrf.mxu0
      %v5936 = vadd.f32 %v5747, %v5935
      %v5937 = vpop.f32.mrf.mxu0
      %5938 = vmatprep.mubr.f32.mxu0 0.0
      %v5939 = vand.u32 %v4999, 4294901760
      %5940 = vmatmul.mubr.f32.gmra.mxu0 %v5939
      %v5941 = vpop.f32.mrf.mxu0
      %v5942 = vadd.f32 %v5755, %v5941
      %v5943 = vpop.f32.mrf.mxu0
      %5944 = vmatprep.mubr.f32.mxu0 0.0
      %v5945 = vand.u32 %v5002, 4294901760
      %5946 = vmatmul.mubr.f32.gmra.mxu0 %v5945
      %v5947 = vpop.f32.mrf.mxu0
      %v5948 = vadd.f32 %v5763, %v5947
      %v5949 = vpop.f32.mrf.mxu0
      %5950 = vmatprep.mubr.f32.mxu0 0.0
      %v5951 = vand.u32 %v5005, 4294901760
      %5952 = vmatmul.mubr.f32.gmra.mxu0 %v5951
      %v5953 = vpop.f32.mrf.mxu0
      %v5954 = vadd.f32 %v5771, %v5953
      %v5955 = vpop.f32.mrf.mxu0
      %5956 = vmatprep.mubr.f32.mxu0 0.0
      %v5957 = vand.u32 %v5008, 4294901760
      %5958 = vmatmul.mubr.f32.gmra.mxu0 %v5957
      %v5959 = vpop.f32.mrf.mxu0
      %v5960 = vadd.f32 %v5779, %v5959
      %v5961 = vpop.f32.mrf.mxu0
      %5962 = vmatprep.mubr.f32.mxu0 0.0
      %v5963 = vand.u32 %v5011, 4294901760
      %5964 = vmatmul.mubr.f32.gmra.mxu0 %v5963
      %v5965 = vpop.f32.mrf.mxu0
      %v5966 = vadd.f32 %v5787, %v5965
      %v5967 = vpop.f32.mrf.mxu0
      %5968 = vmatprep.mubr.f32.mxu0 0.0
      %v5969 = vand.u32 %v5014, 4294901760
      %5970 = vmatmul.mubr.f32.gmra.mxu0 %v5969
      %v5971 = vpop.f32.mrf.mxu0
      %v5972 = vadd.f32 %v5795, %v5971
      %v5973 = vpop.f32.mrf.mxu0
      %5974 = vmatprep.mubr.f32.mxu0 0.0
      %v5975 = vand.u32 %v5017, 4294901760
      %5976 = vmatmul.mubr.f32.gmra.mxu0 %v5975
      %v5977 = vpop.f32.mrf.mxu0
      %v5978 = vadd.f32 %v5803, %v5977
      %v5979 = vpop.f32.mrf.mxu0
      %5980 = vmatprep.mubr.f32.mxu0 0.0
      %v5981 = vand.u32 %v5020, 4294901760
      %5982 = vmatmul.mubr.f32.gmra.mxu0 %v5981
      %v5983 = vpop.f32.mrf.mxu0
      %v5984 = vadd.f32 %v5811, %v5983
      %v5985 = vpop.f32.mrf.mxu0
      %5986 = vdwg.mxu0
      %5987 = vmatprep.subr.mxu0 0.0
      %5988 = vmatpush1.msra.mxu0 0.0
      %5989 = vmatprep.subr.mxu0 0.0
      %5990 = vmatpush1.msra.mxu0 0.0
      %5991 = vmatprep.subr.mxu0 0.0
      %5992 = vmatpush1.msra.mxu0 0.0
      %5993 = vmatprep.subr.mxu0 0.0
      %5994 = vmatpush1.msra.mxu0 0.0
      %5995 = vmatprep.subr.mxu0 0.0
      %5996 = vmatpush1.msra.mxu0 0.0
      %5997 = vmatprep.subr.mxu0 0.0
      %5998 = vmatpush1.msra.mxu0 0.0
      %5999 = vmatprep.subr.mxu0 0.0
      %6000 = vmatpush1.msra.mxu0 0.0
      %6001 = vmatprep.subr.mxu0 0.0
      %6002 = vmatpush1.msra.mxu0 0.0
      %6003 = vmatprep.subr.mxu0 0.0
      %6004 = vmatpush1.msra.mxu0 0.0
      %6005 = vmatprep.subr.mxu0 0.0
      %6006 = vmatpush1.msra.mxu0 0.0
      %6007 = vmatprep.subr.mxu0 0.0
      %6008 = vmatpush1.msra.mxu0 0.0
      %6009 = vmatprep.subr.mxu0 0.0
      %6010 = vmatpush1.msra.mxu0 0.0
      %6011 = vmatprep.subr.mxu0 0.0
      %v6012 = vand.u32 %v3770, 4294901760
      %6013 = vmatpush1.msra.mxu0 %v6012
      %6014 = vmatprep.subr.mxu0 0.0
      %v6015 = vand.u32 %v3769, 4294901760
      %6016 = vmatpush1.msra.mxu0 %v6015
      %6017 = vmatprep.subr.mxu0 0.0
      %v6018 = vand.u32 %v3768, 4294901760
      %6019 = vmatpush1.msra.mxu0 %v6018
      %6020 = vmatprep.subr.mxu0 0.0
      %v6021 = vand.u32 %v3767, 4294901760
      %6022 = vmatpush1.msra.mxu0 %v6021
      %6023 = vmatprep.subr.mxu0 0.0
      %6024 = vmatpush2.msra.mxu0 0.0
      %6025 = vmatprep.subr.mxu0 0.0
      %6026 = vmatpush2.msra.mxu0 0.0
      %6027 = vmatprep.subr.mxu0 0.0
      %6028 = vmatpush2.msra.mxu0 0.0
      %6029 = vmatprep.subr.mxu0 0.0
      %6030 = vmatpush2.msra.mxu0 0.0
      %6031 = vmatprep.subr.mxu0 0.0
      %6032 = vmatpush2.msra.mxu0 0.0
      %6033 = vmatprep.subr.mxu0 0.0
      %6034 = vmatpush2.msra.mxu0 0.0
      %6035 = vmatprep.subr.mxu0 0.0
      %6036 = vmatpush2.msra.mxu0 0.0
      %6037 = vmatprep.subr.mxu0 0.0
      %6038 = vmatpush2.msra.mxu0 0.0
      %6039 = vmatprep.subr.mxu0 0.0
      %6040 = vmatpush2.msra.mxu0 0.0
      %6041 = vmatprep.subr.mxu0 0.0
      %6042 = vmatpush2.msra.mxu0 0.0
      %6043 = vmatprep.subr.mxu0 0.0
      %6044 = vmatpush2.msra.mxu0 0.0
      %6045 = vmatprep.subr.mxu0 0.0
      %6046 = vmatpush2.msra.mxu0 0.0
      %6047 = vmatprep.subr.mxu0 0.0
      %6048 = vmatpush2.msra.mxu0 0.0
      %6049 = vmatprep.subr.mxu0 0.0
      %6050 = vmatpush2.msra.mxu0 0.0
      %6051 = vmatprep.subr.mxu0 0.0
      %6052 = vmatpush2.msra.mxu0 0.0
      %6053 = vmatprep.subr.mxu0 0.0
      %6054 = vmatpush2.msra.mxu0 0.0
      %6055 = vmatprep.mubr.f32.mxu0 0.0
      %v6056 = vand.u32 %v4975, 4294901760
      %6057 = vmatmul.mubr.f32.gmra.mxu0 %v6056
      %v6058 = vpop.f32.mrf.mxu0
      %v6059 = vadd.f32 %v5894, %v6058
      %v6060 = vpop.f32.mrf.mxu0
      %6061 = vmatprep.mubr.f32.mxu0 0.0
      %v6062 = vand.u32 %v4978, 4294901760
      %6063 = vmatmul.mubr.f32.gmra.mxu0 %v6062
      %v6064 = vpop.f32.mrf.mxu0
      %v6065 = vadd.f32 %v5900, %v6064
      %v6066 = vpop.f32.mrf.mxu0
      %6067 = vmatprep.mubr.f32.mxu0 0.0
      %v6068 = vand.u32 %v4981, 4294901760
      %6069 = vmatmul.mubr.f32.gmra.mxu0 %v6068
      %v6070 = vpop.f32.mrf.mxu0
      %v6071 = vadd.f32 %v5906, %v6070
      %v6072 = vpop.f32.mrf.mxu0
      %6073 = vmatprep.mubr.f32.mxu0 0.0
      %v6074 = vand.u32 %v4984, 4294901760
      %6075 = vmatmul.mubr.f32.gmra.mxu0 %v6074
      %v6076 = vpop.f32.mrf.mxu0
      %v6077 = vadd.f32 %v5912, %v6076
      %v6078 = vpop.f32.mrf.mxu0
      %6079 = vmatprep.mubr.f32.mxu0 0.0
      %v6080 = vand.u32 %v4987, 4294901760
      %6081 = vmatmul.mubr.f32.gmra.mxu0 %v6080
      %v6082 = vpop.f32.mrf.mxu0
      %v6083 = vadd.f32 %v5918, %v6082
      %v6084 = vpop.f32.mrf.mxu0
      %6085 = vmatprep.mubr.f32.mxu0 0.0
      %v6086 = vand.u32 %v4990, 4294901760
      %6087 = vmatmul.mubr.f32.gmra.mxu0 %v6086
      %v6088 = vpop.f32.mrf.mxu0
      %v6089 = vadd.f32 %v5924, %v6088
      %v6090 = vpop.f32.mrf.mxu0
      %6091 = vmatprep.mubr.f32.mxu0 0.0
      %v6092 = vand.u32 %v4993, 4294901760
      %6093 = vmatmul.mubr.f32.gmra.mxu0 %v6092
      %v6094 = vpop.f32.mrf.mxu0
      %v6095 = vadd.f32 %v5930, %v6094
      %v6096 = vpop.f32.mrf.mxu0
      %6097 = vmatprep.mubr.f32.mxu0 0.0
      %v6098 = vand.u32 %v4996, 4294901760
      %6099 = vmatmul.mubr.f32.gmra.mxu0 %v6098
      %v6100 = vpop.f32.mrf.mxu0
      %v6101 = vadd.f32 %v5936, %v6100
      %v6102 = vpop.f32.mrf.mxu0
      %6103 = vmatprep.mubr.f32.mxu0 0.0
      %v6104 = vand.u32 %v4999, 4294901760
      %6105 = vmatmul.mubr.f32.gmra.mxu0 %v6104
      %v6106 = vpop.f32.mrf.mxu0
      %v6107 = vadd.f32 %v5942, %v6106
      %v6108 = vpop.f32.mrf.mxu0
      %6109 = vmatprep.mubr.f32.mxu0 0.0
      %v6110 = vand.u32 %v5002, 4294901760
      %6111 = vmatmul.mubr.f32.gmra.mxu0 %v6110
      %v6112 = vpop.f32.mrf.mxu0
      %v6113 = vadd.f32 %v5948, %v6112
      %v6114 = vpop.f32.mrf.mxu0
      %6115 = vmatprep.mubr.f32.mxu0 0.0
      %v6116 = vand.u32 %v5005, 4294901760
      %6117 = vmatmul.mubr.f32.gmra.mxu0 %v6116
      %v6118 = vpop.f32.mrf.mxu0
      %v6119 = vadd.f32 %v5954, %v6118
      %v6120 = vpop.f32.mrf.mxu0
      %6121 = vmatprep.mubr.f32.mxu0 0.0
      %v6122 = vand.u32 %v5008, 4294901760
      %6123 = vmatmul.mubr.f32.gmra.mxu0 %v6122
      %v6124 = vpop.f32.mrf.mxu0
      %v6125 = vadd.f32 %v5960, %v6124
      %v6126 = vpop.f32.mrf.mxu0
      %6127 = vmatprep.mubr.f32.mxu0 0.0
      %v6128 = vand.u32 %v5011, 4294901760
      %6129 = vmatmul.mubr.f32.gmra.mxu0 %v6128
      %v6130 = vpop.f32.mrf.mxu0
      %v6131 = vadd.f32 %v5966, %v6130
      %v6132 = vpop.f32.mrf.mxu0
      %6133 = vmatprep.mubr.f32.mxu0 0.0
      %v6134 = vand.u32 %v5014, 4294901760
      %6135 = vmatmul.mubr.f32.gmra.mxu0 %v6134
      %v6136 = vpop.f32.mrf.mxu0
      %v6137 = vadd.f32 %v5972, %v6136
      %v6138 = vpop.f32.mrf.mxu0
      %6139 = vmatprep.mubr.f32.mxu0 0.0
      %v6140 = vand.u32 %v5017, 4294901760
      %6141 = vmatmul.mubr.f32.gmra.mxu0 %v6140
      %v6142 = vpop.f32.mrf.mxu0
      %v6143 = vadd.f32 %v5978, %v6142
      %v6144 = vpop.f32.mrf.mxu0
      %6145 = vmatprep.mubr.f32.mxu0 0.0
      %v6146 = vand.u32 %v5020, 4294901760
      %6147 = vmatmul.mubr.f32.gmra.mxu0 %v6146
      %v6148 = vpop.f32.mrf.mxu0
      %v6149 = vadd.f32 %v5984, %v6148
      %v6150 = vpop.f32.mrf.mxu0
      %6151 = vdwg.mxu0
      %v6152 = vadd.f32 %v6059, %v3746
      %v6153 = vadd.f32 %v6065, %v3747
      %v6154 = vadd.f32 %v6071, %v3748
      %v6155 = vadd.f32 %v6077, %v3749
      %v6156 = vadd.f32 %v6083, %v3750
      %v6157 = vadd.f32 %v6089, %v3751
      %v6158 = vadd.f32 %v6095, %v3752
      %v6159 = vadd.f32 %v6101, %v3753
      %v6160 = vadd.f32 %v6107, %v3754
      %v6161 = vadd.f32 %v6113, %v3755
      %v6162 = vadd.f32 %v6119, %v3756
      %v6163 = vadd.f32 %v6125, %v3757
      %v6164 = vadd.f32 %v6131, %v3758
      %v6165 = vadd.f32 %v6137, %v3759
      %v6166 = vadd.f32 %v6143, %v3760
      %v6167 = vadd.f32 %v6149, %v3761
      %v6168 = vmax.f32 %v6152, 0.0
      %v6169 = vmax.f32 %v6153, 0.0
      %v6170 = vmax.f32 %v6154, 0.0
      %v6171 = vmax.f32 %v6155, 0.0
      %v6172 = vmax.f32 %v6156, 0.0
      %v6173 = vmax.f32 %v6157, 0.0
      %v6174 = vmax.f32 %v6158, 0.0
      %v6175 = vmax.f32 %v6159, 0.0
      %v6176 = vmax.f32 %v6160, 0.0
      %v6177 = vmax.f32 %v6161, 0.0
      %v6178 = vmax.f32 %v6162, 0.0
      %v6179 = vmax.f32 %v6163, 0.0
      %v6180 = vmax.f32 %v6164, 0.0
      %v6181 = vmax.f32 %v6165, 0.0
      %v6182 = vmax.f32 %v6166, 0.0
      %v6183 = vmax.f32 %v6167, 0.0
      %v6184 = vld [vmem:[%s1 + $0xb8] sm:$0xff]
      %v6185 = vld [vmem:[%s1 + $0xc0] sm:$0xff]
      %v6186 = vld [vmem:[%s1 + $0xc8] sm:$0xff]
      %v6187 = vld [vmem:[%s1 + $0xd0] sm:$0xff]
      %v6188 = vld [vmem:[%s1 + $0xd8] sm:$0x1]
      %v6189 = vld [vmem:[%s1 + $0xe0] sm:$0xff]
      %v6190 = vld [vmem:[%s1 + $0xe8] sm:$0xff]
      %v6191 = vld [vmem:[%s1 + $0xf0] sm:$0xff]
      %v6192 = vld [vmem:[%s1 + $0xf8] sm:$0xff]
      %v6193 = vld [vmem:[%s1 + $0x100] sm:$0x1]
      %v6194 = vlaneseq
      %v6195 = vshrl.u32 %v6194, 7
      %v6196 = vsub.s32 0, %v6195
      %v6197 = vrot.slane %v6188, %v6196
      %v6199 = vsel %vm1353, %v6168, 0
      %v6202 = vsel %vm1353, %v6169, 0
      %v6205 = vsel %vm1353, %v6170, 0
      %v6208 = vsel %vm1353, %v6171, 0
      %v6211 = vsel %vm1353, %v6172, 0
      %v6214 = vsel %vm1353, %v6173, 0
      %v6217 = vsel %vm1353, %v6174, 0
      %v6220 = vsel %vm1353, %v6175, 0
      %v6223 = vsel %vm1353, %v6176, 0
      %v6226 = vsel %vm1353, %v6177, 0
      %v6229 = vsel %vm1353, %v6178, 0
      %v6232 = vsel %vm1353, %v6179, 0
      %v6235 = vsel %vm1353, %v6180, 0
      %v6238 = vsel %vm1353, %v6181, 0
      %v6241 = vsel %vm1353, %v6182, 0
      %v6244 = vsel %vm1353, %v6183, 0
      %6246 = vmatprep.subr.mxu0 0.0
      %6247 = vmatpush1.msra.mxu0 0.0
      %6248 = vmatprep.subr.mxu0 0.0
      %6249 = vmatpush1.msra.mxu0 0.0
      %6250 = vmatprep.subr.mxu0 0.0
      %6251 = vmatpush1.msra.mxu0 0.0
      %6252 = vmatprep.subr.mxu0 0.0
      %6253 = vmatpush1.msra.mxu0 0.0
      %6254 = vmatprep.subr.mxu0 0.0
      %6255 = vmatpush1.msra.mxu0 0.0
      %6256 = vmatprep.subr.mxu0 0.0
      %6257 = vmatpush1.msra.mxu0 0.0
      %6258 = vmatprep.subr.mxu0 0.0
      %6259 = vmatpush1.msra.mxu0 0.0
      %6260 = vmatprep.subr.mxu0 0.0
      %6261 = vmatpush1.msra.mxu0 0.0
      %6262 = vmatprep.subr.mxu0 0.0
      %6263 = vmatpush1.msra.mxu0 0.0
      %6264 = vmatprep.subr.mxu0 0.0
      %6265 = vmatpush1.msra.mxu0 0.0
      %6266 = vmatprep.subr.mxu0 0.0
      %6267 = vmatpush1.msra.mxu0 0.0
      %6268 = vmatprep.subr.mxu0 0.0
      %6269 = vmatpush1.msra.mxu0 0.0
      %6270 = vmatprep.subr.mxu0 0.0
      %v6271 = vand.u32 %v6187, 4294901760
      %6272 = vmatpush1.msra.mxu0 %v6271
      %6273 = vmatprep.subr.mxu0 0.0
      %v6274 = vand.u32 %v6186, 4294901760
      %6275 = vmatpush1.msra.mxu0 %v6274
      %6276 = vmatprep.subr.mxu0 0.0
      %v6277 = vand.u32 %v6185, 4294901760
      %6278 = vmatpush1.msra.mxu0 %v6277
      %6279 = vmatprep.subr.mxu0 0.0
      %v6280 = vand.u32 %v6184, 4294901760
      %6281 = vmatpush1.msra.mxu0 %v6280
      %6282 = vmatprep.subr.mxu0 0.0
      %6283 = vmatpush2.msra.mxu0 0.0
      %6284 = vmatprep.subr.mxu0 0.0
      %6285 = vmatpush2.msra.mxu0 0.0
      %6286 = vmatprep.subr.mxu0 0.0
      %6287 = vmatpush2.msra.mxu0 0.0
      %6288 = vmatprep.subr.mxu0 0.0
      %6289 = vmatpush2.msra.mxu0 0.0
      %6290 = vmatprep.subr.mxu0 0.0
      %6291 = vmatpush2.msra.mxu0 0.0
      %6292 = vmatprep.subr.mxu0 0.0
      %6293 = vmatpush2.msra.mxu0 0.0
      %6294 = vmatprep.subr.mxu0 0.0
      %6295 = vmatpush2.msra.mxu0 0.0
      %6296 = vmatprep.subr.mxu0 0.0
      %6297 = vmatpush2.msra.mxu0 0.0
      %6298 = vmatprep.subr.mxu0 0.0
      %6299 = vmatpush2.msra.mxu0 0.0
      %6300 = vmatprep.subr.mxu0 0.0
      %6301 = vmatpush2.msra.mxu0 0.0
      %6302 = vmatprep.subr.mxu0 0.0
      %6303 = vmatpush2.msra.mxu0 0.0
      %6304 = vmatprep.subr.mxu0 0.0
      %6305 = vmatpush2.msra.mxu0 0.0
      %6306 = vmatprep.subr.mxu0 0.0
      %6307 = vmatpush2.msra.mxu0 0.0
      %6308 = vmatprep.subr.mxu0 0.0
      %6309 = vmatpush2.msra.mxu0 0.0
      %6310 = vmatprep.subr.mxu0 0.0
      %6311 = vmatpush2.msra.mxu0 0.0
      %6312 = vmatprep.subr.mxu0 0.0
      %6313 = vmatpush2.msra.mxu0 0.0
      %6314 = vmatprep.mubr.f32.mxu0 0.0
      %v6315 = vand.u32 %v6199, 4294901760
      %v6316 = vsub.f32 %v6199, %v6315
      %v6317 = vand.u32 %v6316, 4294901760
      %v6318 = vsub.f32 %v6316, %v6317
      %v6319 = vand.u32 %v6318, 4294901760
      %6320 = vmatmul.mubr.f32.gmra.mxu0 %v6319
      %v6321 = vpop.f32.mrf.mxu0
      %v6322 = vadd.f32 %v6197, %v6321
      %v6323 = vpop.f32.mrf.mxu0
      %6324 = vmatprep.mubr.f32.mxu0 0.0
      %v6325 = vand.u32 %v6202, 4294901760
      %v6326 = vsub.f32 %v6202, %v6325
      %v6327 = vand.u32 %v6326, 4294901760
      %v6328 = vsub.f32 %v6326, %v6327
      %v6329 = vand.u32 %v6328, 4294901760
      %6330 = vmatmul.mubr.f32.gmra.mxu0 %v6329
      %v6331 = vpop.f32.mrf.mxu0
      %v6332 = vadd.f32 %v6197, %v6331
      %v6333 = vpop.f32.mrf.mxu0
      %6334 = vmatprep.mubr.f32.mxu0 0.0
      %v6335 = vand.u32 %v6205, 4294901760
      %v6336 = vsub.f32 %v6205, %v6335
      %v6337 = vand.u32 %v6336, 4294901760
      %v6338 = vsub.f32 %v6336, %v6337
      %v6339 = vand.u32 %v6338, 4294901760
      %6340 = vmatmul.mubr.f32.gmra.mxu0 %v6339
      %v6341 = vpop.f32.mrf.mxu0
      %v6342 = vadd.f32 %v6197, %v6341
      %v6343 = vpop.f32.mrf.mxu0
      %6344 = vmatprep.mubr.f32.mxu0 0.0
      %v6345 = vand.u32 %v6208, 4294901760
      %v6346 = vsub.f32 %v6208, %v6345
      %v6347 = vand.u32 %v6346, 4294901760
      %v6348 = vsub.f32 %v6346, %v6347
      %v6349 = vand.u32 %v6348, 4294901760
      %6350 = vmatmul.mubr.f32.gmra.mxu0 %v6349
      %v6351 = vpop.f32.mrf.mxu0
      %v6352 = vadd.f32 %v6197, %v6351
      %v6353 = vpop.f32.mrf.mxu0
      %6354 = vmatprep.mubr.f32.mxu0 0.0
      %v6355 = vand.u32 %v6211, 4294901760
      %v6356 = vsub.f32 %v6211, %v6355
      %v6357 = vand.u32 %v6356, 4294901760
      %v6358 = vsub.f32 %v6356, %v6357
      %v6359 = vand.u32 %v6358, 4294901760
      %6360 = vmatmul.mubr.f32.gmra.mxu0 %v6359
      %v6361 = vpop.f32.mrf.mxu0
      %v6362 = vadd.f32 %v6197, %v6361
      %v6363 = vpop.f32.mrf.mxu0
      %6364 = vmatprep.mubr.f32.mxu0 0.0
      %v6365 = vand.u32 %v6214, 4294901760
      %v6366 = vsub.f32 %v6214, %v6365
      %v6367 = vand.u32 %v6366, 4294901760
      %v6368 = vsub.f32 %v6366, %v6367
      %v6369 = vand.u32 %v6368, 4294901760
      %6370 = vmatmul.mubr.f32.gmra.mxu0 %v6369
      %v6371 = vpop.f32.mrf.mxu0
      %v6372 = vadd.f32 %v6197, %v6371
      %v6373 = vpop.f32.mrf.mxu0
      %6374 = vmatprep.mubr.f32.mxu0 0.0
      %v6375 = vand.u32 %v6217, 4294901760
      %v6376 = vsub.f32 %v6217, %v6375
      %v6377 = vand.u32 %v6376, 4294901760
      %v6378 = vsub.f32 %v6376, %v6377
      %v6379 = vand.u32 %v6378, 4294901760
      %6380 = vmatmul.mubr.f32.gmra.mxu0 %v6379
      %v6381 = vpop.f32.mrf.mxu0
      %v6382 = vadd.f32 %v6197, %v6381
      %v6383 = vpop.f32.mrf.mxu0
      %6384 = vmatprep.mubr.f32.mxu0 0.0
      %v6385 = vand.u32 %v6220, 4294901760
      %v6386 = vsub.f32 %v6220, %v6385
      %v6387 = vand.u32 %v6386, 4294901760
      %v6388 = vsub.f32 %v6386, %v6387
      %v6389 = vand.u32 %v6388, 4294901760
      %6390 = vmatmul.mubr.f32.gmra.mxu0 %v6389
      %v6391 = vpop.f32.mrf.mxu0
      %v6392 = vadd.f32 %v6197, %v6391
      %v6393 = vpop.f32.mrf.mxu0
      %6394 = vmatprep.mubr.f32.mxu0 0.0
      %v6395 = vand.u32 %v6223, 4294901760
      %v6396 = vsub.f32 %v6223, %v6395
      %v6397 = vand.u32 %v6396, 4294901760
      %v6398 = vsub.f32 %v6396, %v6397
      %v6399 = vand.u32 %v6398, 4294901760
      %6400 = vmatmul.mubr.f32.gmra.mxu0 %v6399
      %v6401 = vpop.f32.mrf.mxu0
      %v6402 = vadd.f32 %v6197, %v6401
      %v6403 = vpop.f32.mrf.mxu0
      %6404 = vmatprep.mubr.f32.mxu0 0.0
      %v6405 = vand.u32 %v6226, 4294901760
      %v6406 = vsub.f32 %v6226, %v6405
      %v6407 = vand.u32 %v6406, 4294901760
      %v6408 = vsub.f32 %v6406, %v6407
      %v6409 = vand.u32 %v6408, 4294901760
      %6410 = vmatmul.mubr.f32.gmra.mxu0 %v6409
      %v6411 = vpop.f32.mrf.mxu0
      %v6412 = vadd.f32 %v6197, %v6411
      %v6413 = vpop.f32.mrf.mxu0
      %6414 = vmatprep.mubr.f32.mxu0 0.0
      %v6415 = vand.u32 %v6229, 4294901760
      %v6416 = vsub.f32 %v6229, %v6415
      %v6417 = vand.u32 %v6416, 4294901760
      %v6418 = vsub.f32 %v6416, %v6417
      %v6419 = vand.u32 %v6418, 4294901760
      %6420 = vmatmul.mubr.f32.gmra.mxu0 %v6419
      %v6421 = vpop.f32.mrf.mxu0
      %v6422 = vadd.f32 %v6197, %v6421
      %v6423 = vpop.f32.mrf.mxu0
      %6424 = vmatprep.mubr.f32.mxu0 0.0
      %v6425 = vand.u32 %v6232, 4294901760
      %v6426 = vsub.f32 %v6232, %v6425
      %v6427 = vand.u32 %v6426, 4294901760
      %v6428 = vsub.f32 %v6426, %v6427
      %v6429 = vand.u32 %v6428, 4294901760
      %6430 = vmatmul.mubr.f32.gmra.mxu0 %v6429
      %v6431 = vpop.f32.mrf.mxu0
      %v6432 = vadd.f32 %v6197, %v6431
      %v6433 = vpop.f32.mrf.mxu0
      %6434 = vmatprep.mubr.f32.mxu0 0.0
      %v6435 = vand.u32 %v6235, 4294901760
      %v6436 = vsub.f32 %v6235, %v6435
      %v6437 = vand.u32 %v6436, 4294901760
      %v6438 = vsub.f32 %v6436, %v6437
      %v6439 = vand.u32 %v6438, 4294901760
      %6440 = vmatmul.mubr.f32.gmra.mxu0 %v6439
      %v6441 = vpop.f32.mrf.mxu0
      %v6442 = vadd.f32 %v6197, %v6441
      %v6443 = vpop.f32.mrf.mxu0
      %6444 = vmatprep.mubr.f32.mxu0 0.0
      %v6445 = vand.u32 %v6238, 4294901760
      %v6446 = vsub.f32 %v6238, %v6445
      %v6447 = vand.u32 %v6446, 4294901760
      %v6448 = vsub.f32 %v6446, %v6447
      %v6449 = vand.u32 %v6448, 4294901760
      %6450 = vmatmul.mubr.f32.gmra.mxu0 %v6449
      %v6451 = vpop.f32.mrf.mxu0
      %v6452 = vadd.f32 %v6197, %v6451
      %v6453 = vpop.f32.mrf.mxu0
      %6454 = vmatprep.mubr.f32.mxu0 0.0
      %v6455 = vand.u32 %v6241, 4294901760
      %v6456 = vsub.f32 %v6241, %v6455
      %v6457 = vand.u32 %v6456, 4294901760
      %v6458 = vsub.f32 %v6456, %v6457
      %v6459 = vand.u32 %v6458, 4294901760
      %6460 = vmatmul.mubr.f32.gmra.mxu0 %v6459
      %v6461 = vpop.f32.mrf.mxu0
      %v6462 = vadd.f32 %v6197, %v6461
      %v6463 = vpop.f32.mrf.mxu0
      %6464 = vmatprep.mubr.f32.mxu0 0.0
      %v6465 = vand.u32 %v6244, 4294901760
      %v6466 = vsub.f32 %v6244, %v6465
      %v6467 = vand.u32 %v6466, 4294901760
      %v6468 = vsub.f32 %v6466, %v6467
      %v6469 = vand.u32 %v6468, 4294901760
      %6470 = vmatmul.mubr.f32.gmra.mxu0 %v6469
      %v6471 = vpop.f32.mrf.mxu0
      %v6472 = vadd.f32 %v6197, %v6471
      %v6473 = vpop.f32.mrf.mxu0
      %6474 = vdwg.mxu0
      %6475 = vmatprep.subr.mxu0 0.0
      %6476 = vmatpush1.msra.mxu0 0.0
      %6477 = vmatprep.subr.mxu0 0.0
      %6478 = vmatpush1.msra.mxu0 0.0
      %6479 = vmatprep.subr.mxu0 0.0
      %6480 = vmatpush1.msra.mxu0 0.0
      %6481 = vmatprep.subr.mxu0 0.0
      %6482 = vmatpush1.msra.mxu0 0.0
      %6483 = vmatprep.subr.mxu0 0.0
      %6484 = vmatpush1.msra.mxu0 0.0
      %6485 = vmatprep.subr.mxu0 0.0
      %6486 = vmatpush1.msra.mxu0 0.0
      %6487 = vmatprep.subr.mxu0 0.0
      %6488 = vmatpush1.msra.mxu0 0.0
      %6489 = vmatprep.subr.mxu0 0.0
      %6490 = vmatpush1.msra.mxu0 0.0
      %6491 = vmatprep.subr.mxu0 0.0
      %6492 = vmatpush1.msra.mxu0 0.0
      %6493 = vmatprep.subr.mxu0 0.0
      %6494 = vmatpush1.msra.mxu0 0.0
      %6495 = vmatprep.subr.mxu0 0.0
      %6496 = vmatpush1.msra.mxu0 0.0
      %6497 = vmatprep.subr.mxu0 0.0
      %6498 = vmatpush1.msra.mxu0 0.0
      %6499 = vmatprep.subr.mxu0 0.0
      %v6500 = vand.u32 %v6187, 4294901760
      %v6501 = vsub.f32 %v6187, %v6500
      %v6502 = vand.u32 %v6501, 4294901760
      %v6503 = vsub.f32 %v6501, %v6502
      %v6504 = vand.u32 %v6503, 4294901760
      %6505 = vmatpush1.msra.mxu0 %v6504
      %6506 = vmatprep.subr.mxu0 0.0
      %v6507 = vand.u32 %v6186, 4294901760
      %v6508 = vsub.f32 %v6186, %v6507
      %v6509 = vand.u32 %v6508, 4294901760
      %v6510 = vsub.f32 %v6508, %v6509
      %v6511 = vand.u32 %v6510, 4294901760
      %6512 = vmatpush1.msra.mxu0 %v6511
      %6513 = vmatprep.subr.mxu0 0.0
      %v6514 = vand.u32 %v6185, 4294901760
      %v6515 = vsub.f32 %v6185, %v6514
      %v6516 = vand.u32 %v6515, 4294901760
      %v6517 = vsub.f32 %v6515, %v6516
      %v6518 = vand.u32 %v6517, 4294901760
      %6519 = vmatpush1.msra.mxu0 %v6518
      %6520 = vmatprep.subr.mxu0 0.0
      %v6521 = vand.u32 %v6184, 4294901760
      %v6522 = vsub.f32 %v6184, %v6521
      %v6523 = vand.u32 %v6522, 4294901760
      %v6524 = vsub.f32 %v6522, %v6523
      %v6525 = vand.u32 %v6524, 4294901760
      %6526 = vmatpush1.msra.mxu0 %v6525
      %6527 = vmatprep.subr.mxu0 0.0
      %6528 = vmatpush2.msra.mxu0 0.0
      %6529 = vmatprep.subr.mxu0 0.0
      %6530 = vmatpush2.msra.mxu0 0.0
      %6531 = vmatprep.subr.mxu0 0.0
      %6532 = vmatpush2.msra.mxu0 0.0
      %6533 = vmatprep.subr.mxu0 0.0
      %6534 = vmatpush2.msra.mxu0 0.0
      %6535 = vmatprep.subr.mxu0 0.0
      %6536 = vmatpush2.msra.mxu0 0.0
      %6537 = vmatprep.subr.mxu0 0.0
      %6538 = vmatpush2.msra.mxu0 0.0
      %6539 = vmatprep.subr.mxu0 0.0
      %6540 = vmatpush2.msra.mxu0 0.0
      %6541 = vmatprep.subr.mxu0 0.0
      %6542 = vmatpush2.msra.mxu0 0.0
      %6543 = vmatprep.subr.mxu0 0.0
      %6544 = vmatpush2.msra.mxu0 0.0
      %6545 = vmatprep.subr.mxu0 0.0
      %6546 = vmatpush2.msra.mxu0 0.0
      %6547 = vmatprep.subr.mxu0 0.0
      %6548 = vmatpush2.msra.mxu0 0.0
      %6549 = vmatprep.subr.mxu0 0.0
      %6550 = vmatpush2.msra.mxu0 0.0
      %6551 = vmatprep.subr.mxu0 0.0
      %6552 = vmatpush2.msra.mxu0 0.0
      %6553 = vmatprep.subr.mxu0 0.0
      %6554 = vmatpush2.msra.mxu0 0.0
      %6555 = vmatprep.subr.mxu0 0.0
      %6556 = vmatpush2.msra.mxu0 0.0
      %6557 = vmatprep.subr.mxu0 0.0
      %6558 = vmatpush2.msra.mxu0 0.0
      %6559 = vmatprep.mubr.f32.mxu0 0.0
      %v6560 = vand.u32 %v6199, 4294901760
      %6561 = vmatmul.mubr.f32.gmra.mxu0 %v6560
      %v6562 = vpop.f32.mrf.mxu0
      %v6563 = vadd.f32 %v6322, %v6562
      %v6564 = vpop.f32.mrf.mxu0
      %6565 = vmatprep.mubr.f32.mxu0 0.0
      %v6566 = vand.u32 %v6202, 4294901760
      %6567 = vmatmul.mubr.f32.gmra.mxu0 %v6566
      %v6568 = vpop.f32.mrf.mxu0
      %v6569 = vadd.f32 %v6332, %v6568
      %v6570 = vpop.f32.mrf.mxu0
      %6571 = vmatprep.mubr.f32.mxu0 0.0
      %v6572 = vand.u32 %v6205, 4294901760
      %6573 = vmatmul.mubr.f32.gmra.mxu0 %v6572
      %v6574 = vpop.f32.mrf.mxu0
      %v6575 = vadd.f32 %v6342, %v6574
      %v6576 = vpop.f32.mrf.mxu0
      %6577 = vmatprep.mubr.f32.mxu0 0.0
      %v6578 = vand.u32 %v6208, 4294901760
      %6579 = vmatmul.mubr.f32.gmra.mxu0 %v6578
      %v6580 = vpop.f32.mrf.mxu0
      %v6581 = vadd.f32 %v6352, %v6580
      %v6582 = vpop.f32.mrf.mxu0
      %6583 = vmatprep.mubr.f32.mxu0 0.0
      %v6584 = vand.u32 %v6211, 4294901760
      %6585 = vmatmul.mubr.f32.gmra.mxu0 %v6584
      %v6586 = vpop.f32.mrf.mxu0
      %v6587 = vadd.f32 %v6362, %v6586
      %v6588 = vpop.f32.mrf.mxu0
      %6589 = vmatprep.mubr.f32.mxu0 0.0
      %v6590 = vand.u32 %v6214, 4294901760
      %6591 = vmatmul.mubr.f32.gmra.mxu0 %v6590
      %v6592 = vpop.f32.mrf.mxu0
      %v6593 = vadd.f32 %v6372, %v6592
      %v6594 = vpop.f32.mrf.mxu0
      %6595 = vmatprep.mubr.f32.mxu0 0.0
      %v6596 = vand.u32 %v6217, 4294901760
      %6597 = vmatmul.mubr.f32.gmra.mxu0 %v6596
      %v6598 = vpop.f32.mrf.mxu0
      %v6599 = vadd.f32 %v6382, %v6598
      %v6600 = vpop.f32.mrf.mxu0
      %6601 = vmatprep.mubr.f32.mxu0 0.0
      %v6602 = vand.u32 %v6220, 4294901760
      %6603 = vmatmul.mubr.f32.gmra.mxu0 %v6602
      %v6604 = vpop.f32.mrf.mxu0
      %v6605 = vadd.f32 %v6392, %v6604
      %v6606 = vpop.f32.mrf.mxu0
      %6607 = vmatprep.mubr.f32.mxu0 0.0
      %v6608 = vand.u32 %v6223, 4294901760
      %6609 = vmatmul.mubr.f32.gmra.mxu0 %v6608
      %v6610 = vpop.f32.mrf.mxu0
      %v6611 = vadd.f32 %v6402, %v6610
      %v6612 = vpop.f32.mrf.mxu0
      %6613 = vmatprep.mubr.f32.mxu0 0.0
      %v6614 = vand.u32 %v6226, 4294901760
      %6615 = vmatmul.mubr.f32.gmra.mxu0 %v6614
      %v6616 = vpop.f32.mrf.mxu0
      %v6617 = vadd.f32 %v6412, %v6616
      %v6618 = vpop.f32.mrf.mxu0
      %6619 = vmatprep.mubr.f32.mxu0 0.0
      %v6620 = vand.u32 %v6229, 4294901760
      %6621 = vmatmul.mubr.f32.gmra.mxu0 %v6620
      %v6622 = vpop.f32.mrf.mxu0
      %v6623 = vadd.f32 %v6422, %v6622
      %v6624 = vpop.f32.mrf.mxu0
      %6625 = vmatprep.mubr.f32.mxu0 0.0
      %v6626 = vand.u32 %v6232, 4294901760
      %6627 = vmatmul.mubr.f32.gmra.mxu0 %v6626
      %v6628 = vpop.f32.mrf.mxu0
      %v6629 = vadd.f32 %v6432, %v6628
      %v6630 = vpop.f32.mrf.mxu0
      %6631 = vmatprep.mubr.f32.mxu0 0.0
      %v6632 = vand.u32 %v6235, 4294901760
      %6633 = vmatmul.mubr.f32.gmra.mxu0 %v6632
      %v6634 = vpop.f32.mrf.mxu0
      %v6635 = vadd.f32 %v6442, %v6634
      %v6636 = vpop.f32.mrf.mxu0
      %6637 = vmatprep.mubr.f32.mxu0 0.0
      %v6638 = vand.u32 %v6238, 4294901760
      %6639 = vmatmul.mubr.f32.gmra.mxu0 %v6638
      %v6640 = vpop.f32.mrf.mxu0
      %v6641 = vadd.f32 %v6452, %v6640
      %v6642 = vpop.f32.mrf.mxu0
      %6643 = vmatprep.mubr.f32.mxu0 0.0
      %v6644 = vand.u32 %v6241, 4294901760
      %6645 = vmatmul.mubr.f32.gmra.mxu0 %v6644
      %v6646 = vpop.f32.mrf.mxu0
      %v6647 = vadd.f32 %v6462, %v6646
      %v6648 = vpop.f32.mrf.mxu0
      %6649 = vmatprep.mubr.f32.mxu0 0.0
      %v6650 = vand.u32 %v6244, 4294901760
      %6651 = vmatmul.mubr.f32.gmra.mxu0 %v6650
      %v6652 = vpop.f32.mrf.mxu0
      %v6653 = vadd.f32 %v6472, %v6652
      %v6654 = vpop.f32.mrf.mxu0
      %6655 = vdwg.mxu0
      %6656 = vmatprep.subr.mxu0 0.0
      %6657 = vmatpush1.msra.mxu0 0.0
      %6658 = vmatprep.subr.mxu0 0.0
      %6659 = vmatpush1.msra.mxu0 0.0
      %6660 = vmatprep.subr.mxu0 0.0
      %6661 = vmatpush1.msra.mxu0 0.0
      %6662 = vmatprep.subr.mxu0 0.0
      %6663 = vmatpush1.msra.mxu0 0.0
      %6664 = vmatprep.subr.mxu0 0.0
      %6665 = vmatpush1.msra.mxu0 0.0
      %6666 = vmatprep.subr.mxu0 0.0
      %6667 = vmatpush1.msra.mxu0 0.0
      %6668 = vmatprep.subr.mxu0 0.0
      %6669 = vmatpush1.msra.mxu0 0.0
      %6670 = vmatprep.subr.mxu0 0.0
      %6671 = vmatpush1.msra.mxu0 0.0
      %6672 = vmatprep.subr.mxu0 0.0
      %6673 = vmatpush1.msra.mxu0 0.0
      %6674 = vmatprep.subr.mxu0 0.0
      %6675 = vmatpush1.msra.mxu0 0.0
      %6676 = vmatprep.subr.mxu0 0.0
      %6677 = vmatpush1.msra.mxu0 0.0
      %6678 = vmatprep.subr.mxu0 0.0
      %6679 = vmatpush1.msra.mxu0 0.0
      %6680 = vmatprep.subr.mxu0 0.0
      %v6681 = vand.u32 %v6187, 4294901760
      %v6682 = vsub.f32 %v6187, %v6681
      %6683 = vmatpush1.msra.mxu0 %v6682
      %6684 = vmatprep.subr.mxu0 0.0
      %v6685 = vand.u32 %v6186, 4294901760
      %v6686 = vsub.f32 %v6186, %v6685
      %6687 = vmatpush1.msra.mxu0 %v6686
      %6688 = vmatprep.subr.mxu0 0.0
      %v6689 = vand.u32 %v6185, 4294901760
      %v6690 = vsub.f32 %v6185, %v6689
      %6691 = vmatpush1.msra.mxu0 %v6690
      %6692 = vmatprep.subr.mxu0 0.0
      %v6693 = vand.u32 %v6184, 4294901760
      %v6694 = vsub.f32 %v6184, %v6693
      %6695 = vmatpush1.msra.mxu0 %v6694
      %6696 = vmatprep.subr.mxu0 0.0
      %6697 = vmatpush2.msra.mxu0 0.0
      %6698 = vmatprep.subr.mxu0 0.0
      %6699 = vmatpush2.msra.mxu0 0.0
      %6700 = vmatprep.subr.mxu0 0.0
      %6701 = vmatpush2.msra.mxu0 0.0
      %6702 = vmatprep.subr.mxu0 0.0
      %6703 = vmatpush2.msra.mxu0 0.0
      %6704 = vmatprep.subr.mxu0 0.0
      %6705 = vmatpush2.msra.mxu0 0.0
      %6706 = vmatprep.subr.mxu0 0.0
      %6707 = vmatpush2.msra.mxu0 0.0
      %6708 = vmatprep.subr.mxu0 0.0
      %6709 = vmatpush2.msra.mxu0 0.0
      %6710 = vmatprep.subr.mxu0 0.0
      %6711 = vmatpush2.msra.mxu0 0.0
      %6712 = vmatprep.subr.mxu0 0.0
      %6713 = vmatpush2.msra.mxu0 0.0
      %6714 = vmatprep.subr.mxu0 0.0
      %6715 = vmatpush2.msra.mxu0 0.0
      %6716 = vmatprep.subr.mxu0 0.0
      %6717 = vmatpush2.msra.mxu0 0.0
      %6718 = vmatprep.subr.mxu0 0.0
      %6719 = vmatpush2.msra.mxu0 0.0
      %6720 = vmatprep.subr.mxu0 0.0
      %6721 = vmatpush2.msra.mxu0 0.0
      %6722 = vmatprep.subr.mxu0 0.0
      %6723 = vmatpush2.msra.mxu0 0.0
      %6724 = vmatprep.subr.mxu0 0.0
      %6725 = vmatpush2.msra.mxu0 0.0
      %6726 = vmatprep.subr.mxu0 0.0
      %6727 = vmatpush2.msra.mxu0 0.0
      %6728 = vmatprep.mubr.f32.mxu0 0.0
      %v6729 = vand.u32 %v6199, 4294901760
      %v6730 = vsub.f32 %v6199, %v6729
      %6731 = vmatmul.mubr.f32.gmra.mxu0 %v6730
      %v6732 = vpop.f32.mrf.mxu0
      %v6733 = vadd.f32 %v6563, %v6732
      %v6734 = vpop.f32.mrf.mxu0
      %6735 = vmatprep.mubr.f32.mxu0 0.0
      %v6736 = vand.u32 %v6202, 4294901760
      %v6737 = vsub.f32 %v6202, %v6736
      %6738 = vmatmul.mubr.f32.gmra.mxu0 %v6737
      %v6739 = vpop.f32.mrf.mxu0
      %v6740 = vadd.f32 %v6569, %v6739
      %v6741 = vpop.f32.mrf.mxu0
      %6742 = vmatprep.mubr.f32.mxu0 0.0
      %v6743 = vand.u32 %v6205, 4294901760
      %v6744 = vsub.f32 %v6205, %v6743
      %6745 = vmatmul.mubr.f32.gmra.mxu0 %v6744
      %v6746 = vpop.f32.mrf.mxu0
      %v6747 = vadd.f32 %v6575, %v6746
      %v6748 = vpop.f32.mrf.mxu0
      %6749 = vmatprep.mubr.f32.mxu0 0.0
      %v6750 = vand.u32 %v6208, 4294901760
      %v6751 = vsub.f32 %v6208, %v6750
      %6752 = vmatmul.mubr.f32.gmra.mxu0 %v6751
      %v6753 = vpop.f32.mrf.mxu0
      %v6754 = vadd.f32 %v6581, %v6753
      %v6755 = vpop.f32.mrf.mxu0
      %6756 = vmatprep.mubr.f32.mxu0 0.0
      %v6757 = vand.u32 %v6211, 4294901760
      %v6758 = vsub.f32 %v6211, %v6757
      %6759 = vmatmul.mubr.f32.gmra.mxu0 %v6758
      %v6760 = vpop.f32.mrf.mxu0
      %v6761 = vadd.f32 %v6587, %v6760
      %v6762 = vpop.f32.mrf.mxu0
      %6763 = vmatprep.mubr.f32.mxu0 0.0
      %v6764 = vand.u32 %v6214, 4294901760
      %v6765 = vsub.f32 %v6214, %v6764
      %6766 = vmatmul.mubr.f32.gmra.mxu0 %v6765
      %v6767 = vpop.f32.mrf.mxu0
      %v6768 = vadd.f32 %v6593, %v6767
      %v6769 = vpop.f32.mrf.mxu0
      %6770 = vmatprep.mubr.f32.mxu0 0.0
      %v6771 = vand.u32 %v6217, 4294901760
      %v6772 = vsub.f32 %v6217, %v6771
      %6773 = vmatmul.mubr.f32.gmra.mxu0 %v6772
      %v6774 = vpop.f32.mrf.mxu0
      %v6775 = vadd.f32 %v6599, %v6774
      %v6776 = vpop.f32.mrf.mxu0
      %6777 = vmatprep.mubr.f32.mxu0 0.0
      %v6778 = vand.u32 %v6220, 4294901760
      %v6779 = vsub.f32 %v6220, %v6778
      %6780 = vmatmul.mubr.f32.gmra.mxu0 %v6779
      %v6781 = vpop.f32.mrf.mxu0
      %v6782 = vadd.f32 %v6605, %v6781
      %v6783 = vpop.f32.mrf.mxu0
      %6784 = vmatprep.mubr.f32.mxu0 0.0
      %v6785 = vand.u32 %v6223, 4294901760
      %v6786 = vsub.f32 %v6223, %v6785
      %6787 = vmatmul.mubr.f32.gmra.mxu0 %v6786
      %v6788 = vpop.f32.mrf.mxu0
      %v6789 = vadd.f32 %v6611, %v6788
      %v6790 = vpop.f32.mrf.mxu0
      %6791 = vmatprep.mubr.f32.mxu0 0.0
      %v6792 = vand.u32 %v6226, 4294901760
      %v6793 = vsub.f32 %v6226, %v6792
      %6794 = vmatmul.mubr.f32.gmra.mxu0 %v6793
      %v6795 = vpop.f32.mrf.mxu0
      %v6796 = vadd.f32 %v6617, %v6795
      %v6797 = vpop.f32.mrf.mxu0
      %6798 = vmatprep.mubr.f32.mxu0 0.0
      %v6799 = vand.u32 %v6229, 4294901760
      %v6800 = vsub.f32 %v6229, %v6799
      %6801 = vmatmul.mubr.f32.gmra.mxu0 %v6800
      %v6802 = vpop.f32.mrf.mxu0
      %v6803 = vadd.f32 %v6623, %v6802
      %v6804 = vpop.f32.mrf.mxu0
      %6805 = vmatprep.mubr.f32.mxu0 0.0
      %v6806 = vand.u32 %v6232, 4294901760
      %v6807 = vsub.f32 %v6232, %v6806
      %6808 = vmatmul.mubr.f32.gmra.mxu0 %v6807
      %v6809 = vpop.f32.mrf.mxu0
      %v6810 = vadd.f32 %v6629, %v6809
      %v6811 = vpop.f32.mrf.mxu0
      %6812 = vmatprep.mubr.f32.mxu0 0.0
      %v6813 = vand.u32 %v6235, 4294901760
      %v6814 = vsub.f32 %v6235, %v6813
      %6815 = vmatmul.mubr.f32.gmra.mxu0 %v6814
      %v6816 = vpop.f32.mrf.mxu0
      %v6817 = vadd.f32 %v6635, %v6816
      %v6818 = vpop.f32.mrf.mxu0
      %6819 = vmatprep.mubr.f32.mxu0 0.0
      %v6820 = vand.u32 %v6238, 4294901760
      %v6821 = vsub.f32 %v6238, %v6820
      %6822 = vmatmul.mubr.f32.gmra.mxu0 %v6821
      %v6823 = vpop.f32.mrf.mxu0
      %v6824 = vadd.f32 %v6641, %v6823
      %v6825 = vpop.f32.mrf.mxu0
      %6826 = vmatprep.mubr.f32.mxu0 0.0
      %v6827 = vand.u32 %v6241, 4294901760
      %v6828 = vsub.f32 %v6241, %v6827
      %6829 = vmatmul.mubr.f32.gmra.mxu0 %v6828
      %v6830 = vpop.f32.mrf.mxu0
      %v6831 = vadd.f32 %v6647, %v6830
      %v6832 = vpop.f32.mrf.mxu0
      %6833 = vmatprep.mubr.f32.mxu0 0.0
      %v6834 = vand.u32 %v6244, 4294901760
      %v6835 = vsub.f32 %v6244, %v6834
      %6836 = vmatmul.mubr.f32.gmra.mxu0 %v6835
      %v6837 = vpop.f32.mrf.mxu0
      %v6838 = vadd.f32 %v6653, %v6837
      %v6839 = vpop.f32.mrf.mxu0
      %6840 = vdwg.mxu0
      %6841 = vmatprep.subr.mxu0 0.0
      %6842 = vmatpush1.msra.mxu0 0.0
      %6843 = vmatprep.subr.mxu0 0.0
      %6844 = vmatpush1.msra.mxu0 0.0
      %6845 = vmatprep.subr.mxu0 0.0
      %6846 = vmatpush1.msra.mxu0 0.0
      %6847 = vmatprep.subr.mxu0 0.0
      %6848 = vmatpush1.msra.mxu0 0.0
      %6849 = vmatprep.subr.mxu0 0.0
      %6850 = vmatpush1.msra.mxu0 0.0
      %6851 = vmatprep.subr.mxu0 0.0
      %6852 = vmatpush1.msra.mxu0 0.0
      %6853 = vmatprep.subr.mxu0 0.0
      %6854 = vmatpush1.msra.mxu0 0.0
      %6855 = vmatprep.subr.mxu0 0.0
      %6856 = vmatpush1.msra.mxu0 0.0
      %6857 = vmatprep.subr.mxu0 0.0
      %6858 = vmatpush1.msra.mxu0 0.0
      %6859 = vmatprep.subr.mxu0 0.0
      %6860 = vmatpush1.msra.mxu0 0.0
      %6861 = vmatprep.subr.mxu0 0.0
      %6862 = vmatpush1.msra.mxu0 0.0
      %6863 = vmatprep.subr.mxu0 0.0
      %6864 = vmatpush1.msra.mxu0 0.0
      %6865 = vmatprep.subr.mxu0 0.0
      %v6866 = vand.u32 %v6187, 4294901760
      %6867 = vmatpush1.msra.mxu0 %v6866
      %6868 = vmatprep.subr.mxu0 0.0
      %v6869 = vand.u32 %v6186, 4294901760
      %6870 = vmatpush1.msra.mxu0 %v6869
      %6871 = vmatprep.subr.mxu0 0.0
      %v6872 = vand.u32 %v6185, 4294901760
      %6873 = vmatpush1.msra.mxu0 %v6872
      %6874 = vmatprep.subr.mxu0 0.0
      %v6875 = vand.u32 %v6184, 4294901760
      %6876 = vmatpush1.msra.mxu0 %v6875
      %6877 = vmatprep.subr.mxu0 0.0
      %6878 = vmatpush2.msra.mxu0 0.0
      %6879 = vmatprep.subr.mxu0 0.0
      %6880 = vmatpush2.msra.mxu0 0.0
      %6881 = vmatprep.subr.mxu0 0.0
      %6882 = vmatpush2.msra.mxu0 0.0
      %6883 = vmatprep.subr.mxu0 0.0
      %6884 = vmatpush2.msra.mxu0 0.0
      %6885 = vmatprep.subr.mxu0 0.0
      %6886 = vmatpush2.msra.mxu0 0.0
      %6887 = vmatprep.subr.mxu0 0.0
      %6888 = vmatpush2.msra.mxu0 0.0
      %6889 = vmatprep.subr.mxu0 0.0
      %6890 = vmatpush2.msra.mxu0 0.0
      %6891 = vmatprep.subr.mxu0 0.0
      %6892 = vmatpush2.msra.mxu0 0.0
      %6893 = vmatprep.subr.mxu0 0.0
      %6894 = vmatpush2.msra.mxu0 0.0
      %6895 = vmatprep.subr.mxu0 0.0
      %6896 = vmatpush2.msra.mxu0 0.0
      %6897 = vmatprep.subr.mxu0 0.0
      %6898 = vmatpush2.msra.mxu0 0.0
      %6899 = vmatprep.subr.mxu0 0.0
      %6900 = vmatpush2.msra.mxu0 0.0
      %6901 = vmatprep.subr.mxu0 0.0
      %6902 = vmatpush2.msra.mxu0 0.0
      %6903 = vmatprep.subr.mxu0 0.0
      %6904 = vmatpush2.msra.mxu0 0.0
      %6905 = vmatprep.subr.mxu0 0.0
      %6906 = vmatpush2.msra.mxu0 0.0
      %6907 = vmatprep.subr.mxu0 0.0
      %6908 = vmatpush2.msra.mxu0 0.0
      %6909 = vmatprep.mubr.f32.mxu0 0.0
      %v6910 = vand.u32 %v6199, 4294901760
      %v6911 = vsub.f32 %v6199, %v6910
      %v6912 = vand.u32 %v6911, 4294901760
      %6913 = vmatmul.mubr.f32.gmra.mxu0 %v6912
      %v6914 = vpop.f32.mrf.mxu0
      %v6915 = vadd.f32 %v6733, %v6914
      %v6916 = vpop.f32.mrf.mxu0
      %6917 = vmatprep.mubr.f32.mxu0 0.0
      %v6918 = vand.u32 %v6202, 4294901760
      %v6919 = vsub.f32 %v6202, %v6918
      %v6920 = vand.u32 %v6919, 4294901760
      %6921 = vmatmul.mubr.f32.gmra.mxu0 %v6920
      %v6922 = vpop.f32.mrf.mxu0
      %v6923 = vadd.f32 %v6740, %v6922
      %v6924 = vpop.f32.mrf.mxu0
      %6925 = vmatprep.mubr.f32.mxu0 0.0
      %v6926 = vand.u32 %v6205, 4294901760
      %v6927 = vsub.f32 %v6205, %v6926
      %v6928 = vand.u32 %v6927, 4294901760
      %6929 = vmatmul.mubr.f32.gmra.mxu0 %v6928
      %v6930 = vpop.f32.mrf.mxu0
      %v6931 = vadd.f32 %v6747, %v6930
      %v6932 = vpop.f32.mrf.mxu0
      %6933 = vmatprep.mubr.f32.mxu0 0.0
      %v6934 = vand.u32 %v6208, 4294901760
      %v6935 = vsub.f32 %v6208, %v6934
      %v6936 = vand.u32 %v6935, 4294901760
      %6937 = vmatmul.mubr.f32.gmra.mxu0 %v6936
      %v6938 = vpop.f32.mrf.mxu0
      %v6939 = vadd.f32 %v6754, %v6938
      %v6940 = vpop.f32.mrf.mxu0
      %6941 = vmatprep.mubr.f32.mxu0 0.0
      %v6942 = vand.u32 %v6211, 4294901760
      %v6943 = vsub.f32 %v6211, %v6942
      %v6944 = vand.u32 %v6943, 4294901760
      %6945 = vmatmul.mubr.f32.gmra.mxu0 %v6944
      %v6946 = vpop.f32.mrf.mxu0
      %v6947 = vadd.f32 %v6761, %v6946
      %v6948 = vpop.f32.mrf.mxu0
      %6949 = vmatprep.mubr.f32.mxu0 0.0
      %v6950 = vand.u32 %v6214, 4294901760
      %v6951 = vsub.f32 %v6214, %v6950
      %v6952 = vand.u32 %v6951, 4294901760
      %6953 = vmatmul.mubr.f32.gmra.mxu0 %v6952
      %v6954 = vpop.f32.mrf.mxu0
      %v6955 = vadd.f32 %v6768, %v6954
      %v6956 = vpop.f32.mrf.mxu0
      %6957 = vmatprep.mubr.f32.mxu0 0.0
      %v6958 = vand.u32 %v6217, 4294901760
      %v6959 = vsub.f32 %v6217, %v6958
      %v6960 = vand.u32 %v6959, 4294901760
      %6961 = vmatmul.mubr.f32.gmra.mxu0 %v6960
      %v6962 = vpop.f32.mrf.mxu0
      %v6963 = vadd.f32 %v6775, %v6962
      %v6964 = vpop.f32.mrf.mxu0
      %6965 = vmatprep.mubr.f32.mxu0 0.0
      %v6966 = vand.u32 %v6220, 4294901760
      %v6967 = vsub.f32 %v6220, %v6966
      %v6968 = vand.u32 %v6967, 4294901760
      %6969 = vmatmul.mubr.f32.gmra.mxu0 %v6968
      %v6970 = vpop.f32.mrf.mxu0
      %v6971 = vadd.f32 %v6782, %v6970
      %v6972 = vpop.f32.mrf.mxu0
      %6973 = vmatprep.mubr.f32.mxu0 0.0
      %v6974 = vand.u32 %v6223, 4294901760
      %v6975 = vsub.f32 %v6223, %v6974
      %v6976 = vand.u32 %v6975, 4294901760
      %6977 = vmatmul.mubr.f32.gmra.mxu0 %v6976
      %v6978 = vpop.f32.mrf.mxu0
      %v6979 = vadd.f32 %v6789, %v6978
      %v6980 = vpop.f32.mrf.mxu0
      %6981 = vmatprep.mubr.f32.mxu0 0.0
      %v6982 = vand.u32 %v6226, 4294901760
      %v6983 = vsub.f32 %v6226, %v6982
      %v6984 = vand.u32 %v6983, 4294901760
      %6985 = vmatmul.mubr.f32.gmra.mxu0 %v6984
      %v6986 = vpop.f32.mrf.mxu0
      %v6987 = vadd.f32 %v6796, %v6986
      %v6988 = vpop.f32.mrf.mxu0
      %6989 = vmatprep.mubr.f32.mxu0 0.0
      %v6990 = vand.u32 %v6229, 4294901760
      %v6991 = vsub.f32 %v6229, %v6990
      %v6992 = vand.u32 %v6991, 4294901760
      %6993 = vmatmul.mubr.f32.gmra.mxu0 %v6992
      %v6994 = vpop.f32.mrf.mxu0
      %v6995 = vadd.f32 %v6803, %v6994
      %v6996 = vpop.f32.mrf.mxu0
      %6997 = vmatprep.mubr.f32.mxu0 0.0
      %v6998 = vand.u32 %v6232, 4294901760
      %v6999 = vsub.f32 %v6232, %v6998
      %v7000 = vand.u32 %v6999, 4294901760
      %7001 = vmatmul.mubr.f32.gmra.mxu0 %v7000
      %v7002 = vpop.f32.mrf.mxu0
      %v7003 = vadd.f32 %v6810, %v7002
      %v7004 = vpop.f32.mrf.mxu0
      %7005 = vmatprep.mubr.f32.mxu0 0.0
      %v7006 = vand.u32 %v6235, 4294901760
      %v7007 = vsub.f32 %v6235, %v7006
      %v7008 = vand.u32 %v7007, 4294901760
      %7009 = vmatmul.mubr.f32.gmra.mxu0 %v7008
      %v7010 = vpop.f32.mrf.mxu0
      %v7011 = vadd.f32 %v6817, %v7010
      %v7012 = vpop.f32.mrf.mxu0
      %7013 = vmatprep.mubr.f32.mxu0 0.0
      %v7014 = vand.u32 %v6238, 4294901760
      %v7015 = vsub.f32 %v6238, %v7014
      %v7016 = vand.u32 %v7015, 4294901760
      %7017 = vmatmul.mubr.f32.gmra.mxu0 %v7016
      %v7018 = vpop.f32.mrf.mxu0
      %v7019 = vadd.f32 %v6824, %v7018
      %v7020 = vpop.f32.mrf.mxu0
      %7021 = vmatprep.mubr.f32.mxu0 0.0
      %v7022 = vand.u32 %v6241, 4294901760
      %v7023 = vsub.f32 %v6241, %v7022
      %v7024 = vand.u32 %v7023, 4294901760
      %7025 = vmatmul.mubr.f32.gmra.mxu0 %v7024
      %v7026 = vpop.f32.mrf.mxu0
      %v7027 = vadd.f32 %v6831, %v7026
      %v7028 = vpop.f32.mrf.mxu0
      %7029 = vmatprep.mubr.f32.mxu0 0.0
      %v7030 = vand.u32 %v6244, 4294901760
      %v7031 = vsub.f32 %v6244, %v7030
      %v7032 = vand.u32 %v7031, 4294901760
      %7033 = vmatmul.mubr.f32.gmra.mxu0 %v7032
      %v7034 = vpop.f32.mrf.mxu0
      %v7035 = vadd.f32 %v6838, %v7034
      %v7036 = vpop.f32.mrf.mxu0
      %7037 = vdwg.mxu0
      %7038 = vmatprep.subr.mxu0 0.0
      %7039 = vmatpush1.msra.mxu0 0.0
      %7040 = vmatprep.subr.mxu0 0.0
      %7041 = vmatpush1.msra.mxu0 0.0
      %7042 = vmatprep.subr.mxu0 0.0
      %7043 = vmatpush1.msra.mxu0 0.0
      %7044 = vmatprep.subr.mxu0 0.0
      %7045 = vmatpush1.msra.mxu0 0.0
      %7046 = vmatprep.subr.mxu0 0.0
      %7047 = vmatpush1.msra.mxu0 0.0
      %7048 = vmatprep.subr.mxu0 0.0
      %7049 = vmatpush1.msra.mxu0 0.0
      %7050 = vmatprep.subr.mxu0 0.0
      %7051 = vmatpush1.msra.mxu0 0.0
      %7052 = vmatprep.subr.mxu0 0.0
      %7053 = vmatpush1.msra.mxu0 0.0
      %7054 = vmatprep.subr.mxu0 0.0
      %7055 = vmatpush1.msra.mxu0 0.0
      %7056 = vmatprep.subr.mxu0 0.0
      %7057 = vmatpush1.msra.mxu0 0.0
      %7058 = vmatprep.subr.mxu0 0.0
      %7059 = vmatpush1.msra.mxu0 0.0
      %7060 = vmatprep.subr.mxu0 0.0
      %7061 = vmatpush1.msra.mxu0 0.0
      %7062 = vmatprep.subr.mxu0 0.0
      %v7063 = vand.u32 %v6187, 4294901760
      %v7064 = vsub.f32 %v6187, %v7063
      %v7065 = vand.u32 %v7064, 4294901760
      %7066 = vmatpush1.msra.mxu0 %v7065
      %7067 = vmatprep.subr.mxu0 0.0
      %v7068 = vand.u32 %v6186, 4294901760
      %v7069 = vsub.f32 %v6186, %v7068
      %v7070 = vand.u32 %v7069, 4294901760
      %7071 = vmatpush1.msra.mxu0 %v7070
      %7072 = vmatprep.subr.mxu0 0.0
      %v7073 = vand.u32 %v6185, 4294901760
      %v7074 = vsub.f32 %v6185, %v7073
      %v7075 = vand.u32 %v7074, 4294901760
      %7076 = vmatpush1.msra.mxu0 %v7075
      %7077 = vmatprep.subr.mxu0 0.0
      %v7078 = vand.u32 %v6184, 4294901760
      %v7079 = vsub.f32 %v6184, %v7078
      %v7080 = vand.u32 %v7079, 4294901760
      %7081 = vmatpush1.msra.mxu0 %v7080
      %7082 = vmatprep.subr.mxu0 0.0
      %7083 = vmatpush2.msra.mxu0 0.0
      %7084 = vmatprep.subr.mxu0 0.0
      %7085 = vmatpush2.msra.mxu0 0.0
      %7086 = vmatprep.subr.mxu0 0.0
      %7087 = vmatpush2.msra.mxu0 0.0
      %7088 = vmatprep.subr.mxu0 0.0
      %7089 = vmatpush2.msra.mxu0 0.0
      %7090 = vmatprep.subr.mxu0 0.0
      %7091 = vmatpush2.msra.mxu0 0.0
      %7092 = vmatprep.subr.mxu0 0.0
      %7093 = vmatpush2.msra.mxu0 0.0
      %7094 = vmatprep.subr.mxu0 0.0
      %7095 = vmatpush2.msra.mxu0 0.0
      %7096 = vmatprep.subr.mxu0 0.0
      %7097 = vmatpush2.msra.mxu0 0.0
      %7098 = vmatprep.subr.mxu0 0.0
      %7099 = vmatpush2.msra.mxu0 0.0
      %7100 = vmatprep.subr.mxu0 0.0
      %7101 = vmatpush2.msra.mxu0 0.0
      %7102 = vmatprep.subr.mxu0 0.0
      %7103 = vmatpush2.msra.mxu0 0.0
      %7104 = vmatprep.subr.mxu0 0.0
      %7105 = vmatpush2.msra.mxu0 0.0
      %7106 = vmatprep.subr.mxu0 0.0
      %7107 = vmatpush2.msra.mxu0 0.0
      %7108 = vmatprep.subr.mxu0 0.0
      %7109 = vmatpush2.msra.mxu0 0.0
      %7110 = vmatprep.subr.mxu0 0.0
      %7111 = vmatpush2.msra.mxu0 0.0
      %7112 = vmatprep.subr.mxu0 0.0
      %7113 = vmatpush2.msra.mxu0 0.0
      %7114 = vmatprep.mubr.f32.mxu0 0.0
      %v7115 = vand.u32 %v6199, 4294901760
      %7116 = vmatmul.mubr.f32.gmra.mxu0 %v7115
      %v7117 = vpop.f32.mrf.mxu0
      %v7118 = vadd.f32 %v6915, %v7117
      %v7119 = vpop.f32.mrf.mxu0
      %7120 = vmatprep.mubr.f32.mxu0 0.0
      %v7121 = vand.u32 %v6202, 4294901760
      %7122 = vmatmul.mubr.f32.gmra.mxu0 %v7121
      %v7123 = vpop.f32.mrf.mxu0
      %v7124 = vadd.f32 %v6923, %v7123
      %v7125 = vpop.f32.mrf.mxu0
      %7126 = vmatprep.mubr.f32.mxu0 0.0
      %v7127 = vand.u32 %v6205, 4294901760
      %7128 = vmatmul.mubr.f32.gmra.mxu0 %v7127
      %v7129 = vpop.f32.mrf.mxu0
      %v7130 = vadd.f32 %v6931, %v7129
      %v7131 = vpop.f32.mrf.mxu0
      %7132 = vmatprep.mubr.f32.mxu0 0.0
      %v7133 = vand.u32 %v6208, 4294901760
      %7134 = vmatmul.mubr.f32.gmra.mxu0 %v7133
      %v7135 = vpop.f32.mrf.mxu0
      %v7136 = vadd.f32 %v6939, %v7135
      %v7137 = vpop.f32.mrf.mxu0
      %7138 = vmatprep.mubr.f32.mxu0 0.0
      %v7139 = vand.u32 %v6211, 4294901760
      %7140 = vmatmul.mubr.f32.gmra.mxu0 %v7139
      %v7141 = vpop.f32.mrf.mxu0
      %v7142 = vadd.f32 %v6947, %v7141
      %v7143 = vpop.f32.mrf.mxu0
      %7144 = vmatprep.mubr.f32.mxu0 0.0
      %v7145 = vand.u32 %v6214, 4294901760
      %7146 = vmatmul.mubr.f32.gmra.mxu0 %v7145
      %v7147 = vpop.f32.mrf.mxu0
      %v7148 = vadd.f32 %v6955, %v7147
      %v7149 = vpop.f32.mrf.mxu0
      %7150 = vmatprep.mubr.f32.mxu0 0.0
      %v7151 = vand.u32 %v6217, 4294901760
      %7152 = vmatmul.mubr.f32.gmra.mxu0 %v7151
      %v7153 = vpop.f32.mrf.mxu0
      %v7154 = vadd.f32 %v6963, %v7153
      %v7155 = vpop.f32.mrf.mxu0
      %7156 = vmatprep.mubr.f32.mxu0 0.0
      %v7157 = vand.u32 %v6220, 4294901760
      %7158 = vmatmul.mubr.f32.gmra.mxu0 %v7157
      %v7159 = vpop.f32.mrf.mxu0
      %v7160 = vadd.f32 %v6971, %v7159
      %v7161 = vpop.f32.mrf.mxu0
      %7162 = vmatprep.mubr.f32.mxu0 0.0
      %v7163 = vand.u32 %v6223, 4294901760
      %7164 = vmatmul.mubr.f32.gmra.mxu0 %v7163
      %v7165 = vpop.f32.mrf.mxu0
      %v7166 = vadd.f32 %v6979, %v7165
      %v7167 = vpop.f32.mrf.mxu0
      %7168 = vmatprep.mubr.f32.mxu0 0.0
      %v7169 = vand.u32 %v6226, 4294901760
      %7170 = vmatmul.mubr.f32.gmra.mxu0 %v7169
      %v7171 = vpop.f32.mrf.mxu0
      %v7172 = vadd.f32 %v6987, %v7171
      %v7173 = vpop.f32.mrf.mxu0
      %7174 = vmatprep.mubr.f32.mxu0 0.0
      %v7175 = vand.u32 %v6229, 4294901760
      %7176 = vmatmul.mubr.f32.gmra.mxu0 %v7175
      %v7177 = vpop.f32.mrf.mxu0
      %v7178 = vadd.f32 %v6995, %v7177
      %v7179 = vpop.f32.mrf.mxu0
      %7180 = vmatprep.mubr.f32.mxu0 0.0
      %v7181 = vand.u32 %v6232, 4294901760
      %7182 = vmatmul.mubr.f32.gmra.mxu0 %v7181
      %v7183 = vpop.f32.mrf.mxu0
      %v7184 = vadd.f32 %v7003, %v7183
      %v7185 = vpop.f32.mrf.mxu0
      %7186 = vmatprep.mubr.f32.mxu0 0.0
      %v7187 = vand.u32 %v6235, 4294901760
      %7188 = vmatmul.mubr.f32.gmra.mxu0 %v7187
      %v7189 = vpop.f32.mrf.mxu0
      %v7190 = vadd.f32 %v7011, %v7189
      %v7191 = vpop.f32.mrf.mxu0
      %7192 = vmatprep.mubr.f32.mxu0 0.0
      %v7193 = vand.u32 %v6238, 4294901760
      %7194 = vmatmul.mubr.f32.gmra.mxu0 %v7193
      %v7195 = vpop.f32.mrf.mxu0
      %v7196 = vadd.f32 %v7019, %v7195
      %v7197 = vpop.f32.mrf.mxu0
      %7198 = vmatprep.mubr.f32.mxu0 0.0
      %v7199 = vand.u32 %v6241, 4294901760
      %7200 = vmatmul.mubr.f32.gmra.mxu0 %v7199
      %v7201 = vpop.f32.mrf.mxu0
      %v7202 = vadd.f32 %v7027, %v7201
      %v7203 = vpop.f32.mrf.mxu0
      %7204 = vmatprep.mubr.f32.mxu0 0.0
      %v7205 = vand.u32 %v6244, 4294901760
      %7206 = vmatmul.mubr.f32.gmra.mxu0 %v7205
      %v7207 = vpop.f32.mrf.mxu0
      %v7208 = vadd.f32 %v7035, %v7207
      %v7209 = vpop.f32.mrf.mxu0
      %7210 = vdwg.mxu0
      %7211 = vmatprep.subr.mxu0 0.0
      %7212 = vmatpush1.msra.mxu0 0.0
      %7213 = vmatprep.subr.mxu0 0.0
      %7214 = vmatpush1.msra.mxu0 0.0
      %7215 = vmatprep.subr.mxu0 0.0
      %7216 = vmatpush1.msra.mxu0 0.0
      %7217 = vmatprep.subr.mxu0 0.0
      %7218 = vmatpush1.msra.mxu0 0.0
      %7219 = vmatprep.subr.mxu0 0.0
      %7220 = vmatpush1.msra.mxu0 0.0
      %7221 = vmatprep.subr.mxu0 0.0
      %7222 = vmatpush1.msra.mxu0 0.0
      %7223 = vmatprep.subr.mxu0 0.0
      %7224 = vmatpush1.msra.mxu0 0.0
      %7225 = vmatprep.subr.mxu0 0.0
      %7226 = vmatpush1.msra.mxu0 0.0
      %7227 = vmatprep.subr.mxu0 0.0
      %7228 = vmatpush1.msra.mxu0 0.0
      %7229 = vmatprep.subr.mxu0 0.0
      %7230 = vmatpush1.msra.mxu0 0.0
      %7231 = vmatprep.subr.mxu0 0.0
      %7232 = vmatpush1.msra.mxu0 0.0
      %7233 = vmatprep.subr.mxu0 0.0
      %7234 = vmatpush1.msra.mxu0 0.0
      %7235 = vmatprep.subr.mxu0 0.0
      %v7236 = vand.u32 %v6187, 4294901760
      %7237 = vmatpush1.msra.mxu0 %v7236
      %7238 = vmatprep.subr.mxu0 0.0
      %v7239 = vand.u32 %v6186, 4294901760
      %7240 = vmatpush1.msra.mxu0 %v7239
      %7241 = vmatprep.subr.mxu0 0.0
      %v7242 = vand.u32 %v6185, 4294901760
      %7243 = vmatpush1.msra.mxu0 %v7242
      %7244 = vmatprep.subr.mxu0 0.0
      %v7245 = vand.u32 %v6184, 4294901760
      %7246 = vmatpush1.msra.mxu0 %v7245
      %7247 = vmatprep.subr.mxu0 0.0
      %7248 = vmatpush2.msra.mxu0 0.0
      %7249 = vmatprep.subr.mxu0 0.0
      %7250 = vmatpush2.msra.mxu0 0.0
      %7251 = vmatprep.subr.mxu0 0.0
      %7252 = vmatpush2.msra.mxu0 0.0
      %7253 = vmatprep.subr.mxu0 0.0
      %7254 = vmatpush2.msra.mxu0 0.0
      %7255 = vmatprep.subr.mxu0 0.0
      %7256 = vmatpush2.msra.mxu0 0.0
      %7257 = vmatprep.subr.mxu0 0.0
      %7258 = vmatpush2.msra.mxu0 0.0
      %7259 = vmatprep.subr.mxu0 0.0
      %7260 = vmatpush2.msra.mxu0 0.0
      %7261 = vmatprep.subr.mxu0 0.0
      %7262 = vmatpush2.msra.mxu0 0.0
      %7263 = vmatprep.subr.mxu0 0.0
      %7264 = vmatpush2.msra.mxu0 0.0
      %7265 = vmatprep.subr.mxu0 0.0
      %7266 = vmatpush2.msra.mxu0 0.0
      %7267 = vmatprep.subr.mxu0 0.0
      %7268 = vmatpush2.msra.mxu0 0.0
      %7269 = vmatprep.subr.mxu0 0.0
      %7270 = vmatpush2.msra.mxu0 0.0
      %7271 = vmatprep.subr.mxu0 0.0
      %7272 = vmatpush2.msra.mxu0 0.0
      %7273 = vmatprep.subr.mxu0 0.0
      %7274 = vmatpush2.msra.mxu0 0.0
      %7275 = vmatprep.subr.mxu0 0.0
      %7276 = vmatpush2.msra.mxu0 0.0
      %7277 = vmatprep.subr.mxu0 0.0
      %7278 = vmatpush2.msra.mxu0 0.0
      %7279 = vmatprep.mubr.f32.mxu0 0.0
      %v7280 = vand.u32 %v6199, 4294901760
      %7281 = vmatmul.mubr.f32.gmra.mxu0 %v7280
      %v7282 = vpop.f32.mrf.mxu0
      %v7283 = vadd.f32 %v7118, %v7282
      %v7284 = vpop.f32.mrf.mxu0
      %7285 = vmatprep.mubr.f32.mxu0 0.0
      %v7286 = vand.u32 %v6202, 4294901760
      %7287 = vmatmul.mubr.f32.gmra.mxu0 %v7286
      %v7288 = vpop.f32.mrf.mxu0
      %v7289 = vadd.f32 %v7124, %v7288
      %v7290 = vpop.f32.mrf.mxu0
      %7291 = vmatprep.mubr.f32.mxu0 0.0
      %v7292 = vand.u32 %v6205, 4294901760
      %7293 = vmatmul.mubr.f32.gmra.mxu0 %v7292
      %v7294 = vpop.f32.mrf.mxu0
      %v7295 = vadd.f32 %v7130, %v7294
      %v7296 = vpop.f32.mrf.mxu0
      %7297 = vmatprep.mubr.f32.mxu0 0.0
      %v7298 = vand.u32 %v6208, 4294901760
      %7299 = vmatmul.mubr.f32.gmra.mxu0 %v7298
      %v7300 = vpop.f32.mrf.mxu0
      %v7301 = vadd.f32 %v7136, %v7300
      %v7302 = vpop.f32.mrf.mxu0
      %7303 = vmatprep.mubr.f32.mxu0 0.0
      %v7304 = vand.u32 %v6211, 4294901760
      %7305 = vmatmul.mubr.f32.gmra.mxu0 %v7304
      %v7306 = vpop.f32.mrf.mxu0
      %v7307 = vadd.f32 %v7142, %v7306
      %v7308 = vpop.f32.mrf.mxu0
      %7309 = vmatprep.mubr.f32.mxu0 0.0
      %v7310 = vand.u32 %v6214, 4294901760
      %7311 = vmatmul.mubr.f32.gmra.mxu0 %v7310
      %v7312 = vpop.f32.mrf.mxu0
      %v7313 = vadd.f32 %v7148, %v7312
      %v7314 = vpop.f32.mrf.mxu0
      %7315 = vmatprep.mubr.f32.mxu0 0.0
      %v7316 = vand.u32 %v6217, 4294901760
      %7317 = vmatmul.mubr.f32.gmra.mxu0 %v7316
      %v7318 = vpop.f32.mrf.mxu0
      %v7319 = vadd.f32 %v7154, %v7318
      %v7320 = vpop.f32.mrf.mxu0
      %7321 = vmatprep.mubr.f32.mxu0 0.0
      %v7322 = vand.u32 %v6220, 4294901760
      %7323 = vmatmul.mubr.f32.gmra.mxu0 %v7322
      %v7324 = vpop.f32.mrf.mxu0
      %v7325 = vadd.f32 %v7160, %v7324
      %v7326 = vpop.f32.mrf.mxu0
      %7327 = vmatprep.mubr.f32.mxu0 0.0
      %v7328 = vand.u32 %v6223, 4294901760
      %7329 = vmatmul.mubr.f32.gmra.mxu0 %v7328
      %v7330 = vpop.f32.mrf.mxu0
      %v7331 = vadd.f32 %v7166, %v7330
      %v7332 = vpop.f32.mrf.mxu0
      %7333 = vmatprep.mubr.f32.mxu0 0.0
      %v7334 = vand.u32 %v6226, 4294901760
      %7335 = vmatmul.mubr.f32.gmra.mxu0 %v7334
      %v7336 = vpop.f32.mrf.mxu0
      %v7337 = vadd.f32 %v7172, %v7336
      %v7338 = vpop.f32.mrf.mxu0
      %7339 = vmatprep.mubr.f32.mxu0 0.0
      %v7340 = vand.u32 %v6229, 4294901760
      %7341 = vmatmul.mubr.f32.gmra.mxu0 %v7340
      %v7342 = vpop.f32.mrf.mxu0
      %v7343 = vadd.f32 %v7178, %v7342
      %v7344 = vpop.f32.mrf.mxu0
      %7345 = vmatprep.mubr.f32.mxu0 0.0
      %v7346 = vand.u32 %v6232, 4294901760
      %7347 = vmatmul.mubr.f32.gmra.mxu0 %v7346
      %v7348 = vpop.f32.mrf.mxu0
      %v7349 = vadd.f32 %v7184, %v7348
      %v7350 = vpop.f32.mrf.mxu0
      %7351 = vmatprep.mubr.f32.mxu0 0.0
      %v7352 = vand.u32 %v6235, 4294901760
      %7353 = vmatmul.mubr.f32.gmra.mxu0 %v7352
      %v7354 = vpop.f32.mrf.mxu0
      %v7355 = vadd.f32 %v7190, %v7354
      %v7356 = vpop.f32.mrf.mxu0
      %7357 = vmatprep.mubr.f32.mxu0 0.0
      %v7358 = vand.u32 %v6238, 4294901760
      %7359 = vmatmul.mubr.f32.gmra.mxu0 %v7358
      %v7360 = vpop.f32.mrf.mxu0
      %v7361 = vadd.f32 %v7196, %v7360
      %v7362 = vpop.f32.mrf.mxu0
      %7363 = vmatprep.mubr.f32.mxu0 0.0
      %v7364 = vand.u32 %v6241, 4294901760
      %7365 = vmatmul.mubr.f32.gmra.mxu0 %v7364
      %v7366 = vpop.f32.mrf.mxu0
      %v7367 = vadd.f32 %v7202, %v7366
      %v7368 = vpop.f32.mrf.mxu0
      %7369 = vmatprep.mubr.f32.mxu0 0.0
      %v7370 = vand.u32 %v6244, 4294901760
      %7371 = vmatmul.mubr.f32.gmra.mxu0 %v7370
      %v7372 = vpop.f32.mrf.mxu0
      %v7373 = vadd.f32 %v7208, %v7372
      %v7374 = vpop.f32.mrf.mxu0
      %7375 = vdwg.mxu0
      %v7376 = vmax.f32 %v7283, 0.0
      %v7377 = vmax.f32 %v7289, 0.0
      %v7378 = vmax.f32 %v7295, 0.0
      %v7379 = vmax.f32 %v7301, 0.0
      %v7380 = vmax.f32 %v7307, 0.0
      %v7381 = vmax.f32 %v7313, 0.0
      %v7382 = vmax.f32 %v7319, 0.0
      %v7383 = vmax.f32 %v7325, 0.0
      %v7384 = vmax.f32 %v7331, 0.0
      %v7385 = vmax.f32 %v7337, 0.0
      %v7386 = vmax.f32 %v7343, 0.0
      %v7387 = vmax.f32 %v7349, 0.0
      %v7388 = vmax.f32 %v7355, 0.0
      %v7389 = vmax.f32 %v7361, 0.0
      %v7390 = vmax.f32 %v7367, 0.0
      %v7391 = vmax.f32 %v7373, 0.0
      %v7392 = vlaneseq
      %v7393 = vshrl.u32 %v7392, 7
      %v7394 = vsub.s32 0, %v7393
      %v7395 = vrot.slane %v6193, %v7394
      %v7397 = vsel %vm1353, %v7376, 0
      %v7400 = vsel %vm1353, %v7377, 0
      %v7403 = vsel %vm1353, %v7378, 0
      %v7406 = vsel %vm1353, %v7379, 0
      %v7409 = vsel %vm1353, %v7380, 0
      %v7412 = vsel %vm1353, %v7381, 0
      %v7415 = vsel %vm1353, %v7382, 0
      %v7418 = vsel %vm1353, %v7383, 0
      %v7421 = vsel %vm1353, %v7384, 0
      %v7424 = vsel %vm1353, %v7385, 0
      %v7427 = vsel %vm1353, %v7386, 0
      %v7430 = vsel %vm1353, %v7387, 0
      %v7433 = vsel %vm1353, %v7388, 0
      %v7436 = vsel %vm1353, %v7389, 0
      %v7439 = vsel %vm1353, %v7390, 0
      %v7442 = vsel %vm1353, %v7391, 0
      %7444 = vmatprep.subr.mxu0 0.0
      %7445 = vmatpush1.msra.mxu0 0.0
      %7446 = vmatprep.subr.mxu0 0.0
      %7447 = vmatpush1.msra.mxu0 0.0
      %7448 = vmatprep.subr.mxu0 0.0
      %7449 = vmatpush1.msra.mxu0 0.0
      %7450 = vmatprep.subr.mxu0 0.0
      %7451 = vmatpush1.msra.mxu0 0.0
      %7452 = vmatprep.subr.mxu0 0.0
      %7453 = vmatpush1.msra.mxu0 0.0
      %7454 = vmatprep.subr.mxu0 0.0
      %7455 = vmatpush1.msra.mxu0 0.0
      %7456 = vmatprep.subr.mxu0 0.0
      %7457 = vmatpush1.msra.mxu0 0.0
      %7458 = vmatprep.subr.mxu0 0.0
      %7459 = vmatpush1.msra.mxu0 0.0
      %7460 = vmatprep.subr.mxu0 0.0
      %7461 = vmatpush1.msra.mxu0 0.0
      %7462 = vmatprep.subr.mxu0 0.0
      %7463 = vmatpush1.msra.mxu0 0.0
      %7464 = vmatprep.subr.mxu0 0.0
      %7465 = vmatpush1.msra.mxu0 0.0
      %7466 = vmatprep.subr.mxu0 0.0
      %7467 = vmatpush1.msra.mxu0 0.0
      %7468 = vmatprep.subr.mxu0 0.0
      %v7469 = vand.u32 %v6192, 4294901760
      %7470 = vmatpush1.msra.mxu0 %v7469
      %7471 = vmatprep.subr.mxu0 0.0
      %v7472 = vand.u32 %v6191, 4294901760
      %7473 = vmatpush1.msra.mxu0 %v7472
      %7474 = vmatprep.subr.mxu0 0.0
      %v7475 = vand.u32 %v6190, 4294901760
      %7476 = vmatpush1.msra.mxu0 %v7475
      %7477 = vmatprep.subr.mxu0 0.0
      %v7478 = vand.u32 %v6189, 4294901760
      %7479 = vmatpush1.msra.mxu0 %v7478
      %7480 = vmatprep.subr.mxu0 0.0
      %7481 = vmatpush2.msra.mxu0 0.0
      %7482 = vmatprep.subr.mxu0 0.0
      %7483 = vmatpush2.msra.mxu0 0.0
      %7484 = vmatprep.subr.mxu0 0.0
      %7485 = vmatpush2.msra.mxu0 0.0
      %7486 = vmatprep.subr.mxu0 0.0
      %7487 = vmatpush2.msra.mxu0 0.0
      %7488 = vmatprep.subr.mxu0 0.0
      %7489 = vmatpush2.msra.mxu0 0.0
      %7490 = vmatprep.subr.mxu0 0.0
      %7491 = vmatpush2.msra.mxu0 0.0
      %7492 = vmatprep.subr.mxu0 0.0
      %7493 = vmatpush2.msra.mxu0 0.0
      %7494 = vmatprep.subr.mxu0 0.0
      %7495 = vmatpush2.msra.mxu0 0.0
      %7496 = vmatprep.subr.mxu0 0.0
      %7497 = vmatpush2.msra.mxu0 0.0
      %7498 = vmatprep.subr.mxu0 0.0
      %7499 = vmatpush2.msra.mxu0 0.0
      %7500 = vmatprep.subr.mxu0 0.0
      %7501 = vmatpush2.msra.mxu0 0.0
      %7502 = vmatprep.subr.mxu0 0.0
      %7503 = vmatpush2.msra.mxu0 0.0
      %7504 = vmatprep.subr.mxu0 0.0
      %7505 = vmatpush2.msra.mxu0 0.0
      %7506 = vmatprep.subr.mxu0 0.0
      %7507 = vmatpush2.msra.mxu0 0.0
      %7508 = vmatprep.subr.mxu0 0.0
      %7509 = vmatpush2.msra.mxu0 0.0
      %7510 = vmatprep.subr.mxu0 0.0
      %7511 = vmatpush2.msra.mxu0 0.0
      %7512 = vmatprep.mubr.f32.mxu0 0.0
      %v7513 = vand.u32 %v7397, 4294901760
      %v7514 = vsub.f32 %v7397, %v7513
      %v7515 = vand.u32 %v7514, 4294901760
      %v7516 = vsub.f32 %v7514, %v7515
      %v7517 = vand.u32 %v7516, 4294901760
      %7518 = vmatmul.mubr.f32.gmra.mxu0 %v7517
      %v7519 = vpop.f32.mrf.mxu0
      %v7520 = vadd.f32 %v7395, %v7519
      %v7521 = vpop.f32.mrf.mxu0
      %7522 = vmatprep.mubr.f32.mxu0 0.0
      %v7523 = vand.u32 %v7400, 4294901760
      %v7524 = vsub.f32 %v7400, %v7523
      %v7525 = vand.u32 %v7524, 4294901760
      %v7526 = vsub.f32 %v7524, %v7525
      %v7527 = vand.u32 %v7526, 4294901760
      %7528 = vmatmul.mubr.f32.gmra.mxu0 %v7527
      %v7529 = vpop.f32.mrf.mxu0
      %v7530 = vadd.f32 %v7395, %v7529
      %v7531 = vpop.f32.mrf.mxu0
      %7532 = vmatprep.mubr.f32.mxu0 0.0
      %v7533 = vand.u32 %v7403, 4294901760
      %v7534 = vsub.f32 %v7403, %v7533
      %v7535 = vand.u32 %v7534, 4294901760
      %v7536 = vsub.f32 %v7534, %v7535
      %v7537 = vand.u32 %v7536, 4294901760
      %7538 = vmatmul.mubr.f32.gmra.mxu0 %v7537
      %v7539 = vpop.f32.mrf.mxu0
      %v7540 = vadd.f32 %v7395, %v7539
      %v7541 = vpop.f32.mrf.mxu0
      %7542 = vmatprep.mubr.f32.mxu0 0.0
      %v7543 = vand.u32 %v7406, 4294901760
      %v7544 = vsub.f32 %v7406, %v7543
      %v7545 = vand.u32 %v7544, 4294901760
      %v7546 = vsub.f32 %v7544, %v7545
      %v7547 = vand.u32 %v7546, 4294901760
      %7548 = vmatmul.mubr.f32.gmra.mxu0 %v7547
      %v7549 = vpop.f32.mrf.mxu0
      %v7550 = vadd.f32 %v7395, %v7549
      %v7551 = vpop.f32.mrf.mxu0
      %7552 = vmatprep.mubr.f32.mxu0 0.0
      %v7553 = vand.u32 %v7409, 4294901760
      %v7554 = vsub.f32 %v7409, %v7553
      %v7555 = vand.u32 %v7554, 4294901760
      %v7556 = vsub.f32 %v7554, %v7555
      %v7557 = vand.u32 %v7556, 4294901760
      %7558 = vmatmul.mubr.f32.gmra.mxu0 %v7557
      %v7559 = vpop.f32.mrf.mxu0
      %v7560 = vadd.f32 %v7395, %v7559
      %v7561 = vpop.f32.mrf.mxu0
      %7562 = vmatprep.mubr.f32.mxu0 0.0
      %v7563 = vand.u32 %v7412, 4294901760
      %v7564 = vsub.f32 %v7412, %v7563
      %v7565 = vand.u32 %v7564, 4294901760
      %v7566 = vsub.f32 %v7564, %v7565
      %v7567 = vand.u32 %v7566, 4294901760
      %7568 = vmatmul.mubr.f32.gmra.mxu0 %v7567
      %v7569 = vpop.f32.mrf.mxu0
      %v7570 = vadd.f32 %v7395, %v7569
      %v7571 = vpop.f32.mrf.mxu0
      %7572 = vmatprep.mubr.f32.mxu0 0.0
      %v7573 = vand.u32 %v7415, 4294901760
      %v7574 = vsub.f32 %v7415, %v7573
      %v7575 = vand.u32 %v7574, 4294901760
      %v7576 = vsub.f32 %v7574, %v7575
      %v7577 = vand.u32 %v7576, 4294901760
      %7578 = vmatmul.mubr.f32.gmra.mxu0 %v7577
      %v7579 = vpop.f32.mrf.mxu0
      %v7580 = vadd.f32 %v7395, %v7579
      %v7581 = vpop.f32.mrf.mxu0
      %7582 = vmatprep.mubr.f32.mxu0 0.0
      %v7583 = vand.u32 %v7418, 4294901760
      %v7584 = vsub.f32 %v7418, %v7583
      %v7585 = vand.u32 %v7584, 4294901760
      %v7586 = vsub.f32 %v7584, %v7585
      %v7587 = vand.u32 %v7586, 4294901760
      %7588 = vmatmul.mubr.f32.gmra.mxu0 %v7587
      %v7589 = vpop.f32.mrf.mxu0
      %v7590 = vadd.f32 %v7395, %v7589
      %v7591 = vpop.f32.mrf.mxu0
      %7592 = vmatprep.mubr.f32.mxu0 0.0
      %v7593 = vand.u32 %v7421, 4294901760
      %v7594 = vsub.f32 %v7421, %v7593
      %v7595 = vand.u32 %v7594, 4294901760
      %v7596 = vsub.f32 %v7594, %v7595
      %v7597 = vand.u32 %v7596, 4294901760
      %7598 = vmatmul.mubr.f32.gmra.mxu0 %v7597
      %v7599 = vpop.f32.mrf.mxu0
      %v7600 = vadd.f32 %v7395, %v7599
      %v7601 = vpop.f32.mrf.mxu0
      %7602 = vmatprep.mubr.f32.mxu0 0.0
      %v7603 = vand.u32 %v7424, 4294901760
      %v7604 = vsub.f32 %v7424, %v7603
      %v7605 = vand.u32 %v7604, 4294901760
      %v7606 = vsub.f32 %v7604, %v7605
      %v7607 = vand.u32 %v7606, 4294901760
      %7608 = vmatmul.mubr.f32.gmra.mxu0 %v7607
      %v7609 = vpop.f32.mrf.mxu0
      %v7610 = vadd.f32 %v7395, %v7609
      %v7611 = vpop.f32.mrf.mxu0
      %7612 = vmatprep.mubr.f32.mxu0 0.0
      %v7613 = vand.u32 %v7427, 4294901760
      %v7614 = vsub.f32 %v7427, %v7613
      %v7615 = vand.u32 %v7614, 4294901760
      %v7616 = vsub.f32 %v7614, %v7615
      %v7617 = vand.u32 %v7616, 4294901760
      %7618 = vmatmul.mubr.f32.gmra.mxu0 %v7617
      %v7619 = vpop.f32.mrf.mxu0
      %v7620 = vadd.f32 %v7395, %v7619
      %v7621 = vpop.f32.mrf.mxu0
      %7622 = vmatprep.mubr.f32.mxu0 0.0
      %v7623 = vand.u32 %v7430, 4294901760
      %v7624 = vsub.f32 %v7430, %v7623
      %v7625 = vand.u32 %v7624, 4294901760
      %v7626 = vsub.f32 %v7624, %v7625
      %v7627 = vand.u32 %v7626, 4294901760
      %7628 = vmatmul.mubr.f32.gmra.mxu0 %v7627
      %v7629 = vpop.f32.mrf.mxu0
      %v7630 = vadd.f32 %v7395, %v7629
      %v7631 = vpop.f32.mrf.mxu0
      %7632 = vmatprep.mubr.f32.mxu0 0.0
      %v7633 = vand.u32 %v7433, 4294901760
      %v7634 = vsub.f32 %v7433, %v7633
      %v7635 = vand.u32 %v7634, 4294901760
      %v7636 = vsub.f32 %v7634, %v7635
      %v7637 = vand.u32 %v7636, 4294901760
      %7638 = vmatmul.mubr.f32.gmra.mxu0 %v7637
      %v7639 = vpop.f32.mrf.mxu0
      %v7640 = vadd.f32 %v7395, %v7639
      %v7641 = vpop.f32.mrf.mxu0
      %7642 = vmatprep.mubr.f32.mxu0 0.0
      %v7643 = vand.u32 %v7436, 4294901760
      %v7644 = vsub.f32 %v7436, %v7643
      %v7645 = vand.u32 %v7644, 4294901760
      %v7646 = vsub.f32 %v7644, %v7645
      %v7647 = vand.u32 %v7646, 4294901760
      %7648 = vmatmul.mubr.f32.gmra.mxu0 %v7647
      %v7649 = vpop.f32.mrf.mxu0
      %v7650 = vadd.f32 %v7395, %v7649
      %v7651 = vpop.f32.mrf.mxu0
      %7652 = vmatprep.mubr.f32.mxu0 0.0
      %v7653 = vand.u32 %v7439, 4294901760
      %v7654 = vsub.f32 %v7439, %v7653
      %v7655 = vand.u32 %v7654, 4294901760
      %v7656 = vsub.f32 %v7654, %v7655
      %v7657 = vand.u32 %v7656, 4294901760
      %7658 = vmatmul.mubr.f32.gmra.mxu0 %v7657
      %v7659 = vpop.f32.mrf.mxu0
      %v7660 = vadd.f32 %v7395, %v7659
      %v7661 = vpop.f32.mrf.mxu0
      %7662 = vmatprep.mubr.f32.mxu0 0.0
      %v7663 = vand.u32 %v7442, 4294901760
      %v7664 = vsub.f32 %v7442, %v7663
      %v7665 = vand.u32 %v7664, 4294901760
      %v7666 = vsub.f32 %v7664, %v7665
      %v7667 = vand.u32 %v7666, 4294901760
      %7668 = vmatmul.mubr.f32.gmra.mxu0 %v7667
      %v7669 = vpop.f32.mrf.mxu0
      %v7670 = vadd.f32 %v7395, %v7669
      %v7671 = vpop.f32.mrf.mxu0
      %7672 = vdwg.mxu0
      %7673 = vmatprep.subr.mxu0 0.0
      %7674 = vmatpush1.msra.mxu0 0.0
      %7675 = vmatprep.subr.mxu0 0.0
      %7676 = vmatpush1.msra.mxu0 0.0
      %7677 = vmatprep.subr.mxu0 0.0
      %7678 = vmatpush1.msra.mxu0 0.0
      %7679 = vmatprep.subr.mxu0 0.0
      %7680 = vmatpush1.msra.mxu0 0.0
      %7681 = vmatprep.subr.mxu0 0.0
      %7682 = vmatpush1.msra.mxu0 0.0
      %7683 = vmatprep.subr.mxu0 0.0
      %7684 = vmatpush1.msra.mxu0 0.0
      %7685 = vmatprep.subr.mxu0 0.0
      %7686 = vmatpush1.msra.mxu0 0.0
      %7687 = vmatprep.subr.mxu0 0.0
      %7688 = vmatpush1.msra.mxu0 0.0
      %7689 = vmatprep.subr.mxu0 0.0
      %7690 = vmatpush1.msra.mxu0 0.0
      %7691 = vmatprep.subr.mxu0 0.0
      %7692 = vmatpush1.msra.mxu0 0.0
      %7693 = vmatprep.subr.mxu0 0.0
      %7694 = vmatpush1.msra.mxu0 0.0
      %7695 = vmatprep.subr.mxu0 0.0
      %7696 = vmatpush1.msra.mxu0 0.0
      %7697 = vmatprep.subr.mxu0 0.0
      %v7698 = vand.u32 %v6192, 4294901760
      %v7699 = vsub.f32 %v6192, %v7698
      %v7700 = vand.u32 %v7699, 4294901760
      %v7701 = vsub.f32 %v7699, %v7700
      %v7702 = vand.u32 %v7701, 4294901760
      %7703 = vmatpush1.msra.mxu0 %v7702
      %7704 = vmatprep.subr.mxu0 0.0
      %v7705 = vand.u32 %v6191, 4294901760
      %v7706 = vsub.f32 %v6191, %v7705
      %v7707 = vand.u32 %v7706, 4294901760
      %v7708 = vsub.f32 %v7706, %v7707
      %v7709 = vand.u32 %v7708, 4294901760
      %7710 = vmatpush1.msra.mxu0 %v7709
      %7711 = vmatprep.subr.mxu0 0.0
      %v7712 = vand.u32 %v6190, 4294901760
      %v7713 = vsub.f32 %v6190, %v7712
      %v7714 = vand.u32 %v7713, 4294901760
      %v7715 = vsub.f32 %v7713, %v7714
      %v7716 = vand.u32 %v7715, 4294901760
      %7717 = vmatpush1.msra.mxu0 %v7716
      %7718 = vmatprep.subr.mxu0 0.0
      %v7719 = vand.u32 %v6189, 4294901760
      %v7720 = vsub.f32 %v6189, %v7719
      %v7721 = vand.u32 %v7720, 4294901760
      %v7722 = vsub.f32 %v7720, %v7721
      %v7723 = vand.u32 %v7722, 4294901760
      %7724 = vmatpush1.msra.mxu0 %v7723
      %7725 = vmatprep.subr.mxu0 0.0
      %7726 = vmatpush2.msra.mxu0 0.0
      %7727 = vmatprep.subr.mxu0 0.0
      %7728 = vmatpush2.msra.mxu0 0.0
      %7729 = vmatprep.subr.mxu0 0.0
      %7730 = vmatpush2.msra.mxu0 0.0
      %7731 = vmatprep.subr.mxu0 0.0
      %7732 = vmatpush2.msra.mxu0 0.0
      %7733 = vmatprep.subr.mxu0 0.0
      %7734 = vmatpush2.msra.mxu0 0.0
      %7735 = vmatprep.subr.mxu0 0.0
      %7736 = vmatpush2.msra.mxu0 0.0
      %7737 = vmatprep.subr.mxu0 0.0
      %7738 = vmatpush2.msra.mxu0 0.0
      %7739 = vmatprep.subr.mxu0 0.0
      %7740 = vmatpush2.msra.mxu0 0.0
      %7741 = vmatprep.subr.mxu0 0.0
      %7742 = vmatpush2.msra.mxu0 0.0
      %7743 = vmatprep.subr.mxu0 0.0
      %7744 = vmatpush2.msra.mxu0 0.0
      %7745 = vmatprep.subr.mxu0 0.0
      %7746 = vmatpush2.msra.mxu0 0.0
      %7747 = vmatprep.subr.mxu0 0.0
      %7748 = vmatpush2.msra.mxu0 0.0
      %7749 = vmatprep.subr.mxu0 0.0
      %7750 = vmatpush2.msra.mxu0 0.0
      %7751 = vmatprep.subr.mxu0 0.0
      %7752 = vmatpush2.msra.mxu0 0.0
      %7753 = vmatprep.subr.mxu0 0.0
      %7754 = vmatpush2.msra.mxu0 0.0
      %7755 = vmatprep.subr.mxu0 0.0
      %7756 = vmatpush2.msra.mxu0 0.0
      %7757 = vmatprep.mubr.f32.mxu0 0.0
      %v7758 = vand.u32 %v7397, 4294901760
      %7759 = vmatmul.mubr.f32.gmra.mxu0 %v7758
      %v7760 = vpop.f32.mrf.mxu0
      %v7761 = vadd.f32 %v7520, %v7760
      %v7762 = vpop.f32.mrf.mxu0
      %7763 = vmatprep.mubr.f32.mxu0 0.0
      %v7764 = vand.u32 %v7400, 4294901760
      %7765 = vmatmul.mubr.f32.gmra.mxu0 %v7764
      %v7766 = vpop.f32.mrf.mxu0
      %v7767 = vadd.f32 %v7530, %v7766
      %v7768 = vpop.f32.mrf.mxu0
      %7769 = vmatprep.mubr.f32.mxu0 0.0
      %v7770 = vand.u32 %v7403, 4294901760
      %7771 = vmatmul.mubr.f32.gmra.mxu0 %v7770
      %v7772 = vpop.f32.mrf.mxu0
      %v7773 = vadd.f32 %v7540, %v7772
      %v7774 = vpop.f32.mrf.mxu0
      %7775 = vmatprep.mubr.f32.mxu0 0.0
      %v7776 = vand.u32 %v7406, 4294901760
      %7777 = vmatmul.mubr.f32.gmra.mxu0 %v7776
      %v7778 = vpop.f32.mrf.mxu0
      %v7779 = vadd.f32 %v7550, %v7778
      %v7780 = vpop.f32.mrf.mxu0
      %7781 = vmatprep.mubr.f32.mxu0 0.0
      %v7782 = vand.u32 %v7409, 4294901760
      %7783 = vmatmul.mubr.f32.gmra.mxu0 %v7782
      %v7784 = vpop.f32.mrf.mxu0
      %v7785 = vadd.f32 %v7560, %v7784
      %v7786 = vpop.f32.mrf.mxu0
      %7787 = vmatprep.mubr.f32.mxu0 0.0
      %v7788 = vand.u32 %v7412, 4294901760
      %7789 = vmatmul.mubr.f32.gmra.mxu0 %v7788
      %v7790 = vpop.f32.mrf.mxu0
      %v7791 = vadd.f32 %v7570, %v7790
      %v7792 = vpop.f32.mrf.mxu0
      %7793 = vmatprep.mubr.f32.mxu0 0.0
      %v7794 = vand.u32 %v7415, 4294901760
      %7795 = vmatmul.mubr.f32.gmra.mxu0 %v7794
      %v7796 = vpop.f32.mrf.mxu0
      %v7797 = vadd.f32 %v7580, %v7796
      %v7798 = vpop.f32.mrf.mxu0
      %7799 = vmatprep.mubr.f32.mxu0 0.0
      %v7800 = vand.u32 %v7418, 4294901760
      %7801 = vmatmul.mubr.f32.gmra.mxu0 %v7800
      %v7802 = vpop.f32.mrf.mxu0
      %v7803 = vadd.f32 %v7590, %v7802
      %v7804 = vpop.f32.mrf.mxu0
      %7805 = vmatprep.mubr.f32.mxu0 0.0
      %v7806 = vand.u32 %v7421, 4294901760
      %7807 = vmatmul.mubr.f32.gmra.mxu0 %v7806
      %v7808 = vpop.f32.mrf.mxu0
      %v7809 = vadd.f32 %v7600, %v7808
      %v7810 = vpop.f32.mrf.mxu0
      %7811 = vmatprep.mubr.f32.mxu0 0.0
      %v7812 = vand.u32 %v7424, 4294901760
      %7813 = vmatmul.mubr.f32.gmra.mxu0 %v7812
      %v7814 = vpop.f32.mrf.mxu0
      %v7815 = vadd.f32 %v7610, %v7814
      %v7816 = vpop.f32.mrf.mxu0
      %7817 = vmatprep.mubr.f32.mxu0 0.0
      %v7818 = vand.u32 %v7427, 4294901760
      %7819 = vmatmul.mubr.f32.gmra.mxu0 %v7818
      %v7820 = vpop.f32.mrf.mxu0
      %v7821 = vadd.f32 %v7620, %v7820
      %v7822 = vpop.f32.mrf.mxu0
      %7823 = vmatprep.mubr.f32.mxu0 0.0
      %v7824 = vand.u32 %v7430, 4294901760
      %7825 = vmatmul.mubr.f32.gmra.mxu0 %v7824
      %v7826 = vpop.f32.mrf.mxu0
      %v7827 = vadd.f32 %v7630, %v7826
      %v7828 = vpop.f32.mrf.mxu0
      %7829 = vmatprep.mubr.f32.mxu0 0.0
      %v7830 = vand.u32 %v7433, 4294901760
      %7831 = vmatmul.mubr.f32.gmra.mxu0 %v7830
      %v7832 = vpop.f32.mrf.mxu0
      %v7833 = vadd.f32 %v7640, %v7832
      %v7834 = vpop.f32.mrf.mxu0
      %7835 = vmatprep.mubr.f32.mxu0 0.0
      %v7836 = vand.u32 %v7436, 4294901760
      %7837 = vmatmul.mubr.f32.gmra.mxu0 %v7836
      %v7838 = vpop.f32.mrf.mxu0
      %v7839 = vadd.f32 %v7650, %v7838
      %v7840 = vpop.f32.mrf.mxu0
      %7841 = vmatprep.mubr.f32.mxu0 0.0
      %v7842 = vand.u32 %v7439, 4294901760
      %7843 = vmatmul.mubr.f32.gmra.mxu0 %v7842
      %v7844 = vpop.f32.mrf.mxu0
      %v7845 = vadd.f32 %v7660, %v7844
      %v7846 = vpop.f32.mrf.mxu0
      %7847 = vmatprep.mubr.f32.mxu0 0.0
      %v7848 = vand.u32 %v7442, 4294901760
      %7849 = vmatmul.mubr.f32.gmra.mxu0 %v7848
      %v7850 = vpop.f32.mrf.mxu0
      %v7851 = vadd.f32 %v7670, %v7850
      %v7852 = vpop.f32.mrf.mxu0
      %7853 = vdwg.mxu0
      %7854 = vmatprep.subr.mxu0 0.0
      %7855 = vmatpush1.msra.mxu0 0.0
      %7856 = vmatprep.subr.mxu0 0.0
      %7857 = vmatpush1.msra.mxu0 0.0
      %7858 = vmatprep.subr.mxu0 0.0
      %7859 = vmatpush1.msra.mxu0 0.0
      %7860 = vmatprep.subr.mxu0 0.0
      %7861 = vmatpush1.msra.mxu0 0.0
      %7862 = vmatprep.subr.mxu0 0.0
      %7863 = vmatpush1.msra.mxu0 0.0
      %7864 = vmatprep.subr.mxu0 0.0
      %7865 = vmatpush1.msra.mxu0 0.0
      %7866 = vmatprep.subr.mxu0 0.0
      %7867 = vmatpush1.msra.mxu0 0.0
      %7868 = vmatprep.subr.mxu0 0.0
      %7869 = vmatpush1.msra.mxu0 0.0
      %7870 = vmatprep.subr.mxu0 0.0
      %7871 = vmatpush1.msra.mxu0 0.0
      %7872 = vmatprep.subr.mxu0 0.0
      %7873 = vmatpush1.msra.mxu0 0.0
      %7874 = vmatprep.subr.mxu0 0.0
      %7875 = vmatpush1.msra.mxu0 0.0
      %7876 = vmatprep.subr.mxu0 0.0
      %7877 = vmatpush1.msra.mxu0 0.0
      %7878 = vmatprep.subr.mxu0 0.0
      %v7879 = vand.u32 %v6192, 4294901760
      %v7880 = vsub.f32 %v6192, %v7879
      %7881 = vmatpush1.msra.mxu0 %v7880
      %7882 = vmatprep.subr.mxu0 0.0
      %v7883 = vand.u32 %v6191, 4294901760
      %v7884 = vsub.f32 %v6191, %v7883
      %7885 = vmatpush1.msra.mxu0 %v7884
      %7886 = vmatprep.subr.mxu0 0.0
      %v7887 = vand.u32 %v6190, 4294901760
      %v7888 = vsub.f32 %v6190, %v7887
      %7889 = vmatpush1.msra.mxu0 %v7888
      %7890 = vmatprep.subr.mxu0 0.0
      %v7891 = vand.u32 %v6189, 4294901760
      %v7892 = vsub.f32 %v6189, %v7891
      %7893 = vmatpush1.msra.mxu0 %v7892
      %7894 = vmatprep.subr.mxu0 0.0
      %7895 = vmatpush2.msra.mxu0 0.0
      %7896 = vmatprep.subr.mxu0 0.0
      %7897 = vmatpush2.msra.mxu0 0.0
      %7898 = vmatprep.subr.mxu0 0.0
      %7899 = vmatpush2.msra.mxu0 0.0
      %7900 = vmatprep.subr.mxu0 0.0
      %7901 = vmatpush2.msra.mxu0 0.0
      %7902 = vmatprep.subr.mxu0 0.0
      %7903 = vmatpush2.msra.mxu0 0.0
      %7904 = vmatprep.subr.mxu0 0.0
      %7905 = vmatpush2.msra.mxu0 0.0
      %7906 = vmatprep.subr.mxu0 0.0
      %7907 = vmatpush2.msra.mxu0 0.0
      %7908 = vmatprep.subr.mxu0 0.0
      %7909 = vmatpush2.msra.mxu0 0.0
      %7910 = vmatprep.subr.mxu0 0.0
      %7911 = vmatpush2.msra.mxu0 0.0
      %7912 = vmatprep.subr.mxu0 0.0
      %7913 = vmatpush2.msra.mxu0 0.0
      %7914 = vmatprep.subr.mxu0 0.0
      %7915 = vmatpush2.msra.mxu0 0.0
      %7916 = vmatprep.subr.mxu0 0.0
      %7917 = vmatpush2.msra.mxu0 0.0
      %7918 = vmatprep.subr.mxu0 0.0
      %7919 = vmatpush2.msra.mxu0 0.0
      %7920 = vmatprep.subr.mxu0 0.0
      %7921 = vmatpush2.msra.mxu0 0.0
      %7922 = vmatprep.subr.mxu0 0.0
      %7923 = vmatpush2.msra.mxu0 0.0
      %7924 = vmatprep.subr.mxu0 0.0
      %7925 = vmatpush2.msra.mxu0 0.0
      %7926 = vmatprep.mubr.f32.mxu0 0.0
      %v7927 = vand.u32 %v7397, 4294901760
      %v7928 = vsub.f32 %v7397, %v7927
      %7929 = vmatmul.mubr.f32.gmra.mxu0 %v7928
      %v7930 = vpop.f32.mrf.mxu0
      %v7931 = vadd.f32 %v7761, %v7930
      %v7932 = vpop.f32.mrf.mxu0
      %7933 = vmatprep.mubr.f32.mxu0 0.0
      %v7934 = vand.u32 %v7400, 4294901760
      %v7935 = vsub.f32 %v7400, %v7934
      %7936 = vmatmul.mubr.f32.gmra.mxu0 %v7935
      %v7937 = vpop.f32.mrf.mxu0
      %v7938 = vadd.f32 %v7767, %v7937
      %v7939 = vpop.f32.mrf.mxu0
      %7940 = vmatprep.mubr.f32.mxu0 0.0
      %v7941 = vand.u32 %v7403, 4294901760
      %v7942 = vsub.f32 %v7403, %v7941
      %7943 = vmatmul.mubr.f32.gmra.mxu0 %v7942
      %v7944 = vpop.f32.mrf.mxu0
      %v7945 = vadd.f32 %v7773, %v7944
      %v7946 = vpop.f32.mrf.mxu0
      %7947 = vmatprep.mubr.f32.mxu0 0.0
      %v7948 = vand.u32 %v7406, 4294901760
      %v7949 = vsub.f32 %v7406, %v7948
      %7950 = vmatmul.mubr.f32.gmra.mxu0 %v7949
      %v7951 = vpop.f32.mrf.mxu0
      %v7952 = vadd.f32 %v7779, %v7951
      %v7953 = vpop.f32.mrf.mxu0
      %7954 = vmatprep.mubr.f32.mxu0 0.0
      %v7955 = vand.u32 %v7409, 4294901760
      %v7956 = vsub.f32 %v7409, %v7955
      %7957 = vmatmul.mubr.f32.gmra.mxu0 %v7956
      %v7958 = vpop.f32.mrf.mxu0
      %v7959 = vadd.f32 %v7785, %v7958
      %v7960 = vpop.f32.mrf.mxu0
      %7961 = vmatprep.mubr.f32.mxu0 0.0
      %v7962 = vand.u32 %v7412, 4294901760
      %v7963 = vsub.f32 %v7412, %v7962
      %7964 = vmatmul.mubr.f32.gmra.mxu0 %v7963
      %v7965 = vpop.f32.mrf.mxu0
      %v7966 = vadd.f32 %v7791, %v7965
      %v7967 = vpop.f32.mrf.mxu0
      %7968 = vmatprep.mubr.f32.mxu0 0.0
      %v7969 = vand.u32 %v7415, 4294901760
      %v7970 = vsub.f32 %v7415, %v7969
      %7971 = vmatmul.mubr.f32.gmra.mxu0 %v7970
      %v7972 = vpop.f32.mrf.mxu0
      %v7973 = vadd.f32 %v7797, %v7972
      %v7974 = vpop.f32.mrf.mxu0
      %7975 = vmatprep.mubr.f32.mxu0 0.0
      %v7976 = vand.u32 %v7418, 4294901760
      %v7977 = vsub.f32 %v7418, %v7976
      %7978 = vmatmul.mubr.f32.gmra.mxu0 %v7977
      %v7979 = vpop.f32.mrf.mxu0
      %v7980 = vadd.f32 %v7803, %v7979
      %v7981 = vpop.f32.mrf.mxu0
      %7982 = vmatprep.mubr.f32.mxu0 0.0
      %v7983 = vand.u32 %v7421, 4294901760
      %v7984 = vsub.f32 %v7421, %v7983
      %7985 = vmatmul.mubr.f32.gmra.mxu0 %v7984
      %v7986 = vpop.f32.mrf.mxu0
      %v7987 = vadd.f32 %v7809, %v7986
      %v7988 = vpop.f32.mrf.mxu0
      %7989 = vmatprep.mubr.f32.mxu0 0.0
      %v7990 = vand.u32 %v7424, 4294901760
      %v7991 = vsub.f32 %v7424, %v7990
      %7992 = vmatmul.mubr.f32.gmra.mxu0 %v7991
      %v7993 = vpop.f32.mrf.mxu0
      %v7994 = vadd.f32 %v7815, %v7993
      %v7995 = vpop.f32.mrf.mxu0
      %7996 = vmatprep.mubr.f32.mxu0 0.0
      %v7997 = vand.u32 %v7427, 4294901760
      %v7998 = vsub.f32 %v7427, %v7997
      %7999 = vmatmul.mubr.f32.gmra.mxu0 %v7998
      %v8000 = vpop.f32.mrf.mxu0
      %v8001 = vadd.f32 %v7821, %v8000
      %v8002 = vpop.f32.mrf.mxu0
      %8003 = vmatprep.mubr.f32.mxu0 0.0
      %v8004 = vand.u32 %v7430, 4294901760
      %v8005 = vsub.f32 %v7430, %v8004
      %8006 = vmatmul.mubr.f32.gmra.mxu0 %v8005
      %v8007 = vpop.f32.mrf.mxu0
      %v8008 = vadd.f32 %v7827, %v8007
      %v8009 = vpop.f32.mrf.mxu0
      %8010 = vmatprep.mubr.f32.mxu0 0.0
      %v8011 = vand.u32 %v7433, 4294901760
      %v8012 = vsub.f32 %v7433, %v8011
      %8013 = vmatmul.mubr.f32.gmra.mxu0 %v8012
      %v8014 = vpop.f32.mrf.mxu0
      %v8015 = vadd.f32 %v7833, %v8014
      %v8016 = vpop.f32.mrf.mxu0
      %8017 = vmatprep.mubr.f32.mxu0 0.0
      %v8018 = vand.u32 %v7436, 4294901760
      %v8019 = vsub.f32 %v7436, %v8018
      %8020 = vmatmul.mubr.f32.gmra.mxu0 %v8019
      %v8021 = vpop.f32.mrf.mxu0
      %v8022 = vadd.f32 %v7839, %v8021
      %v8023 = vpop.f32.mrf.mxu0
      %8024 = vmatprep.mubr.f32.mxu0 0.0
      %v8025 = vand.u32 %v7439, 4294901760
      %v8026 = vsub.f32 %v7439, %v8025
      %8027 = vmatmul.mubr.f32.gmra.mxu0 %v8026
      %v8028 = vpop.f32.mrf.mxu0
      %v8029 = vadd.f32 %v7845, %v8028
      %v8030 = vpop.f32.mrf.mxu0
      %8031 = vmatprep.mubr.f32.mxu0 0.0
      %v8032 = vand.u32 %v7442, 4294901760
      %v8033 = vsub.f32 %v7442, %v8032
      %8034 = vmatmul.mubr.f32.gmra.mxu0 %v8033
      %v8035 = vpop.f32.mrf.mxu0
      %v8036 = vadd.f32 %v7851, %v8035
      %v8037 = vpop.f32.mrf.mxu0
      %8038 = vdwg.mxu0
      %8039 = vmatprep.subr.mxu0 0.0
      %8040 = vmatpush1.msra.mxu0 0.0
      %8041 = vmatprep.subr.mxu0 0.0
      %8042 = vmatpush1.msra.mxu0 0.0
      %8043 = vmatprep.subr.mxu0 0.0
      %8044 = vmatpush1.msra.mxu0 0.0
      %8045 = vmatprep.subr.mxu0 0.0
      %8046 = vmatpush1.msra.mxu0 0.0
      %8047 = vmatprep.subr.mxu0 0.0
      %8048 = vmatpush1.msra.mxu0 0.0
      %8049 = vmatprep.subr.mxu0 0.0
      %8050 = vmatpush1.msra.mxu0 0.0
      %8051 = vmatprep.subr.mxu0 0.0
      %8052 = vmatpush1.msra.mxu0 0.0
      %8053 = vmatprep.subr.mxu0 0.0
      %8054 = vmatpush1.msra.mxu0 0.0
      %8055 = vmatprep.subr.mxu0 0.0
      %8056 = vmatpush1.msra.mxu0 0.0
      %8057 = vmatprep.subr.mxu0 0.0
      %8058 = vmatpush1.msra.mxu0 0.0
      %8059 = vmatprep.subr.mxu0 0.0
      %8060 = vmatpush1.msra.mxu0 0.0
      %8061 = vmatprep.subr.mxu0 0.0
      %8062 = vmatpush1.msra.mxu0 0.0
      %8063 = vmatprep.subr.mxu0 0.0
      %v8064 = vand.u32 %v6192, 4294901760
      %8065 = vmatpush1.msra.mxu0 %v8064
      %8066 = vmatprep.subr.mxu0 0.0
      %v8067 = vand.u32 %v6191, 4294901760
      %8068 = vmatpush1.msra.mxu0 %v8067
      %8069 = vmatprep.subr.mxu0 0.0
      %v8070 = vand.u32 %v6190, 4294901760
      %8071 = vmatpush1.msra.mxu0 %v8070
      %8072 = vmatprep.subr.mxu0 0.0
      %v8073 = vand.u32 %v6189, 4294901760
      %8074 = vmatpush1.msra.mxu0 %v8073
      %8075 = vmatprep.subr.mxu0 0.0
      %8076 = vmatpush2.msra.mxu0 0.0
      %8077 = vmatprep.subr.mxu0 0.0
      %8078 = vmatpush2.msra.mxu0 0.0
      %8079 = vmatprep.subr.mxu0 0.0
      %8080 = vmatpush2.msra.mxu0 0.0
      %8081 = vmatprep.subr.mxu0 0.0
      %8082 = vmatpush2.msra.mxu0 0.0
      %8083 = vmatprep.subr.mxu0 0.0
      %8084 = vmatpush2.msra.mxu0 0.0
      %8085 = vmatprep.subr.mxu0 0.0
      %8086 = vmatpush2.msra.mxu0 0.0
      %8087 = vmatprep.subr.mxu0 0.0
      %8088 = vmatpush2.msra.mxu0 0.0
      %8089 = vmatprep.subr.mxu0 0.0
      %8090 = vmatpush2.msra.mxu0 0.0
      %8091 = vmatprep.subr.mxu0 0.0
      %8092 = vmatpush2.msra.mxu0 0.0
      %8093 = vmatprep.subr.mxu0 0.0
      %8094 = vmatpush2.msra.mxu0 0.0
      %8095 = vmatprep.subr.mxu0 0.0
      %8096 = vmatpush2.msra.mxu0 0.0
      %8097 = vmatprep.subr.mxu0 0.0
      %8098 = vmatpush2.msra.mxu0 0.0
      %8099 = vmatprep.subr.mxu0 0.0
      %8100 = vmatpush2.msra.mxu0 0.0
      %8101 = vmatprep.subr.mxu0 0.0
      %8102 = vmatpush2.msra.mxu0 0.0
      %8103 = vmatprep.subr.mxu0 0.0
      %8104 = vmatpush2.msra.mxu0 0.0
      %8105 = vmatprep.subr.mxu0 0.0
      %8106 = vmatpush2.msra.mxu0 0.0
      %8107 = vmatprep.mubr.f32.mxu0 0.0
      %v8108 = vand.u32 %v7397, 4294901760
      %v8109 = vsub.f32 %v7397, %v8108
      %v8110 = vand.u32 %v8109, 4294901760
      %8111 = vmatmul.mubr.f32.gmra.mxu0 %v8110
      %v8112 = vpop.f32.mrf.mxu0
      %v8113 = vadd.f32 %v7931, %v8112
      %v8114 = vpop.f32.mrf.mxu0
      %8115 = vmatprep.mubr.f32.mxu0 0.0
      %v8116 = vand.u32 %v7400, 4294901760
      %v8117 = vsub.f32 %v7400, %v8116
      %v8118 = vand.u32 %v8117, 4294901760
      %8119 = vmatmul.mubr.f32.gmra.mxu0 %v8118
      %v8120 = vpop.f32.mrf.mxu0
      %v8121 = vadd.f32 %v7938, %v8120
      %v8122 = vpop.f32.mrf.mxu0
      %8123 = vmatprep.mubr.f32.mxu0 0.0
      %v8124 = vand.u32 %v7403, 4294901760
      %v8125 = vsub.f32 %v7403, %v8124
      %v8126 = vand.u32 %v8125, 4294901760
      %8127 = vmatmul.mubr.f32.gmra.mxu0 %v8126
      %v8128 = vpop.f32.mrf.mxu0
      %v8129 = vadd.f32 %v7945, %v8128
      %v8130 = vpop.f32.mrf.mxu0
      %8131 = vmatprep.mubr.f32.mxu0 0.0
      %v8132 = vand.u32 %v7406, 4294901760
      %v8133 = vsub.f32 %v7406, %v8132
      %v8134 = vand.u32 %v8133, 4294901760
      %8135 = vmatmul.mubr.f32.gmra.mxu0 %v8134
      %v8136 = vpop.f32.mrf.mxu0
      %v8137 = vadd.f32 %v7952, %v8136
      %v8138 = vpop.f32.mrf.mxu0
      %8139 = vmatprep.mubr.f32.mxu0 0.0
      %v8140 = vand.u32 %v7409, 4294901760
      %v8141 = vsub.f32 %v7409, %v8140
      %v8142 = vand.u32 %v8141, 4294901760
      %8143 = vmatmul.mubr.f32.gmra.mxu0 %v8142
      %v8144 = vpop.f32.mrf.mxu0
      %v8145 = vadd.f32 %v7959, %v8144
      %v8146 = vpop.f32.mrf.mxu0
      %8147 = vmatprep.mubr.f32.mxu0 0.0
      %v8148 = vand.u32 %v7412, 4294901760
      %v8149 = vsub.f32 %v7412, %v8148
      %v8150 = vand.u32 %v8149, 4294901760
      %8151 = vmatmul.mubr.f32.gmra.mxu0 %v8150
      %v8152 = vpop.f32.mrf.mxu0
      %v8153 = vadd.f32 %v7966, %v8152
      %v8154 = vpop.f32.mrf.mxu0
      %8155 = vmatprep.mubr.f32.mxu0 0.0
      %v8156 = vand.u32 %v7415, 4294901760
      %v8157 = vsub.f32 %v7415, %v8156
      %v8158 = vand.u32 %v8157, 4294901760
      %8159 = vmatmul.mubr.f32.gmra.mxu0 %v8158
      %v8160 = vpop.f32.mrf.mxu0
      %v8161 = vadd.f32 %v7973, %v8160
      %v8162 = vpop.f32.mrf.mxu0
      %8163 = vmatprep.mubr.f32.mxu0 0.0
      %v8164 = vand.u32 %v7418, 4294901760
      %v8165 = vsub.f32 %v7418, %v8164
      %v8166 = vand.u32 %v8165, 4294901760
      %8167 = vmatmul.mubr.f32.gmra.mxu0 %v8166
      %v8168 = vpop.f32.mrf.mxu0
      %v8169 = vadd.f32 %v7980, %v8168
      %v8170 = vpop.f32.mrf.mxu0
      %8171 = vmatprep.mubr.f32.mxu0 0.0
      %v8172 = vand.u32 %v7421, 4294901760
      %v8173 = vsub.f32 %v7421, %v8172
      %v8174 = vand.u32 %v8173, 4294901760
      %8175 = vmatmul.mubr.f32.gmra.mxu0 %v8174
      %v8176 = vpop.f32.mrf.mxu0
      %v8177 = vadd.f32 %v7987, %v8176
      %v8178 = vpop.f32.mrf.mxu0
      %8179 = vmatprep.mubr.f32.mxu0 0.0
      %v8180 = vand.u32 %v7424, 4294901760
      %v8181 = vsub.f32 %v7424, %v8180
      %v8182 = vand.u32 %v8181, 4294901760
      %8183 = vmatmul.mubr.f32.gmra.mxu0 %v8182
      %v8184 = vpop.f32.mrf.mxu0
      %v8185 = vadd.f32 %v7994, %v8184
      %v8186 = vpop.f32.mrf.mxu0
      %8187 = vmatprep.mubr.f32.mxu0 0.0
      %v8188 = vand.u32 %v7427, 4294901760
      %v8189 = vsub.f32 %v7427, %v8188
      %v8190 = vand.u32 %v8189, 4294901760
      %8191 = vmatmul.mubr.f32.gmra.mxu0 %v8190
      %v8192 = vpop.f32.mrf.mxu0
      %v8193 = vadd.f32 %v8001, %v8192
      %v8194 = vpop.f32.mrf.mxu0
      %8195 = vmatprep.mubr.f32.mxu0 0.0
      %v8196 = vand.u32 %v7430, 4294901760
      %v8197 = vsub.f32 %v7430, %v8196
      %v8198 = vand.u32 %v8197, 4294901760
      %8199 = vmatmul.mubr.f32.gmra.mxu0 %v8198
      %v8200 = vpop.f32.mrf.mxu0
      %v8201 = vadd.f32 %v8008, %v8200
      %v8202 = vpop.f32.mrf.mxu0
      %8203 = vmatprep.mubr.f32.mxu0 0.0
      %v8204 = vand.u32 %v7433, 4294901760
      %v8205 = vsub.f32 %v7433, %v8204
      %v8206 = vand.u32 %v8205, 4294901760
      %8207 = vmatmul.mubr.f32.gmra.mxu0 %v8206
      %v8208 = vpop.f32.mrf.mxu0
      %v8209 = vadd.f32 %v8015, %v8208
      %v8210 = vpop.f32.mrf.mxu0
      %8211 = vmatprep.mubr.f32.mxu0 0.0
      %v8212 = vand.u32 %v7436, 4294901760
      %v8213 = vsub.f32 %v7436, %v8212
      %v8214 = vand.u32 %v8213, 4294901760
      %8215 = vmatmul.mubr.f32.gmra.mxu0 %v8214
      %v8216 = vpop.f32.mrf.mxu0
      %v8217 = vadd.f32 %v8022, %v8216
      %v8218 = vpop.f32.mrf.mxu0
      %8219 = vmatprep.mubr.f32.mxu0 0.0
      %v8220 = vand.u32 %v7439, 4294901760
      %v8221 = vsub.f32 %v7439, %v8220
      %v8222 = vand.u32 %v8221, 4294901760
      %8223 = vmatmul.mubr.f32.gmra.mxu0 %v8222
      %v8224 = vpop.f32.mrf.mxu0
      %v8225 = vadd.f32 %v8029, %v8224
      %v8226 = vpop.f32.mrf.mxu0
      %8227 = vmatprep.mubr.f32.mxu0 0.0
      %v8228 = vand.u32 %v7442, 4294901760
      %v8229 = vsub.f32 %v7442, %v8228
      %v8230 = vand.u32 %v8229, 4294901760
      %8231 = vmatmul.mubr.f32.gmra.mxu0 %v8230
      %v8232 = vpop.f32.mrf.mxu0
      %v8233 = vadd.f32 %v8036, %v8232
      %v8234 = vpop.f32.mrf.mxu0
      %8235 = vdwg.mxu0
      %8236 = vmatprep.subr.mxu0 0.0
      %8237 = vmatpush1.msra.mxu0 0.0
      %8238 = vmatprep.subr.mxu0 0.0
      %8239 = vmatpush1.msra.mxu0 0.0
      %8240 = vmatprep.subr.mxu0 0.0
      %8241 = vmatpush1.msra.mxu0 0.0
      %8242 = vmatprep.subr.mxu0 0.0
      %8243 = vmatpush1.msra.mxu0 0.0
      %8244 = vmatprep.subr.mxu0 0.0
      %8245 = vmatpush1.msra.mxu0 0.0
      %8246 = vmatprep.subr.mxu0 0.0
      %8247 = vmatpush1.msra.mxu0 0.0
      %8248 = vmatprep.subr.mxu0 0.0
      %8249 = vmatpush1.msra.mxu0 0.0
      %8250 = vmatprep.subr.mxu0 0.0
      %8251 = vmatpush1.msra.mxu0 0.0
      %8252 = vmatprep.subr.mxu0 0.0
      %8253 = vmatpush1.msra.mxu0 0.0
      %8254 = vmatprep.subr.mxu0 0.0
      %8255 = vmatpush1.msra.mxu0 0.0
      %8256 = vmatprep.subr.mxu0 0.0
      %8257 = vmatpush1.msra.mxu0 0.0
      %8258 = vmatprep.subr.mxu0 0.0
      %8259 = vmatpush1.msra.mxu0 0.0
      %8260 = vmatprep.subr.mxu0 0.0
      %v8261 = vand.u32 %v6192, 4294901760
      %v8262 = vsub.f32 %v6192, %v8261
      %v8263 = vand.u32 %v8262, 4294901760
      %8264 = vmatpush1.msra.mxu0 %v8263
      %8265 = vmatprep.subr.mxu0 0.0
      %v8266 = vand.u32 %v6191, 4294901760
      %v8267 = vsub.f32 %v6191, %v8266
      %v8268 = vand.u32 %v8267, 4294901760
      %8269 = vmatpush1.msra.mxu0 %v8268
      %8270 = vmatprep.subr.mxu0 0.0
      %v8271 = vand.u32 %v6190, 4294901760
      %v8272 = vsub.f32 %v6190, %v8271
      %v8273 = vand.u32 %v8272, 4294901760
      %8274 = vmatpush1.msra.mxu0 %v8273
      %8275 = vmatprep.subr.mxu0 0.0
      %v8276 = vand.u32 %v6189, 4294901760
      %v8277 = vsub.f32 %v6189, %v8276
      %v8278 = vand.u32 %v8277, 4294901760
      %8279 = vmatpush1.msra.mxu0 %v8278
      %8280 = vmatprep.subr.mxu0 0.0
      %8281 = vmatpush2.msra.mxu0 0.0
      %8282 = vmatprep.subr.mxu0 0.0
      %8283 = vmatpush2.msra.mxu0 0.0
      %8284 = vmatprep.subr.mxu0 0.0
      %8285 = vmatpush2.msra.mxu0 0.0
      %8286 = vmatprep.subr.mxu0 0.0
      %8287 = vmatpush2.msra.mxu0 0.0
      %8288 = vmatprep.subr.mxu0 0.0
      %8289 = vmatpush2.msra.mxu0 0.0
      %8290 = vmatprep.subr.mxu0 0.0
      %8291 = vmatpush2.msra.mxu0 0.0
      %8292 = vmatprep.subr.mxu0 0.0
      %8293 = vmatpush2.msra.mxu0 0.0
      %8294 = vmatprep.subr.mxu0 0.0
      %8295 = vmatpush2.msra.mxu0 0.0
      %8296 = vmatprep.subr.mxu0 0.0
      %8297 = vmatpush2.msra.mxu0 0.0
      %8298 = vmatprep.subr.mxu0 0.0
      %8299 = vmatpush2.msra.mxu0 0.0
      %8300 = vmatprep.subr.mxu0 0.0
      %8301 = vmatpush2.msra.mxu0 0.0
      %8302 = vmatprep.subr.mxu0 0.0
      %8303 = vmatpush2.msra.mxu0 0.0
      %8304 = vmatprep.subr.mxu0 0.0
      %8305 = vmatpush2.msra.mxu0 0.0
      %8306 = vmatprep.subr.mxu0 0.0
      %8307 = vmatpush2.msra.mxu0 0.0
      %8308 = vmatprep.subr.mxu0 0.0
      %8309 = vmatpush2.msra.mxu0 0.0
      %8310 = vmatprep.subr.mxu0 0.0
      %8311 = vmatpush2.msra.mxu0 0.0
      %8312 = vmatprep.mubr.f32.mxu0 0.0
      %v8313 = vand.u32 %v7397, 4294901760
      %8314 = vmatmul.mubr.f32.gmra.mxu0 %v8313
      %v8315 = vpop.f32.mrf.mxu0
      %v8316 = vadd.f32 %v8113, %v8315
      %v8317 = vpop.f32.mrf.mxu0
      %8318 = vmatprep.mubr.f32.mxu0 0.0
      %v8319 = vand.u32 %v7400, 4294901760
      %8320 = vmatmul.mubr.f32.gmra.mxu0 %v8319
      %v8321 = vpop.f32.mrf.mxu0
      %v8322 = vadd.f32 %v8121, %v8321
      %v8323 = vpop.f32.mrf.mxu0
      %8324 = vmatprep.mubr.f32.mxu0 0.0
      %v8325 = vand.u32 %v7403, 4294901760
      %8326 = vmatmul.mubr.f32.gmra.mxu0 %v8325
      %v8327 = vpop.f32.mrf.mxu0
      %v8328 = vadd.f32 %v8129, %v8327
      %v8329 = vpop.f32.mrf.mxu0
      %8330 = vmatprep.mubr.f32.mxu0 0.0
      %v8331 = vand.u32 %v7406, 4294901760
      %8332 = vmatmul.mubr.f32.gmra.mxu0 %v8331
      %v8333 = vpop.f32.mrf.mxu0
      %v8334 = vadd.f32 %v8137, %v8333
      %v8335 = vpop.f32.mrf.mxu0
      %8336 = vmatprep.mubr.f32.mxu0 0.0
      %v8337 = vand.u32 %v7409, 4294901760
      %8338 = vmatmul.mubr.f32.gmra.mxu0 %v8337
      %v8339 = vpop.f32.mrf.mxu0
      %v8340 = vadd.f32 %v8145, %v8339
      %v8341 = vpop.f32.mrf.mxu0
      %8342 = vmatprep.mubr.f32.mxu0 0.0
      %v8343 = vand.u32 %v7412, 4294901760
      %8344 = vmatmul.mubr.f32.gmra.mxu0 %v8343
      %v8345 = vpop.f32.mrf.mxu0
      %v8346 = vadd.f32 %v8153, %v8345
      %v8347 = vpop.f32.mrf.mxu0
      %8348 = vmatprep.mubr.f32.mxu0 0.0
      %v8349 = vand.u32 %v7415, 4294901760
      %8350 = vmatmul.mubr.f32.gmra.mxu0 %v8349
      %v8351 = vpop.f32.mrf.mxu0
      %v8352 = vadd.f32 %v8161, %v8351
      %v8353 = vpop.f32.mrf.mxu0
      %8354 = vmatprep.mubr.f32.mxu0 0.0
      %v8355 = vand.u32 %v7418, 4294901760
      %8356 = vmatmul.mubr.f32.gmra.mxu0 %v8355
      %v8357 = vpop.f32.mrf.mxu0
      %v8358 = vadd.f32 %v8169, %v8357
      %v8359 = vpop.f32.mrf.mxu0
      %8360 = vmatprep.mubr.f32.mxu0 0.0
      %v8361 = vand.u32 %v7421, 4294901760
      %8362 = vmatmul.mubr.f32.gmra.mxu0 %v8361
      %v8363 = vpop.f32.mrf.mxu0
      %v8364 = vadd.f32 %v8177, %v8363
      %v8365 = vpop.f32.mrf.mxu0
      %8366 = vmatprep.mubr.f32.mxu0 0.0
      %v8367 = vand.u32 %v7424, 4294901760
      %8368 = vmatmul.mubr.f32.gmra.mxu0 %v8367
      %v8369 = vpop.f32.mrf.mxu0
      %v8370 = vadd.f32 %v8185, %v8369
      %v8371 = vpop.f32.mrf.mxu0
      %8372 = vmatprep.mubr.f32.mxu0 0.0
      %v8373 = vand.u32 %v7427, 4294901760
      %8374 = vmatmul.mubr.f32.gmra.mxu0 %v8373
      %v8375 = vpop.f32.mrf.mxu0
      %v8376 = vadd.f32 %v8193, %v8375
      %v8377 = vpop.f32.mrf.mxu0
      %8378 = vmatprep.mubr.f32.mxu0 0.0
      %v8379 = vand.u32 %v7430, 4294901760
      %8380 = vmatmul.mubr.f32.gmra.mxu0 %v8379
      %v8381 = vpop.f32.mrf.mxu0
      %v8382 = vadd.f32 %v8201, %v8381
      %v8383 = vpop.f32.mrf.mxu0
      %8384 = vmatprep.mubr.f32.mxu0 0.0
      %v8385 = vand.u32 %v7433, 4294901760
      %8386 = vmatmul.mubr.f32.gmra.mxu0 %v8385
      %v8387 = vpop.f32.mrf.mxu0
      %v8388 = vadd.f32 %v8209, %v8387
      %v8389 = vpop.f32.mrf.mxu0
      %8390 = vmatprep.mubr.f32.mxu0 0.0
      %v8391 = vand.u32 %v7436, 4294901760
      %8392 = vmatmul.mubr.f32.gmra.mxu0 %v8391
      %v8393 = vpop.f32.mrf.mxu0
      %v8394 = vadd.f32 %v8217, %v8393
      %v8395 = vpop.f32.mrf.mxu0
      %8396 = vmatprep.mubr.f32.mxu0 0.0
      %v8397 = vand.u32 %v7439, 4294901760
      %8398 = vmatmul.mubr.f32.gmra.mxu0 %v8397
      %v8399 = vpop.f32.mrf.mxu0
      %v8400 = vadd.f32 %v8225, %v8399
      %v8401 = vpop.f32.mrf.mxu0
      %8402 = vmatprep.mubr.f32.mxu0 0.0
      %v8403 = vand.u32 %v7442, 4294901760
      %8404 = vmatmul.mubr.f32.gmra.mxu0 %v8403
      %v8405 = vpop.f32.mrf.mxu0
      %v8406 = vadd.f32 %v8233, %v8405
      %v8407 = vpop.f32.mrf.mxu0
      %8408 = vdwg.mxu0
      %8409 = vmatprep.subr.mxu0 0.0
      %8410 = vmatpush1.msra.mxu0 0.0
      %8411 = vmatprep.subr.mxu0 0.0
      %8412 = vmatpush1.msra.mxu0 0.0
      %8413 = vmatprep.subr.mxu0 0.0
      %8414 = vmatpush1.msra.mxu0 0.0
      %8415 = vmatprep.subr.mxu0 0.0
      %8416 = vmatpush1.msra.mxu0 0.0
      %8417 = vmatprep.subr.mxu0 0.0
      %8418 = vmatpush1.msra.mxu0 0.0
      %8419 = vmatprep.subr.mxu0 0.0
      %8420 = vmatpush1.msra.mxu0 0.0
      %8421 = vmatprep.subr.mxu0 0.0
      %8422 = vmatpush1.msra.mxu0 0.0
      %8423 = vmatprep.subr.mxu0 0.0
      %8424 = vmatpush1.msra.mxu0 0.0
      %8425 = vmatprep.subr.mxu0 0.0
      %8426 = vmatpush1.msra.mxu0 0.0
      %8427 = vmatprep.subr.mxu0 0.0
      %8428 = vmatpush1.msra.mxu0 0.0
      %8429 = vmatprep.subr.mxu0 0.0
      %8430 = vmatpush1.msra.mxu0 0.0
      %8431 = vmatprep.subr.mxu0 0.0
      %8432 = vmatpush1.msra.mxu0 0.0
      %8433 = vmatprep.subr.mxu0 0.0
      %v8434 = vand.u32 %v6192, 4294901760
      %8435 = vmatpush1.msra.mxu0 %v8434
      %8436 = vmatprep.subr.mxu0 0.0
      %v8437 = vand.u32 %v6191, 4294901760
      %8438 = vmatpush1.msra.mxu0 %v8437
      %8439 = vmatprep.subr.mxu0 0.0
      %v8440 = vand.u32 %v6190, 4294901760
      %8441 = vmatpush1.msra.mxu0 %v8440
      %8442 = vmatprep.subr.mxu0 0.0
      %v8443 = vand.u32 %v6189, 4294901760
      %8444 = vmatpush1.msra.mxu0 %v8443
      %8445 = vmatprep.subr.mxu0 0.0
      %8446 = vmatpush2.msra.mxu0 0.0
      %8447 = vmatprep.subr.mxu0 0.0
      %8448 = vmatpush2.msra.mxu0 0.0
      %8449 = vmatprep.subr.mxu0 0.0
      %8450 = vmatpush2.msra.mxu0 0.0
      %8451 = vmatprep.subr.mxu0 0.0
      %8452 = vmatpush2.msra.mxu0 0.0
      %8453 = vmatprep.subr.mxu0 0.0
      %8454 = vmatpush2.msra.mxu0 0.0
      %8455 = vmatprep.subr.mxu0 0.0
      %8456 = vmatpush2.msra.mxu0 0.0
      %8457 = vmatprep.subr.mxu0 0.0
      %8458 = vmatpush2.msra.mxu0 0.0
      %8459 = vmatprep.subr.mxu0 0.0
      %8460 = vmatpush2.msra.mxu0 0.0
      %8461 = vmatprep.subr.mxu0 0.0
      %8462 = vmatpush2.msra.mxu0 0.0
      %8463 = vmatprep.subr.mxu0 0.0
      %8464 = vmatpush2.msra.mxu0 0.0
      %8465 = vmatprep.subr.mxu0 0.0
      %8466 = vmatpush2.msra.mxu0 0.0
      %8467 = vmatprep.subr.mxu0 0.0
      %8468 = vmatpush2.msra.mxu0 0.0
      %8469 = vmatprep.subr.mxu0 0.0
      %8470 = vmatpush2.msra.mxu0 0.0
      %8471 = vmatprep.subr.mxu0 0.0
      %8472 = vmatpush2.msra.mxu0 0.0
      %8473 = vmatprep.subr.mxu0 0.0
      %8474 = vmatpush2.msra.mxu0 0.0
      %8475 = vmatprep.subr.mxu0 0.0
      %8476 = vmatpush2.msra.mxu0 0.0
      %8477 = vmatprep.mubr.f32.mxu0 0.0
      %v8478 = vand.u32 %v7397, 4294901760
      %8479 = vmatmul.mubr.f32.gmra.mxu0 %v8478
      %v8480 = vpop.f32.mrf.mxu0
      %v8481 = vadd.f32 %v8316, %v8480
      %v8482 = vpop.f32.mrf.mxu0
      %8483 = vmatprep.mubr.f32.mxu0 0.0
      %v8484 = vand.u32 %v7400, 4294901760
      %8485 = vmatmul.mubr.f32.gmra.mxu0 %v8484
      %v8486 = vpop.f32.mrf.mxu0
      %v8487 = vadd.f32 %v8322, %v8486
      %v8488 = vpop.f32.mrf.mxu0
      %8489 = vmatprep.mubr.f32.mxu0 0.0
      %v8490 = vand.u32 %v7403, 4294901760
      %8491 = vmatmul.mubr.f32.gmra.mxu0 %v8490
      %v8492 = vpop.f32.mrf.mxu0
      %v8493 = vadd.f32 %v8328, %v8492
      %v8494 = vpop.f32.mrf.mxu0
      %8495 = vmatprep.mubr.f32.mxu0 0.0
      %v8496 = vand.u32 %v7406, 4294901760
      %8497 = vmatmul.mubr.f32.gmra.mxu0 %v8496
      %v8498 = vpop.f32.mrf.mxu0
      %v8499 = vadd.f32 %v8334, %v8498
      %v8500 = vpop.f32.mrf.mxu0
      %8501 = vmatprep.mubr.f32.mxu0 0.0
      %v8502 = vand.u32 %v7409, 4294901760
      %8503 = vmatmul.mubr.f32.gmra.mxu0 %v8502
      %v8504 = vpop.f32.mrf.mxu0
      %v8505 = vadd.f32 %v8340, %v8504
      %v8506 = vpop.f32.mrf.mxu0
      %8507 = vmatprep.mubr.f32.mxu0 0.0
      %v8508 = vand.u32 %v7412, 4294901760
      %8509 = vmatmul.mubr.f32.gmra.mxu0 %v8508
      %v8510 = vpop.f32.mrf.mxu0
      %v8511 = vadd.f32 %v8346, %v8510
      %v8512 = vpop.f32.mrf.mxu0
      %8513 = vmatprep.mubr.f32.mxu0 0.0
      %v8514 = vand.u32 %v7415, 4294901760
      %8515 = vmatmul.mubr.f32.gmra.mxu0 %v8514
      %v8516 = vpop.f32.mrf.mxu0
      %v8517 = vadd.f32 %v8352, %v8516
      %v8518 = vpop.f32.mrf.mxu0
      %8519 = vmatprep.mubr.f32.mxu0 0.0
      %v8520 = vand.u32 %v7418, 4294901760
      %8521 = vmatmul.mubr.f32.gmra.mxu0 %v8520
      %v8522 = vpop.f32.mrf.mxu0
      %v8523 = vadd.f32 %v8358, %v8522
      %v8524 = vpop.f32.mrf.mxu0
      %8525 = vmatprep.mubr.f32.mxu0 0.0
      %v8526 = vand.u32 %v7421, 4294901760
      %8527 = vmatmul.mubr.f32.gmra.mxu0 %v8526
      %v8528 = vpop.f32.mrf.mxu0
      %v8529 = vadd.f32 %v8364, %v8528
      %v8530 = vpop.f32.mrf.mxu0
      %8531 = vmatprep.mubr.f32.mxu0 0.0
      %v8532 = vand.u32 %v7424, 4294901760
      %8533 = vmatmul.mubr.f32.gmra.mxu0 %v8532
      %v8534 = vpop.f32.mrf.mxu0
      %v8535 = vadd.f32 %v8370, %v8534
      %v8536 = vpop.f32.mrf.mxu0
      %8537 = vmatprep.mubr.f32.mxu0 0.0
      %v8538 = vand.u32 %v7427, 4294901760
      %8539 = vmatmul.mubr.f32.gmra.mxu0 %v8538
      %v8540 = vpop.f32.mrf.mxu0
      %v8541 = vadd.f32 %v8376, %v8540
      %v8542 = vpop.f32.mrf.mxu0
      %8543 = vmatprep.mubr.f32.mxu0 0.0
      %v8544 = vand.u32 %v7430, 4294901760
      %8545 = vmatmul.mubr.f32.gmra.mxu0 %v8544
      %v8546 = vpop.f32.mrf.mxu0
      %v8547 = vadd.f32 %v8382, %v8546
      %v8548 = vpop.f32.mrf.mxu0
      %8549 = vmatprep.mubr.f32.mxu0 0.0
      %v8550 = vand.u32 %v7433, 4294901760
      %8551 = vmatmul.mubr.f32.gmra.mxu0 %v8550
      %v8552 = vpop.f32.mrf.mxu0
      %v8553 = vadd.f32 %v8388, %v8552
      %v8554 = vpop.f32.mrf.mxu0
      %8555 = vmatprep.mubr.f32.mxu0 0.0
      %v8556 = vand.u32 %v7436, 4294901760
      %8557 = vmatmul.mubr.f32.gmra.mxu0 %v8556
      %v8558 = vpop.f32.mrf.mxu0
      %v8559 = vadd.f32 %v8394, %v8558
      %v8560 = vpop.f32.mrf.mxu0
      %8561 = vmatprep.mubr.f32.mxu0 0.0
      %v8562 = vand.u32 %v7439, 4294901760
      %8563 = vmatmul.mubr.f32.gmra.mxu0 %v8562
      %v8564 = vpop.f32.mrf.mxu0
      %v8565 = vadd.f32 %v8400, %v8564
      %v8566 = vpop.f32.mrf.mxu0
      %8567 = vmatprep.mubr.f32.mxu0 0.0
      %v8568 = vand.u32 %v7442, 4294901760
      %8569 = vmatmul.mubr.f32.gmra.mxu0 %v8568
      %v8570 = vpop.f32.mrf.mxu0
      %v8571 = vadd.f32 %v8406, %v8570
      %v8572 = vpop.f32.mrf.mxu0
      %8573 = vdwg.mxu0
      %v8574 = vadd.f32 %v8481, %v6168
      %v8575 = vadd.f32 %v8487, %v6169
      %v8576 = vadd.f32 %v8493, %v6170
      %v8577 = vadd.f32 %v8499, %v6171
      %v8578 = vadd.f32 %v8505, %v6172
      %v8579 = vadd.f32 %v8511, %v6173
      %v8580 = vadd.f32 %v8517, %v6174
      %v8581 = vadd.f32 %v8523, %v6175
      %v8582 = vadd.f32 %v8529, %v6176
      %v8583 = vadd.f32 %v8535, %v6177
      %v8584 = vadd.f32 %v8541, %v6178
      %v8585 = vadd.f32 %v8547, %v6179
      %v8586 = vadd.f32 %v8553, %v6180
      %v8587 = vadd.f32 %v8559, %v6181
      %v8588 = vadd.f32 %v8565, %v6182
      %v8589 = vadd.f32 %v8571, %v6183
      %v8590 = vmax.f32 %v8574, 0.0
      %v8591 = vmax.f32 %v8575, 0.0
      %v8592 = vmax.f32 %v8576, 0.0
      %v8593 = vmax.f32 %v8577, 0.0
      %v8594 = vmax.f32 %v8578, 0.0
      %v8595 = vmax.f32 %v8579, 0.0
      %v8596 = vmax.f32 %v8580, 0.0
      %v8597 = vmax.f32 %v8581, 0.0
      %v8598 = vmax.f32 %v8582, 0.0
      %v8599 = vmax.f32 %v8583, 0.0
      %v8600 = vmax.f32 %v8584, 0.0
      %v8601 = vmax.f32 %v8585, 0.0
      %v8602 = vmax.f32 %v8586, 0.0
      %v8603 = vmax.f32 %v8587, 0.0
      %v8604 = vmax.f32 %v8588, 0.0
      %v8605 = vmax.f32 %v8589, 0.0
      %v8606 = vld [vmem:[%s1 + $0x108] sm:$0xff]
      %v8607 = vld [vmem:[%s1 + $0x110] sm:$0xff]
      %v8608 = vld [vmem:[%s1 + $0x118] sm:$0xff]
      %v8609 = vld [vmem:[%s1 + $0x120] sm:$0xff]
      %v8610 = vld [vmem:[%s1 + $0x128] sm:$0x1]
      %v8611 = vlaneseq
      %v8612 = vshrl.u32 %v8611, 7
      %v8613 = vsub.s32 0, %v8612
      %v8614 = vrot.slane %v8610, %v8613
      %v8616 = vsel %vm1353, %v8590, 0
      %v8619 = vsel %vm1353, %v8591, 0
      %v8622 = vsel %vm1353, %v8592, 0
      %v8625 = vsel %vm1353, %v8593, 0
      %v8628 = vsel %vm1353, %v8594, 0
      %v8631 = vsel %vm1353, %v8595, 0
      %v8634 = vsel %vm1353, %v8596, 0
      %v8637 = vsel %vm1353, %v8597, 0
      %v8640 = vsel %vm1353, %v8598, 0
      %v8643 = vsel %vm1353, %v8599, 0
      %v8646 = vsel %vm1353, %v8600, 0
      %v8649 = vsel %vm1353, %v8601, 0
      %v8652 = vsel %vm1353, %v8602, 0
      %v8655 = vsel %vm1353, %v8603, 0
      %v8658 = vsel %vm1353, %v8604, 0
      %v8661 = vsel %vm1353, %v8605, 0
      %8663 = vmatprep.subr.mxu0 0.0
      %8664 = vmatpush1.msra.mxu0 0.0
      %8665 = vmatprep.subr.mxu0 0.0
      %8666 = vmatpush1.msra.mxu0 0.0
      %8667 = vmatprep.subr.mxu0 0.0
      %8668 = vmatpush1.msra.mxu0 0.0
      %8669 = vmatprep.subr.mxu0 0.0
      %8670 = vmatpush1.msra.mxu0 0.0
      %8671 = vmatprep.subr.mxu0 0.0
      %8672 = vmatpush1.msra.mxu0 0.0
      %8673 = vmatprep.subr.mxu0 0.0
      %8674 = vmatpush1.msra.mxu0 0.0
      %8675 = vmatprep.subr.mxu0 0.0
      %8676 = vmatpush1.msra.mxu0 0.0
      %8677 = vmatprep.subr.mxu0 0.0
      %8678 = vmatpush1.msra.mxu0 0.0
      %8679 = vmatprep.subr.mxu0 0.0
      %8680 = vmatpush1.msra.mxu0 0.0
      %8681 = vmatprep.subr.mxu0 0.0
      %8682 = vmatpush1.msra.mxu0 0.0
      %8683 = vmatprep.subr.mxu0 0.0
      %8684 = vmatpush1.msra.mxu0 0.0
      %8685 = vmatprep.subr.mxu0 0.0
      %8686 = vmatpush1.msra.mxu0 0.0
      %8687 = vmatprep.subr.mxu0 0.0
      %v8688 = vand.u32 %v8609, 4294901760
      %8689 = vmatpush1.msra.mxu0 %v8688
      %8690 = vmatprep.subr.mxu0 0.0
      %v8691 = vand.u32 %v8608, 4294901760
      %8692 = vmatpush1.msra.mxu0 %v8691
      %8693 = vmatprep.subr.mxu0 0.0
      %v8694 = vand.u32 %v8607, 4294901760
      %8695 = vmatpush1.msra.mxu0 %v8694
      %8696 = vmatprep.subr.mxu0 0.0
      %v8697 = vand.u32 %v8606, 4294901760
      %8698 = vmatpush1.msra.mxu0 %v8697
      %8699 = vmatprep.subr.mxu0 0.0
      %8700 = vmatpush2.msra.mxu0 0.0
      %8701 = vmatprep.subr.mxu0 0.0
      %8702 = vmatpush2.msra.mxu0 0.0
      %8703 = vmatprep.subr.mxu0 0.0
      %8704 = vmatpush2.msra.mxu0 0.0
      %8705 = vmatprep.subr.mxu0 0.0
      %8706 = vmatpush2.msra.mxu0 0.0
      %8707 = vmatprep.subr.mxu0 0.0
      %8708 = vmatpush2.msra.mxu0 0.0
      %8709 = vmatprep.subr.mxu0 0.0
      %8710 = vmatpush2.msra.mxu0 0.0
      %8711 = vmatprep.subr.mxu0 0.0
      %8712 = vmatpush2.msra.mxu0 0.0
      %8713 = vmatprep.subr.mxu0 0.0
      %8714 = vmatpush2.msra.mxu0 0.0
      %8715 = vmatprep.subr.mxu0 0.0
      %8716 = vmatpush2.msra.mxu0 0.0
      %8717 = vmatprep.subr.mxu0 0.0
      %8718 = vmatpush2.msra.mxu0 0.0
      %8719 = vmatprep.subr.mxu0 0.0
      %8720 = vmatpush2.msra.mxu0 0.0
      %8721 = vmatprep.subr.mxu0 0.0
      %8722 = vmatpush2.msra.mxu0 0.0
      %8723 = vmatprep.subr.mxu0 0.0
      %8724 = vmatpush2.msra.mxu0 0.0
      %8725 = vmatprep.subr.mxu0 0.0
      %8726 = vmatpush2.msra.mxu0 0.0
      %8727 = vmatprep.subr.mxu0 0.0
      %8728 = vmatpush2.msra.mxu0 0.0
      %8729 = vmatprep.subr.mxu0 0.0
      %8730 = vmatpush2.msra.mxu0 0.0
      %8731 = vmatprep.mubr.f32.mxu0 0.0
      %v8732 = vand.u32 %v8616, 4294901760
      %v8733 = vsub.f32 %v8616, %v8732
      %v8734 = vand.u32 %v8733, 4294901760
      %v8735 = vsub.f32 %v8733, %v8734
      %v8736 = vand.u32 %v8735, 4294901760
      %8737 = vmatmul.mubr.f32.gmra.mxu0 %v8736
      %v8738 = vpop.f32.mrf.mxu0
      %v8739 = vadd.f32 %v8614, %v8738
      %v8740 = vpop.f32.mrf.mxu0
      %8741 = vmatprep.mubr.f32.mxu0 0.0
      %v8742 = vand.u32 %v8619, 4294901760
      %v8743 = vsub.f32 %v8619, %v8742
      %v8744 = vand.u32 %v8743, 4294901760
      %v8745 = vsub.f32 %v8743, %v8744
      %v8746 = vand.u32 %v8745, 4294901760
      %8747 = vmatmul.mubr.f32.gmra.mxu0 %v8746
      %v8748 = vpop.f32.mrf.mxu0
      %v8749 = vadd.f32 %v8614, %v8748
      %v8750 = vpop.f32.mrf.mxu0
      %8751 = vmatprep.mubr.f32.mxu0 0.0
      %v8752 = vand.u32 %v8622, 4294901760
      %v8753 = vsub.f32 %v8622, %v8752
      %v8754 = vand.u32 %v8753, 4294901760
      %v8755 = vsub.f32 %v8753, %v8754
      %v8756 = vand.u32 %v8755, 4294901760
      %8757 = vmatmul.mubr.f32.gmra.mxu0 %v8756
      %v8758 = vpop.f32.mrf.mxu0
      %v8759 = vadd.f32 %v8614, %v8758
      %v8760 = vpop.f32.mrf.mxu0
      %8761 = vmatprep.mubr.f32.mxu0 0.0
      %v8762 = vand.u32 %v8625, 4294901760
      %v8763 = vsub.f32 %v8625, %v8762
      %v8764 = vand.u32 %v8763, 4294901760
      %v8765 = vsub.f32 %v8763, %v8764
      %v8766 = vand.u32 %v8765, 4294901760
      %8767 = vmatmul.mubr.f32.gmra.mxu0 %v8766
      %v8768 = vpop.f32.mrf.mxu0
      %v8769 = vadd.f32 %v8614, %v8768
      %v8770 = vpop.f32.mrf.mxu0
      %8771 = vmatprep.mubr.f32.mxu0 0.0
      %v8772 = vand.u32 %v8628, 4294901760
      %v8773 = vsub.f32 %v8628, %v8772
      %v8774 = vand.u32 %v8773, 4294901760
      %v8775 = vsub.f32 %v8773, %v8774
      %v8776 = vand.u32 %v8775, 4294901760
      %8777 = vmatmul.mubr.f32.gmra.mxu0 %v8776
      %v8778 = vpop.f32.mrf.mxu0
      %v8779 = vadd.f32 %v8614, %v8778
      %v8780 = vpop.f32.mrf.mxu0
      %8781 = vmatprep.mubr.f32.mxu0 0.0
      %v8782 = vand.u32 %v8631, 4294901760
      %v8783 = vsub.f32 %v8631, %v8782
      %v8784 = vand.u32 %v8783, 4294901760
      %v8785 = vsub.f32 %v8783, %v8784
      %v8786 = vand.u32 %v8785, 4294901760
      %8787 = vmatmul.mubr.f32.gmra.mxu0 %v8786
      %v8788 = vpop.f32.mrf.mxu0
      %v8789 = vadd.f32 %v8614, %v8788
      %v8790 = vpop.f32.mrf.mxu0
      %8791 = vmatprep.mubr.f32.mxu0 0.0
      %v8792 = vand.u32 %v8634, 4294901760
      %v8793 = vsub.f32 %v8634, %v8792
      %v8794 = vand.u32 %v8793, 4294901760
      %v8795 = vsub.f32 %v8793, %v8794
      %v8796 = vand.u32 %v8795, 4294901760
      %8797 = vmatmul.mubr.f32.gmra.mxu0 %v8796
      %v8798 = vpop.f32.mrf.mxu0
      %v8799 = vadd.f32 %v8614, %v8798
      %v8800 = vpop.f32.mrf.mxu0
      %8801 = vmatprep.mubr.f32.mxu0 0.0
      %v8802 = vand.u32 %v8637, 4294901760
      %v8803 = vsub.f32 %v8637, %v8802
      %v8804 = vand.u32 %v8803, 4294901760
      %v8805 = vsub.f32 %v8803, %v8804
      %v8806 = vand.u32 %v8805, 4294901760
      %8807 = vmatmul.mubr.f32.gmra.mxu0 %v8806
      %v8808 = vpop.f32.mrf.mxu0
      %v8809 = vadd.f32 %v8614, %v8808
      %v8810 = vpop.f32.mrf.mxu0
      %8811 = vmatprep.mubr.f32.mxu0 0.0
      %v8812 = vand.u32 %v8640, 4294901760
      %v8813 = vsub.f32 %v8640, %v8812
      %v8814 = vand.u32 %v8813, 4294901760
      %v8815 = vsub.f32 %v8813, %v8814
      %v8816 = vand.u32 %v8815, 4294901760
      %8817 = vmatmul.mubr.f32.gmra.mxu0 %v8816
      %v8818 = vpop.f32.mrf.mxu0
      %v8819 = vadd.f32 %v8614, %v8818
      %v8820 = vpop.f32.mrf.mxu0
      %8821 = vmatprep.mubr.f32.mxu0 0.0
      %v8822 = vand.u32 %v8643, 4294901760
      %v8823 = vsub.f32 %v8643, %v8822
      %v8824 = vand.u32 %v8823, 4294901760
      %v8825 = vsub.f32 %v8823, %v8824
      %v8826 = vand.u32 %v8825, 4294901760
      %8827 = vmatmul.mubr.f32.gmra.mxu0 %v8826
      %v8828 = vpop.f32.mrf.mxu0
      %v8829 = vadd.f32 %v8614, %v8828
      %v8830 = vpop.f32.mrf.mxu0
      %8831 = vmatprep.mubr.f32.mxu0 0.0
      %v8832 = vand.u32 %v8646, 4294901760
      %v8833 = vsub.f32 %v8646, %v8832
      %v8834 = vand.u32 %v8833, 4294901760
      %v8835 = vsub.f32 %v8833, %v8834
      %v8836 = vand.u32 %v8835, 4294901760
      %8837 = vmatmul.mubr.f32.gmra.mxu0 %v8836
      %v8838 = vpop.f32.mrf.mxu0
      %v8839 = vadd.f32 %v8614, %v8838
      %v8840 = vpop.f32.mrf.mxu0
      %8841 = vmatprep.mubr.f32.mxu0 0.0
      %v8842 = vand.u32 %v8649, 4294901760
      %v8843 = vsub.f32 %v8649, %v8842
      %v8844 = vand.u32 %v8843, 4294901760
      %v8845 = vsub.f32 %v8843, %v8844
      %v8846 = vand.u32 %v8845, 4294901760
      %8847 = vmatmul.mubr.f32.gmra.mxu0 %v8846
      %v8848 = vpop.f32.mrf.mxu0
      %v8849 = vadd.f32 %v8614, %v8848
      %v8850 = vpop.f32.mrf.mxu0
      %8851 = vmatprep.mubr.f32.mxu0 0.0
      %v8852 = vand.u32 %v8652, 4294901760
      %v8853 = vsub.f32 %v8652, %v8852
      %v8854 = vand.u32 %v8853, 4294901760
      %v8855 = vsub.f32 %v8853, %v8854
      %v8856 = vand.u32 %v8855, 4294901760
      %8857 = vmatmul.mubr.f32.gmra.mxu0 %v8856
      %v8858 = vpop.f32.mrf.mxu0
      %v8859 = vadd.f32 %v8614, %v8858
      %v8860 = vpop.f32.mrf.mxu0
      %8861 = vmatprep.mubr.f32.mxu0 0.0
      %v8862 = vand.u32 %v8655, 4294901760
      %v8863 = vsub.f32 %v8655, %v8862
      %v8864 = vand.u32 %v8863, 4294901760
      %v8865 = vsub.f32 %v8863, %v8864
      %v8866 = vand.u32 %v8865, 4294901760
      %8867 = vmatmul.mubr.f32.gmra.mxu0 %v8866
      %v8868 = vpop.f32.mrf.mxu0
      %v8869 = vadd.f32 %v8614, %v8868
      %v8870 = vpop.f32.mrf.mxu0
      %8871 = vmatprep.mubr.f32.mxu0 0.0
      %v8872 = vand.u32 %v8658, 4294901760
      %v8873 = vsub.f32 %v8658, %v8872
      %v8874 = vand.u32 %v8873, 4294901760
      %v8875 = vsub.f32 %v8873, %v8874
      %v8876 = vand.u32 %v8875, 4294901760
      %8877 = vmatmul.mubr.f32.gmra.mxu0 %v8876
      %v8878 = vpop.f32.mrf.mxu0
      %v8879 = vadd.f32 %v8614, %v8878
      %v8880 = vpop.f32.mrf.mxu0
      %8881 = vmatprep.mubr.f32.mxu0 0.0
      %v8882 = vand.u32 %v8661, 4294901760
      %v8883 = vsub.f32 %v8661, %v8882
      %v8884 = vand.u32 %v8883, 4294901760
      %v8885 = vsub.f32 %v8883, %v8884
      %v8886 = vand.u32 %v8885, 4294901760
      %8887 = vmatmul.mubr.f32.gmra.mxu0 %v8886
      %v8888 = vpop.f32.mrf.mxu0
      %v8889 = vadd.f32 %v8614, %v8888
      %v8890 = vpop.f32.mrf.mxu0
      %8891 = vdwg.mxu0
      %8892 = vmatprep.subr.mxu0 0.0
      %8893 = vmatpush1.msra.mxu0 0.0
      %8894 = vmatprep.subr.mxu0 0.0
      %8895 = vmatpush1.msra.mxu0 0.0
      %8896 = vmatprep.subr.mxu0 0.0
      %8897 = vmatpush1.msra.mxu0 0.0
      %8898 = vmatprep.subr.mxu0 0.0
      %8899 = vmatpush1.msra.mxu0 0.0
      %8900 = vmatprep.subr.mxu0 0.0
      %8901 = vmatpush1.msra.mxu0 0.0
      %8902 = vmatprep.subr.mxu0 0.0
      %8903 = vmatpush1.msra.mxu0 0.0
      %8904 = vmatprep.subr.mxu0 0.0
      %8905 = vmatpush1.msra.mxu0 0.0
      %8906 = vmatprep.subr.mxu0 0.0
      %8907 = vmatpush1.msra.mxu0 0.0
      %8908 = vmatprep.subr.mxu0 0.0
      %8909 = vmatpush1.msra.mxu0 0.0
      %8910 = vmatprep.subr.mxu0 0.0
      %8911 = vmatpush1.msra.mxu0 0.0
      %8912 = vmatprep.subr.mxu0 0.0
      %8913 = vmatpush1.msra.mxu0 0.0
      %8914 = vmatprep.subr.mxu0 0.0
      %8915 = vmatpush1.msra.mxu0 0.0
      %8916 = vmatprep.subr.mxu0 0.0
      %v8917 = vand.u32 %v8609, 4294901760
      %v8918 = vsub.f32 %v8609, %v8917
      %v8919 = vand.u32 %v8918, 4294901760
      %v8920 = vsub.f32 %v8918, %v8919
      %v8921 = vand.u32 %v8920, 4294901760
      %8922 = vmatpush1.msra.mxu0 %v8921
      %8923 = vmatprep.subr.mxu0 0.0
      %v8924 = vand.u32 %v8608, 4294901760
      %v8925 = vsub.f32 %v8608, %v8924
      %v8926 = vand.u32 %v8925, 4294901760
      %v8927 = vsub.f32 %v8925, %v8926
      %v8928 = vand.u32 %v8927, 4294901760
      %8929 = vmatpush1.msra.mxu0 %v8928
      %8930 = vmatprep.subr.mxu0 0.0
      %v8931 = vand.u32 %v8607, 4294901760
      %v8932 = vsub.f32 %v8607, %v8931
      %v8933 = vand.u32 %v8932, 4294901760
      %v8934 = vsub.f32 %v8932, %v8933
      %v8935 = vand.u32 %v8934, 4294901760
      %8936 = vmatpush1.msra.mxu0 %v8935
      %8937 = vmatprep.subr.mxu0 0.0
      %v8938 = vand.u32 %v8606, 4294901760
      %v8939 = vsub.f32 %v8606, %v8938
      %v8940 = vand.u32 %v8939, 4294901760
      %v8941 = vsub.f32 %v8939, %v8940
      %v8942 = vand.u32 %v8941, 4294901760
      %8943 = vmatpush1.msra.mxu0 %v8942
      %8944 = vmatprep.subr.mxu0 0.0
      %8945 = vmatpush2.msra.mxu0 0.0
      %8946 = vmatprep.subr.mxu0 0.0
      %8947 = vmatpush2.msra.mxu0 0.0
      %8948 = vmatprep.subr.mxu0 0.0
      %8949 = vmatpush2.msra.mxu0 0.0
      %8950 = vmatprep.subr.mxu0 0.0
      %8951 = vmatpush2.msra.mxu0 0.0
      %8952 = vmatprep.subr.mxu0 0.0
      %8953 = vmatpush2.msra.mxu0 0.0
      %8954 = vmatprep.subr.mxu0 0.0
      %8955 = vmatpush2.msra.mxu0 0.0
      %8956 = vmatprep.subr.mxu0 0.0
      %8957 = vmatpush2.msra.mxu0 0.0
      %8958 = vmatprep.subr.mxu0 0.0
      %8959 = vmatpush2.msra.mxu0 0.0
      %8960 = vmatprep.subr.mxu0 0.0
      %8961 = vmatpush2.msra.mxu0 0.0
      %8962 = vmatprep.subr.mxu0 0.0
      %8963 = vmatpush2.msra.mxu0 0.0
      %8964 = vmatprep.subr.mxu0 0.0
      %8965 = vmatpush2.msra.mxu0 0.0
      %8966 = vmatprep.subr.mxu0 0.0
      %8967 = vmatpush2.msra.mxu0 0.0
      %8968 = vmatprep.subr.mxu0 0.0
      %8969 = vmatpush2.msra.mxu0 0.0
      %8970 = vmatprep.subr.mxu0 0.0
      %8971 = vmatpush2.msra.mxu0 0.0
      %8972 = vmatprep.subr.mxu0 0.0
      %8973 = vmatpush2.msra.mxu0 0.0
      %8974 = vmatprep.subr.mxu0 0.0
      %8975 = vmatpush2.msra.mxu0 0.0
      %8976 = vmatprep.mubr.f32.mxu0 0.0
      %v8977 = vand.u32 %v8616, 4294901760
      %8978 = vmatmul.mubr.f32.gmra.mxu0 %v8977
      %v8979 = vpop.f32.mrf.mxu0
      %v8980 = vadd.f32 %v8739, %v8979
      %v8981 = vpop.f32.mrf.mxu0
      %8982 = vmatprep.mubr.f32.mxu0 0.0
      %v8983 = vand.u32 %v8619, 4294901760
      %8984 = vmatmul.mubr.f32.gmra.mxu0 %v8983
      %v8985 = vpop.f32.mrf.mxu0
      %v8986 = vadd.f32 %v8749, %v8985
      %v8987 = vpop.f32.mrf.mxu0
      %8988 = vmatprep.mubr.f32.mxu0 0.0
      %v8989 = vand.u32 %v8622, 4294901760
      %8990 = vmatmul.mubr.f32.gmra.mxu0 %v8989
      %v8991 = vpop.f32.mrf.mxu0
      %v8992 = vadd.f32 %v8759, %v8991
      %v8993 = vpop.f32.mrf.mxu0
      %8994 = vmatprep.mubr.f32.mxu0 0.0
      %v8995 = vand.u32 %v8625, 4294901760
      %8996 = vmatmul.mubr.f32.gmra.mxu0 %v8995
      %v8997 = vpop.f32.mrf.mxu0
      %v8998 = vadd.f32 %v8769, %v8997
      %v8999 = vpop.f32.mrf.mxu0
      %9000 = vmatprep.mubr.f32.mxu0 0.0
      %v9001 = vand.u32 %v8628, 4294901760
      %9002 = vmatmul.mubr.f32.gmra.mxu0 %v9001
      %v9003 = vpop.f32.mrf.mxu0
      %v9004 = vadd.f32 %v8779, %v9003
      %v9005 = vpop.f32.mrf.mxu0
      %9006 = vmatprep.mubr.f32.mxu0 0.0
      %v9007 = vand.u32 %v8631, 4294901760
      %9008 = vmatmul.mubr.f32.gmra.mxu0 %v9007
      %v9009 = vpop.f32.mrf.mxu0
      %v9010 = vadd.f32 %v8789, %v9009
      %v9011 = vpop.f32.mrf.mxu0
      %9012 = vmatprep.mubr.f32.mxu0 0.0
      %v9013 = vand.u32 %v8634, 4294901760
      %9014 = vmatmul.mubr.f32.gmra.mxu0 %v9013
      %v9015 = vpop.f32.mrf.mxu0
      %v9016 = vadd.f32 %v8799, %v9015
      %v9017 = vpop.f32.mrf.mxu0
      %9018 = vmatprep.mubr.f32.mxu0 0.0
      %v9019 = vand.u32 %v8637, 4294901760
      %9020 = vmatmul.mubr.f32.gmra.mxu0 %v9019
      %v9021 = vpop.f32.mrf.mxu0
      %v9022 = vadd.f32 %v8809, %v9021
      %v9023 = vpop.f32.mrf.mxu0
      %9024 = vmatprep.mubr.f32.mxu0 0.0
      %v9025 = vand.u32 %v8640, 4294901760
      %9026 = vmatmul.mubr.f32.gmra.mxu0 %v9025
      %v9027 = vpop.f32.mrf.mxu0
      %v9028 = vadd.f32 %v8819, %v9027
      %v9029 = vpop.f32.mrf.mxu0
      %9030 = vmatprep.mubr.f32.mxu0 0.0
      %v9031 = vand.u32 %v8643, 4294901760
      %9032 = vmatmul.mubr.f32.gmra.mxu0 %v9031
      %v9033 = vpop.f32.mrf.mxu0
      %v9034 = vadd.f32 %v8829, %v9033
      %v9035 = vpop.f32.mrf.mxu0
      %9036 = vmatprep.mubr.f32.mxu0 0.0
      %v9037 = vand.u32 %v8646, 4294901760
      %9038 = vmatmul.mubr.f32.gmra.mxu0 %v9037
      %v9039 = vpop.f32.mrf.mxu0
      %v9040 = vadd.f32 %v8839, %v9039
      %v9041 = vpop.f32.mrf.mxu0
      %9042 = vmatprep.mubr.f32.mxu0 0.0
      %v9043 = vand.u32 %v8649, 4294901760
      %9044 = vmatmul.mubr.f32.gmra.mxu0 %v9043
      %v9045 = vpop.f32.mrf.mxu0
      %v9046 = vadd.f32 %v8849, %v9045
      %v9047 = vpop.f32.mrf.mxu0
      %9048 = vmatprep.mubr.f32.mxu0 0.0
      %v9049 = vand.u32 %v8652, 4294901760
      %9050 = vmatmul.mubr.f32.gmra.mxu0 %v9049
      %v9051 = vpop.f32.mrf.mxu0
      %v9052 = vadd.f32 %v8859, %v9051
      %v9053 = vpop.f32.mrf.mxu0
      %9054 = vmatprep.mubr.f32.mxu0 0.0
      %v9055 = vand.u32 %v8655, 4294901760
      %9056 = vmatmul.mubr.f32.gmra.mxu0 %v9055
      %v9057 = vpop.f32.mrf.mxu0
      %v9058 = vadd.f32 %v8869, %v9057
      %v9059 = vpop.f32.mrf.mxu0
      %9060 = vmatprep.mubr.f32.mxu0 0.0
      %v9061 = vand.u32 %v8658, 4294901760
      %9062 = vmatmul.mubr.f32.gmra.mxu0 %v9061
      %v9063 = vpop.f32.mrf.mxu0
      %v9064 = vadd.f32 %v8879, %v9063
      %v9065 = vpop.f32.mrf.mxu0
      %9066 = vmatprep.mubr.f32.mxu0 0.0
      %v9067 = vand.u32 %v8661, 4294901760
      %9068 = vmatmul.mubr.f32.gmra.mxu0 %v9067
      %v9069 = vpop.f32.mrf.mxu0
      %v9070 = vadd.f32 %v8889, %v9069
      %v9071 = vpop.f32.mrf.mxu0
      %9072 = vdwg.mxu0
      %9073 = vmatprep.subr.mxu0 0.0
      %9074 = vmatpush1.msra.mxu0 0.0
      %9075 = vmatprep.subr.mxu0 0.0
      %9076 = vmatpush1.msra.mxu0 0.0
      %9077 = vmatprep.subr.mxu0 0.0
      %9078 = vmatpush1.msra.mxu0 0.0
      %9079 = vmatprep.subr.mxu0 0.0
      %9080 = vmatpush1.msra.mxu0 0.0
      %9081 = vmatprep.subr.mxu0 0.0
      %9082 = vmatpush1.msra.mxu0 0.0
      %9083 = vmatprep.subr.mxu0 0.0
      %9084 = vmatpush1.msra.mxu0 0.0
      %9085 = vmatprep.subr.mxu0 0.0
      %9086 = vmatpush1.msra.mxu0 0.0
      %9087 = vmatprep.subr.mxu0 0.0
      %9088 = vmatpush1.msra.mxu0 0.0
      %9089 = vmatprep.subr.mxu0 0.0
      %9090 = vmatpush1.msra.mxu0 0.0
      %9091 = vmatprep.subr.mxu0 0.0
      %9092 = vmatpush1.msra.mxu0 0.0
      %9093 = vmatprep.subr.mxu0 0.0
      %9094 = vmatpush1.msra.mxu0 0.0
      %9095 = vmatprep.subr.mxu0 0.0
      %9096 = vmatpush1.msra.mxu0 0.0
      %9097 = vmatprep.subr.mxu0 0.0
      %v9098 = vand.u32 %v8609, 4294901760
      %v9099 = vsub.f32 %v8609, %v9098
      %9100 = vmatpush1.msra.mxu0 %v9099
      %9101 = vmatprep.subr.mxu0 0.0
      %v9102 = vand.u32 %v8608, 4294901760
      %v9103 = vsub.f32 %v8608, %v9102
      %9104 = vmatpush1.msra.mxu0 %v9103
      %9105 = vmatprep.subr.mxu0 0.0
      %v9106 = vand.u32 %v8607, 4294901760
      %v9107 = vsub.f32 %v8607, %v9106
      %9108 = vmatpush1.msra.mxu0 %v9107
      %9109 = vmatprep.subr.mxu0 0.0
      %v9110 = vand.u32 %v8606, 4294901760
      %v9111 = vsub.f32 %v8606, %v9110
      %9112 = vmatpush1.msra.mxu0 %v9111
      %9113 = vmatprep.subr.mxu0 0.0
      %9114 = vmatpush2.msra.mxu0 0.0
      %9115 = vmatprep.subr.mxu0 0.0
      %9116 = vmatpush2.msra.mxu0 0.0
      %9117 = vmatprep.subr.mxu0 0.0
      %9118 = vmatpush2.msra.mxu0 0.0
      %9119 = vmatprep.subr.mxu0 0.0
      %9120 = vmatpush2.msra.mxu0 0.0
      %9121 = vmatprep.subr.mxu0 0.0
      %9122 = vmatpush2.msra.mxu0 0.0
      %9123 = vmatprep.subr.mxu0 0.0
      %9124 = vmatpush2.msra.mxu0 0.0
      %9125 = vmatprep.subr.mxu0 0.0
      %9126 = vmatpush2.msra.mxu0 0.0
      %9127 = vmatprep.subr.mxu0 0.0
      %9128 = vmatpush2.msra.mxu0 0.0
      %9129 = vmatprep.subr.mxu0 0.0
      %9130 = vmatpush2.msra.mxu0 0.0
      %9131 = vmatprep.subr.mxu0 0.0
      %9132 = vmatpush2.msra.mxu0 0.0
      %9133 = vmatprep.subr.mxu0 0.0
      %9134 = vmatpush2.msra.mxu0 0.0
      %9135 = vmatprep.subr.mxu0 0.0
      %9136 = vmatpush2.msra.mxu0 0.0
      %9137 = vmatprep.subr.mxu0 0.0
      %9138 = vmatpush2.msra.mxu0 0.0
      %9139 = vmatprep.subr.mxu0 0.0
      %9140 = vmatpush2.msra.mxu0 0.0
      %9141 = vmatprep.subr.mxu0 0.0
      %9142 = vmatpush2.msra.mxu0 0.0
      %9143 = vmatprep.subr.mxu0 0.0
      %9144 = vmatpush2.msra.mxu0 0.0
      %9145 = vmatprep.mubr.f32.mxu0 0.0
      %v9146 = vand.u32 %v8616, 4294901760
      %v9147 = vsub.f32 %v8616, %v9146
      %9148 = vmatmul.mubr.f32.gmra.mxu0 %v9147
      %v9149 = vpop.f32.mrf.mxu0
      %v9150 = vadd.f32 %v8980, %v9149
      %v9151 = vpop.f32.mrf.mxu0
      %9152 = vmatprep.mubr.f32.mxu0 0.0
      %v9153 = vand.u32 %v8619, 4294901760
      %v9154 = vsub.f32 %v8619, %v9153
      %9155 = vmatmul.mubr.f32.gmra.mxu0 %v9154
      %v9156 = vpop.f32.mrf.mxu0
      %v9157 = vadd.f32 %v8986, %v9156
      %v9158 = vpop.f32.mrf.mxu0
      %9159 = vmatprep.mubr.f32.mxu0 0.0
      %v9160 = vand.u32 %v8622, 4294901760
      %v9161 = vsub.f32 %v8622, %v9160
      %9162 = vmatmul.mubr.f32.gmra.mxu0 %v9161
      %v9163 = vpop.f32.mrf.mxu0
      %v9164 = vadd.f32 %v8992, %v9163
      %v9165 = vpop.f32.mrf.mxu0
      %9166 = vmatprep.mubr.f32.mxu0 0.0
      %v9167 = vand.u32 %v8625, 4294901760
      %v9168 = vsub.f32 %v8625, %v9167
      %9169 = vmatmul.mubr.f32.gmra.mxu0 %v9168
      %v9170 = vpop.f32.mrf.mxu0
      %v9171 = vadd.f32 %v8998, %v9170
      %v9172 = vpop.f32.mrf.mxu0
      %9173 = vmatprep.mubr.f32.mxu0 0.0
      %v9174 = vand.u32 %v8628, 4294901760
      %v9175 = vsub.f32 %v8628, %v9174
      %9176 = vmatmul.mubr.f32.gmra.mxu0 %v9175
      %v9177 = vpop.f32.mrf.mxu0
      %v9178 = vadd.f32 %v9004, %v9177
      %v9179 = vpop.f32.mrf.mxu0
      %9180 = vmatprep.mubr.f32.mxu0 0.0
      %v9181 = vand.u32 %v8631, 4294901760
      %v9182 = vsub.f32 %v8631, %v9181
      %9183 = vmatmul.mubr.f32.gmra.mxu0 %v9182
      %v9184 = vpop.f32.mrf.mxu0
      %v9185 = vadd.f32 %v9010, %v9184
      %v9186 = vpop.f32.mrf.mxu0
      %9187 = vmatprep.mubr.f32.mxu0 0.0
      %v9188 = vand.u32 %v8634, 4294901760
      %v9189 = vsub.f32 %v8634, %v9188
      %9190 = vmatmul.mubr.f32.gmra.mxu0 %v9189
      %v9191 = vpop.f32.mrf.mxu0
      %v9192 = vadd.f32 %v9016, %v9191
      %v9193 = vpop.f32.mrf.mxu0
      %9194 = vmatprep.mubr.f32.mxu0 0.0
      %v9195 = vand.u32 %v8637, 4294901760
      %v9196 = vsub.f32 %v8637, %v9195
      %9197 = vmatmul.mubr.f32.gmra.mxu0 %v9196
      %v9198 = vpop.f32.mrf.mxu0
      %v9199 = vadd.f32 %v9022, %v9198
      %v9200 = vpop.f32.mrf.mxu0
      %9201 = vmatprep.mubr.f32.mxu0 0.0
      %v9202 = vand.u32 %v8640, 4294901760
      %v9203 = vsub.f32 %v8640, %v9202
      %9204 = vmatmul.mubr.f32.gmra.mxu0 %v9203
      %v9205 = vpop.f32.mrf.mxu0
      %v9206 = vadd.f32 %v9028, %v9205
      %v9207 = vpop.f32.mrf.mxu0
      %9208 = vmatprep.mubr.f32.mxu0 0.0
      %v9209 = vand.u32 %v8643, 4294901760
      %v9210 = vsub.f32 %v8643, %v9209
      %9211 = vmatmul.mubr.f32.gmra.mxu0 %v9210
      %v9212 = vpop.f32.mrf.mxu0
      %v9213 = vadd.f32 %v9034, %v9212
      %v9214 = vpop.f32.mrf.mxu0
      %9215 = vmatprep.mubr.f32.mxu0 0.0
      %v9216 = vand.u32 %v8646, 4294901760
      %v9217 = vsub.f32 %v8646, %v9216
      %9218 = vmatmul.mubr.f32.gmra.mxu0 %v9217
      %v9219 = vpop.f32.mrf.mxu0
      %v9220 = vadd.f32 %v9040, %v9219
      %v9221 = vpop.f32.mrf.mxu0
      %9222 = vmatprep.mubr.f32.mxu0 0.0
      %v9223 = vand.u32 %v8649, 4294901760
      %v9224 = vsub.f32 %v8649, %v9223
      %9225 = vmatmul.mubr.f32.gmra.mxu0 %v9224
      %v9226 = vpop.f32.mrf.mxu0
      %v9227 = vadd.f32 %v9046, %v9226
      %v9228 = vpop.f32.mrf.mxu0
      %9229 = vmatprep.mubr.f32.mxu0 0.0
      %v9230 = vand.u32 %v8652, 4294901760
      %v9231 = vsub.f32 %v8652, %v9230
      %9232 = vmatmul.mubr.f32.gmra.mxu0 %v9231
      %v9233 = vpop.f32.mrf.mxu0
      %v9234 = vadd.f32 %v9052, %v9233
      %v9235 = vpop.f32.mrf.mxu0
      %9236 = vmatprep.mubr.f32.mxu0 0.0
      %v9237 = vand.u32 %v8655, 4294901760
      %v9238 = vsub.f32 %v8655, %v9237
      %9239 = vmatmul.mubr.f32.gmra.mxu0 %v9238
      %v9240 = vpop.f32.mrf.mxu0
      %v9241 = vadd.f32 %v9058, %v9240
      %v9242 = vpop.f32.mrf.mxu0
      %9243 = vmatprep.mubr.f32.mxu0 0.0
      %v9244 = vand.u32 %v8658, 4294901760
      %v9245 = vsub.f32 %v8658, %v9244
      %9246 = vmatmul.mubr.f32.gmra.mxu0 %v9245
      %v9247 = vpop.f32.mrf.mxu0
      %v9248 = vadd.f32 %v9064, %v9247
      %v9249 = vpop.f32.mrf.mxu0
      %9250 = vmatprep.mubr.f32.mxu0 0.0
      %v9251 = vand.u32 %v8661, 4294901760
      %v9252 = vsub.f32 %v8661, %v9251
      %9253 = vmatmul.mubr.f32.gmra.mxu0 %v9252
      %v9254 = vpop.f32.mrf.mxu0
      %v9255 = vadd.f32 %v9070, %v9254
      %v9256 = vpop.f32.mrf.mxu0
      %9257 = vdwg.mxu0
      %9258 = vmatprep.subr.mxu0 0.0
      %9259 = vmatpush1.msra.mxu0 0.0
      %9260 = vmatprep.subr.mxu0 0.0
      %9261 = vmatpush1.msra.mxu0 0.0
      %9262 = vmatprep.subr.mxu0 0.0
      %9263 = vmatpush1.msra.mxu0 0.0
      %9264 = vmatprep.subr.mxu0 0.0
      %9265 = vmatpush1.msra.mxu0 0.0
      %9266 = vmatprep.subr.mxu0 0.0
      %9267 = vmatpush1.msra.mxu0 0.0
      %9268 = vmatprep.subr.mxu0 0.0
      %9269 = vmatpush1.msra.mxu0 0.0
      %9270 = vmatprep.subr.mxu0 0.0
      %9271 = vmatpush1.msra.mxu0 0.0
      %9272 = vmatprep.subr.mxu0 0.0
      %9273 = vmatpush1.msra.mxu0 0.0
      %9274 = vmatprep.subr.mxu0 0.0
      %9275 = vmatpush1.msra.mxu0 0.0
      %9276 = vmatprep.subr.mxu0 0.0
      %9277 = vmatpush1.msra.mxu0 0.0
      %9278 = vmatprep.subr.mxu0 0.0
      %9279 = vmatpush1.msra.mxu0 0.0
      %9280 = vmatprep.subr.mxu0 0.0
      %9281 = vmatpush1.msra.mxu0 0.0
      %9282 = vmatprep.subr.mxu0 0.0
      %v9283 = vand.u32 %v8609, 4294901760
      %9284 = vmatpush1.msra.mxu0 %v9283
      %9285 = vmatprep.subr.mxu0 0.0
      %v9286 = vand.u32 %v8608, 4294901760
      %9287 = vmatpush1.msra.mxu0 %v9286
      %9288 = vmatprep.subr.mxu0 0.0
      %v9289 = vand.u32 %v8607, 4294901760
      %9290 = vmatpush1.msra.mxu0 %v9289
      %9291 = vmatprep.subr.mxu0 0.0
      %v9292 = vand.u32 %v8606, 4294901760
      %9293 = vmatpush1.msra.mxu0 %v9292
      %9294 = vmatprep.subr.mxu0 0.0
      %9295 = vmatpush2.msra.mxu0 0.0
      %9296 = vmatprep.subr.mxu0 0.0
      %9297 = vmatpush2.msra.mxu0 0.0
      %9298 = vmatprep.subr.mxu0 0.0
      %9299 = vmatpush2.msra.mxu0 0.0
      %9300 = vmatprep.subr.mxu0 0.0
      %9301 = vmatpush2.msra.mxu0 0.0
      %9302 = vmatprep.subr.mxu0 0.0
      %9303 = vmatpush2.msra.mxu0 0.0
      %9304 = vmatprep.subr.mxu0 0.0
      %9305 = vmatpush2.msra.mxu0 0.0
      %9306 = vmatprep.subr.mxu0 0.0
      %9307 = vmatpush2.msra.mxu0 0.0
      %9308 = vmatprep.subr.mxu0 0.0
      %9309 = vmatpush2.msra.mxu0 0.0
      %9310 = vmatprep.subr.mxu0 0.0
      %9311 = vmatpush2.msra.mxu0 0.0
      %9312 = vmatprep.subr.mxu0 0.0
      %9313 = vmatpush2.msra.mxu0 0.0
      %9314 = vmatprep.subr.mxu0 0.0
      %9315 = vmatpush2.msra.mxu0 0.0
      %9316 = vmatprep.subr.mxu0 0.0
      %9317 = vmatpush2.msra.mxu0 0.0
      %9318 = vmatprep.subr.mxu0 0.0
      %9319 = vmatpush2.msra.mxu0 0.0
      %9320 = vmatprep.subr.mxu0 0.0
      %9321 = vmatpush2.msra.mxu0 0.0
      %9322 = vmatprep.subr.mxu0 0.0
      %9323 = vmatpush2.msra.mxu0 0.0
      %9324 = vmatprep.subr.mxu0 0.0
      %9325 = vmatpush2.msra.mxu0 0.0
      %9326 = vmatprep.mubr.f32.mxu0 0.0
      %v9327 = vand.u32 %v8616, 4294901760
      %v9328 = vsub.f32 %v8616, %v9327
      %v9329 = vand.u32 %v9328, 4294901760
      %9330 = vmatmul.mubr.f32.gmra.mxu0 %v9329
      %v9331 = vpop.f32.mrf.mxu0
      %v9332 = vadd.f32 %v9150, %v9331
      %v9333 = vpop.f32.mrf.mxu0
      %9334 = vmatprep.mubr.f32.mxu0 0.0
      %v9335 = vand.u32 %v8619, 4294901760
      %v9336 = vsub.f32 %v8619, %v9335
      %v9337 = vand.u32 %v9336, 4294901760
      %9338 = vmatmul.mubr.f32.gmra.mxu0 %v9337
      %v9339 = vpop.f32.mrf.mxu0
      %v9340 = vadd.f32 %v9157, %v9339
      %v9341 = vpop.f32.mrf.mxu0
      %9342 = vmatprep.mubr.f32.mxu0 0.0
      %v9343 = vand.u32 %v8622, 4294901760
      %v9344 = vsub.f32 %v8622, %v9343
      %v9345 = vand.u32 %v9344, 4294901760
      %9346 = vmatmul.mubr.f32.gmra.mxu0 %v9345
      %v9347 = vpop.f32.mrf.mxu0
      %v9348 = vadd.f32 %v9164, %v9347
      %v9349 = vpop.f32.mrf.mxu0
      %9350 = vmatprep.mubr.f32.mxu0 0.0
      %v9351 = vand.u32 %v8625, 4294901760
      %v9352 = vsub.f32 %v8625, %v9351
      %v9353 = vand.u32 %v9352, 4294901760
      %9354 = vmatmul.mubr.f32.gmra.mxu0 %v9353
      %v9355 = vpop.f32.mrf.mxu0
      %v9356 = vadd.f32 %v9171, %v9355
      %v9357 = vpop.f32.mrf.mxu0
      %9358 = vmatprep.mubr.f32.mxu0 0.0
      %v9359 = vand.u32 %v8628, 4294901760
      %v9360 = vsub.f32 %v8628, %v9359
      %v9361 = vand.u32 %v9360, 4294901760
      %9362 = vmatmul.mubr.f32.gmra.mxu0 %v9361
      %v9363 = vpop.f32.mrf.mxu0
      %v9364 = vadd.f32 %v9178, %v9363
      %v9365 = vpop.f32.mrf.mxu0
      %9366 = vmatprep.mubr.f32.mxu0 0.0
      %v9367 = vand.u32 %v8631, 4294901760
      %v9368 = vsub.f32 %v8631, %v9367
      %v9369 = vand.u32 %v9368, 4294901760
      %9370 = vmatmul.mubr.f32.gmra.mxu0 %v9369
      %v9371 = vpop.f32.mrf.mxu0
      %v9372 = vadd.f32 %v9185, %v9371
      %v9373 = vpop.f32.mrf.mxu0
      %9374 = vmatprep.mubr.f32.mxu0 0.0
      %v9375 = vand.u32 %v8634, 4294901760
      %v9376 = vsub.f32 %v8634, %v9375
      %v9377 = vand.u32 %v9376, 4294901760
      %9378 = vmatmul.mubr.f32.gmra.mxu0 %v9377
      %v9379 = vpop.f32.mrf.mxu0
      %v9380 = vadd.f32 %v9192, %v9379
      %v9381 = vpop.f32.mrf.mxu0
      %9382 = vmatprep.mubr.f32.mxu0 0.0
      %v9383 = vand.u32 %v8637, 4294901760
      %v9384 = vsub.f32 %v8637, %v9383
      %v9385 = vand.u32 %v9384, 4294901760
      %9386 = vmatmul.mubr.f32.gmra.mxu0 %v9385
      %v9387 = vpop.f32.mrf.mxu0
      %v9388 = vadd.f32 %v9199, %v9387
      %v9389 = vpop.f32.mrf.mxu0
      %9390 = vmatprep.mubr.f32.mxu0 0.0
      %v9391 = vand.u32 %v8640, 4294901760
      %v9392 = vsub.f32 %v8640, %v9391
      %v9393 = vand.u32 %v9392, 4294901760
      %9394 = vmatmul.mubr.f32.gmra.mxu0 %v9393
      %v9395 = vpop.f32.mrf.mxu0
      %v9396 = vadd.f32 %v9206, %v9395
      %v9397 = vpop.f32.mrf.mxu0
      %9398 = vmatprep.mubr.f32.mxu0 0.0
      %v9399 = vand.u32 %v8643, 4294901760
      %v9400 = vsub.f32 %v8643, %v9399
      %v9401 = vand.u32 %v9400, 4294901760
      %9402 = vmatmul.mubr.f32.gmra.mxu0 %v9401
      %v9403 = vpop.f32.mrf.mxu0
      %v9404 = vadd.f32 %v9213, %v9403
      %v9405 = vpop.f32.mrf.mxu0
      %9406 = vmatprep.mubr.f32.mxu0 0.0
      %v9407 = vand.u32 %v8646, 4294901760
      %v9408 = vsub.f32 %v8646, %v9407
      %v9409 = vand.u32 %v9408, 4294901760
      %9410 = vmatmul.mubr.f32.gmra.mxu0 %v9409
      %v9411 = vpop.f32.mrf.mxu0
      %v9412 = vadd.f32 %v9220, %v9411
      %v9413 = vpop.f32.mrf.mxu0
      %9414 = vmatprep.mubr.f32.mxu0 0.0
      %v9415 = vand.u32 %v8649, 4294901760
      %v9416 = vsub.f32 %v8649, %v9415
      %v9417 = vand.u32 %v9416, 4294901760
      %9418 = vmatmul.mubr.f32.gmra.mxu0 %v9417
      %v9419 = vpop.f32.mrf.mxu0
      %v9420 = vadd.f32 %v9227, %v9419
      %v9421 = vpop.f32.mrf.mxu0
      %9422 = vmatprep.mubr.f32.mxu0 0.0
      %v9423 = vand.u32 %v8652, 4294901760
      %v9424 = vsub.f32 %v8652, %v9423
      %v9425 = vand.u32 %v9424, 4294901760
      %9426 = vmatmul.mubr.f32.gmra.mxu0 %v9425
      %v9427 = vpop.f32.mrf.mxu0
      %v9428 = vadd.f32 %v9234, %v9427
      %v9429 = vpop.f32.mrf.mxu0
      %9430 = vmatprep.mubr.f32.mxu0 0.0
      %v9431 = vand.u32 %v8655, 4294901760
      %v9432 = vsub.f32 %v8655, %v9431
      %v9433 = vand.u32 %v9432, 4294901760
      %9434 = vmatmul.mubr.f32.gmra.mxu0 %v9433
      %v9435 = vpop.f32.mrf.mxu0
      %v9436 = vadd.f32 %v9241, %v9435
      %v9437 = vpop.f32.mrf.mxu0
      %9438 = vmatprep.mubr.f32.mxu0 0.0
      %v9439 = vand.u32 %v8658, 4294901760
      %v9440 = vsub.f32 %v8658, %v9439
      %v9441 = vand.u32 %v9440, 4294901760
      %9442 = vmatmul.mubr.f32.gmra.mxu0 %v9441
      %v9443 = vpop.f32.mrf.mxu0
      %v9444 = vadd.f32 %v9248, %v9443
      %v9445 = vpop.f32.mrf.mxu0
      %9446 = vmatprep.mubr.f32.mxu0 0.0
      %v9447 = vand.u32 %v8661, 4294901760
      %v9448 = vsub.f32 %v8661, %v9447
      %v9449 = vand.u32 %v9448, 4294901760
      %9450 = vmatmul.mubr.f32.gmra.mxu0 %v9449
      %v9451 = vpop.f32.mrf.mxu0
      %v9452 = vadd.f32 %v9255, %v9451
      %v9453 = vpop.f32.mrf.mxu0
      %9454 = vdwg.mxu0
      %9455 = vmatprep.subr.mxu0 0.0
      %9456 = vmatpush1.msra.mxu0 0.0
      %9457 = vmatprep.subr.mxu0 0.0
      %9458 = vmatpush1.msra.mxu0 0.0
      %9459 = vmatprep.subr.mxu0 0.0
      %9460 = vmatpush1.msra.mxu0 0.0
      %9461 = vmatprep.subr.mxu0 0.0
      %9462 = vmatpush1.msra.mxu0 0.0
      %9463 = vmatprep.subr.mxu0 0.0
      %9464 = vmatpush1.msra.mxu0 0.0
      %9465 = vmatprep.subr.mxu0 0.0
      %9466 = vmatpush1.msra.mxu0 0.0
      %9467 = vmatprep.subr.mxu0 0.0
      %9468 = vmatpush1.msra.mxu0 0.0
      %9469 = vmatprep.subr.mxu0 0.0
      %9470 = vmatpush1.msra.mxu0 0.0
      %9471 = vmatprep.subr.mxu0 0.0
      %9472 = vmatpush1.msra.mxu0 0.0
      %9473 = vmatprep.subr.mxu0 0.0
      %9474 = vmatpush1.msra.mxu0 0.0
      %9475 = vmatprep.subr.mxu0 0.0
      %9476 = vmatpush1.msra.mxu0 0.0
      %9477 = vmatprep.subr.mxu0 0.0
      %9478 = vmatpush1.msra.mxu0 0.0
      %9479 = vmatprep.subr.mxu0 0.0
      %v9480 = vand.u32 %v8609, 4294901760
      %v9481 = vsub.f32 %v8609, %v9480
      %v9482 = vand.u32 %v9481, 4294901760
      %9483 = vmatpush1.msra.mxu0 %v9482
      %9484 = vmatprep.subr.mxu0 0.0
      %v9485 = vand.u32 %v8608, 4294901760
      %v9486 = vsub.f32 %v8608, %v9485
      %v9487 = vand.u32 %v9486, 4294901760
      %9488 = vmatpush1.msra.mxu0 %v9487
      %9489 = vmatprep.subr.mxu0 0.0
      %v9490 = vand.u32 %v8607, 4294901760
      %v9491 = vsub.f32 %v8607, %v9490
      %v9492 = vand.u32 %v9491, 4294901760
      %9493 = vmatpush1.msra.mxu0 %v9492
      %9494 = vmatprep.subr.mxu0 0.0
      %v9495 = vand.u32 %v8606, 4294901760
      %v9496 = vsub.f32 %v8606, %v9495
      %v9497 = vand.u32 %v9496, 4294901760
      %9498 = vmatpush1.msra.mxu0 %v9497
      %9499 = vmatprep.subr.mxu0 0.0
      %9500 = vmatpush2.msra.mxu0 0.0
      %9501 = vmatprep.subr.mxu0 0.0
      %9502 = vmatpush2.msra.mxu0 0.0
      %9503 = vmatprep.subr.mxu0 0.0
      %9504 = vmatpush2.msra.mxu0 0.0
      %9505 = vmatprep.subr.mxu0 0.0
      %9506 = vmatpush2.msra.mxu0 0.0
      %9507 = vmatprep.subr.mxu0 0.0
      %9508 = vmatpush2.msra.mxu0 0.0
      %9509 = vmatprep.subr.mxu0 0.0
      %9510 = vmatpush2.msra.mxu0 0.0
      %9511 = vmatprep.subr.mxu0 0.0
      %9512 = vmatpush2.msra.mxu0 0.0
      %9513 = vmatprep.subr.mxu0 0.0
      %9514 = vmatpush2.msra.mxu0 0.0
      %9515 = vmatprep.subr.mxu0 0.0
      %9516 = vmatpush2.msra.mxu0 0.0
      %9517 = vmatprep.subr.mxu0 0.0
      %9518 = vmatpush2.msra.mxu0 0.0
      %9519 = vmatprep.subr.mxu0 0.0
      %9520 = vmatpush2.msra.mxu0 0.0
      %9521 = vmatprep.subr.mxu0 0.0
      %9522 = vmatpush2.msra.mxu0 0.0
      %9523 = vmatprep.subr.mxu0 0.0
      %9524 = vmatpush2.msra.mxu0 0.0
      %9525 = vmatprep.subr.mxu0 0.0
      %9526 = vmatpush2.msra.mxu0 0.0
      %9527 = vmatprep.subr.mxu0 0.0
      %9528 = vmatpush2.msra.mxu0 0.0
      %9529 = vmatprep.subr.mxu0 0.0
      %9530 = vmatpush2.msra.mxu0 0.0
      %9531 = vmatprep.mubr.f32.mxu0 0.0
      %v9532 = vand.u32 %v8616, 4294901760
      %9533 = vmatmul.mubr.f32.gmra.mxu0 %v9532
      %v9534 = vpop.f32.mrf.mxu0
      %v9535 = vadd.f32 %v9332, %v9534
      %v9536 = vpop.f32.mrf.mxu0
      %9537 = vmatprep.mubr.f32.mxu0 0.0
      %v9538 = vand.u32 %v8619, 4294901760
      %9539 = vmatmul.mubr.f32.gmra.mxu0 %v9538
      %v9540 = vpop.f32.mrf.mxu0
      %v9541 = vadd.f32 %v9340, %v9540
      %v9542 = vpop.f32.mrf.mxu0
      %9543 = vmatprep.mubr.f32.mxu0 0.0
      %v9544 = vand.u32 %v8622, 4294901760
      %9545 = vmatmul.mubr.f32.gmra.mxu0 %v9544
      %v9546 = vpop.f32.mrf.mxu0
      %v9547 = vadd.f32 %v9348, %v9546
      %v9548 = vpop.f32.mrf.mxu0
      %9549 = vmatprep.mubr.f32.mxu0 0.0
      %v9550 = vand.u32 %v8625, 4294901760
      %9551 = vmatmul.mubr.f32.gmra.mxu0 %v9550
      %v9552 = vpop.f32.mrf.mxu0
      %v9553 = vadd.f32 %v9356, %v9552
      %v9554 = vpop.f32.mrf.mxu0
      %9555 = vmatprep.mubr.f32.mxu0 0.0
      %v9556 = vand.u32 %v8628, 4294901760
      %9557 = vmatmul.mubr.f32.gmra.mxu0 %v9556
      %v9558 = vpop.f32.mrf.mxu0
      %v9559 = vadd.f32 %v9364, %v9558
      %v9560 = vpop.f32.mrf.mxu0
      %9561 = vmatprep.mubr.f32.mxu0 0.0
      %v9562 = vand.u32 %v8631, 4294901760
      %9563 = vmatmul.mubr.f32.gmra.mxu0 %v9562
      %v9564 = vpop.f32.mrf.mxu0
      %v9565 = vadd.f32 %v9372, %v9564
      %v9566 = vpop.f32.mrf.mxu0
      %9567 = vmatprep.mubr.f32.mxu0 0.0
      %v9568 = vand.u32 %v8634, 4294901760
      %9569 = vmatmul.mubr.f32.gmra.mxu0 %v9568
      %v9570 = vpop.f32.mrf.mxu0
      %v9571 = vadd.f32 %v9380, %v9570
      %v9572 = vpop.f32.mrf.mxu0
      %9573 = vmatprep.mubr.f32.mxu0 0.0
      %v9574 = vand.u32 %v8637, 4294901760
      %9575 = vmatmul.mubr.f32.gmra.mxu0 %v9574
      %v9576 = vpop.f32.mrf.mxu0
      %v9577 = vadd.f32 %v9388, %v9576
      %v9578 = vpop.f32.mrf.mxu0
      %9579 = vmatprep.mubr.f32.mxu0 0.0
      %v9580 = vand.u32 %v8640, 4294901760
      %9581 = vmatmul.mubr.f32.gmra.mxu0 %v9580
      %v9582 = vpop.f32.mrf.mxu0
      %v9583 = vadd.f32 %v9396, %v9582
      %v9584 = vpop.f32.mrf.mxu0
      %9585 = vmatprep.mubr.f32.mxu0 0.0
      %v9586 = vand.u32 %v8643, 4294901760
      %9587 = vmatmul.mubr.f32.gmra.mxu0 %v9586
      %v9588 = vpop.f32.mrf.mxu0
      %v9589 = vadd.f32 %v9404, %v9588
      %v9590 = vpop.f32.mrf.mxu0
      %9591 = vmatprep.mubr.f32.mxu0 0.0
      %v9592 = vand.u32 %v8646, 4294901760
      %9593 = vmatmul.mubr.f32.gmra.mxu0 %v9592
      %v9594 = vpop.f32.mrf.mxu0
      %v9595 = vadd.f32 %v9412, %v9594
      %v9596 = vpop.f32.mrf.mxu0
      %9597 = vmatprep.mubr.f32.mxu0 0.0
      %v9598 = vand.u32 %v8649, 4294901760
      %9599 = vmatmul.mubr.f32.gmra.mxu0 %v9598
      %v9600 = vpop.f32.mrf.mxu0
      %v9601 = vadd.f32 %v9420, %v9600
      %v9602 = vpop.f32.mrf.mxu0
      %9603 = vmatprep.mubr.f32.mxu0 0.0
      %v9604 = vand.u32 %v8652, 4294901760
      %9605 = vmatmul.mubr.f32.gmra.mxu0 %v9604
      %v9606 = vpop.f32.mrf.mxu0
      %v9607 = vadd.f32 %v9428, %v9606
      %v9608 = vpop.f32.mrf.mxu0
      %9609 = vmatprep.mubr.f32.mxu0 0.0
      %v9610 = vand.u32 %v8655, 4294901760
      %9611 = vmatmul.mubr.f32.gmra.mxu0 %v9610
      %v9612 = vpop.f32.mrf.mxu0
      %v9613 = vadd.f32 %v9436, %v9612
      %v9614 = vpop.f32.mrf.mxu0
      %9615 = vmatprep.mubr.f32.mxu0 0.0
      %v9616 = vand.u32 %v8658, 4294901760
      %9617 = vmatmul.mubr.f32.gmra.mxu0 %v9616
      %v9618 = vpop.f32.mrf.mxu0
      %v9619 = vadd.f32 %v9444, %v9618
      %v9620 = vpop.f32.mrf.mxu0
      %9621 = vmatprep.mubr.f32.mxu0 0.0
      %v9622 = vand.u32 %v8661, 4294901760
      %9623 = vmatmul.mubr.f32.gmra.mxu0 %v9622
      %v9624 = vpop.f32.mrf.mxu0
      %v9625 = vadd.f32 %v9452, %v9624
      %v9626 = vpop.f32.mrf.mxu0
      %9627 = vdwg.mxu0
      %9628 = vmatprep.subr.mxu0 0.0
      %9629 = vmatpush1.msra.mxu0 0.0
      %9630 = vmatprep.subr.mxu0 0.0
      %9631 = vmatpush1.msra.mxu0 0.0
      %9632 = vmatprep.subr.mxu0 0.0
      %9633 = vmatpush1.msra.mxu0 0.0
      %9634 = vmatprep.subr.mxu0 0.0
      %9635 = vmatpush1.msra.mxu0 0.0
      %9636 = vmatprep.subr.mxu0 0.0
      %9637 = vmatpush1.msra.mxu0 0.0
      %9638 = vmatprep.subr.mxu0 0.0
      %9639 = vmatpush1.msra.mxu0 0.0
      %9640 = vmatprep.subr.mxu0 0.0
      %9641 = vmatpush1.msra.mxu0 0.0
      %9642 = vmatprep.subr.mxu0 0.0
      %9643 = vmatpush1.msra.mxu0 0.0
      %9644 = vmatprep.subr.mxu0 0.0
      %9645 = vmatpush1.msra.mxu0 0.0
      %9646 = vmatprep.subr.mxu0 0.0
      %9647 = vmatpush1.msra.mxu0 0.0
      %9648 = vmatprep.subr.mxu0 0.0
      %9649 = vmatpush1.msra.mxu0 0.0
      %9650 = vmatprep.subr.mxu0 0.0
      %9651 = vmatpush1.msra.mxu0 0.0
      %9652 = vmatprep.subr.mxu0 0.0
      %v9653 = vand.u32 %v8609, 4294901760
      %9654 = vmatpush1.msra.mxu0 %v9653
      %9655 = vmatprep.subr.mxu0 0.0
      %v9656 = vand.u32 %v8608, 4294901760
      %9657 = vmatpush1.msra.mxu0 %v9656
      %9658 = vmatprep.subr.mxu0 0.0
      %v9659 = vand.u32 %v8607, 4294901760
      %9660 = vmatpush1.msra.mxu0 %v9659
      %9661 = vmatprep.subr.mxu0 0.0
      %v9662 = vand.u32 %v8606, 4294901760
      %9663 = vmatpush1.msra.mxu0 %v9662
      %9664 = vmatprep.subr.mxu0 0.0
      %9665 = vmatpush2.msra.mxu0 0.0
      %9666 = vmatprep.subr.mxu0 0.0
      %9667 = vmatpush2.msra.mxu0 0.0
      %9668 = vmatprep.subr.mxu0 0.0
      %9669 = vmatpush2.msra.mxu0 0.0
      %9670 = vmatprep.subr.mxu0 0.0
      %9671 = vmatpush2.msra.mxu0 0.0
      %9672 = vmatprep.subr.mxu0 0.0
      %9673 = vmatpush2.msra.mxu0 0.0
      %9674 = vmatprep.subr.mxu0 0.0
      %9675 = vmatpush2.msra.mxu0 0.0
      %9676 = vmatprep.subr.mxu0 0.0
      %9677 = vmatpush2.msra.mxu0 0.0
      %9678 = vmatprep.subr.mxu0 0.0
      %9679 = vmatpush2.msra.mxu0 0.0
      %9680 = vmatprep.subr.mxu0 0.0
      %9681 = vmatpush2.msra.mxu0 0.0
      %9682 = vmatprep.subr.mxu0 0.0
      %9683 = vmatpush2.msra.mxu0 0.0
      %9684 = vmatprep.subr.mxu0 0.0
      %9685 = vmatpush2.msra.mxu0 0.0
      %9686 = vmatprep.subr.mxu0 0.0
      %9687 = vmatpush2.msra.mxu0 0.0
      %9688 = vmatprep.subr.mxu0 0.0
      %9689 = vmatpush2.msra.mxu0 0.0
      %9690 = vmatprep.subr.mxu0 0.0
      %9691 = vmatpush2.msra.mxu0 0.0
      %9692 = vmatprep.subr.mxu0 0.0
      %9693 = vmatpush2.msra.mxu0 0.0
      %9694 = vmatprep.subr.mxu0 0.0
      %9695 = vmatpush2.msra.mxu0 0.0
      %9696 = vmatprep.mubr.f32.mxu0 0.0
      %v9697 = vand.u32 %v8616, 4294901760
      %9698 = vmatmul.mubr.f32.gmra.mxu0 %v9697
      %v9699 = vpop.f32.mrf.mxu0
      %v9700 = vadd.f32 %v9535, %v9699
      %v9701 = vpop.f32.mrf.mxu0
      %9702 = vmatprep.mubr.f32.mxu0 0.0
      %v9703 = vand.u32 %v8619, 4294901760
      %9704 = vmatmul.mubr.f32.gmra.mxu0 %v9703
      %v9705 = vpop.f32.mrf.mxu0
      %v9706 = vadd.f32 %v9541, %v9705
      %v9707 = vpop.f32.mrf.mxu0
      %9708 = vmatprep.mubr.f32.mxu0 0.0
      %v9709 = vand.u32 %v8622, 4294901760
      %9710 = vmatmul.mubr.f32.gmra.mxu0 %v9709
      %v9711 = vpop.f32.mrf.mxu0
      %v9712 = vadd.f32 %v9547, %v9711
      %v9713 = vpop.f32.mrf.mxu0
      %9714 = vmatprep.mubr.f32.mxu0 0.0
      %v9715 = vand.u32 %v8625, 4294901760
      %9716 = vmatmul.mubr.f32.gmra.mxu0 %v9715
      %v9717 = vpop.f32.mrf.mxu0
      %v9718 = vadd.f32 %v9553, %v9717
      %v9719 = vpop.f32.mrf.mxu0
      %9720 = vmatprep.mubr.f32.mxu0 0.0
      %v9721 = vand.u32 %v8628, 4294901760
      %9722 = vmatmul.mubr.f32.gmra.mxu0 %v9721
      %v9723 = vpop.f32.mrf.mxu0
      %v9724 = vadd.f32 %v9559, %v9723
      %v9725 = vpop.f32.mrf.mxu0
      %9726 = vmatprep.mubr.f32.mxu0 0.0
      %v9727 = vand.u32 %v8631, 4294901760
      %9728 = vmatmul.mubr.f32.gmra.mxu0 %v9727
      %v9729 = vpop.f32.mrf.mxu0
      %v9730 = vadd.f32 %v9565, %v9729
      %v9731 = vpop.f32.mrf.mxu0
      %9732 = vmatprep.mubr.f32.mxu0 0.0
      %v9733 = vand.u32 %v8634, 4294901760
      %9734 = vmatmul.mubr.f32.gmra.mxu0 %v9733
      %v9735 = vpop.f32.mrf.mxu0
      %v9736 = vadd.f32 %v9571, %v9735
      %v9737 = vpop.f32.mrf.mxu0
      %9738 = vmatprep.mubr.f32.mxu0 0.0
      %v9739 = vand.u32 %v8637, 4294901760
      %9740 = vmatmul.mubr.f32.gmra.mxu0 %v9739
      %v9741 = vpop.f32.mrf.mxu0
      %v9742 = vadd.f32 %v9577, %v9741
      %v9743 = vpop.f32.mrf.mxu0
      %9744 = vmatprep.mubr.f32.mxu0 0.0
      %v9745 = vand.u32 %v8640, 4294901760
      %9746 = vmatmul.mubr.f32.gmra.mxu0 %v9745
      %v9747 = vpop.f32.mrf.mxu0
      %v9748 = vadd.f32 %v9583, %v9747
      %v9749 = vpop.f32.mrf.mxu0
      %9750 = vmatprep.mubr.f32.mxu0 0.0
      %v9751 = vand.u32 %v8643, 4294901760
      %9752 = vmatmul.mubr.f32.gmra.mxu0 %v9751
      %v9753 = vpop.f32.mrf.mxu0
      %v9754 = vadd.f32 %v9589, %v9753
      %v9755 = vpop.f32.mrf.mxu0
      %9756 = vmatprep.mubr.f32.mxu0 0.0
      %v9757 = vand.u32 %v8646, 4294901760
      %9758 = vmatmul.mubr.f32.gmra.mxu0 %v9757
      %v9759 = vpop.f32.mrf.mxu0
      %v9760 = vadd.f32 %v9595, %v9759
      %v9761 = vpop.f32.mrf.mxu0
      %9762 = vmatprep.mubr.f32.mxu0 0.0
      %v9763 = vand.u32 %v8649, 4294901760
      %9764 = vmatmul.mubr.f32.gmra.mxu0 %v9763
      %v9765 = vpop.f32.mrf.mxu0
      %v9766 = vadd.f32 %v9601, %v9765
      %v9767 = vpop.f32.mrf.mxu0
      %9768 = vmatprep.mubr.f32.mxu0 0.0
      %v9769 = vand.u32 %v8652, 4294901760
      %9770 = vmatmul.mubr.f32.gmra.mxu0 %v9769
      %v9771 = vpop.f32.mrf.mxu0
      %v9772 = vadd.f32 %v9607, %v9771
      %v9773 = vpop.f32.mrf.mxu0
      %9774 = vmatprep.mubr.f32.mxu0 0.0
      %v9775 = vand.u32 %v8655, 4294901760
      %9776 = vmatmul.mubr.f32.gmra.mxu0 %v9775
      %v9777 = vpop.f32.mrf.mxu0
      %v9778 = vadd.f32 %v9613, %v9777
      %v9779 = vpop.f32.mrf.mxu0
      %9780 = vmatprep.mubr.f32.mxu0 0.0
      %v9781 = vand.u32 %v8658, 4294901760
      %9782 = vmatmul.mubr.f32.gmra.mxu0 %v9781
      %v9783 = vpop.f32.mrf.mxu0
      %v9784 = vadd.f32 %v9619, %v9783
      %v9785 = vpop.f32.mrf.mxu0
      %9786 = vmatprep.mubr.f32.mxu0 0.0
      %v9787 = vand.u32 %v8661, 4294901760
      %9788 = vmatmul.mubr.f32.gmra.mxu0 %v9787
      %v9789 = vpop.f32.mrf.mxu0
      %v9790 = vadd.f32 %v9625, %v9789
      %v9791 = vpop.f32.mrf.mxu0
      %9792 = vdwg.mxu0
      %9793 = vst.msk [vmem:[%s145] sm:$0xff] %vm1353, %v9700
      %9794 = vst.msk [vmem:[%s145 + $0x8] sm:$0xff] %vm1353, %v9706
      %9795 = vst.msk [vmem:[%s145 + $0x10] sm:$0xff] %vm1353, %v9712
      %9796 = vst.msk [vmem:[%s145 + $0x18] sm:$0xff] %vm1353, %v9718
      %9797 = vst.msk [vmem:[%s145 + $0x20] sm:$0xff] %vm1353, %v9724
      %9798 = vst.msk [vmem:[%s145 + $0x28] sm:$0xff] %vm1353, %v9730
      %9799 = vst.msk [vmem:[%s145 + $0x30] sm:$0xff] %vm1353, %v9736
      %9800 = vst.msk [vmem:[%s145 + $0x38] sm:$0xff] %vm1353, %v9742
      %9801 = vst.msk [vmem:[%s145 + $0x40] sm:$0xff] %vm1353, %v9748
      %9802 = vst.msk [vmem:[%s145 + $0x48] sm:$0xff] %vm1353, %v9754
      %9803 = vst.msk [vmem:[%s145 + $0x50] sm:$0xff] %vm1353, %v9760
      %9804 = vst.msk [vmem:[%s145 + $0x58] sm:$0xff] %vm1353, %v9766
      %9805 = vst.msk [vmem:[%s145 + $0x60] sm:$0xff] %vm1353, %v9772
      %9806 = vst.msk [vmem:[%s145 + $0x68] sm:$0xff] %vm1353, %v9778
      %9807 = vst.msk [vmem:[%s145 + $0x70] sm:$0xff] %vm1353, %v9784
      %9808 = vst.msk [vmem:[%s145 + $0x78] sm:$0xff] %vm1353, %v9790
      %s9809 = smul.u32 16, %s13
      %p9810 = scmp.lt.s32.totalorder %s9809, 31
      %s9811 = scalar_select %p9810, %s9809, 31
      %s9812 = smul.addr %s9811, 8
      %s9813 = scalar_lea.vmem %s2, %s9812
      // Predicated region
      $region29: #{tpu_custom_call.1} parent=27 // pred_check
        %p9814 = pneg %p78
      $region30: #{tpu_custom_call.1} parent=27 // pred_check_branch
        %9816 = sbr.rel (%p9814) target = $region32
      $region31: #{tpu_custom_call.1} parent=27 // pred_region
        %s9817 = smul.u32 16, %s13
      $region32: #{tpu_custom_call.1} parent=27 // pred_fallthru
        _
    $region28: #{tpu_custom_call.1} parent=5 // pred_fallthru
      _
    %p9818 = scmp.le.s32.totalorder 2, %s8
    // Predicated region
    $region33: #{tpu_custom_call.1} parent=5 // pred_check
      %p9819 = pneg %p9818
    $region34: #{tpu_custom_call.1} parent=5 // pred_check_branch
      %9821 = sbr.rel (%p9819) target = $region36
    $region35: #{tpu_custom_call.1} parent=5 // pred_region
      %s9822 = ssub.s32 %s8, 2
      // Predicated region
      $region37: #{tpu_custom_call.1} parent=35 // pred_check
        %p9823 = pneg %p84
      $region38: #{tpu_custom_call.1} parent=35 // pred_check_branch
        %9825 = sbr.rel (%p9823) target = $region40
      $region39: #{tpu_custom_call.1} parent=35 // pred_region
        %s9826 = smul.u32 16, %s14
        %p9827 = scmp.lt.s32.totalorder %s9826, 31
        %s9828 = scalar_select %p9827, %s9826, 31
        %s9829 = smul.addr %s9828, 8
        %s9830 = scalar_lea.vmem %s2, %s9829
      $region40: #{tpu_custom_call.1} parent=35 // pred_fallthru
        _
    $region36: #{tpu_custom_call.1} parent=5 // pred_fallthru
      _
  $region6: #{tpu_custom_call.1} parent=0 // loop_footer
    %s12 = sadd.s32 1, %s8
  $region7: #{tpu_custom_call.1} parent=0 // loop_footer_branch
    %7 = sbr.rel target = $region3
  $region8: #{tpu_custom_call.1} parent=0 // loop_exit
    _

</llo_original>
